<compile_context>
chip_gen: v7x
topology: tpu7x:2x2x1
jax: 0.10.0
libtpu: 0.0.40
codegen_flags: <defaults>
</compile_context>

<pallas_src>
import jax
import jax.numpy as jnp
from jax.experimental import pallas as pl
from jax.experimental.pallas import tpu as pltpu

BN_EPS = 1e-5
KSIZE = 5
PAD = KSIZE // 2
POOL = 4


def _fused_kernel(xp_ref, w1_ref, b1_ref, w2_ref, b2_ref,
                  wih_ref, whh_ref, blstm_ref, wl_ref, bl_ref,
                  o_ref, p1pad_ref):
    """Whole Net forward; one invocation, all activations stay in VMEM/vregs."""
    N, Tp, _ = xp_ref.shape
    T = Tp - 2 * PAD                 # conv1 output length (32)
    T1 = T // POOL                   # after pool1 (8)
    L = T1 // POOL                   # LSTM steps (2)
    C1 = w1_ref.shape[-1]            # 200
    C2 = w2_ref.shape[-1]            # 300
    H = whh_ref.shape[-1]            # 50
    f32 = jnp.float32
    bf16 = jnp.bfloat16

    # Pre-zeroed scratch provides conv2's 'same' zero padding without an
    # in-register sublane-shifting concatenate; edge rows are never rewritten.
    p1pad_ref[...] = jnp.zeros_like(p1pad_ref)

    outs = []
    for n in range(N):               # static loop; batch folded into one step
        xv = xp_ref[n]               # (Tp, Cin) bf16, already 'same'-padded in time

        # ---- Conv1 (BN folded into w/b) + ReLU + MaxPool(4) ----
        acc1 = jnp.zeros((T, C1), f32)
        for k in range(KSIZE):       # 5 bf16 MXU taps, f32 accumulation
            acc1 = acc1 + jnp.dot(xv[k:k + T, :], w1_ref[k],
                                  preferred_element_type=f32)
        y1 = jnp.maximum(acc1 + b1_ref[...], 0.0)
        p1 = jnp.max(y1.reshape(T1, POOL, C1), axis=1)          # (T1, C1) f32

        # ---- Conv2 ('same' pad via scratch) + MaxPool(4) + ReLU ----
        # (ReLU before pool == pool before ReLU since ReLU is monotone.)
        p1pad_ref[PAD:PAD + T1, :] = p1.astype(bf16)
        acc2 = jnp.zeros((T1, C2), f32)
        for k in range(KSIZE):
            acc2 = acc2 + jnp.dot(p1pad_ref[k:k + T1, :], w2_ref[k],
                                  preferred_element_type=f32)
        y2 = jnp.maximum(acc2 + b2_ref[...], 0.0)
        p2 = jnp.max(y2.reshape(L, POOL, C2), axis=1)           # (L, C2) f32

        # ---- LSTM (gate order i, f, g, o); input projection hoisted ----
        p2b = p2.astype(bf16)
        xproj = [jnp.dot(p2b, wih_ref[g], preferred_element_type=f32)
                 + blstm_ref[g] for g in range(4)]              # 4 x (L, H) f32
        h = jnp.zeros((1, H), f32)
        c = jnp.zeros((1, H), f32)
        for t in range(L):           # tiny static recurrence
            hb = h.astype(bf16)
            rec = [jnp.dot(hb, whh_ref[g], preferred_element_type=f32)
                   for g in range(4)]
            gi = jax.nn.sigmoid(xproj[0][t:t + 1] + rec[0])
            gf = jax.nn.sigmoid(xproj[1][t:t + 1] + rec[1])
            gg = jnp.tanh(xproj[2][t:t + 1] + rec[2])
            go = jax.nn.sigmoid(xproj[3][t:t + 1] + rec[3])
            c = gf * c + gi * gg
            h = go * jnp.tanh(c)

        # ---- final-hidden ReLU -> Linear ----
        hr = jnp.maximum(h, 0.0).astype(bf16)
        outs.append(jnp.dot(hr, wl_ref[...], preferred_element_type=f32)
                    + bl_ref[...])

    o_ref[...] = jnp.concatenate(outs, axis=0).astype(o_ref.dtype)


def net_forward(x, p):
    """x: (N, T, 104) f32.  Params are f32, in the 'math' layouts noted below."""
    N, T, _ = x.shape
    nout = p["wl"].shape[-1]
    C1 = p["w1"].shape[-1]
    T1 = T // POOL

    # Fold eval-mode BatchNorm (with real running stats) into the conv w/b:
    #   s = gamma / sqrt(running_var + eps);  w <- w*s;  b <- (b - mean)*s + beta
    s1 = p["g1"] / jnp.sqrt(p["rv1"] + BN_EPS)
    s2 = p["g2"] / jnp.sqrt(p["rv2"] + BN_EPS)
    w1f = (p["w1"] * s1).astype(jnp.bfloat16)                       # (K, Cin, C1)
    b1f = ((p["b1"] - p["rm1"]) * s1 + p["be1"]).reshape(1, C1)
    w2f = (p["w2"] * s2).astype(jnp.bfloat16)                       # (K, C1, C2)
    b2f = ((p["b2"] - p["rm2"]) * s2 + p["be2"]).reshape(1, -1)

    # LSTM: PyTorch's b_ih + b_hh summed once here; weights unpadded bf16.
    wih = p["wih"].astype(jnp.bfloat16)                             # (4, C2, H)
    whh = p["whh"].astype(jnp.bfloat16)                             # (4, H, H)
    blstm = (p["b_ih"] + p["b_hh"])[:, None, :]                     # (4, 1, H) f32
    wl = p["wl"].astype(jnp.bfloat16)                               # (H, nout)
    bl = p["bl"].reshape(1, nout)

    # Single host-side 'same' time pad of the raw input; bf16 for the MXU LHS.
    xp = jnp.pad(x, ((0, 0), (PAD, PAD), (0, 0))).astype(jnp.bfloat16)

    vmem = pl.BlockSpec(memory_space=pltpu.MemorySpace.VMEM)
    return pl.pallas_call(
        _fused_kernel,
        out_shape=jax.ShapeDtypeStruct((N, nout), jnp.float32),
        in_specs=[vmem] * 10,
        out_specs=vmem,
        scratch_shapes=[pltpu.VMEM((T1 + 2 * PAD, C1), jnp.bfloat16)],
    )(xp, w1f, b1f, w2f, b2f, wih, whh, blstm, wl, bl)


def ref_forward(x, p):
    """Pure-JAX f32 reference (same semantics) for the correctness check."""
    def conv(h, w, b):
        K = w.shape[0]
        pad = K // 2
        Tt = h.shape[1]
        hp = jnp.pad(h, ((0, 0), (pad, pad), (0, 0)))
        acc = jnp.zeros((h.shape[0], Tt, w.shape[-1]), jnp.float32)
        for k in range(K):
            acc = acc + jnp.einsum("ntc,co->nto", hp[:, k:k + Tt, :], w[k])
        return acc + b

    def bn(y, g, be, rm, rv):
        return (y - rm) / jnp.sqrt(rv + BN_EPS) * g + be

    with jax.default_matmul_precision("highest"):
        N = x.shape[0]
        h = conv(x, p["w1"], p["b1"])
        h = jnp.maximum(bn(h, p["g1"], p["be1"], p["rm1"], p["rv1"]), 0.0)
        h = jnp.max(h.reshape(N, h.shape[1] // POOL, POOL, -1), axis=2)
        h = conv(h, p["w2"], p["b2"])
        h = bn(h, p["g2"], p["be2"], p["rm2"], p["rv2"])
        h = jnp.max(h.reshape(N, h.shape[1] // POOL, POOL, -1), axis=2)
        h = jnp.maximum(h, 0.0)

        L = h.shape[1]
        H = p["whh"].shape[-1]
        blstm = p["b_ih"] + p["b_hh"]
        hh = jnp.zeros((N, H), jnp.float32)
        cc = jnp.zeros((N, H), jnp.float32)
        for t in range(L):
            xt = h[:, t, :]
            gi = jax.nn.sigmoid(xt @ p["wih"][0] + hh @ p["whh"][0] + blstm[0])
            gf = jax.nn.sigmoid(xt @ p["wih"][1] + hh @ p["whh"][1] + blstm[1])
            gg = jnp.tanh(xt @ p["wih"][2] + hh @ p["whh"][2] + blstm[2])
            go = jax.nn.sigmoid(xt @ p["wih"][3] + hh @ p["whh"][3] + blstm[3])
            cc = gf * cc + gi * gg
            hh = go * jnp.tanh(cc)
        return jnp.maximum(hh, 0.0) @ p["wl"] + p["bl"]


if __name__ == "__main__":
    N, T, CIN, NOUT = 2, 32, 104, 11     # T=32 -> pool 8 -> 2 LSTM steps
    C1, C2, H = 200, 300, 50

    def nrm(k, shape, scale):
        return scale * jax.random.normal(k, shape, dtype=jnp.float32)

    ks = jax.random.split(jax.random.PRNGKey(0), 20)
    params = {
        # Conv weights in (K, Cin, Cout) layout (= PyTorch (Cout, Cin, K) transposed).
        "w1": nrm(ks[0], (KSIZE, CIN, C1), (1.0 / (KSIZE * CIN)) ** 0.5),
        "b1": nrm(ks[1], (C1,), 0.05),
        "g1": 1.0 + nrm(ks[2], (C1,), 0.1),
        "be1": nrm(ks[3], (C1,), 0.1),
        "rm1": nrm(ks[4], (C1,), 0.1),
        "rv1": 1.0 + 0.2 * jnp.abs(jax.random.normal(ks[5], (C1,), dtype=jnp.float32)),
        "w2": nrm(ks[6], (KSIZE, C1, C2), (1.0 / (KSIZE * C1)) ** 0.5),
        "b2": nrm(ks[7], (C2,), 0.05),
        "g2": 1.0 + nrm(ks[8], (C2,), 0.1),
        "be2": nrm(ks[9], (C2,), 0.1),
        "rm2": nrm(ks[10], (C2,), 0.1),
        "rv2": 1.0 + 0.2 * jnp.abs(jax.random.normal(ks[11], (C2,), dtype=jnp.float32)),
        # LSTM in math layout: wih (4, in, H), whh (4, H, H), gate order (i, f, g, o)
        # (= PyTorch weight_ih_l0 (4H, in) split into 4 chunks, each transposed).
        "wih": nrm(ks[12], (4, C2, H), (1.0 / C2) ** 0.5),
        "whh": nrm(ks[13], (4, H, H), (1.0 / H) ** 0.5),
        "b_ih": nrm(ks[14], (4, H), 0.05),
        "b_hh": nrm(ks[15], (4, H), 0.05),
        # Linear in (in, out) layout (= PyTorch weight transposed).
        "wl": nrm(ks[16], (H, NOUT), (1.0 / H) ** 0.5),
        "bl": nrm(ks[17], (NOUT,), 0.05),
    }
    x = jax.random.normal(ks[18], (N, T, CIN), dtype=jnp.float32)

    out = jax.block_until_ready(net_forward(x, params))
    assert out.shape == (N, NOUT), out.shape
    assert bool(jnp.all(jnp.isfinite(out)))
    ref = ref_forward(x, params)
    assert bool(jnp.allclose(out, ref, atol=5e-2, rtol=5e-2)), (out, ref)

    print("KERNEL_OK")
</pallas_src>

<mosaic_0001>
module attributes {stable_mosaic.version = 11 : i64} {
  func.func @_fused_kernel(%arg0: memref<2x36x104xbf16, #tpu.memory_space<vmem>>, %arg1: memref<5x104x200xbf16, #tpu.memory_space<vmem>>, %arg2: memref<1x200xf32, #tpu.memory_space<vmem>>, %arg3: memref<5x200x300xbf16, #tpu.memory_space<vmem>>, %arg4: memref<1x300xf32, #tpu.memory_space<vmem>>, %arg5: memref<4x300x50xbf16, #tpu.memory_space<vmem>>, %arg6: memref<4x50x50xbf16, #tpu.memory_space<vmem>>, %arg7: memref<4x1x50xf32, #tpu.memory_space<vmem>>, %arg8: memref<50x11xbf16, #tpu.memory_space<vmem>>, %arg9: memref<1x11xf32, #tpu.memory_space<vmem>>, %arg10: memref<2x11xf32, #tpu.memory_space<vmem>>, %arg11: memref<12x200xbf16, #tpu.memory_space<vmem>>) attributes {dimension_semantics = [], scalar_prefetch = 0 : i64, scratch_operands = 1 : i64, tpu.core_type = #tpu.core_type<tc>} {
    %cst = arith.constant 0.000000e+00 : bf16
    %0 = vector.broadcast %cst : bf16 to vector<12x200xbf16>
    %c0 = arith.constant 0 : index
    %c0_0 = arith.constant 0 : index
    %1 = vector.load %arg11[%c0, %c0_0] : memref<12x200xbf16, #tpu.memory_space<vmem>>, vector<12x200xbf16>
    tpu.vector_store %arg11[%c0, %c0_0], %0 {strides = array<i32>} : memref<12x200xbf16, #tpu.memory_space<vmem>>, vector<12x200xbf16>,
    %c0_1 = arith.constant 0 : index
    %c0_2 = arith.constant 0 : index
    %c0_3 = arith.constant 0 : index
    %2 = vector.load %arg0[%c0_1, %c0_2, %c0_3] : memref<2x36x104xbf16, #tpu.memory_space<vmem>>, vector<1x36x104xbf16>
    %3 = vector.shape_cast %2 : vector<1x36x104xbf16> to vector<36x104xbf16>
    %cst_4 = arith.constant 0.000000e+00 : f32
    %4 = vector.broadcast %cst_4 : f32 to vector<32x200xf32>
    %5 = vector.extract_strided_slice %3 {offsets = [0, 0], sizes = [32, 104], strides = [1, 1]} : vector<36x104xbf16> to vector<32x104xbf16>
    %c0_5 = arith.constant 0 : index
    %c0_6 = arith.constant 0 : index
    %c0_7 = arith.constant 0 : index
    %6 = vector.load %arg1[%c0_5, %c0_6, %c0_7] : memref<5x104x200xbf16, #tpu.memory_space<vmem>>, vector<1x104x200xbf16>
    %7 = vector.shape_cast %6 : vector<1x104x200xbf16> to vector<104x200xbf16>
    %cst_8 = arith.constant dense<0.000000e+00> : vector<32x200xf32>
    %8 = tpu.matmul %5, %7, %cst_8 {dimension_numbers = #tpu.dot_dimension_numbers<[1], [0], [0], [1], [0, 0, 1, 1], [], []>} : vector<32x104xbf16>, vector<104x200xbf16>, vector<32x200xf32> -> vector<32x200xf32>
    %9 = arith.addf %4, %8 : vector<32x200xf32>
    %10 = vector.extract_strided_slice %3 {offsets = [1, 0], sizes = [32, 104], strides = [1, 1]} : vector<36x104xbf16> to vector<32x104xbf16>
    %c1 = arith.constant 1 : index
    %c0_9 = arith.constant 0 : index
    %c0_10 = arith.constant 0 : index
    %11 = vector.load %arg1[%c1, %c0_9, %c0_10] : memref<5x104x200xbf16, #tpu.memory_space<vmem>>, vector<1x104x200xbf16>
    %12 = vector.shape_cast %11 : vector<1x104x200xbf16> to vector<104x200xbf16>
    %cst_11 = arith.constant dense<0.000000e+00> : vector<32x200xf32>
    %13 = tpu.matmul %10, %12, %cst_11 {dimension_numbers = #tpu.dot_dimension_numbers<[1], [0], [0], [1], [0, 0, 1, 1], [], []>} : vector<32x104xbf16>, vector<104x200xbf16>, vector<32x200xf32> -> vector<32x200xf32>
    %14 = arith.addf %9, %13 : vector<32x200xf32>
    %15 = vector.extract_strided_slice %3 {offsets = [2, 0], sizes = [32, 104], strides = [1, 1]} : vector<36x104xbf16> to vector<32x104xbf16>
    %c2 = arith.constant 2 : index
    %c0_12 = arith.constant 0 : index
    %c0_13 = arith.constant 0 : index
    %16 = vector.load %arg1[%c2, %c0_12, %c0_13] : memref<5x104x200xbf16, #tpu.memory_space<vmem>>, vector<1x104x200xbf16>
    %17 = vector.shape_cast %16 : vector<1x104x200xbf16> to vector<104x200xbf16>
    %cst_14 = arith.constant dense<0.000000e+00> : vector<32x200xf32>
    %18 = tpu.matmul %15, %17, %cst_14 {dimension_numbers = #tpu.dot_dimension_numbers<[1], [0], [0], [1], [0, 0, 1, 1], [], []>} : vector<32x104xbf16>, vector<104x200xbf16>, vector<32x200xf32> -> vector<32x200xf32>
    %19 = arith.addf %14, %18 : vector<32x200xf32>
    %20 = vector.extract_strided_slice %3 {offsets = [3, 0], sizes = [32, 104], strides = [1, 1]} : vector<36x104xbf16> to vector<32x104xbf16>
    %c3 = arith.constant 3 : index
    %c0_15 = arith.constant 0 : index
    %c0_16 = arith.constant 0 : index
    %21 = vector.load %arg1[%c3, %c0_15, %c0_16] : memref<5x104x200xbf16, #tpu.memory_space<vmem>>, vector<1x104x200xbf16>
    %22 = vector.shape_cast %21 : vector<1x104x200xbf16> to vector<104x200xbf16>
    %cst_17 = arith.constant dense<0.000000e+00> : vector<32x200xf32>
    %23 = tpu.matmul %20, %22, %cst_17 {dimension_numbers = #tpu.dot_dimension_numbers<[1], [0], [0], [1], [0, 0, 1, 1], [], []>} : vector<32x104xbf16>, vector<104x200xbf16>, vector<32x200xf32> -> vector<32x200xf32>
    %24 = arith.addf %19, %23 : vector<32x200xf32>
    %25 = vector.extract_strided_slice %3 {offsets = [4, 0], sizes = [32, 104], strides = [1, 1]} : vector<36x104xbf16> to vector<32x104xbf16>
    %c4 = arith.constant 4 : index
    %c0_18 = arith.constant 0 : index
    %c0_19 = arith.constant 0 : index
    %26 = vector.load %arg1[%c4, %c0_18, %c0_19] : memref<5x104x200xbf16, #tpu.memory_space<vmem>>, vector<1x104x200xbf16>
    %27 = vector.shape_cast %26 : vector<1x104x200xbf16> to vector<104x200xbf16>
    %cst_20 = arith.constant dense<0.000000e+00> : vector<32x200xf32>
    %28 = tpu.matmul %25, %27, %cst_20 {dimension_numbers = #tpu.dot_dimension_numbers<[1], [0], [0], [1], [0, 0, 1, 1], [], []>} : vector<32x104xbf16>, vector<104x200xbf16>, vector<32x200xf32> -> vector<32x200xf32>
    %29 = arith.addf %24, %28 : vector<32x200xf32>
    %c0_21 = arith.constant 0 : index
    %c0_22 = arith.constant 0 : index
    %30 = vector.load %arg2[%c0_21, %c0_22] : memref<1x200xf32, #tpu.memory_space<vmem>>, vector<1x200xf32>
    %31 = vector.broadcast %30 : vector<1x200xf32> to vector<32x200xf32>
    %32 = arith.addf %29, %31 : vector<32x200xf32>
    %cst_23 = arith.constant 0.000000e+00 : f32
    %33 = vector.broadcast %cst_23 : f32 to vector<32x200xf32>
    %34 = arith.maximumf %32, %33 : vector<32x200xf32>
    %35 = vector.shape_cast %34 : vector<32x200xf32> to vector<8x4x200xf32>
    %cst_24 = arith.constant dense<0xFF800000> : vector<8x200xf32>
    %36 = vector.multi_reduction <maximumf>, %35, %cst_24 [1] : vector<8x4x200xf32> to vector<8x200xf32>
    %37 = arith.truncf %36 : vector<8x200xf32> to vector<8x200xbf16>
    %c2_25 = arith.constant 2 : index
    %c0_26 = arith.constant 0 : index
    %38 = vector.load %arg11[%c2_25, %c0_26] : memref<12x200xbf16, #tpu.memory_space<vmem>>, vector<8x200xbf16>
    tpu.vector_store %arg11[%c2_25, %c0_26], %37 {strides = array<i32>} : memref<12x200xbf16, #tpu.memory_space<vmem>>, vector<8x200xbf16>,
    %cst_27 = arith.constant 0.000000e+00 : f32
    %39 = vector.broadcast %cst_27 : f32 to vector<8x300xf32>
    %c0_28 = arith.constant 0 : index
    %c0_29 = arith.constant 0 : index
    %40 = vector.load %arg11[%c0_28, %c0_29] : memref<12x200xbf16, #tpu.memory_space<vmem>>, vector<8x200xbf16>
    %c0_30 = arith.constant 0 : index
    %c0_31 = arith.constant 0 : index
    %c0_32 = arith.constant 0 : index
    %41 = vector.load %arg3[%c0_30, %c0_31, %c0_32] : memref<5x200x300xbf16, #tpu.memory_space<vmem>>, vector<1x200x300xbf16>
    %42 = vector.shape_cast %41 : vector<1x200x300xbf16> to vector<200x300xbf16>
    %cst_33 = arith.constant dense<0.000000e+00> : vector<8x300xf32>
    %43 = tpu.matmul %40, %42, %cst_33 {dimension_numbers = #tpu.dot_dimension_numbers<[1], [0], [0], [1], [0, 0, 1, 1], [], []>} : vector<8x200xbf16>, vector<200x300xbf16>, vector<8x300xf32> -> vector<8x300xf32>
    %44 = arith.addf %39, %43 : vector<8x300xf32>
    %c1_34 = arith.constant 1 : index
    %c0_35 = arith.constant 0 : index
    %45 = vector.load %arg11[%c1_34, %c0_35] : memref<12x200xbf16, #tpu.memory_space<vmem>>, vector<8x200xbf16>
    %c1_36 = arith.constant 1 : index
    %c0_37 = arith.constant 0 : index
    %c0_38 = arith.constant 0 : index
    %46 = vector.load %arg3[%c1_36, %c0_37, %c0_38] : memref<5x200x300xbf16, #tpu.memory_space<vmem>>, vector<1x200x300xbf16>
    %47 = vector.shape_cast %46 : vector<1x200x300xbf16> to vector<200x300xbf16>
    %cst_39 = arith.constant dense<0.000000e+00> : vector<8x300xf32>
    %48 = tpu.matmul %45, %47, %cst_39 {dimension_numbers = #tpu.dot_dimension_numbers<[1], [0], [0], [1], [0, 0, 1, 1], [], []>} : vector<8x200xbf16>, vector<200x300xbf16>, vector<8x300xf32> -> vector<8x300xf32>
    %49 = arith.addf %44, %48 : vector<8x300xf32>
    %c2_40 = arith.constant 2 : index
    %c0_41 = arith.constant 0 : index
    %50 = vector.load %arg11[%c2_40, %c0_41] : memref<12x200xbf16, #tpu.memory_space<vmem>>, vector<8x200xbf16>
    %c2_42 = arith.constant 2 : index
    %c0_43 = arith.constant 0 : index
    %c0_44 = arith.constant 0 : index
    %51 = vector.load %arg3[%c2_42, %c0_43, %c0_44] : memref<5x200x300xbf16, #tpu.memory_space<vmem>>, vector<1x200x300xbf16>
    %52 = vector.shape_cast %51 : vector<1x200x300xbf16> to vector<200x300xbf16>
    %cst_45 = arith.constant dense<0.000000e+00> : vector<8x300xf32>
    %53 = tpu.matmul %50, %52, %cst_45 {dimension_numbers = #tpu.dot_dimension_numbers<[1], [0], [0], [1], [0, 0, 1, 1], [], []>} : vector<8x200xbf16>, vector<200x300xbf16>, vector<8x300xf32> -> vector<8x300xf32>
    %54 = arith.addf %49, %53 : vector<8x300xf32>
    %c3_46 = arith.constant 3 : index
    %c0_47 = arith.constant 0 : index
    %55 = vector.load %arg11[%c3_46, %c0_47] : memref<12x200xbf16, #tpu.memory_space<vmem>>, vector<8x200xbf16>
    %c3_48 = arith.constant 3 : index
    %c0_49 = arith.constant 0 : index
    %c0_50 = arith.constant 0 : index
    %56 = vector.load %arg3[%c3_48, %c0_49, %c0_50] : memref<5x200x300xbf16, #tpu.memory_space<vmem>>, vector<1x200x300xbf16>
    %57 = vector.shape_cast %56 : vector<1x200x300xbf16> to vector<200x300xbf16>
    %cst_51 = arith.constant dense<0.000000e+00> : vector<8x300xf32>
    %58 = tpu.matmul %55, %57, %cst_51 {dimension_numbers = #tpu.dot_dimension_numbers<[1], [0], [0], [1], [0, 0, 1, 1], [], []>} : vector<8x200xbf16>, vector<200x300xbf16>, vector<8x300xf32> -> vector<8x300xf32>
    %59 = arith.addf %54, %58 : vector<8x300xf32>
    %c4_52 = arith.constant 4 : index
    %c0_53 = arith.constant 0 : index
    %60 = vector.load %arg11[%c4_52, %c0_53] : memref<12x200xbf16, #tpu.memory_space<vmem>>, vector<8x200xbf16>
    %c4_54 = arith.constant 4 : index
    %c0_55 = arith.constant 0 : index
    %c0_56 = arith.constant 0 : index
    %61 = vector.load %arg3[%c4_54, %c0_55, %c0_56] : memref<5x200x300xbf16, #tpu.memory_space<vmem>>, vector<1x200x300xbf16>
    %62 = vector.shape_cast %61 : vector<1x200x300xbf16> to vector<200x300xbf16>
    %cst_57 = arith.constant dense<0.000000e+00> : vector<8x300xf32>
    %63 = tpu.matmul %60, %62, %cst_57 {dimension_numbers = #tpu.dot_dimension_numbers<[1], [0], [0], [1], [0, 0, 1, 1], [], []>} : vector<8x200xbf16>, vector<200x300xbf16>, vector<8x300xf32> -> vector<8x300xf32>
    %64 = arith.addf %59, %63 : vector<8x300xf32>
    %c0_58 = arith.constant 0 : index
    %c0_59 = arith.constant 0 : index
    %65 = vector.load %arg4[%c0_58, %c0_59] : memref<1x300xf32, #tpu.memory_space<vmem>>, vector<1x300xf32>
    %66 = vector.broadcast %65 : vector<1x300xf32> to vector<8x300xf32>
    %67 = arith.addf %64, %66 : vector<8x300xf32>
    %cst_60 = arith.constant 0.000000e+00 : f32
    %68 = vector.broadcast %cst_60 : f32 to vector<8x300xf32>
    %69 = arith.maximumf %67, %68 : vector<8x300xf32>
    %70 = vector.shape_cast %69 : vector<8x300xf32> to vector<2x4x300xf32>
    %cst_61 = arith.constant dense<0xFF800000> : vector<2x300xf32>
    %71 = vector.multi_reduction <maximumf>, %70, %cst_61 [1] : vector<2x4x300xf32> to vector<2x300xf32>
    %72 = arith.truncf %71 : vector<2x300xf32> to vector<2x300xbf16>
    %c0_62 = arith.constant 0 : index
    %c0_63 = arith.constant 0 : index
    %c0_64 = arith.constant 0 : index
    %73 = vector.load %arg5[%c0_62, %c0_63, %c0_64] : memref<4x300x50xbf16, #tpu.memory_space<vmem>>, vector<1x300x50xbf16>
    %74 = vector.shape_cast %73 : vector<1x300x50xbf16> to vector<300x50xbf16>
    %cst_65 = arith.constant dense<0.000000e+00> : vector<2x50xf32>
    %75 = tpu.matmul %72, %74, %cst_65 {dimension_numbers = #tpu.dot_dimension_numbers<[1], [0], [0], [1], [0, 0, 1, 1], [], []>} : vector<2x300xbf16>, vector<300x50xbf16>, vector<2x50xf32> -> vector<2x50xf32>
    %c0_66 = arith.constant 0 : index
    %c0_67 = arith.constant 0 : index
    %c0_68 = arith.constant 0 : index
    %76 = vector.load %arg7[%c0_66, %c0_67, %c0_68] : memref<4x1x50xf32, #tpu.memory_space<vmem>>, vector<1x1x50xf32>
    %77 = vector.shape_cast %76 : vector<1x1x50xf32> to vector<1x50xf32>
    %78 = vector.broadcast %77 : vector<1x50xf32> to vector<2x50xf32>
    %79 = arith.addf %75, %78 : vector<2x50xf32>
    %c1_69 = arith.constant 1 : index
    %c0_70 = arith.constant 0 : index
    %c0_71 = arith.constant 0 : index
    %80 = vector.load %arg5[%c1_69, %c0_70, %c0_71] : memref<4x300x50xbf16, #tpu.memory_space<vmem>>, vector<1x300x50xbf16>
    %81 = vector.shape_cast %80 : vector<1x300x50xbf16> to vector<300x50xbf16>
    %cst_72 = arith.constant dense<0.000000e+00> : vector<2x50xf32>
    %82 = tpu.matmul %72, %81, %cst_72 {dimension_numbers = #tpu.dot_dimension_numbers<[1], [0], [0], [1], [0, 0, 1, 1], [], []>} : vector<2x300xbf16>, vector<300x50xbf16>, vector<2x50xf32> -> vector<2x50xf32>
    %c1_73 = arith.constant 1 : index
    %c0_74 = arith.constant 0 : index
    %c0_75 = arith.constant 0 : index
    %83 = vector.load %arg7[%c1_73, %c0_74, %c0_75] : memref<4x1x50xf32, #tpu.memory_space<vmem>>, vector<1x1x50xf32>
    %84 = vector.shape_cast %83 : vector<1x1x50xf32> to vector<1x50xf32>
    %85 = vector.broadcast %84 : vector<1x50xf32> to vector<2x50xf32>
    %86 = arith.addf %82, %85 : vector<2x50xf32>
    %c2_76 = arith.constant 2 : index
    %c0_77 = arith.constant 0 : index
    %c0_78 = arith.constant 0 : index
    %87 = vector.load %arg5[%c2_76, %c0_77, %c0_78] : memref<4x300x50xbf16, #tpu.memory_space<vmem>>, vector<1x300x50xbf16>
    %88 = vector.shape_cast %87 : vector<1x300x50xbf16> to vector<300x50xbf16>
    %cst_79 = arith.constant dense<0.000000e+00> : vector<2x50xf32>
    %89 = tpu.matmul %72, %88, %cst_79 {dimension_numbers = #tpu.dot_dimension_numbers<[1], [0], [0], [1], [0, 0, 1, 1], [], []>} : vector<2x300xbf16>, vector<300x50xbf16>, vector<2x50xf32> -> vector<2x50xf32>
    %c2_80 = arith.constant 2 : index
    %c0_81 = arith.constant 0 : index
    %c0_82 = arith.constant 0 : index
    %90 = vector.load %arg7[%c2_80, %c0_81, %c0_82] : memref<4x1x50xf32, #tpu.memory_space<vmem>>, vector<1x1x50xf32>
    %91 = vector.shape_cast %90 : vector<1x1x50xf32> to vector<1x50xf32>
    %92 = vector.broadcast %91 : vector<1x50xf32> to vector<2x50xf32>
    %93 = arith.addf %89, %92 : vector<2x50xf32>
    %c3_83 = arith.constant 3 : index
    %c0_84 = arith.constant 0 : index
    %c0_85 = arith.constant 0 : index
    %94 = vector.load %arg5[%c3_83, %c0_84, %c0_85] : memref<4x300x50xbf16, #tpu.memory_space<vmem>>, vector<1x300x50xbf16>
    %95 = vector.shape_cast %94 : vector<1x300x50xbf16> to vector<300x50xbf16>
    %cst_86 = arith.constant dense<0.000000e+00> : vector<2x50xf32>
    %96 = tpu.matmul %72, %95, %cst_86 {dimension_numbers = #tpu.dot_dimension_numbers<[1], [0], [0], [1], [0, 0, 1, 1], [], []>} : vector<2x300xbf16>, vector<300x50xbf16>, vector<2x50xf32> -> vector<2x50xf32>
    %c3_87 = arith.constant 3 : index
    %c0_88 = arith.constant 0 : index
    %c0_89 = arith.constant 0 : index
    %97 = vector.load %arg7[%c3_87, %c0_88, %c0_89] : memref<4x1x50xf32, #tpu.memory_space<vmem>>, vector<1x1x50xf32>
    %98 = vector.shape_cast %97 : vector<1x1x50xf32> to vector<1x50xf32>
    %99 = vector.broadcast %98 : vector<1x50xf32> to vector<2x50xf32>
    %100 = arith.addf %96, %99 : vector<2x50xf32>
    %cst_90 = arith.constant 0.000000e+00 : f32
    %101 = vector.broadcast %cst_90 : f32 to vector<1x50xf32>
    %cst_91 = arith.constant 0.000000e+00 : f32
    %102 = vector.broadcast %cst_91 : f32 to vector<1x50xf32>
    %103 = arith.truncf %101 : vector<1x50xf32> to vector<1x50xbf16>
    %c0_92 = arith.constant 0 : index
    %c0_93 = arith.constant 0 : index
    %c0_94 = arith.constant 0 : index
    %104 = vector.load %arg6[%c0_92, %c0_93, %c0_94] : memref<4x50x50xbf16, #tpu.memory_space<vmem>>, vector<1x50x50xbf16>
    %105 = vector.shape_cast %104 : vector<1x50x50xbf16> to vector<50x50xbf16>
    %cst_95 = arith.constant dense<0.000000e+00> : vector<1x50xf32>
    %106 = tpu.matmul %103, %105, %cst_95 {dimension_numbers = #tpu.dot_dimension_numbers<[1], [0], [0], [1], [0, 0, 1, 1], [], []>} : vector<1x50xbf16>, vector<50x50xbf16>, vector<1x50xf32> -> vector<1x50xf32>
    %c1_96 = arith.constant 1 : index
    %c0_97 = arith.constant 0 : index
    %c0_98 = arith.constant 0 : index
    %107 = vector.load %arg6[%c1_96, %c0_97, %c0_98] : memref<4x50x50xbf16, #tpu.memory_space<vmem>>, vector<1x50x50xbf16>
    %108 = vector.shape_cast %107 : vector<1x50x50xbf16> to vector<50x50xbf16>
    %cst_99 = arith.constant dense<0.000000e+00> : vector<1x50xf32>
    %109 = tpu.matmul %103, %108, %cst_99 {dimension_numbers = #tpu.dot_dimension_numbers<[1], [0], [0], [1], [0, 0, 1, 1], [], []>} : vector<1x50xbf16>, vector<50x50xbf16>, vector<1x50xf32> -> vector<1x50xf32>
    %c2_100 = arith.constant 2 : index
    %c0_101 = arith.constant 0 : index
    %c0_102 = arith.constant 0 : index
    %110 = vector.load %arg6[%c2_100, %c0_101, %c0_102] : memref<4x50x50xbf16, #tpu.memory_space<vmem>>, vector<1x50x50xbf16>
    %111 = vector.shape_cast %110 : vector<1x50x50xbf16> to vector<50x50xbf16>
    %cst_103 = arith.constant dense<0.000000e+00> : vector<1x50xf32>
    %112 = tpu.matmul %103, %111, %cst_103 {dimension_numbers = #tpu.dot_dimension_numbers<[1], [0], [0], [1], [0, 0, 1, 1], [], []>} : vector<1x50xbf16>, vector<50x50xbf16>, vector<1x50xf32> -> vector<1x50xf32>
    %c3_104 = arith.constant 3 : index
    %c0_105 = arith.constant 0 : index
    %c0_106 = arith.constant 0 : index
    %113 = vector.load %arg6[%c3_104, %c0_105, %c0_106] : memref<4x50x50xbf16, #tpu.memory_space<vmem>>, vector<1x50x50xbf16>
    %114 = vector.shape_cast %113 : vector<1x50x50xbf16> to vector<50x50xbf16>
    %cst_107 = arith.constant dense<0.000000e+00> : vector<1x50xf32>
    %115 = tpu.matmul %103, %114, %cst_107 {dimension_numbers = #tpu.dot_dimension_numbers<[1], [0], [0], [1], [0, 0, 1, 1], [], []>} : vector<1x50xbf16>, vector<50x50xbf16>, vector<1x50xf32> -> vector<1x50xf32>
    %116 = vector.extract_strided_slice %79 {offsets = [0, 0], sizes = [1, 50], strides = [1, 1]} : vector<2x50xf32> to vector<1x50xf32>
    %117 = arith.addf %116, %106 : vector<1x50xf32>
    %118 = arith.negf %117 : vector<1x50xf32>
    %119 = math.exp %118 : vector<1x50xf32>
    %cst_108 = arith.constant 1.000000e+00 : f32
    %120 = vector.broadcast %cst_108 : f32 to vector<1x50xf32>
    %121 = arith.addf %120, %119 : vector<1x50xf32>
    %122 = arith.divf %120, %121 : vector<1x50xf32>
    %123 = vector.extract_strided_slice %86 {offsets = [0, 0], sizes = [1, 50], strides = [1, 1]} : vector<2x50xf32> to vector<1x50xf32>
    %124 = arith.addf %123, %109 : vector<1x50xf32>
    %125 = arith.negf %124 : vector<1x50xf32>
    %126 = math.exp %125 : vector<1x50xf32>
    %cst_109 = arith.constant 1.000000e+00 : f32
    %127 = vector.broadcast %cst_109 : f32 to vector<1x50xf32>
    %128 = arith.addf %127, %126 : vector<1x50xf32>
    %129 = arith.divf %127, %128 : vector<1x50xf32>
    %130 = vector.extract_strided_slice %93 {offsets = [0, 0], sizes = [1, 50], strides = [1, 1]} : vector<2x50xf32> to vector<1x50xf32>
    %131 = arith.addf %130, %112 : vector<1x50xf32>
    %132 = math.tanh %131 : vector<1x50xf32>
    %133 = vector.extract_strided_slice %100 {offsets = [0, 0], sizes = [1, 50], strides = [1, 1]} : vector<2x50xf32> to vector<1x50xf32>
    %134 = arith.addf %133, %115 : vector<1x50xf32>
    %135 = arith.negf %134 : vector<1x50xf32>
    %136 = math.exp %135 : vector<1x50xf32>
    %cst_110 = arith.constant 1.000000e+00 : f32
    %137 = vector.broadcast %cst_110 : f32 to vector<1x50xf32>
    %138 = arith.addf %137, %136 : vector<1x50xf32>
    %139 = arith.divf %137, %138 : vector<1x50xf32>
    %140 = arith.mulf %129, %102 : vector<1x50xf32>
    %141 = arith.mulf %122, %132 : vector<1x50xf32>
    %142 = arith.addf %140, %141 : vector<1x50xf32>
    %143 = math.tanh %142 : vector<1x50xf32>
    %144 = arith.mulf %139, %143 : vector<1x50xf32>
    %145 = arith.truncf %144 : vector<1x50xf32> to vector<1x50xbf16>
    %c0_111 = arith.constant 0 : index
    %c0_112 = arith.constant 0 : index
    %c0_113 = arith.constant 0 : index
    %146 = vector.load %arg6[%c0_111, %c0_112, %c0_113] : memref<4x50x50xbf16, #tpu.memory_space<vmem>>, vector<1x50x50xbf16>
    %147 = vector.shape_cast %146 : vector<1x50x50xbf16> to vector<50x50xbf16>
    %cst_114 = arith.constant dense<0.000000e+00> : vector<1x50xf32>
    %148 = tpu.matmul %145, %147, %cst_114 {dimension_numbers = #tpu.dot_dimension_numbers<[1], [0], [0], [1], [0, 0, 1, 1], [], []>} : vector<1x50xbf16>, vector<50x50xbf16>, vector<1x50xf32> -> vector<1x50xf32>
    %c1_115 = arith.constant 1 : index
    %c0_116 = arith.constant 0 : index
    %c0_117 = arith.constant 0 : index
    %149 = vector.load %arg6[%c1_115, %c0_116, %c0_117] : memref<4x50x50xbf16, #tpu.memory_space<vmem>>, vector<1x50x50xbf16>
    %150 = vector.shape_cast %149 : vector<1x50x50xbf16> to vector<50x50xbf16>
    %cst_118 = arith.constant dense<0.000000e+00> : vector<1x50xf32>
    %151 = tpu.matmul %145, %150, %cst_118 {dimension_numbers = #tpu.dot_dimension_numbers<[1], [0], [0], [1], [0, 0, 1, 1], [], []>} : vector<1x50xbf16>, vector<50x50xbf16>, vector<1x50xf32> -> vector<1x50xf32>
    %c2_119 = arith.constant 2 : index
    %c0_120 = arith.constant 0 : index
    %c0_121 = arith.constant 0 : index
    %152 = vector.load %arg6[%c2_119, %c0_120, %c0_121] : memref<4x50x50xbf16, #tpu.memory_space<vmem>>, vector<1x50x50xbf16>
    %153 = vector.shape_cast %152 : vector<1x50x50xbf16> to vector<50x50xbf16>
    %cst_122 = arith.constant dense<0.000000e+00> : vector<1x50xf32>
    %154 = tpu.matmul %145, %153, %cst_122 {dimension_numbers = #tpu.dot_dimension_numbers<[1], [0], [0], [1], [0, 0, 1, 1], [], []>} : vector<1x50xbf16>, vector<50x50xbf16>, vector<1x50xf32> -> vector<1x50xf32>
    %c3_123 = arith.constant 3 : index
    %c0_124 = arith.constant 0 : index
    %c0_125 = arith.constant 0 : index
    %155 = vector.load %arg6[%c3_123, %c0_124, %c0_125] : memref<4x50x50xbf16, #tpu.memory_space<vmem>>, vector<1x50x50xbf16>
    %156 = vector.shape_cast %155 : vector<1x50x50xbf16> to vector<50x50xbf16>
    %cst_126 = arith.constant dense<0.000000e+00> : vector<1x50xf32>
    %157 = tpu.matmul %145, %156, %cst_126 {dimension_numbers = #tpu.dot_dimension_numbers<[1], [0], [0], [1], [0, 0, 1, 1], [], []>} : vector<1x50xbf16>, vector<50x50xbf16>, vector<1x50xf32> -> vector<1x50xf32>
    %158 = vector.extract_strided_slice %79 {offsets = [1, 0], sizes = [1, 50], strides = [1, 1]} : vector<2x50xf32> to vector<1x50xf32>
    %159 = arith.addf %158, %148 : vector<1x50xf32>
    %160 = arith.negf %159 : vector<1x50xf32>
    %161 = math.exp %160 : vector<1x50xf32>
    %cst_127 = arith.constant 1.000000e+00 : f32
    %162 = vector.broadcast %cst_127 : f32 to vector<1x50xf32>
    %163 = arith.addf %162, %161 : vector<1x50xf32>
    %164 = arith.divf %162, %163 : vector<1x50xf32>
    %165 = vector.extract_strided_slice %86 {offsets = [1, 0], sizes = [1, 50], strides = [1, 1]} : vector<2x50xf32> to vector<1x50xf32>
    %166 = arith.addf %165, %151 : vector<1x50xf32>
    %167 = arith.negf %166 : vector<1x50xf32>
    %168 = math.exp %167 : vector<1x50xf32>
    %cst_128 = arith.constant 1.000000e+00 : f32
    %169 = vector.broadcast %cst_128 : f32 to vector<1x50xf32>
    %170 = arith.addf %169, %168 : vector<1x50xf32>
    %171 = arith.divf %169, %170 : vector<1x50xf32>
    %172 = vector.extract_strided_slice %93 {offsets = [1, 0], sizes = [1, 50], strides = [1, 1]} : vector<2x50xf32> to vector<1x50xf32>
    %173 = arith.addf %172, %154 : vector<1x50xf32>
    %174 = math.tanh %173 : vector<1x50xf32>
    %175 = vector.extract_strided_slice %100 {offsets = [1, 0], sizes = [1, 50], strides = [1, 1]} : vector<2x50xf32> to vector<1x50xf32>
    %176 = arith.addf %175, %157 : vector<1x50xf32>
    %177 = arith.negf %176 : vector<1x50xf32>
    %178 = math.exp %177 : vector<1x50xf32>
    %cst_129 = arith.constant 1.000000e+00 : f32
    %179 = vector.broadcast %cst_129 : f32 to vector<1x50xf32>
    %180 = arith.addf %179, %178 : vector<1x50xf32>
    %181 = arith.divf %179, %180 : vector<1x50xf32>
    %182 = arith.mulf %171, %142 : vector<1x50xf32>
    %183 = arith.mulf %164, %174 : vector<1x50xf32>
    %184 = arith.addf %182, %183 : vector<1x50xf32>
    %185 = math.tanh %184 : vector<1x50xf32>
    %186 = arith.mulf %181, %185 : vector<1x50xf32>
    %cst_130 = arith.constant 0.000000e+00 : f32
    %187 = vector.broadcast %cst_130 : f32 to vector<1x50xf32>
    %188 = arith.maximumf %186, %187 : vector<1x50xf32>
    %189 = arith.truncf %188 : vector<1x50xf32> to vector<1x50xbf16>
    %c0_131 = arith.constant 0 : index
    %c0_132 = arith.constant 0 : index
    %190 = vector.load %arg8[%c0_131, %c0_132] : memref<50x11xbf16, #tpu.memory_space<vmem>>, vector<50x11xbf16>
    %cst_133 = arith.constant dense<0.000000e+00> : vector<1x11xf32>
    %191 = tpu.matmul %189, %190, %cst_133 {dimension_numbers = #tpu.dot_dimension_numbers<[1], [0], [0], [1], [0, 0, 1, 1], [], []>} : vector<1x50xbf16>, vector<50x11xbf16>, vector<1x11xf32> -> vector<1x11xf32>
    %c0_134 = arith.constant 0 : index
    %c0_135 = arith.constant 0 : index
    %192 = vector.load %arg9[%c0_134, %c0_135] : memref<1x11xf32, #tpu.memory_space<vmem>>, vector<1x11xf32>
    %193 = arith.addf %191, %192 : vector<1x11xf32>
    %c1_136 = arith.constant 1 : index
    %c0_137 = arith.constant 0 : index
    %c0_138 = arith.constant 0 : index
    %194 = vector.load %arg0[%c1_136, %c0_137, %c0_138] : memref<2x36x104xbf16, #tpu.memory_space<vmem>>, vector<1x36x104xbf16>
    %195 = vector.shape_cast %194 : vector<1x36x104xbf16> to vector<36x104xbf16>
    %cst_139 = arith.constant 0.000000e+00 : f32
    %196 = vector.broadcast %cst_139 : f32 to vector<32x200xf32>
    %197 = vector.extract_strided_slice %195 {offsets = [0, 0], sizes = [32, 104], strides = [1, 1]} : vector<36x104xbf16> to vector<32x104xbf16>
    %c0_140 = arith.constant 0 : index
    %c0_141 = arith.constant 0 : index
    %c0_142 = arith.constant 0 : index
    %198 = vector.load %arg1[%c0_140, %c0_141, %c0_142] : memref<5x104x200xbf16, #tpu.memory_space<vmem>>, vector<1x104x200xbf16>
    %199 = vector.shape_cast %198 : vector<1x104x200xbf16> to vector<104x200xbf16>
    %cst_143 = arith.constant dense<0.000000e+00> : vector<32x200xf32>
    %200 = tpu.matmul %197, %199, %cst_143 {dimension_numbers = #tpu.dot_dimension_numbers<[1], [0], [0], [1], [0, 0, 1, 1], [], []>} : vector<32x104xbf16>, vector<104x200xbf16>, vector<32x200xf32> -> vector<32x200xf32>
    %201 = arith.addf %196, %200 : vector<32x200xf32>
    %202 = vector.extract_strided_slice %195 {offsets = [1, 0], sizes = [32, 104], strides = [1, 1]} : vector<36x104xbf16> to vector<32x104xbf16>
    %c1_144 = arith.constant 1 : index
    %c0_145 = arith.constant 0 : index
    %c0_146 = arith.constant 0 : index
    %203 = vector.load %arg1[%c1_144, %c0_145, %c0_146] : memref<5x104x200xbf16, #tpu.memory_space<vmem>>, vector<1x104x200xbf16>
    %204 = vector.shape_cast %203 : vector<1x104x200xbf16> to vector<104x200xbf16>
    %cst_147 = arith.constant dense<0.000000e+00> : vector<32x200xf32>
    %205 = tpu.matmul %202, %204, %cst_147 {dimension_numbers = #tpu.dot_dimension_numbers<[1], [0], [0], [1], [0, 0, 1, 1], [], []>} : vector<32x104xbf16>, vector<104x200xbf16>, vector<32x200xf32> -> vector<32x200xf32>
    %206 = arith.addf %201, %205 : vector<32x200xf32>
    %207 = vector.extract_strided_slice %195 {offsets = [2, 0], sizes = [32, 104], strides = [1, 1]} : vector<36x104xbf16> to vector<32x104xbf16>
    %c2_148 = arith.constant 2 : index
    %c0_149 = arith.constant 0 : index
    %c0_150 = arith.constant 0 : index
    %208 = vector.load %arg1[%c2_148, %c0_149, %c0_150] : memref<5x104x200xbf16, #tpu.memory_space<vmem>>, vector<1x104x200xbf16>
    %209 = vector.shape_cast %208 : vector<1x104x200xbf16> to vector<104x200xbf16>
    %cst_151 = arith.constant dense<0.000000e+00> : vector<32x200xf32>
    %210 = tpu.matmul %207, %209, %cst_151 {dimension_numbers = #tpu.dot_dimension_numbers<[1], [0], [0], [1], [0, 0, 1, 1], [], []>} : vector<32x104xbf16>, vector<104x200xbf16>, vector<32x200xf32> -> vector<32x200xf32>
    %211 = arith.addf %206, %210 : vector<32x200xf32>
    %212 = vector.extract_strided_slice %195 {offsets = [3, 0], sizes = [32, 104], strides = [1, 1]} : vector<36x104xbf16> to vector<32x104xbf16>
    %c3_152 = arith.constant 3 : index
    %c0_153 = arith.constant 0 : index
    %c0_154 = arith.constant 0 : index
    %213 = vector.load %arg1[%c3_152, %c0_153, %c0_154] : memref<5x104x200xbf16, #tpu.memory_space<vmem>>, vector<1x104x200xbf16>
    %214 = vector.shape_cast %213 : vector<1x104x200xbf16> to vector<104x200xbf16>
    %cst_155 = arith.constant dense<0.000000e+00> : vector<32x200xf32>
    %215 = tpu.matmul %212, %214, %cst_155 {dimension_numbers = #tpu.dot_dimension_numbers<[1], [0], [0], [1], [0, 0, 1, 1], [], []>} : vector<32x104xbf16>, vector<104x200xbf16>, vector<32x200xf32> -> vector<32x200xf32>
    %216 = arith.addf %211, %215 : vector<32x200xf32>
    %217 = vector.extract_strided_slice %195 {offsets = [4, 0], sizes = [32, 104], strides = [1, 1]} : vector<36x104xbf16> to vector<32x104xbf16>
    %c4_156 = arith.constant 4 : index
    %c0_157 = arith.constant 0 : index
    %c0_158 = arith.constant 0 : index
    %218 = vector.load %arg1[%c4_156, %c0_157, %c0_158] : memref<5x104x200xbf16, #tpu.memory_space<vmem>>, vector<1x104x200xbf16>
    %219 = vector.shape_cast %218 : vector<1x104x200xbf16> to vector<104x200xbf16>
    %cst_159 = arith.constant dense<0.000000e+00> : vector<32x200xf32>
    %220 = tpu.matmul %217, %219, %cst_159 {dimension_numbers = #tpu.dot_dimension_numbers<[1], [0], [0], [1], [0, 0, 1, 1], [], []>} : vector<32x104xbf16>, vector<104x200xbf16>, vector<32x200xf32> -> vector<32x200xf32>
    %221 = arith.addf %216, %220 : vector<32x200xf32>
    %c0_160 = arith.constant 0 : index
    %c0_161 = arith.constant 0 : index
    %222 = vector.load %arg2[%c0_160, %c0_161] : memref<1x200xf32, #tpu.memory_space<vmem>>, vector<1x200xf32>
    %223 = vector.broadcast %222 : vector<1x200xf32> to vector<32x200xf32>
    %224 = arith.addf %221, %223 : vector<32x200xf32>
    %cst_162 = arith.constant 0.000000e+00 : f32
    %225 = vector.broadcast %cst_162 : f32 to vector<32x200xf32>
    %226 = arith.maximumf %224, %225 : vector<32x200xf32>
    %227 = vector.shape_cast %226 : vector<32x200xf32> to vector<8x4x200xf32>
    %cst_163 = arith.constant dense<0xFF800000> : vector<8x200xf32>
    %228 = vector.multi_reduction <maximumf>, %227, %cst_163 [1] : vector<8x4x200xf32> to vector<8x200xf32>
    %229 = arith.truncf %228 : vector<8x200xf32> to vector<8x200xbf16>
    %c2_164 = arith.constant 2 : index
    %c0_165 = arith.constant 0 : index
    %230 = vector.load %arg11[%c2_164, %c0_165] : memref<12x200xbf16, #tpu.memory_space<vmem>>, vector<8x200xbf16>
    tpu.vector_store %arg11[%c2_164, %c0_165], %229 {strides = array<i32>} : memref<12x200xbf16, #tpu.memory_space<vmem>>, vector<8x200xbf16>,
    %cst_166 = arith.constant 0.000000e+00 : f32
    %231 = vector.broadcast %cst_166 : f32 to vector<8x300xf32>
    %c0_167 = arith.constant 0 : index
    %c0_168 = arith.constant 0 : index
    %232 = vector.load %arg11[%c0_167, %c0_168] : memref<12x200xbf16, #tpu.memory_space<vmem>>, vector<8x200xbf16>
    %c0_169 = arith.constant 0 : index
    %c0_170 = arith.constant 0 : index
    %c0_171 = arith.constant 0 : index
    %233 = vector.load %arg3[%c0_169, %c0_170, %c0_171] : memref<5x200x300xbf16, #tpu.memory_space<vmem>>, vector<1x200x300xbf16>
    %234 = vector.shape_cast %233 : vector<1x200x300xbf16> to vector<200x300xbf16>
    %cst_172 = arith.constant dense<0.000000e+00> : vector<8x300xf32>
    %235 = tpu.matmul %232, %234, %cst_172 {dimension_numbers = #tpu.dot_dimension_numbers<[1], [0], [0], [1], [0, 0, 1, 1], [], []>} : vector<8x200xbf16>, vector<200x300xbf16>, vector<8x300xf32> -> vector<8x300xf32>
    %236 = arith.addf %231, %235 : vector<8x300xf32>
    %c1_173 = arith.constant 1 : index
    %c0_174 = arith.constant 0 : index
    %237 = vector.load %arg11[%c1_173, %c0_174] : memref<12x200xbf16, #tpu.memory_space<vmem>>, vector<8x200xbf16>
    %c1_175 = arith.constant 1 : index
    %c0_176 = arith.constant 0 : index
    %c0_177 = arith.constant 0 : index
    %238 = vector.load %arg3[%c1_175, %c0_176, %c0_177] : memref<5x200x300xbf16, #tpu.memory_space<vmem>>, vector<1x200x300xbf16>
    %239 = vector.shape_cast %238 : vector<1x200x300xbf16> to vector<200x300xbf16>
    %cst_178 = arith.constant dense<0.000000e+00> : vector<8x300xf32>
    %240 = tpu.matmul %237, %239, %cst_178 {dimension_numbers = #tpu.dot_dimension_numbers<[1], [0], [0], [1], [0, 0, 1, 1], [], []>} : vector<8x200xbf16>, vector<200x300xbf16>, vector<8x300xf32> -> vector<8x300xf32>
    %241 = arith.addf %236, %240 : vector<8x300xf32>
    %c2_179 = arith.constant 2 : index
    %c0_180 = arith.constant 0 : index
    %242 = vector.load %arg11[%c2_179, %c0_180] : memref<12x200xbf16, #tpu.memory_space<vmem>>, vector<8x200xbf16>
    %c2_181 = arith.constant 2 : index
    %c0_182 = arith.constant 0 : index
    %c0_183 = arith.constant 0 : index
    %243 = vector.load %arg3[%c2_181, %c0_182, %c0_183] : memref<5x200x300xbf16, #tpu.memory_space<vmem>>, vector<1x200x300xbf16>
    %244 = vector.shape_cast %243 : vector<1x200x300xbf16> to vector<200x300xbf16>
    %cst_184 = arith.constant dense<0.000000e+00> : vector<8x300xf32>
    %245 = tpu.matmul %242, %244, %cst_184 {dimension_numbers = #tpu.dot_dimension_numbers<[1], [0], [0], [1], [0, 0, 1, 1], [], []>} : vector<8x200xbf16>, vector<200x300xbf16>, vector<8x300xf32> -> vector<8x300xf32>
    %246 = arith.addf %241, %245 : vector<8x300xf32>
    %c3_185 = arith.constant 3 : index
    %c0_186 = arith.constant 0 : index
    %247 = vector.load %arg11[%c3_185, %c0_186] : memref<12x200xbf16, #tpu.memory_space<vmem>>, vector<8x200xbf16>
    %c3_187 = arith.constant 3 : index
    %c0_188 = arith.constant 0 : index
    %c0_189 = arith.constant 0 : index
    %248 = vector.load %arg3[%c3_187, %c0_188, %c0_189] : memref<5x200x300xbf16, #tpu.memory_space<vmem>>, vector<1x200x300xbf16>
    %249 = vector.shape_cast %248 : vector<1x200x300xbf16> to vector<200x300xbf16>
    %cst_190 = arith.constant dense<0.000000e+00> : vector<8x300xf32>
    %250 = tpu.matmul %247, %249, %cst_190 {dimension_numbers = #tpu.dot_dimension_numbers<[1], [0], [0], [1], [0, 0, 1, 1], [], []>} : vector<8x200xbf16>, vector<200x300xbf16>, vector<8x300xf32> -> vector<8x300xf32>
    %251 = arith.addf %246, %250 : vector<8x300xf32>
    %c4_191 = arith.constant 4 : index
    %c0_192 = arith.constant 0 : index
    %252 = vector.load %arg11[%c4_191, %c0_192] : memref<12x200xbf16, #tpu.memory_space<vmem>>, vector<8x200xbf16>
    %c4_193 = arith.constant 4 : index
    %c0_194 = arith.constant 0 : index
    %c0_195 = arith.constant 0 : index
    %253 = vector.load %arg3[%c4_193, %c0_194, %c0_195] : memref<5x200x300xbf16, #tpu.memory_space<vmem>>, vector<1x200x300xbf16>
    %254 = vector.shape_cast %253 : vector<1x200x300xbf16> to vector<200x300xbf16>
    %cst_196 = arith.constant dense<0.000000e+00> : vector<8x300xf32>
    %255 = tpu.matmul %252, %254, %cst_196 {dimension_numbers = #tpu.dot_dimension_numbers<[1], [0], [0], [1], [0, 0, 1, 1], [], []>} : vector<8x200xbf16>, vector<200x300xbf16>, vector<8x300xf32> -> vector<8x300xf32>
    %256 = arith.addf %251, %255 : vector<8x300xf32>
    %c0_197 = arith.constant 0 : index
    %c0_198 = arith.constant 0 : index
    %257 = vector.load %arg4[%c0_197, %c0_198] : memref<1x300xf32, #tpu.memory_space<vmem>>, vector<1x300xf32>
    %258 = vector.broadcast %257 : vector<1x300xf32> to vector<8x300xf32>
    %259 = arith.addf %256, %258 : vector<8x300xf32>
    %cst_199 = arith.constant 0.000000e+00 : f32
    %260 = vector.broadcast %cst_199 : f32 to vector<8x300xf32>
    %261 = arith.maximumf %259, %260 : vector<8x300xf32>
    %262 = vector.shape_cast %261 : vector<8x300xf32> to vector<2x4x300xf32>
    %cst_200 = arith.constant dense<0xFF800000> : vector<2x300xf32>
    %263 = vector.multi_reduction <maximumf>, %262, %cst_200 [1] : vector<2x4x300xf32> to vector<2x300xf32>
    %264 = arith.truncf %263 : vector<2x300xf32> to vector<2x300xbf16>
    %c0_201 = arith.constant 0 : index
    %c0_202 = arith.constant 0 : index
    %c0_203 = arith.constant 0 : index
    %265 = vector.load %arg5[%c0_201, %c0_202, %c0_203] : memref<4x300x50xbf16, #tpu.memory_space<vmem>>, vector<1x300x50xbf16>
    %266 = vector.shape_cast %265 : vector<1x300x50xbf16> to vector<300x50xbf16>
    %cst_204 = arith.constant dense<0.000000e+00> : vector<2x50xf32>
    %267 = tpu.matmul %264, %266, %cst_204 {dimension_numbers = #tpu.dot_dimension_numbers<[1], [0], [0], [1], [0, 0, 1, 1], [], []>} : vector<2x300xbf16>, vector<300x50xbf16>, vector<2x50xf32> -> vector<2x50xf32>
    %c0_205 = arith.constant 0 : index
    %c0_206 = arith.constant 0 : index
    %c0_207 = arith.constant 0 : index
    %268 = vector.load %arg7[%c0_205, %c0_206, %c0_207] : memref<4x1x50xf32, #tpu.memory_space<vmem>>, vector<1x1x50xf32>
    %269 = vector.shape_cast %268 : vector<1x1x50xf32> to vector<1x50xf32>
    %270 = vector.broadcast %269 : vector<1x50xf32> to vector<2x50xf32>
    %271 = arith.addf %267, %270 : vector<2x50xf32>
    %c1_208 = arith.constant 1 : index
    %c0_209 = arith.constant 0 : index
    %c0_210 = arith.constant 0 : index
    %272 = vector.load %arg5[%c1_208, %c0_209, %c0_210] : memref<4x300x50xbf16, #tpu.memory_space<vmem>>, vector<1x300x50xbf16>
    %273 = vector.shape_cast %272 : vector<1x300x50xbf16> to vector<300x50xbf16>
    %cst_211 = arith.constant dense<0.000000e+00> : vector<2x50xf32>
    %274 = tpu.matmul %264, %273, %cst_211 {dimension_numbers = #tpu.dot_dimension_numbers<[1], [0], [0], [1], [0, 0, 1, 1], [], []>} : vector<2x300xbf16>, vector<300x50xbf16>, vector<2x50xf32> -> vector<2x50xf32>
    %c1_212 = arith.constant 1 : index
    %c0_213 = arith.constant 0 : index
    %c0_214 = arith.constant 0 : index
    %275 = vector.load %arg7[%c1_212, %c0_213, %c0_214] : memref<4x1x50xf32, #tpu.memory_space<vmem>>, vector<1x1x50xf32>
    %276 = vector.shape_cast %275 : vector<1x1x50xf32> to vector<1x50xf32>
    %277 = vector.broadcast %276 : vector<1x50xf32> to vector<2x50xf32>
    %278 = arith.addf %274, %277 : vector<2x50xf32>
    %c2_215 = arith.constant 2 : index
    %c0_216 = arith.constant 0 : index
    %c0_217 = arith.constant 0 : index
    %279 = vector.load %arg5[%c2_215, %c0_216, %c0_217] : memref<4x300x50xbf16, #tpu.memory_space<vmem>>, vector<1x300x50xbf16>
    %280 = vector.shape_cast %279 : vector<1x300x50xbf16> to vector<300x50xbf16>
    %cst_218 = arith.constant dense<0.000000e+00> : vector<2x50xf32>
    %281 = tpu.matmul %264, %280, %cst_218 {dimension_numbers = #tpu.dot_dimension_numbers<[1], [0], [0], [1], [0, 0, 1, 1], [], []>} : vector<2x300xbf16>, vector<300x50xbf16>, vector<2x50xf32> -> vector<2x50xf32>
    %c2_219 = arith.constant 2 : index
    %c0_220 = arith.constant 0 : index
    %c0_221 = arith.constant 0 : index
    %282 = vector.load %arg7[%c2_219, %c0_220, %c0_221] : memref<4x1x50xf32, #tpu.memory_space<vmem>>, vector<1x1x50xf32>
    %283 = vector.shape_cast %282 : vector<1x1x50xf32> to vector<1x50xf32>
    %284 = vector.broadcast %283 : vector<1x50xf32> to vector<2x50xf32>
    %285 = arith.addf %281, %284 : vector<2x50xf32>
    %c3_222 = arith.constant 3 : index
    %c0_223 = arith.constant 0 : index
    %c0_224 = arith.constant 0 : index
    %286 = vector.load %arg5[%c3_222, %c0_223, %c0_224] : memref<4x300x50xbf16, #tpu.memory_space<vmem>>, vector<1x300x50xbf16>
    %287 = vector.shape_cast %286 : vector<1x300x50xbf16> to vector<300x50xbf16>
    %cst_225 = arith.constant dense<0.000000e+00> : vector<2x50xf32>
    %288 = tpu.matmul %264, %287, %cst_225 {dimension_numbers = #tpu.dot_dimension_numbers<[1], [0], [0], [1], [0, 0, 1, 1], [], []>} : vector<2x300xbf16>, vector<300x50xbf16>, vector<2x50xf32> -> vector<2x50xf32>
    %c3_226 = arith.constant 3 : index
    %c0_227 = arith.constant 0 : index
    %c0_228 = arith.constant 0 : index
    %289 = vector.load %arg7[%c3_226, %c0_227, %c0_228] : memref<4x1x50xf32, #tpu.memory_space<vmem>>, vector<1x1x50xf32>
    %290 = vector.shape_cast %289 : vector<1x1x50xf32> to vector<1x50xf32>
    %291 = vector.broadcast %290 : vector<1x50xf32> to vector<2x50xf32>
    %292 = arith.addf %288, %291 : vector<2x50xf32>
    %cst_229 = arith.constant 0.000000e+00 : f32
    %293 = vector.broadcast %cst_229 : f32 to vector<1x50xf32>
    %cst_230 = arith.constant 0.000000e+00 : f32
    %294 = vector.broadcast %cst_230 : f32 to vector<1x50xf32>
    %295 = arith.truncf %293 : vector<1x50xf32> to vector<1x50xbf16>
    %c0_231 = arith.constant 0 : index
    %c0_232 = arith.constant 0 : index
    %c0_233 = arith.constant 0 : index
    %296 = vector.load %arg6[%c0_231, %c0_232, %c0_233] : memref<4x50x50xbf16, #tpu.memory_space<vmem>>, vector<1x50x50xbf16>
    %297 = vector.shape_cast %296 : vector<1x50x50xbf16> to vector<50x50xbf16>
    %cst_234 = arith.constant dense<0.000000e+00> : vector<1x50xf32>
    %298 = tpu.matmul %295, %297, %cst_234 {dimension_numbers = #tpu.dot_dimension_numbers<[1], [0], [0], [1], [0, 0, 1, 1], [], []>} : vector<1x50xbf16>, vector<50x50xbf16>, vector<1x50xf32> -> vector<1x50xf32>
    %c1_235 = arith.constant 1 : index
    %c0_236 = arith.constant 0 : index
    %c0_237 = arith.constant 0 : index
    %299 = vector.load %arg6[%c1_235, %c0_236, %c0_237] : memref<4x50x50xbf16, #tpu.memory_space<vmem>>, vector<1x50x50xbf16>
    %300 = vector.shape_cast %299 : vector<1x50x50xbf16> to vector<50x50xbf16>
    %cst_238 = arith.constant dense<0.000000e+00> : vector<1x50xf32>
    %301 = tpu.matmul %295, %300, %cst_238 {dimension_numbers = #tpu.dot_dimension_numbers<[1], [0], [0], [1], [0, 0, 1, 1], [], []>} : vector<1x50xbf16>, vector<50x50xbf16>, vector<1x50xf32> -> vector<1x50xf32>
    %c2_239 = arith.constant 2 : index
    %c0_240 = arith.constant 0 : index
    %c0_241 = arith.constant 0 : index
    %302 = vector.load %arg6[%c2_239, %c0_240, %c0_241] : memref<4x50x50xbf16, #tpu.memory_space<vmem>>, vector<1x50x50xbf16>
    %303 = vector.shape_cast %302 : vector<1x50x50xbf16> to vector<50x50xbf16>
    %cst_242 = arith.constant dense<0.000000e+00> : vector<1x50xf32>
    %304 = tpu.matmul %295, %303, %cst_242 {dimension_numbers = #tpu.dot_dimension_numbers<[1], [0], [0], [1], [0, 0, 1, 1], [], []>} : vector<1x50xbf16>, vector<50x50xbf16>, vector<1x50xf32> -> vector<1x50xf32>
    %c3_243 = arith.constant 3 : index
    %c0_244 = arith.constant 0 : index
    %c0_245 = arith.constant 0 : index
    %305 = vector.load %arg6[%c3_243, %c0_244, %c0_245] : memref<4x50x50xbf16, #tpu.memory_space<vmem>>, vector<1x50x50xbf16>
    %306 = vector.shape_cast %305 : vector<1x50x50xbf16> to vector<50x50xbf16>
    %cst_246 = arith.constant dense<0.000000e+00> : vector<1x50xf32>
    %307 = tpu.matmul %295, %306, %cst_246 {dimension_numbers = #tpu.dot_dimension_numbers<[1], [0], [0], [1], [0, 0, 1, 1], [], []>} : vector<1x50xbf16>, vector<50x50xbf16>, vector<1x50xf32> -> vector<1x50xf32>
    %308 = vector.extract_strided_slice %271 {offsets = [0, 0], sizes = [1, 50], strides = [1, 1]} : vector<2x50xf32> to vector<1x50xf32>
    %309 = arith.addf %308, %298 : vector<1x50xf32>
    %310 = arith.negf %309 : vector<1x50xf32>
    %311 = math.exp %310 : vector<1x50xf32>
    %cst_247 = arith.constant 1.000000e+00 : f32
    %312 = vector.broadcast %cst_247 : f32 to vector<1x50xf32>
    %313 = arith.addf %312, %311 : vector<1x50xf32>
    %314 = arith.divf %312, %313 : vector<1x50xf32>
    %315 = vector.extract_strided_slice %278 {offsets = [0, 0], sizes = [1, 50], strides = [1, 1]} : vector<2x50xf32> to vector<1x50xf32>
    %316 = arith.addf %315, %301 : vector<1x50xf32>
    %317 = arith.negf %316 : vector<1x50xf32>
    %318 = math.exp %317 : vector<1x50xf32>
    %cst_248 = arith.constant 1.000000e+00 : f32
    %319 = vector.broadcast %cst_248 : f32 to vector<1x50xf32>
    %320 = arith.addf %319, %318 : vector<1x50xf32>
    %321 = arith.divf %319, %320 : vector<1x50xf32>
    %322 = vector.extract_strided_slice %285 {offsets = [0, 0], sizes = [1, 50], strides = [1, 1]} : vector<2x50xf32> to vector<1x50xf32>
    %323 = arith.addf %322, %304 : vector<1x50xf32>
    %324 = math.tanh %323 : vector<1x50xf32>
    %325 = vector.extract_strided_slice %292 {offsets = [0, 0], sizes = [1, 50], strides = [1, 1]} : vector<2x50xf32> to vector<1x50xf32>
    %326 = arith.addf %325, %307 : vector<1x50xf32>
    %327 = arith.negf %326 : vector<1x50xf32>
    %328 = math.exp %327 : vector<1x50xf32>
    %cst_249 = arith.constant 1.000000e+00 : f32
    %329 = vector.broadcast %cst_249 : f32 to vector<1x50xf32>
    %330 = arith.addf %329, %328 : vector<1x50xf32>
    %331 = arith.divf %329, %330 : vector<1x50xf32>
    %332 = arith.mulf %321, %294 : vector<1x50xf32>
    %333 = arith.mulf %314, %324 : vector<1x50xf32>
    %334 = arith.addf %332, %333 : vector<1x50xf32>
    %335 = math.tanh %334 : vector<1x50xf32>
    %336 = arith.mulf %331, %335 : vector<1x50xf32>
    %337 = arith.truncf %336 : vector<1x50xf32> to vector<1x50xbf16>
    %c0_250 = arith.constant 0 : index
    %c0_251 = arith.constant 0 : index
    %c0_252 = arith.constant 0 : index
    %338 = vector.load %arg6[%c0_250, %c0_251, %c0_252] : memref<4x50x50xbf16, #tpu.memory_space<vmem>>, vector<1x50x50xbf16>
    %339 = vector.shape_cast %338 : vector<1x50x50xbf16> to vector<50x50xbf16>
    %cst_253 = arith.constant dense<0.000000e+00> : vector<1x50xf32>
    %340 = tpu.matmul %337, %339, %cst_253 {dimension_numbers = #tpu.dot_dimension_numbers<[1], [0], [0], [1], [0, 0, 1, 1], [], []>} : vector<1x50xbf16>, vector<50x50xbf16>, vector<1x50xf32> -> vector<1x50xf32>
    %c1_254 = arith.constant 1 : index
    %c0_255 = arith.constant 0 : index
    %c0_256 = arith.constant 0 : index
    %341 = vector.load %arg6[%c1_254, %c0_255, %c0_256] : memref<4x50x50xbf16, #tpu.memory_space<vmem>>, vector<1x50x50xbf16>
    %342 = vector.shape_cast %341 : vector<1x50x50xbf16> to vector<50x50xbf16>
    %cst_257 = arith.constant dense<0.000000e+00> : vector<1x50xf32>
    %343 = tpu.matmul %337, %342, %cst_257 {dimension_numbers = #tpu.dot_dimension_numbers<[1], [0], [0], [1], [0, 0, 1, 1], [], []>} : vector<1x50xbf16>, vector<50x50xbf16>, vector<1x50xf32> -> vector<1x50xf32>
    %c2_258 = arith.constant 2 : index
    %c0_259 = arith.constant 0 : index
    %c0_260 = arith.constant 0 : index
    %344 = vector.load %arg6[%c2_258, %c0_259, %c0_260] : memref<4x50x50xbf16, #tpu.memory_space<vmem>>, vector<1x50x50xbf16>
    %345 = vector.shape_cast %344 : vector<1x50x50xbf16> to vector<50x50xbf16>
    %cst_261 = arith.constant dense<0.000000e+00> : vector<1x50xf32>
    %346 = tpu.matmul %337, %345, %cst_261 {dimension_numbers = #tpu.dot_dimension_numbers<[1], [0], [0], [1], [0, 0, 1, 1], [], []>} : vector<1x50xbf16>, vector<50x50xbf16>, vector<1x50xf32> -> vector<1x50xf32>
    %c3_262 = arith.constant 3 : index
    %c0_263 = arith.constant 0 : index
    %c0_264 = arith.constant 0 : index
    %347 = vector.load %arg6[%c3_262, %c0_263, %c0_264] : memref<4x50x50xbf16, #tpu.memory_space<vmem>>, vector<1x50x50xbf16>
    %348 = vector.shape_cast %347 : vector<1x50x50xbf16> to vector<50x50xbf16>
    %cst_265 = arith.constant dense<0.000000e+00> : vector<1x50xf32>
    %349 = tpu.matmul %337, %348, %cst_265 {dimension_numbers = #tpu.dot_dimension_numbers<[1], [0], [0], [1], [0, 0, 1, 1], [], []>} : vector<1x50xbf16>, vector<50x50xbf16>, vector<1x50xf32> -> vector<1x50xf32>
    %350 = vector.extract_strided_slice %271 {offsets = [1, 0], sizes = [1, 50], strides = [1, 1]} : vector<2x50xf32> to vector<1x50xf32>
    %351 = arith.addf %350, %340 : vector<1x50xf32>
    %352 = arith.negf %351 : vector<1x50xf32>
    %353 = math.exp %352 : vector<1x50xf32>
    %cst_266 = arith.constant 1.000000e+00 : f32
    %354 = vector.broadcast %cst_266 : f32 to vector<1x50xf32>
    %355 = arith.addf %354, %353 : vector<1x50xf32>
    %356 = arith.divf %354, %355 : vector<1x50xf32>
    %357 = vector.extract_strided_slice %278 {offsets = [1, 0], sizes = [1, 50], strides = [1, 1]} : vector<2x50xf32> to vector<1x50xf32>
    %358 = arith.addf %357, %343 : vector<1x50xf32>
    %359 = arith.negf %358 : vector<1x50xf32>
    %360 = math.exp %359 : vector<1x50xf32>
    %cst_267 = arith.constant 1.000000e+00 : f32
    %361 = vector.broadcast %cst_267 : f32 to vector<1x50xf32>
    %362 = arith.addf %361, %360 : vector<1x50xf32>
    %363 = arith.divf %361, %362 : vector<1x50xf32>
    %364 = vector.extract_strided_slice %285 {offsets = [1, 0], sizes = [1, 50], strides = [1, 1]} : vector<2x50xf32> to vector<1x50xf32>
    %365 = arith.addf %364, %346 : vector<1x50xf32>
    %366 = math.tanh %365 : vector<1x50xf32>
    %367 = vector.extract_strided_slice %292 {offsets = [1, 0], sizes = [1, 50], strides = [1, 1]} : vector<2x50xf32> to vector<1x50xf32>
    %368 = arith.addf %367, %349 : vector<1x50xf32>
    %369 = arith.negf %368 : vector<1x50xf32>
    %370 = math.exp %369 : vector<1x50xf32>
    %cst_268 = arith.constant 1.000000e+00 : f32
    %371 = vector.broadcast %cst_268 : f32 to vector<1x50xf32>
    %372 = arith.addf %371, %370 : vector<1x50xf32>
    %373 = arith.divf %371, %372 : vector<1x50xf32>
    %374 = arith.mulf %363, %334 : vector<1x50xf32>
    %375 = arith.mulf %356, %366 : vector<1x50xf32>
    %376 = arith.addf %374, %375 : vector<1x50xf32>
    %377 = math.tanh %376 : vector<1x50xf32>
    %378 = arith.mulf %373, %377 : vector<1x50xf32>
    %cst_269 = arith.constant 0.000000e+00 : f32
    %379 = vector.broadcast %cst_269 : f32 to vector<1x50xf32>
    %380 = arith.maximumf %378, %379 : vector<1x50xf32>
    %381 = arith.truncf %380 : vector<1x50xf32> to vector<1x50xbf16>
    %c0_270 = arith.constant 0 : index
    %c0_271 = arith.constant 0 : index
    %382 = vector.load %arg8[%c0_270, %c0_271] : memref<50x11xbf16, #tpu.memory_space<vmem>>, vector<50x11xbf16>
    %cst_272 = arith.constant dense<0.000000e+00> : vector<1x11xf32>
    %383 = tpu.matmul %381, %382, %cst_272 {dimension_numbers = #tpu.dot_dimension_numbers<[1], [0], [0], [1], [0, 0, 1, 1], [], []>} : vector<1x50xbf16>, vector<50x11xbf16>, vector<1x11xf32> -> vector<1x11xf32>
    %c0_273 = arith.constant 0 : index
    %c0_274 = arith.constant 0 : index
    %384 = vector.load %arg9[%c0_273, %c0_274] : memref<1x11xf32, #tpu.memory_space<vmem>>, vector<1x11xf32>
    %385 = arith.addf %383, %384 : vector<1x11xf32>
    %386 = tpu.concatenate %193, %385 in 0 : vector<1x11xf32>, vector<1x11xf32> -> vector<2x11xf32>
    %c0_275 = arith.constant 0 : index
    %c0_276 = arith.constant 0 : index
    %387 = vector.load %arg10[%c0_275, %c0_276] : memref<2x11xf32, #tpu.memory_space<vmem>>, vector<2x11xf32>
    tpu.vector_store %arg10[%c0_275, %c0_276], %386 {strides = array<i32>} : memref<2x11xf32, #tpu.memory_space<vmem>>, vector<2x11xf32>,
    return
  }
}

</mosaic_0001>

<llo_original>
// kernel: tpu_custom_call.1
$region0: #{tpu_custom_call.1}
  #allocation0 [shape = 'u32[]', space=smem, size = 0x4, offset = 0x4, fixed_abs, tag = 'smem constant byte address 0x4 - core index']
  #allocation1 [shape = 'u32[144,128]{1,0:T(1,128)}', space=vmem, size = 0x12000, scoped, tag = 'internal scratch']
  #allocation2 [shape = 'bf16[12,200]{1,0:T(8,128)(2,1)}', space=vmem, size = 0x2000, scoped, tag = 'scratch operand']
  %s0 = inlined_call_operand.vmem [shape: bf16[2,36,104], index: 0, kind: input, shape index: {}]
  %s1 = inlined_call_operand.vmem [shape: bf16[5,104,200], index: 1, kind: input, shape index: {}]
  %s2 = inlined_call_operand.vmem [shape: f32[1,200], index: 2, kind: input, shape index: {}]
  %s3 = inlined_call_operand.vmem [shape: bf16[5,200,300], index: 3, kind: input, shape index: {}]
  %s4 = inlined_call_operand.vmem [shape: f32[1,300], index: 4, kind: input, shape index: {}]
  %s5 = inlined_call_operand.vmem [shape: bf16[4,300,50], index: 5, kind: input, shape index: {}]
  %s6 = inlined_call_operand.vmem [shape: bf16[4,50,50], index: 6, kind: input, shape index: {}]
  %s7 = inlined_call_operand.vmem [shape: f32[4,1,50], index: 7, kind: input, shape index: {}]
  %s8 = inlined_call_operand.vmem [shape: bf16[50,11], index: 8, kind: input, shape index: {}]
  %s9 = inlined_call_operand.vmem [shape: f32[1,11], index: 9, kind: input, shape index: {}]
  %s10 = inlined_call_operand.hbm [shape: f32[2,11], index: 10, kind: output, shape index: {}]
  %s11 = sld [smem:[#allocation0]]
  $region50: #{tpu_custom_call.1} parent=0
    _
  %s13 = ssub.s32 1, %s11
  %s14 = scalar_select 0, %s13, %s11
  $region1: #{tpu_custom_call.1} parent=0
    #allocation3 [shape = 'u8[1024]{0}', space=vmem, size = 0x400, scoped, tag = 'output window, operand 0, single buffered']
    #allocation4 [shape = 's32[1]{0}', space=sflag, size = 0x4, scoped, tag = 'scoped memory for tpu_custom_call.1']
    %15 = vsyncpa [#allocation4], 0
    // Predicated region
    $region2: #{tpu_custom_call.1} parent=1 // pred_check
      _
    $region3: #{tpu_custom_call.1} parent=1 // pred_check_branch
      %17 = sbr.rel (0) target = $region5
    $region4: #{tpu_custom_call.1} parent=1 // pred_region
      _
    $region5: #{tpu_custom_call.1} parent=1 // pred_fallthru
      _
    // Predicated region
    $region6: #{tpu_custom_call.1} parent=1 // pred_check
      _
    $region7: #{tpu_custom_call.1} parent=1 // pred_check_branch
      %19 = sbr.rel (0) target = $region9
    $region8: #{tpu_custom_call.1} parent=1 // pred_region
      _
    $region9: #{tpu_custom_call.1} parent=1 // pred_fallthru
      _
    // Predicated region
    $region10: #{tpu_custom_call.1} parent=1 // pred_check
      _
    $region11: #{tpu_custom_call.1} parent=1 // pred_check_branch
      %21 = sbr.rel (0) target = $region13
    $region12: #{tpu_custom_call.1} parent=1 // pred_region
      _
    $region13: #{tpu_custom_call.1} parent=1 // pred_fallthru
      _
    // Predicated region
    $region14: #{tpu_custom_call.1} parent=1 // pred_check
      _
    $region15: #{tpu_custom_call.1} parent=1 // pred_check_branch
      %23 = sbr.rel (0) target = $region17
    $region16: #{tpu_custom_call.1} parent=1 // pred_region
      _
    $region17: #{tpu_custom_call.1} parent=1 // pred_fallthru
      _
    // Predicated region
    $region18: #{tpu_custom_call.1} parent=1 // pred_check
      _
    $region19: #{tpu_custom_call.1} parent=1 // pred_check_branch
      %25 = sbr.rel (0) target = $region21
    $region20: #{tpu_custom_call.1} parent=1 // pred_region
      _
    $region21: #{tpu_custom_call.1} parent=1 // pred_fallthru
      _
    // Predicated region
    $region22: #{tpu_custom_call.1} parent=1 // pred_check
      _
    $region23: #{tpu_custom_call.1} parent=1 // pred_check_branch
      %27 = sbr.rel (0) target = $region25
    $region24: #{tpu_custom_call.1} parent=1 // pred_region
      _
    $region25: #{tpu_custom_call.1} parent=1 // pred_fallthru
      _
    // Predicated region
    $region26: #{tpu_custom_call.1} parent=1 // pred_check
      _
    $region27: #{tpu_custom_call.1} parent=1 // pred_check_branch
      %29 = sbr.rel (0) target = $region29
    $region28: #{tpu_custom_call.1} parent=1 // pred_region
      _
    $region29: #{tpu_custom_call.1} parent=1 // pred_fallthru
      _
    // Predicated region
    $region30: #{tpu_custom_call.1} parent=1 // pred_check
      _
    $region31: #{tpu_custom_call.1} parent=1 // pred_check_branch
      %31 = sbr.rel (0) target = $region33
    $region32: #{tpu_custom_call.1} parent=1 // pred_region
      _
    $region33: #{tpu_custom_call.1} parent=1 // pred_fallthru
      _
    // Predicated region
    $region34: #{tpu_custom_call.1} parent=1 // pred_check
      _
    $region35: #{tpu_custom_call.1} parent=1 // pred_check_branch
      %33 = sbr.rel (0) target = $region37
    $region36: #{tpu_custom_call.1} parent=1 // pred_region
      _
    $region37: #{tpu_custom_call.1} parent=1 // pred_fallthru
      _
    // Predicated region
    $region38: #{tpu_custom_call.1} parent=1 // pred_check
      _
    $region39: #{tpu_custom_call.1} parent=1 // pred_check_branch
      %35 = sbr.rel (0) target = $region41
    $region40: #{tpu_custom_call.1} parent=1 // pred_region
      _
    $region41: #{tpu_custom_call.1} parent=1 // pred_fallthru
      _
    %vm37 = vcmask 1043456
    %vm38 = vcmask 588804
    %vm39 = vmor %vm38, %vm37
    %40 = vst.msk [vmem:[#allocation2] sm:$0xff] %vm39, 0
    %vm41 = vcmask 1041408
    %vm42 = vcmask 586756
    %vm43 = vmor %vm42, %vm41
    %44 = vst.msk [vmem:[#allocation2 + $0x8] sm:$0x33] %vm43, 0
    %v45 = vld [vmem:[%s0] sm:$0xf]
    %v46 = vld [vmem:[%s0 + $0x4] sm:$0xf]
    %v47 = vld [vmem:[%s0 + $0x8] sm:$0xf]
    %v48 = vld [vmem:[%s0 + $0xc] sm:$0xf]
    %v49 = vld [vmem:[%s0 + $0x10] sm:$0x3]
    %v50 = vld [vmem:[%s1] sm:$0xff]
    %v51 = vld [vmem:[%s1 + $0x8] sm:$0xff]
    %v52 = vld [vmem:[%s1 + $0x10] sm:$0xff]
    %v53 = vld [vmem:[%s1 + $0x18] sm:$0xff]
    %v54 = vld [vmem:[%s1 + $0x20] sm:$0xff]
    %v55 = vld [vmem:[%s1 + $0x28] sm:$0xff]
    %v56 = vld [vmem:[%s1 + $0x30] sm:$0xff]
    %v57 = vld [vmem:[%s1 + $0x38] sm:$0xff]
    %v58 = vld [vmem:[%s1 + $0x40] sm:$0xff]
    %v59 = vld [vmem:[%s1 + $0x48] sm:$0xff]
    %v60 = vld [vmem:[%s1 + $0x50] sm:$0xff]
    %v61 = vld [vmem:[%s1 + $0x58] sm:$0xff]
    %v62 = vld [vmem:[%s1 + $0x60] sm:$0xff]
    %s63 = scalar_lea.vmem %s1, 104
    %v64 = vld [vmem:[%s63] sm:$0xff]
    %v65 = vld [vmem:[%s63 + $0x8] sm:$0xff]
    %v66 = vld [vmem:[%s63 + $0x10] sm:$0xff]
    %v67 = vld [vmem:[%s63 + $0x18] sm:$0xff]
    %v68 = vld [vmem:[%s63 + $0x20] sm:$0xff]
    %v69 = vld [vmem:[%s63 + $0x28] sm:$0xff]
    %v70 = vld [vmem:[%s63 + $0x30] sm:$0xff]
    %v71 = vld [vmem:[%s63 + $0x38] sm:$0xff]
    %v72 = vld [vmem:[%s63 + $0x40] sm:$0xff]
    %v73 = vld [vmem:[%s63 + $0x48] sm:$0xff]
    %v74 = vld [vmem:[%s63 + $0x50] sm:$0xff]
    %v75 = vld [vmem:[%s63 + $0x58] sm:$0xff]
    %v76 = vld [vmem:[%s63 + $0x60] sm:$0xff]
    %v82 = vunpack.c.l.b16 %v45
    %v83 = vunpack.c.l.b16 %v46
    %v84 = vunpack.c.l.b16 %v47
    %v85 = vunpack.c.l.b16 %v48
    %v86 = vunpack.c.l.b16 %v49
    %v87 = vpack.c.b16 %v83, %v82
    %v88 = vpack.c.b16 %v85, %v84
    %v89 = vpack.c.b16 %v86, %v86
    %vm90 = vsmask.f32 7424
    %v92 = vshrl.u32 %v87, 16
    %v94 = vshll.u32 %v87, 16
    %v96 = vrot.slane %v94, 1
    %v97 = vor.u32 %v92, %v96
    %v99 = vshll.u32 %v88, 16
    %v101 = vrot.slane %v99, 1
    %v102 = vsel %vm90, %v97, %v101
    %v103 = vshrl.u32 %v88, 16
    %v105 = vor.u32 %v103, %v101
    %v107 = vshll.u32 %v89, 16
    %v109 = vrot.slane %v107, 1
    %v110 = vsel %vm90, %v105, %v109
    %v124 = vunpack.c.l.b16 %v64
    %v125 = vunpack.c.h.b16 %v64
    %v126 = vunpack.c.l.b16 %v65
    %v127 = vunpack.c.h.b16 %v65
    %v128 = vunpack.c.l.b16 %v66
    %v129 = vunpack.c.h.b16 %v66
    %v130 = vunpack.c.l.b16 %v67
    %v131 = vunpack.c.h.b16 %v67
    %v132 = vunpack.c.l.b16 %v68
    %v133 = vunpack.c.h.b16 %v68
    %v134 = vunpack.c.l.b16 %v69
    %v135 = vunpack.c.h.b16 %v69
    %v136 = vunpack.c.l.b16 %v70
    %v137 = vunpack.c.h.b16 %v70
    %v138 = vunpack.c.l.b16 %v71
    %v139 = vunpack.c.h.b16 %v71
    %v140 = vunpack.c.l.b16 %v72
    %v141 = vunpack.c.h.b16 %v72
    %v142 = vunpack.c.l.b16 %v73
    %v143 = vunpack.c.h.b16 %v73
    %v144 = vunpack.c.l.b16 %v74
    %v145 = vunpack.c.h.b16 %v74
    %v146 = vunpack.c.l.b16 %v75
    %v147 = vunpack.c.h.b16 %v75
    %v148 = vunpack.c.l.b16 %v76
    %v149 = vunpack.c.h.b16 %v76
    %v150 = vpack.c.b16 %v126, %v124
    %v151 = vpack.c.b16 %v127, %v125
    %v152 = vpack.c.b16 %v130, %v128
    %v153 = vpack.c.b16 %v131, %v129
    %v154 = vpack.c.b16 %v134, %v132
    %v155 = vpack.c.b16 %v135, %v133
    %v156 = vpack.c.b16 %v138, %v136
    %v157 = vpack.c.b16 %v139, %v137
    %v158 = vpack.c.b16 %v142, %v140
    %v159 = vpack.c.b16 %v143, %v141
    %v160 = vpack.c.b16 %v146, %v144
    %v161 = vpack.c.b16 %v147, %v145
    %v162 = vpack.c.b16 %v148, %v148
    %v163 = vpack.c.b16 %v149, %v149
    %vm176 = vcmask 850944
    %v178 = vsel %vm176, %v102, 0
    %v181 = vsel %vm176, %v110, 0
    %v184 = vsel %vm37, %v162, 0
    %v187 = vsel %vm37, %v163, 0
    %189 = vmatprep.subr.bf16.mxu0 %v151
    %190 = vmatpush1.bf16.msra.mxu0 %v150
    %191 = vmatprep.subr.bf16.mxu0 %v153
    %192 = vmatpush1.bf16.msra.mxu0 %v152
    %193 = vmatprep.subr.bf16.mxu0 %v155
    %194 = vmatpush1.bf16.msra.mxu0 %v154
    %195 = vmatprep.subr.bf16.mxu0 %v157
    %196 = vmatpush1.bf16.msra.mxu0 %v156
    %197 = vmatprep.subr.bf16.mxu0 %v159
    %198 = vmatpush1.bf16.msra.mxu0 %v158
    %199 = vmatprep.subr.bf16.mxu0 %v161
    %200 = vmatpush1.bf16.msra.mxu0 %v160
    %201 = vmatprep.subr.bf16.mxu0 %v187
    %202 = vmatpush1.bf16.msra.mxu0 %v184
    %203 = vmatprep.subr.bf16.mxu0 0
    %204 = vmatpush1.bf16.msra.mxu0 0
    %205 = vmatprep.subr.bf16.mxu0 0
    %206 = vmatpush1.bf16.msra.mxu0 0
    %207 = vmatprep.subr.bf16.mxu0 0
    %208 = vmatpush1.bf16.msra.mxu0 0
    %209 = vmatprep.subr.bf16.mxu0 0
    %210 = vmatpush1.bf16.msra.mxu0 0
    %211 = vmatprep.subr.bf16.mxu0 0
    %212 = vmatpush1.bf16.msra.mxu0 0
    %213 = vmatprep.subr.bf16.mxu0 0
    %214 = vmatpush1.bf16.msra.mxu0 0
    %215 = vmatprep.subr.bf16.mxu0 0
    %216 = vmatpush1.bf16.msra.mxu0 0
    %217 = vmatprep.subr.bf16.mxu0 0
    %218 = vmatpush1.bf16.msra.mxu0 0
    %219 = vmatprep.subr.bf16.mxu0 0
    %220 = vmatpush1.bf16.msra.mxu0 0
    %221 = vmatprep.mubr.bf16.mxu0 0
    %222 = vmatmul.mubr.bf16.gmra.mrb[0].mxu0 %v178
    %v223 = vpop.f32.mrb[0].mxu0
    %v224 = vadd.f32 0.0, %v223
    %v225 = vpop.f32.mrb[0].mxu0
    %v226 = vadd.f32 0.0, %v225
    %v227 = vpop.f32.mrb[0].mxu0
    %v228 = vadd.f32 0.0, %v227
    %v229 = vpop.f32.mrb[0].mxu0
    %v230 = vadd.f32 0.0, %v229
    %231 = vmatprep.mubr.bf16.mxu0 0
    %232 = vmatmul.mubr.bf16.gmra.mrb[0].mxu0 %v181
    %v233 = vpop.f32.mrb[0].mxu0
    %v234 = vadd.f32 0.0, %v233
    %v235 = vpop.f32.mrb[0].mxu0
    %v236 = vadd.f32 0.0, %v235
    %v237 = vpop.f32.mrb[0].mxu0
    %v238 = vadd.f32 0.0, %v237
    %v239 = vpop.f32.mrb[0].mxu0
    %v240 = vadd.f32 0.0, %v239
    %241 = vdwg.mxu0
    %v255 = vunpack.c.l.b16 %v50
    %v256 = vunpack.c.h.b16 %v50
    %v257 = vunpack.c.l.b16 %v51
    %v258 = vunpack.c.h.b16 %v51
    %v259 = vunpack.c.l.b16 %v52
    %v260 = vunpack.c.h.b16 %v52
    %v261 = vunpack.c.l.b16 %v53
    %v262 = vunpack.c.h.b16 %v53
    %v263 = vunpack.c.l.b16 %v54
    %v264 = vunpack.c.h.b16 %v54
    %v265 = vunpack.c.l.b16 %v55
    %v266 = vunpack.c.h.b16 %v55
    %v267 = vunpack.c.l.b16 %v56
    %v268 = vunpack.c.h.b16 %v56
    %v269 = vunpack.c.l.b16 %v57
    %v270 = vunpack.c.h.b16 %v57
    %v271 = vunpack.c.l.b16 %v58
    %v272 = vunpack.c.h.b16 %v58
    %v273 = vunpack.c.l.b16 %v59
    %v274 = vunpack.c.h.b16 %v59
    %v275 = vunpack.c.l.b16 %v60
    %v276 = vunpack.c.h.b16 %v60
    %v277 = vunpack.c.l.b16 %v61
    %v278 = vunpack.c.h.b16 %v61
    %v279 = vunpack.c.l.b16 %v62
    %v280 = vunpack.c.h.b16 %v62
    %v281 = vpack.c.b16 %v257, %v255
    %v282 = vpack.c.b16 %v258, %v256
    %v283 = vpack.c.b16 %v261, %v259
    %v284 = vpack.c.b16 %v262, %v260
    %v285 = vpack.c.b16 %v265, %v263
    %v286 = vpack.c.b16 %v266, %v264
    %v287 = vpack.c.b16 %v269, %v267
    %v288 = vpack.c.b16 %v270, %v268
    %v289 = vpack.c.b16 %v273, %v271
    %v290 = vpack.c.b16 %v274, %v272
    %v291 = vpack.c.b16 %v277, %v275
    %v292 = vpack.c.b16 %v278, %v276
    %v293 = vpack.c.b16 %v279, %v279
    %v294 = vpack.c.b16 %v280, %v280
    %v307 = vsel %vm176, %v87, 0
    %v309 = vsel %vm176, %v88, 0
    %v312 = vsel %vm37, %v293, 0
    %v315 = vsel %vm37, %v294, 0
    %317 = vmatprep.subr.bf16.mxu0 %v282
    %318 = vmatpush1.bf16.msra.mxu0 %v281
    %319 = vmatprep.subr.bf16.mxu0 %v284
    %320 = vmatpush1.bf16.msra.mxu0 %v283
    %321 = vmatprep.subr.bf16.mxu0 %v286
    %322 = vmatpush1.bf16.msra.mxu0 %v285
    %323 = vmatprep.subr.bf16.mxu0 %v288
    %324 = vmatpush1.bf16.msra.mxu0 %v287
    %325 = vmatprep.subr.bf16.mxu0 %v290
    %326 = vmatpush1.bf16.msra.mxu0 %v289
    %327 = vmatprep.subr.bf16.mxu0 %v292
    %328 = vmatpush1.bf16.msra.mxu0 %v291
    %329 = vmatprep.subr.bf16.mxu0 %v315
    %330 = vmatpush1.bf16.msra.mxu0 %v312
    %331 = vmatprep.subr.bf16.mxu0 0
    %332 = vmatpush1.bf16.msra.mxu0 0
    %333 = vmatprep.subr.bf16.mxu0 0
    %334 = vmatpush1.bf16.msra.mxu0 0
    %335 = vmatprep.subr.bf16.mxu0 0
    %336 = vmatpush1.bf16.msra.mxu0 0
    %337 = vmatprep.subr.bf16.mxu0 0
    %338 = vmatpush1.bf16.msra.mxu0 0
    %339 = vmatprep.subr.bf16.mxu0 0
    %340 = vmatpush1.bf16.msra.mxu0 0
    %341 = vmatprep.subr.bf16.mxu0 0
    %342 = vmatpush1.bf16.msra.mxu0 0
    %343 = vmatprep.subr.bf16.mxu0 0
    %344 = vmatpush1.bf16.msra.mxu0 0
    %345 = vmatprep.subr.bf16.mxu0 0
    %346 = vmatpush1.bf16.msra.mxu0 0
    %347 = vmatprep.subr.bf16.mxu0 0
    %348 = vmatpush1.bf16.msra.mxu0 0
    %349 = vmatprep.mubr.bf16.mxu0 0
    %350 = vmatmul.mubr.bf16.gmra.mrb[0].mxu0 %v307
    %v351 = vpop.f32.mrb[0].mxu0
    %v352 = vadd.f32 %v224, %v351
    %v353 = vpop.f32.mrb[0].mxu0
    %v354 = vadd.f32 %v226, %v353
    %v355 = vpop.f32.mrb[0].mxu0
    %v356 = vadd.f32 %v228, %v355
    %v357 = vpop.f32.mrb[0].mxu0
    %v358 = vadd.f32 %v230, %v357
    %359 = vmatprep.mubr.bf16.mxu0 0
    %360 = vmatmul.mubr.bf16.gmra.mrb[0].mxu0 %v309
    %v361 = vpop.f32.mrb[0].mxu0
    %v362 = vadd.f32 %v234, %v361
    %v363 = vpop.f32.mrb[0].mxu0
    %v364 = vadd.f32 %v236, %v363
    %v365 = vpop.f32.mrb[0].mxu0
    %v366 = vadd.f32 %v238, %v365
    %v367 = vpop.f32.mrb[0].mxu0
    %v368 = vadd.f32 %v240, %v367
    %369 = vdwg.mxu0
    %s370 = scalar_lea.vmem %s1, 208
    %v371 = vld [vmem:[%s370] sm:$0xff]
    %v372 = vld [vmem:[%s370 + $0x8] sm:$0xff]
    %v373 = vld [vmem:[%s370 + $0x10] sm:$0xff]
    %v374 = vld [vmem:[%s370 + $0x18] sm:$0xff]
    %v375 = vld [vmem:[%s370 + $0x20] sm:$0xff]
    %v376 = vld [vmem:[%s370 + $0x28] sm:$0xff]
    %v377 = vld [vmem:[%s370 + $0x30] sm:$0xff]
    %v378 = vld [vmem:[%s370 + $0x38] sm:$0xff]
    %v379 = vld [vmem:[%s370 + $0x40] sm:$0xff]
    %v380 = vld [vmem:[%s370 + $0x48] sm:$0xff]
    %v381 = vld [vmem:[%s370 + $0x50] sm:$0xff]
    %v382 = vld [vmem:[%s370 + $0x58] sm:$0xff]
    %v383 = vld [vmem:[%s370 + $0x60] sm:$0xff]
    %vm384 = vcmask 1046528
    %v385 = vrot.slane %v87, 1
    %v386 = vrot.slane %v88, 1
    %v387 = vsel %vm384, %v385, %v386
    %v388 = vrot.slane %v89, 1
    %v389 = vsel %vm384, %v386, %v388
    %v403 = vunpack.c.l.b16 %v371
    %v404 = vunpack.c.h.b16 %v371
    %v405 = vunpack.c.l.b16 %v372
    %v406 = vunpack.c.h.b16 %v372
    %v407 = vunpack.c.l.b16 %v373
    %v408 = vunpack.c.h.b16 %v373
    %v409 = vunpack.c.l.b16 %v374
    %v410 = vunpack.c.h.b16 %v374
    %v411 = vunpack.c.l.b16 %v375
    %v412 = vunpack.c.h.b16 %v375
    %v413 = vunpack.c.l.b16 %v376
    %v414 = vunpack.c.h.b16 %v376
    %v415 = vunpack.c.l.b16 %v377
    %v416 = vunpack.c.h.b16 %v377
    %v417 = vunpack.c.l.b16 %v378
    %v418 = vunpack.c.h.b16 %v378
    %v419 = vunpack.c.l.b16 %v379
    %v420 = vunpack.c.h.b16 %v379
    %v421 = vunpack.c.l.b16 %v380
    %v422 = vunpack.c.h.b16 %v380
    %v423 = vunpack.c.l.b16 %v381
    %v424 = vunpack.c.h.b16 %v381
    %v425 = vunpack.c.l.b16 %v382
    %v426 = vunpack.c.h.b16 %v382
    %v427 = vunpack.c.l.b16 %v383
    %v428 = vunpack.c.h.b16 %v383
    %v429 = vpack.c.b16 %v405, %v403
    %v430 = vpack.c.b16 %v406, %v404
    %v431 = vpack.c.b16 %v409, %v407
    %v432 = vpack.c.b16 %v410, %v408
    %v433 = vpack.c.b16 %v413, %v411
    %v434 = vpack.c.b16 %v414, %v412
    %v435 = vpack.c.b16 %v417, %v415
    %v436 = vpack.c.b16 %v418, %v416
    %v437 = vpack.c.b16 %v421, %v419
    %v438 = vpack.c.b16 %v422, %v420
    %v439 = vpack.c.b16 %v425, %v423
    %v440 = vpack.c.b16 %v426, %v424
    %v441 = vpack.c.b16 %v427, %v427
    %v442 = vpack.c.b16 %v428, %v428
    %v456 = vsel %vm176, %v387, 0
    %v459 = vsel %vm176, %v389, 0
    %v462 = vsel %vm37, %v441, 0
    %v465 = vsel %vm37, %v442, 0
    %467 = vmatprep.subr.bf16.mxu0 %v430
    %468 = vmatpush1.bf16.msra.mxu0 %v429
    %469 = vmatprep.subr.bf16.mxu0 %v432
    %470 = vmatpush1.bf16.msra.mxu0 %v431
    %471 = vmatprep.subr.bf16.mxu0 %v434
    %472 = vmatpush1.bf16.msra.mxu0 %v433
    %473 = vmatprep.subr.bf16.mxu0 %v436
    %474 = vmatpush1.bf16.msra.mxu0 %v435
    %475 = vmatprep.subr.bf16.mxu0 %v438
    %476 = vmatpush1.bf16.msra.mxu0 %v437
    %477 = vmatprep.subr.bf16.mxu0 %v440
    %478 = vmatpush1.bf16.msra.mxu0 %v439
    %479 = vmatprep.subr.bf16.mxu0 %v465
    %480 = vmatpush1.bf16.msra.mxu0 %v462
    %481 = vmatprep.subr.bf16.mxu0 0
    %482 = vmatpush1.bf16.msra.mxu0 0
    %483 = vmatprep.subr.bf16.mxu0 0
    %484 = vmatpush1.bf16.msra.mxu0 0
    %485 = vmatprep.subr.bf16.mxu0 0
    %486 = vmatpush1.bf16.msra.mxu0 0
    %487 = vmatprep.subr.bf16.mxu0 0
    %488 = vmatpush1.bf16.msra.mxu0 0
    %489 = vmatprep.subr.bf16.mxu0 0
    %490 = vmatpush1.bf16.msra.mxu0 0
    %491 = vmatprep.subr.bf16.mxu0 0
    %492 = vmatpush1.bf16.msra.mxu0 0
    %493 = vmatprep.subr.bf16.mxu0 0
    %494 = vmatpush1.bf16.msra.mxu0 0
    %495 = vmatprep.subr.bf16.mxu0 0
    %496 = vmatpush1.bf16.msra.mxu0 0
    %497 = vmatprep.subr.bf16.mxu0 0
    %498 = vmatpush1.bf16.msra.mxu0 0
    %499 = vmatprep.mubr.bf16.mxu0 0
    %500 = vmatmul.mubr.bf16.gmra.mrb[0].mxu0 %v456
    %v501 = vpop.f32.mrb[0].mxu0
    %v502 = vadd.f32 0.0, %v501
    %v503 = vpop.f32.mrb[0].mxu0
    %v504 = vadd.f32 0.0, %v503
    %v505 = vpop.f32.mrb[0].mxu0
    %v506 = vadd.f32 0.0, %v505
    %v507 = vpop.f32.mrb[0].mxu0
    %v508 = vadd.f32 0.0, %v507
    %509 = vmatprep.mubr.bf16.mxu0 0
    %510 = vmatmul.mubr.bf16.gmra.mrb[0].mxu0 %v459
    %v511 = vpop.f32.mrb[0].mxu0
    %v512 = vadd.f32 0.0, %v511
    %v513 = vpop.f32.mrb[0].mxu0
    %v514 = vadd.f32 0.0, %v513
    %v515 = vpop.f32.mrb[0].mxu0
    %v516 = vadd.f32 0.0, %v515
    %v517 = vpop.f32.mrb[0].mxu0
    %v518 = vadd.f32 0.0, %v517
    %519 = vdwg.mxu0
    %v520 = vadd.f32 %v352, %v502
    %v521 = vadd.f32 %v354, %v504
    %v522 = vadd.f32 %v356, %v506
    %v523 = vadd.f32 %v358, %v508
    %v524 = vadd.f32 %v362, %v512
    %v525 = vadd.f32 %v364, %v514
    %v526 = vadd.f32 %v366, %v516
    %v527 = vadd.f32 %v368, %v518
    %s528 = scalar_lea.vmem %s1, 312
    %v529 = vld [vmem:[%s528] sm:$0xff]
    %v530 = vld [vmem:[%s528 + $0x8] sm:$0xff]
    %v531 = vld [vmem:[%s528 + $0x10] sm:$0xff]
    %v532 = vld [vmem:[%s528 + $0x18] sm:$0xff]
    %v533 = vld [vmem:[%s528 + $0x20] sm:$0xff]
    %v534 = vld [vmem:[%s528 + $0x28] sm:$0xff]
    %v535 = vld [vmem:[%s528 + $0x30] sm:$0xff]
    %v536 = vld [vmem:[%s528 + $0x38] sm:$0xff]
    %v537 = vld [vmem:[%s528 + $0x40] sm:$0xff]
    %v538 = vld [vmem:[%s528 + $0x48] sm:$0xff]
    %v539 = vld [vmem:[%s528 + $0x50] sm:$0xff]
    %v540 = vld [vmem:[%s528 + $0x58] sm:$0xff]
    %v541 = vld [vmem:[%s528 + $0x60] sm:$0xff]
    %vm542 = vsmask.f32 6400
    %v543 = vrot.slane %v92, 1
    %v544 = vrot.slane %v94, 2
    %v545 = vor.u32 %v543, %v544
    %v546 = vrot.slane %v103, 1
    %v547 = vrot.slane %v99, 2
    %v548 = vor.u32 %v546, %v547
    %v549 = vsel %vm542, %v545, %v548
    %v550 = vshrl.u32 %v89, 16
    %v552 = vrot.slane %v550, 1
    %v553 = vrot.slane %v107, 2
    %v554 = vor.u32 %v552, %v553
    %v555 = vsel %vm542, %v548, %v554
    %v569 = vunpack.c.l.b16 %v529
    %v570 = vunpack.c.h.b16 %v529
    %v571 = vunpack.c.l.b16 %v530
    %v572 = vunpack.c.h.b16 %v530
    %v573 = vunpack.c.l.b16 %v531
    %v574 = vunpack.c.h.b16 %v531
    %v575 = vunpack.c.l.b16 %v532
    %v576 = vunpack.c.h.b16 %v532
    %v577 = vunpack.c.l.b16 %v533
    %v578 = vunpack.c.h.b16 %v533
    %v579 = vunpack.c.l.b16 %v534
    %v580 = vunpack.c.h.b16 %v534
    %v581 = vunpack.c.l.b16 %v535
    %v582 = vunpack.c.h.b16 %v535
    %v583 = vunpack.c.l.b16 %v536
    %v584 = vunpack.c.h.b16 %v536
    %v585 = vunpack.c.l.b16 %v537
    %v586 = vunpack.c.h.b16 %v537
    %v587 = vunpack.c.l.b16 %v538
    %v588 = vunpack.c.h.b16 %v538
    %v589 = vunpack.c.l.b16 %v539
    %v590 = vunpack.c.h.b16 %v539
    %v591 = vunpack.c.l.b16 %v540
    %v592 = vunpack.c.h.b16 %v540
    %v593 = vunpack.c.l.b16 %v541
    %v594 = vunpack.c.h.b16 %v541
    %v595 = vpack.c.b16 %v571, %v569
    %v596 = vpack.c.b16 %v572, %v570
    %v597 = vpack.c.b16 %v575, %v573
    %v598 = vpack.c.b16 %v576, %v574
    %v599 = vpack.c.b16 %v579, %v577
    %v600 = vpack.c.b16 %v580, %v578
    %v601 = vpack.c.b16 %v583, %v581
    %v602 = vpack.c.b16 %v584, %v582
    %v603 = vpack.c.b16 %v587, %v585
    %v604 = vpack.c.b16 %v588, %v586
    %v605 = vpack.c.b16 %v591, %v589
    %v606 = vpack.c.b16 %v592, %v590
    %v607 = vpack.c.b16 %v593, %v593
    %v608 = vpack.c.b16 %v594, %v594
    %v622 = vsel %vm176, %v549, 0
    %v625 = vsel %vm176, %v555, 0
    %v628 = vsel %vm37, %v607, 0
    %v631 = vsel %vm37, %v608, 0
    %633 = vmatprep.subr.bf16.mxu0 %v596
    %634 = vmatpush1.bf16.msra.mxu0 %v595
    %635 = vmatprep.subr.bf16.mxu0 %v598
    %636 = vmatpush1.bf16.msra.mxu0 %v597
    %637 = vmatprep.subr.bf16.mxu0 %v600
    %638 = vmatpush1.bf16.msra.mxu0 %v599
    %639 = vmatprep.subr.bf16.mxu0 %v602
    %640 = vmatpush1.bf16.msra.mxu0 %v601
    %641 = vmatprep.subr.bf16.mxu0 %v604
    %642 = vmatpush1.bf16.msra.mxu0 %v603
    %643 = vmatprep.subr.bf16.mxu0 %v606
    %644 = vmatpush1.bf16.msra.mxu0 %v605
    %645 = vmatprep.subr.bf16.mxu0 %v631
    %646 = vmatpush1.bf16.msra.mxu0 %v628
    %647 = vmatprep.subr.bf16.mxu0 0
    %648 = vmatpush1.bf16.msra.mxu0 0
    %649 = vmatprep.subr.bf16.mxu0 0
    %650 = vmatpush1.bf16.msra.mxu0 0
    %651 = vmatprep.subr.bf16.mxu0 0
    %652 = vmatpush1.bf16.msra.mxu0 0
    %653 = vmatprep.subr.bf16.mxu0 0
    %654 = vmatpush1.bf16.msra.mxu0 0
    %655 = vmatprep.subr.bf16.mxu0 0
    %656 = vmatpush1.bf16.msra.mxu0 0
    %657 = vmatprep.subr.bf16.mxu0 0
    %658 = vmatpush1.bf16.msra.mxu0 0
    %659 = vmatprep.subr.bf16.mxu0 0
    %660 = vmatpush1.bf16.msra.mxu0 0
    %661 = vmatprep.subr.bf16.mxu0 0
    %662 = vmatpush1.bf16.msra.mxu0 0
    %663 = vmatprep.subr.bf16.mxu0 0
    %664 = vmatpush1.bf16.msra.mxu0 0
    %665 = vmatprep.mubr.bf16.mxu0 0
    %666 = vmatmul.mubr.bf16.gmra.mrb[0].mxu0 %v622
    %v667 = vpop.f32.mrb[0].mxu0
    %v668 = vadd.f32 0.0, %v667
    %v669 = vpop.f32.mrb[0].mxu0
    %v670 = vadd.f32 0.0, %v669
    %v671 = vpop.f32.mrb[0].mxu0
    %v672 = vadd.f32 0.0, %v671
    %v673 = vpop.f32.mrb[0].mxu0
    %v674 = vadd.f32 0.0, %v673
    %675 = vmatprep.mubr.bf16.mxu0 0
    %676 = vmatmul.mubr.bf16.gmra.mrb[0].mxu0 %v625
    %v677 = vpop.f32.mrb[0].mxu0
    %v678 = vadd.f32 0.0, %v677
    %v679 = vpop.f32.mrb[0].mxu0
    %v680 = vadd.f32 0.0, %v679
    %v681 = vpop.f32.mrb[0].mxu0
    %v682 = vadd.f32 0.0, %v681
    %v683 = vpop.f32.mrb[0].mxu0
    %v684 = vadd.f32 0.0, %v683
    %685 = vdwg.mxu0
    %v686 = vadd.f32 %v520, %v668
    %v687 = vadd.f32 %v521, %v670
    %v688 = vadd.f32 %v522, %v672
    %v689 = vadd.f32 %v523, %v674
    %v690 = vadd.f32 %v524, %v678
    %v691 = vadd.f32 %v525, %v680
    %v692 = vadd.f32 %v526, %v682
    %v693 = vadd.f32 %v527, %v684
    %s694 = scalar_lea.vmem %s1, 416
    %v695 = vld [vmem:[%s694] sm:$0xff]
    %v696 = vld [vmem:[%s694 + $0x8] sm:$0xff]
    %v697 = vld [vmem:[%s694 + $0x10] sm:$0xff]
    %v698 = vld [vmem:[%s694 + $0x18] sm:$0xff]
    %v699 = vld [vmem:[%s694 + $0x20] sm:$0xff]
    %v700 = vld [vmem:[%s694 + $0x28] sm:$0xff]
    %v701 = vld [vmem:[%s694 + $0x30] sm:$0xff]
    %v702 = vld [vmem:[%s694 + $0x38] sm:$0xff]
    %v703 = vld [vmem:[%s694 + $0x40] sm:$0xff]
    %v704 = vld [vmem:[%s694 + $0x48] sm:$0xff]
    %v705 = vld [vmem:[%s694 + $0x50] sm:$0xff]
    %v706 = vld [vmem:[%s694 + $0x58] sm:$0xff]
    %v707 = vld [vmem:[%s694 + $0x60] sm:$0xff]
    %vm708 = vcmask 1045504
    %v709 = vrot.slane %v87, 2
    %v710 = vrot.slane %v88, 2
    %v711 = vsel %vm708, %v709, %v710
    %v712 = vrot.slane %v89, 2
    %v713 = vsel %vm708, %v710, %v712
    %v727 = vunpack.c.l.b16 %v695
    %v728 = vunpack.c.h.b16 %v695
    %v729 = vunpack.c.l.b16 %v696
    %v730 = vunpack.c.h.b16 %v696
    %v731 = vunpack.c.l.b16 %v697
    %v732 = vunpack.c.h.b16 %v697
    %v733 = vunpack.c.l.b16 %v698
    %v734 = vunpack.c.h.b16 %v698
    %v735 = vunpack.c.l.b16 %v699
    %v736 = vunpack.c.h.b16 %v699
    %v737 = vunpack.c.l.b16 %v700
    %v738 = vunpack.c.h.b16 %v700
    %v739 = vunpack.c.l.b16 %v701
    %v740 = vunpack.c.h.b16 %v701
    %v741 = vunpack.c.l.b16 %v702
    %v742 = vunpack.c.h.b16 %v702
    %v743 = vunpack.c.l.b16 %v703
    %v744 = vunpack.c.h.b16 %v703
    %v745 = vunpack.c.l.b16 %v704
    %v746 = vunpack.c.h.b16 %v704
    %v747 = vunpack.c.l.b16 %v705
    %v748 = vunpack.c.h.b16 %v705
    %v749 = vunpack.c.l.b16 %v706
    %v750 = vunpack.c.h.b16 %v706
    %v751 = vunpack.c.l.b16 %v707
    %v752 = vunpack.c.h.b16 %v707
    %v753 = vpack.c.b16 %v729, %v727
    %v754 = vpack.c.b16 %v730, %v728
    %v755 = vpack.c.b16 %v733, %v731
    %v756 = vpack.c.b16 %v734, %v732
    %v757 = vpack.c.b16 %v737, %v735
    %v758 = vpack.c.b16 %v738, %v736
    %v759 = vpack.c.b16 %v741, %v739
    %v760 = vpack.c.b16 %v742, %v740
    %v761 = vpack.c.b16 %v745, %v743
    %v762 = vpack.c.b16 %v746, %v744
    %v763 = vpack.c.b16 %v749, %v747
    %v764 = vpack.c.b16 %v750, %v748
    %v765 = vpack.c.b16 %v751, %v751
    %v766 = vpack.c.b16 %v752, %v752
    %v780 = vsel %vm176, %v711, 0
    %v783 = vsel %vm176, %v713, 0
    %v786 = vsel %vm37, %v765, 0
    %v789 = vsel %vm37, %v766, 0
    %791 = vmatprep.subr.bf16.mxu0 %v754
    %792 = vmatpush1.bf16.msra.mxu0 %v753
    %793 = vmatprep.subr.bf16.mxu0 %v756
    %794 = vmatpush1.bf16.msra.mxu0 %v755
    %795 = vmatprep.subr.bf16.mxu0 %v758
    %796 = vmatpush1.bf16.msra.mxu0 %v757
    %797 = vmatprep.subr.bf16.mxu0 %v760
    %798 = vmatpush1.bf16.msra.mxu0 %v759
    %799 = vmatprep.subr.bf16.mxu0 %v762
    %800 = vmatpush1.bf16.msra.mxu0 %v761
    %801 = vmatprep.subr.bf16.mxu0 %v764
    %802 = vmatpush1.bf16.msra.mxu0 %v763
    %803 = vmatprep.subr.bf16.mxu0 %v789
    %804 = vmatpush1.bf16.msra.mxu0 %v786
    %805 = vmatprep.subr.bf16.mxu0 0
    %806 = vmatpush1.bf16.msra.mxu0 0
    %807 = vmatprep.subr.bf16.mxu0 0
    %808 = vmatpush1.bf16.msra.mxu0 0
    %809 = vmatprep.subr.bf16.mxu0 0
    %810 = vmatpush1.bf16.msra.mxu0 0
    %811 = vmatprep.subr.bf16.mxu0 0
    %812 = vmatpush1.bf16.msra.mxu0 0
    %813 = vmatprep.subr.bf16.mxu0 0
    %814 = vmatpush1.bf16.msra.mxu0 0
    %815 = vmatprep.subr.bf16.mxu0 0
    %816 = vmatpush1.bf16.msra.mxu0 0
    %817 = vmatprep.subr.bf16.mxu0 0
    %818 = vmatpush1.bf16.msra.mxu0 0
    %819 = vmatprep.subr.bf16.mxu0 0
    %820 = vmatpush1.bf16.msra.mxu0 0
    %821 = vmatprep.subr.bf16.mxu0 0
    %822 = vmatpush1.bf16.msra.mxu0 0
    %823 = vmatprep.mubr.bf16.mxu0 0
    %824 = vmatmul.mubr.bf16.gmra.mrb[0].mxu0 %v780
    %v825 = vpop.f32.mrb[0].mxu0
    %v826 = vadd.f32 0.0, %v825
    %v827 = vpop.f32.mrb[0].mxu0
    %v828 = vadd.f32 0.0, %v827
    %v829 = vpop.f32.mrb[0].mxu0
    %v830 = vadd.f32 0.0, %v829
    %v831 = vpop.f32.mrb[0].mxu0
    %v832 = vadd.f32 0.0, %v831
    %833 = vmatprep.mubr.bf16.mxu0 0
    %834 = vmatmul.mubr.bf16.gmra.mrb[0].mxu0 %v783
    %v835 = vpop.f32.mrb[0].mxu0
    %v836 = vadd.f32 0.0, %v835
    %v837 = vpop.f32.mrb[0].mxu0
    %v838 = vadd.f32 0.0, %v837
    %v839 = vpop.f32.mrb[0].mxu0
    %v840 = vadd.f32 0.0, %v839
    %v841 = vpop.f32.mrb[0].mxu0
    %v842 = vadd.f32 0.0, %v841
    %843 = vdwg.mxu0
    %v844 = vadd.f32 %v686, %v826
    %v845 = vadd.f32 %v687, %v828
    %v846 = vadd.f32 %v688, %v830
    %v847 = vadd.f32 %v689, %v832
    %v848 = vadd.f32 %v690, %v836
    %v849 = vadd.f32 %v691, %v838
    %v850 = vadd.f32 %v692, %v840
    %v851 = vadd.f32 %v693, %v842
    %v852 = vld [vmem:[%s2] sm:$0x3]
    %v854 = vlaneseq
    %v855 = vshrl.u32 %v854, 7
    %v856 = vsub.s32 0, %v855
    %v857 = vrot.slane %v852, %v856
    %v858 = vlaneseq
    %v859 = vshrl.u32 %v858, 7
    %v860 = vsub.s32 1, %v859
    %v861 = vrot.slane %v852, %v860
    %v864 = vadd.f32 %v844, %v857
    %v865 = vadd.f32 %v845, %v861
    %v866 = vadd.f32 %v846, %v857
    %v867 = vadd.f32 %v847, %v861
    %v868 = vadd.f32 %v848, %v857
    %v869 = vadd.f32 %v849, %v861
    %v870 = vadd.f32 %v850, %v857
    %v871 = vadd.f32 %v851, %v861
    %v872 = vmax.f32 %v864, 0.0
    %v873 = vmax.f32 %v865, 0.0
    %v874 = vmax.f32 %v866, 0.0
    %v875 = vmax.f32 %v867, 0.0
    %v876 = vmax.f32 %v868, 0.0
    %v877 = vmax.f32 %v869, 0.0
    %v878 = vmax.f32 %v870, 0.0
    %v879 = vmax.f32 %v871, 0.0
    %v888 = vcombine.low %v872, %v873
    %v889 = vcombine.high %v872, %v873
    %v890 = vcombine.low %v874, %v875
    %v891 = vcombine.high %v874, %v875
    %v892 = vcombine.low %v876, %v877
    %v893 = vcombine.high %v876, %v877
    %v894 = vcombine.low %v878, %v879
    %v895 = vcombine.high %v878, %v879
    %v904 = vcombine.high %v888, %v888
    %v905 = vcombine.high %v889, %v889
    %v906 = vcombine.high %v890, %v890
    %v907 = vcombine.high %v891, %v891
    %v908 = vcombine.high %v892, %v892
    %v909 = vcombine.high %v893, %v893
    %v910 = vcombine.high %v894, %v894
    %v911 = vcombine.high %v895, %v895
    %v920 = vsel %vm37, %v888, -inf
    %v921 = vrot.slane %v920, 4
    %v922 = vmax.f32 %v920, %v921
    %v923 = vrot.slane %v922, 2
    %v924 = vmax.f32 %v922, %v923
    %v925 = vrot.slane %v924, 1
    %v926 = vmax.f32 %v924, %v925
    %vm927 = vcmask 584704
    %v928 = vsel %vm927, %v904, -inf
    %v929 = vrot.slane %v928, 4
    %v930 = vmax.f32 %v928, %v929
    %v931 = vrot.slane %v930, 2
    %v932 = vmax.f32 %v930, %v931
    %v933 = vrot.slane %v932, 1
    %v934 = vmax.f32 %v932, %v933
    %v935 = vsel %vm37, %v889, -inf
    %v936 = vrot.slane %v935, 4
    %v937 = vmax.f32 %v935, %v936
    %v938 = vrot.slane %v937, 2
    %v939 = vmax.f32 %v937, %v938
    %v940 = vrot.slane %v939, 1
    %v941 = vmax.f32 %v939, %v940
    %v942 = vsel %vm927, %v905, -inf
    %v943 = vrot.slane %v942, 4
    %v944 = vmax.f32 %v942, %v943
    %v945 = vrot.slane %v944, 2
    %v946 = vmax.f32 %v944, %v945
    %v947 = vrot.slane %v946, 1
    %v948 = vmax.f32 %v946, %v947
    %v949 = vsel %vm37, %v890, -inf
    %v950 = vrot.slane %v949, 4
    %v951 = vmax.f32 %v949, %v950
    %v952 = vrot.slane %v951, 2
    %v953 = vmax.f32 %v951, %v952
    %v954 = vrot.slane %v953, 1
    %v955 = vmax.f32 %v953, %v954
    %v956 = vsel %vm927, %v906, -inf
    %v957 = vrot.slane %v956, 4
    %v958 = vmax.f32 %v956, %v957
    %v959 = vrot.slane %v958, 2
    %v960 = vmax.f32 %v958, %v959
    %v961 = vrot.slane %v960, 1
    %v962 = vmax.f32 %v960, %v961
    %v963 = vsel %vm37, %v891, -inf
    %v964 = vrot.slane %v963, 4
    %v965 = vmax.f32 %v963, %v964
    %v966 = vrot.slane %v965, 2
    %v967 = vmax.f32 %v965, %v966
    %v968 = vrot.slane %v967, 1
    %v969 = vmax.f32 %v967, %v968
    %v970 = vsel %vm927, %v907, -inf
    %v971 = vrot.slane %v970, 4
    %v972 = vmax.f32 %v970, %v971
    %v973 = vrot.slane %v972, 2
    %v974 = vmax.f32 %v972, %v973
    %v975 = vrot.slane %v974, 1
    %v976 = vmax.f32 %v974, %v975
    %v977 = vsel %vm37, %v892, -inf
    %v978 = vrot.slane %v977, 4
    %v979 = vmax.f32 %v977, %v978
    %v980 = vrot.slane %v979, 2
    %v981 = vmax.f32 %v979, %v980
    %v982 = vrot.slane %v981, 1
    %v983 = vmax.f32 %v981, %v982
    %v984 = vsel %vm927, %v908, -inf
    %v985 = vrot.slane %v984, 4
    %v986 = vmax.f32 %v984, %v985
    %v987 = vrot.slane %v986, 2
    %v988 = vmax.f32 %v986, %v987
    %v989 = vrot.slane %v988, 1
    %v990 = vmax.f32 %v988, %v989
    %v991 = vsel %vm37, %v893, -inf
    %v992 = vrot.slane %v991, 4
    %v993 = vmax.f32 %v991, %v992
    %v994 = vrot.slane %v993, 2
    %v995 = vmax.f32 %v993, %v994
    %v996 = vrot.slane %v995, 1
    %v997 = vmax.f32 %v995, %v996
    %v998 = vsel %vm927, %v909, -inf
    %v999 = vrot.slane %v998, 4
    %v1000 = vmax.f32 %v998, %v999
    %v1001 = vrot.slane %v1000, 2
    %v1002 = vmax.f32 %v1000, %v1001
    %v1003 = vrot.slane %v1002, 1
    %v1004 = vmax.f32 %v1002, %v1003
    %v1005 = vsel %vm37, %v894, -inf
    %v1006 = vrot.slane %v1005, 4
    %v1007 = vmax.f32 %v1005, %v1006
    %v1008 = vrot.slane %v1007, 2
    %v1009 = vmax.f32 %v1007, %v1008
    %v1010 = vrot.slane %v1009, 1
    %v1011 = vmax.f32 %v1009, %v1010
    %v1012 = vsel %vm927, %v910, -inf
    %v1013 = vrot.slane %v1012, 4
    %v1014 = vmax.f32 %v1012, %v1013
    %v1015 = vrot.slane %v1014, 2
    %v1016 = vmax.f32 %v1014, %v1015
    %v1017 = vrot.slane %v1016, 1
    %v1018 = vmax.f32 %v1016, %v1017
    %v1019 = vsel %vm37, %v895, -inf
    %v1020 = vrot.slane %v1019, 4
    %v1021 = vmax.f32 %v1019, %v1020
    %v1022 = vrot.slane %v1021, 2
    %v1023 = vmax.f32 %v1021, %v1022
    %v1024 = vrot.slane %v1023, 1
    %v1025 = vmax.f32 %v1023, %v1024
    %v1026 = vsel %vm927, %v911, -inf
    %v1027 = vrot.slane %v1026, 4
    %v1028 = vmax.f32 %v1026, %v1027
    %v1029 = vrot.slane %v1028, 2
    %v1030 = vmax.f32 %v1028, %v1029
    %v1031 = vrot.slane %v1030, 1
    %v1032 = vmax.f32 %v1030, %v1031
    %v1033 = vpack.c.bf16 %v926, %v926
    %v1034 = vpack.c.bf16 %v934, %v934
    %v1035 = vpack.c.bf16 %v941, %v941
    %v1036 = vpack.c.bf16 %v948, %v948
    %v1037 = vpack.c.bf16 %v955, %v955
    %v1038 = vpack.c.bf16 %v962, %v962
    %v1039 = vpack.c.bf16 %v969, %v969
    %v1040 = vpack.c.bf16 %v976, %v976
    %v1041 = vpack.c.bf16 %v983, %v983
    %v1042 = vpack.c.bf16 %v990, %v990
    %v1043 = vpack.c.bf16 %v997, %v997
    %v1044 = vpack.c.bf16 %v1004, %v1004
    %v1045 = vpack.c.bf16 %v1011, %v1011
    %v1046 = vpack.c.bf16 %v1018, %v1018
    %v1047 = vpack.c.bf16 %v1025, %v1025
    %v1048 = vpack.c.bf16 %v1032, %v1032
    %v1065 = vunpack.c.l.b16 %v1033
    %v1066 = vunpack.c.l.b16 %v1034
    %v1067 = vunpack.c.l.b16 %v1035
    %v1068 = vunpack.c.l.b16 %v1036
    %v1069 = vunpack.c.l.b16 %v1037
    %v1070 = vunpack.c.l.b16 %v1038
    %v1071 = vunpack.c.l.b16 %v1039
    %v1072 = vunpack.c.l.b16 %v1040
    %v1073 = vunpack.c.l.b16 %v1041
    %v1074 = vunpack.c.l.b16 %v1042
    %v1075 = vunpack.c.l.b16 %v1043
    %v1076 = vunpack.c.l.b16 %v1044
    %v1077 = vunpack.c.l.b16 %v1045
    %v1078 = vunpack.c.l.b16 %v1046
    %v1079 = vunpack.c.l.b16 %v1047
    %v1080 = vunpack.c.l.b16 %v1048
    %v1081 = vpack.c.b16 %v1066, %v1065
    %v1082 = vpack.c.b16 %v1068, %v1067
    %v1083 = vpack.c.b16 %v1070, %v1069
    %v1084 = vpack.c.b16 %v1072, %v1071
    %v1085 = vpack.c.b16 %v1074, %v1073
    %v1086 = vpack.c.b16 %v1076, %v1075
    %v1087 = vpack.c.b16 %v1078, %v1077
    %v1088 = vpack.c.b16 %v1080, %v1079
    %v1089 = vunpack.c.l.b16 %v1081
    %v1090 = vunpack.c.h.b16 %v1081
    %v1091 = vunpack.c.l.b16 %v1082
    %v1092 = vunpack.c.h.b16 %v1082
    %v1093 = vunpack.c.l.b16 %v1083
    %v1094 = vunpack.c.h.b16 %v1083
    %v1095 = vunpack.c.l.b16 %v1084
    %v1096 = vunpack.c.h.b16 %v1084
    %v1097 = vunpack.c.l.b16 %v1085
    %v1098 = vunpack.c.h.b16 %v1085
    %v1099 = vunpack.c.l.b16 %v1086
    %v1100 = vunpack.c.h.b16 %v1086
    %v1101 = vunpack.c.l.b16 %v1087
    %v1102 = vunpack.c.h.b16 %v1087
    %v1103 = vunpack.c.l.b16 %v1088
    %v1104 = vunpack.c.h.b16 %v1088
    %vm1105 = vcmask 1043459
    %v1106 = vsel %vm1105, %v1091, %v1089
    %vm1107 = vcmask 1044484
    %v1108 = vsel %vm1107, %v1093, %v1106
    %vm1109 = vcmask 1045509
    %v1110 = vsel %vm1109, %v1095, %v1108
    %vm1111 = vcmask 1046534
    %v1112 = vsel %vm1111, %v1097, %v1110
    %vm1113 = vcmask 1047559
    %v1114 = vsel %vm1113, %v1099, %v1112
    %v1115 = vsel %vm1105, %v1092, %v1090
    %v1116 = vsel %vm1107, %v1094, %v1115
    %v1117 = vsel %vm1109, %v1096, %v1116
    %v1118 = vsel %vm1111, %v1098, %v1117
    %v1119 = vsel %vm1113, %v1100, %v1118
    %vm1120 = vcmask 1041409
    %v1121 = vsel %vm1120, %v1103, %v1101
    %v1122 = vsel %vm1120, %v1104, %v1102
    %v1123 = vpack.c.b16 %v1119, %v1114
    %v1124 = vpack.c.b16 %v1122, %v1121
    %vm1127 = vcmask 1043457
    %vm1128 = vcmask 588805
    %vm1129 = vmor %vm1128, %vm1127
    %1130 = vst.msk [vmem:[#allocation2] sm:$0xee] %vm1129, %v1123
    %vm1131 = vcmask 1040384
    %vm1132 = vcmask 585732
    %vm1133 = vmor %vm1132, %vm1131
    %1134 = vst.msk [vmem:[#allocation2 + $0x8] sm:$0x11] %vm1133, %v1124
    %v1135 = vld [vmem:[#allocation2] sm:$0xff]
    %v1136 = vld [vmem:[%s3] sm:$0xff]
    %v1137 = vld [vmem:[%s3 + $0x8] sm:$0xf]
    %v1138 = vld [vmem:[%s3 + $0xc] sm:$0xff]
    %v1139 = vld [vmem:[%s3 + $0x14] sm:$0xf]
    %v1140 = vld [vmem:[%s3 + $0x18] sm:$0xff]
    %v1141 = vld [vmem:[%s3 + $0x20] sm:$0xf]
    %v1142 = vld [vmem:[%s3 + $0x24] sm:$0xff]
    %v1143 = vld [vmem:[%s3 + $0x2c] sm:$0xf]
    %v1144 = vld [vmem:[%s3 + $0x30] sm:$0xff]
    %v1145 = vld [vmem:[%s3 + $0x38] sm:$0xf]
    %v1146 = vld [vmem:[%s3 + $0x3c] sm:$0xff]
    %v1147 = vld [vmem:[%s3 + $0x44] sm:$0xf]
    %v1148 = vld [vmem:[%s3 + $0x48] sm:$0xff]
    %v1149 = vld [vmem:[%s3 + $0x50] sm:$0xf]
    %v1150 = vld [vmem:[%s3 + $0x54] sm:$0xff]
    %v1151 = vld [vmem:[%s3 + $0x5c] sm:$0xf]
    %v1152 = vld [vmem:[%s3 + $0x60] sm:$0xff]
    %v1153 = vld [vmem:[%s3 + $0x68] sm:$0xf]
    %v1154 = vld [vmem:[%s3 + $0x6c] sm:$0xff]
    %v1155 = vld [vmem:[%s3 + $0x74] sm:$0xf]
    %v1156 = vld [vmem:[%s3 + $0x78] sm:$0xff]
    %v1157 = vld [vmem:[%s3 + $0x80] sm:$0xf]
    %v1158 = vld [vmem:[%s3 + $0x84] sm:$0xff]
    %v1159 = vld [vmem:[%s3 + $0x8c] sm:$0xf]
    %v1160 = vld [vmem:[%s3 + $0x90] sm:$0xff]
    %v1161 = vld [vmem:[%s3 + $0x98] sm:$0xf]
    %v1162 = vld [vmem:[%s3 + $0x9c] sm:$0xff]
    %v1163 = vld [vmem:[%s3 + $0xa4] sm:$0xf]
    %v1164 = vld [vmem:[%s3 + $0xa8] sm:$0xff]
    %v1165 = vld [vmem:[%s3 + $0xb0] sm:$0xf]
    %v1166 = vld [vmem:[%s3 + $0xb4] sm:$0xff]
    %v1167 = vld [vmem:[%s3 + $0xbc] sm:$0xf]
    %v1168 = vld [vmem:[%s3 + $0xc0] sm:$0xff]
    %v1169 = vld [vmem:[%s3 + $0xc8] sm:$0xf]
    %v1170 = vld [vmem:[%s3 + $0xcc] sm:$0xff]
    %v1171 = vld [vmem:[%s3 + $0xd4] sm:$0xf]
    %v1172 = vld [vmem:[%s3 + $0xd8] sm:$0xff]
    %v1173 = vld [vmem:[%s3 + $0xe0] sm:$0xf]
    %v1174 = vld [vmem:[%s3 + $0xe4] sm:$0xff]
    %v1175 = vld [vmem:[%s3 + $0xec] sm:$0xf]
    %v1176 = vld [vmem:[%s3 + $0xf0] sm:$0xff]
    %v1177 = vld [vmem:[%s3 + $0xf8] sm:$0xf]
    %v1178 = vld [vmem:[%s3 + $0xfc] sm:$0xff]
    %v1179 = vld [vmem:[%s3 + $0x104] sm:$0xf]
    %v1180 = vld [vmem:[%s3 + $0x108] sm:$0xff]
    %v1181 = vld [vmem:[%s3 + $0x110] sm:$0xf]
    %v1182 = vld [vmem:[%s3 + $0x114] sm:$0xff]
    %v1183 = vld [vmem:[%s3 + $0x11c] sm:$0xf]
    %v1184 = vld [vmem:[%s3 + $0x120] sm:$0xff]
    %v1185 = vld [vmem:[%s3 + $0x128] sm:$0xf]
    %v1186 = vld [vmem:[#allocation2 + $0x8] sm:$0x11]
    %s1187 = scalar_lea.vmem %s3, 300
    %v1188 = vld [vmem:[%s1187] sm:$0xff]
    %v1189 = vld [vmem:[%s1187 + $0x8] sm:$0xf]
    %v1190 = vld [vmem:[%s1187 + $0xc] sm:$0xff]
    %v1191 = vld [vmem:[%s1187 + $0x14] sm:$0xf]
    %v1192 = vld [vmem:[%s1187 + $0x18] sm:$0xff]
    %v1193 = vld [vmem:[%s1187 + $0x20] sm:$0xf]
    %v1194 = vld [vmem:[%s1187 + $0x24] sm:$0xff]
    %v1195 = vld [vmem:[%s1187 + $0x2c] sm:$0xf]
    %v1196 = vld [vmem:[%s1187 + $0x30] sm:$0xff]
    %v1197 = vld [vmem:[%s1187 + $0x38] sm:$0xf]
    %v1198 = vld [vmem:[%s1187 + $0x3c] sm:$0xff]
    %v1199 = vld [vmem:[%s1187 + $0x44] sm:$0xf]
    %v1200 = vld [vmem:[%s1187 + $0x48] sm:$0xff]
    %v1201 = vld [vmem:[%s1187 + $0x50] sm:$0xf]
    %v1202 = vld [vmem:[%s1187 + $0x54] sm:$0xff]
    %v1203 = vld [vmem:[%s1187 + $0x5c] sm:$0xf]
    %v1204 = vld [vmem:[%s1187 + $0x60] sm:$0xff]
    %v1205 = vld [vmem:[%s1187 + $0x68] sm:$0xf]
    %v1206 = vld [vmem:[%s1187 + $0x6c] sm:$0xff]
    %v1207 = vld [vmem:[%s1187 + $0x74] sm:$0xf]
    %v1208 = vld [vmem:[%s1187 + $0x78] sm:$0xff]
    %v1209 = vld [vmem:[%s1187 + $0x80] sm:$0xf]
    %v1210 = vld [vmem:[%s1187 + $0x84] sm:$0xff]
    %v1211 = vld [vmem:[%s1187 + $0x8c] sm:$0xf]
    %v1212 = vld [vmem:[%s1187 + $0x90] sm:$0xff]
    %v1213 = vld [vmem:[%s1187 + $0x98] sm:$0xf]
    %v1214 = vld [vmem:[%s1187 + $0x9c] sm:$0xff]
    %v1215 = vld [vmem:[%s1187 + $0xa4] sm:$0xf]
    %v1216 = vld [vmem:[%s1187 + $0xa8] sm:$0xff]
    %v1217 = vld [vmem:[%s1187 + $0xb0] sm:$0xf]
    %v1218 = vld [vmem:[%s1187 + $0xb4] sm:$0xff]
    %v1219 = vld [vmem:[%s1187 + $0xbc] sm:$0xf]
    %v1220 = vld [vmem:[%s1187 + $0xc0] sm:$0xff]
    %v1221 = vld [vmem:[%s1187 + $0xc8] sm:$0xf]
    %v1222 = vld [vmem:[%s1187 + $0xcc] sm:$0xff]
    %v1223 = vld [vmem:[%s1187 + $0xd4] sm:$0xf]
    %v1224 = vld [vmem:[%s1187 + $0xd8] sm:$0xff]
    %v1225 = vld [vmem:[%s1187 + $0xe0] sm:$0xf]
    %v1226 = vld [vmem:[%s1187 + $0xe4] sm:$0xff]
    %v1227 = vld [vmem:[%s1187 + $0xec] sm:$0xf]
    %v1228 = vld [vmem:[%s1187 + $0xf0] sm:$0xff]
    %v1229 = vld [vmem:[%s1187 + $0xf8] sm:$0xf]
    %v1230 = vld [vmem:[%s1187 + $0xfc] sm:$0xff]
    %v1231 = vld [vmem:[%s1187 + $0x104] sm:$0xf]
    %v1232 = vld [vmem:[%s1187 + $0x108] sm:$0xff]
    %v1233 = vld [vmem:[%s1187 + $0x110] sm:$0xf]
    %v1234 = vld [vmem:[%s1187 + $0x114] sm:$0xff]
    %v1235 = vld [vmem:[%s1187 + $0x11c] sm:$0xf]
    %v1236 = vld [vmem:[%s1187 + $0x120] sm:$0xff]
    %v1237 = vld [vmem:[%s1187 + $0x128] sm:$0xf]
    %v1240 = vunpack.c.l.b16 %v1135
    %v1241 = vunpack.c.h.b16 %v1135
    %v1242 = vunpack.c.l.b16 %v1186
    %v1243 = vunpack.c.h.b16 %v1186
    %v1244 = vpack.c.b16 %v1242, %v1240
    %v1245 = vpack.c.b16 %v1243, %v1241
    %v1247 = vshrl.u32 %v1244, 16
    %v1249 = vshll.u32 %v1244, 16
    %v1251 = vrot.slane %v1249, 1
    %v1252 = vor.u32 %v1247, %v1251
    %v1254 = vshrl.u32 %v1245, 16
    %v1256 = vshll.u32 %v1245, 16
    %v1258 = vrot.slane %v1256, 1
    %v1259 = vor.u32 %v1254, %v1258
    %v1311 = vunpack.c.l.b16 %v1188
    %v1312 = vunpack.c.h.b16 %v1188
    %v1313 = vunpack.c.l.b16 %v1189
    %v1314 = vunpack.c.l.b16 %v1190
    %v1315 = vunpack.c.h.b16 %v1190
    %v1316 = vunpack.c.l.b16 %v1191
    %v1317 = vunpack.c.l.b16 %v1192
    %v1318 = vunpack.c.h.b16 %v1192
    %v1319 = vunpack.c.l.b16 %v1193
    %v1320 = vunpack.c.l.b16 %v1194
    %v1321 = vunpack.c.h.b16 %v1194
    %v1322 = vunpack.c.l.b16 %v1195
    %v1323 = vunpack.c.l.b16 %v1196
    %v1324 = vunpack.c.h.b16 %v1196
    %v1325 = vunpack.c.l.b16 %v1197
    %v1326 = vunpack.c.l.b16 %v1198
    %v1327 = vunpack.c.h.b16 %v1198
    %v1328 = vunpack.c.l.b16 %v1199
    %v1329 = vunpack.c.l.b16 %v1200
    %v1330 = vunpack.c.h.b16 %v1200
    %v1331 = vunpack.c.l.b16 %v1201
    %v1332 = vunpack.c.l.b16 %v1202
    %v1333 = vunpack.c.h.b16 %v1202
    %v1334 = vunpack.c.l.b16 %v1203
    %v1335 = vunpack.c.l.b16 %v1204
    %v1336 = vunpack.c.h.b16 %v1204
    %v1337 = vunpack.c.l.b16 %v1205
    %v1338 = vunpack.c.l.b16 %v1206
    %v1339 = vunpack.c.h.b16 %v1206
    %v1340 = vunpack.c.l.b16 %v1207
    %v1341 = vunpack.c.l.b16 %v1208
    %v1342 = vunpack.c.h.b16 %v1208
    %v1343 = vunpack.c.l.b16 %v1209
    %v1344 = vunpack.c.l.b16 %v1210
    %v1345 = vunpack.c.h.b16 %v1210
    %v1346 = vunpack.c.l.b16 %v1211
    %v1347 = vunpack.c.l.b16 %v1212
    %v1348 = vunpack.c.h.b16 %v1212
    %v1349 = vunpack.c.l.b16 %v1213
    %v1350 = vunpack.c.l.b16 %v1214
    %v1351 = vunpack.c.h.b16 %v1214
    %v1352 = vunpack.c.l.b16 %v1215
    %v1353 = vunpack.c.l.b16 %v1216
    %v1354 = vunpack.c.h.b16 %v1216
    %v1355 = vunpack.c.l.b16 %v1217
    %v1356 = vunpack.c.l.b16 %v1218
    %v1357 = vunpack.c.h.b16 %v1218
    %v1358 = vunpack.c.l.b16 %v1219
    %v1359 = vunpack.c.l.b16 %v1220
    %v1360 = vunpack.c.h.b16 %v1220
    %v1361 = vunpack.c.l.b16 %v1221
    %v1362 = vunpack.c.l.b16 %v1222
    %v1363 = vunpack.c.h.b16 %v1222
    %v1364 = vunpack.c.l.b16 %v1223
    %v1365 = vunpack.c.l.b16 %v1224
    %v1366 = vunpack.c.h.b16 %v1224
    %v1367 = vunpack.c.l.b16 %v1225
    %v1368 = vunpack.c.l.b16 %v1226
    %v1369 = vunpack.c.h.b16 %v1226
    %v1370 = vunpack.c.l.b16 %v1227
    %v1371 = vunpack.c.l.b16 %v1228
    %v1372 = vunpack.c.h.b16 %v1228
    %v1373 = vunpack.c.l.b16 %v1229
    %v1374 = vunpack.c.l.b16 %v1230
    %v1375 = vunpack.c.h.b16 %v1230
    %v1376 = vunpack.c.l.b16 %v1231
    %v1377 = vunpack.c.l.b16 %v1232
    %v1378 = vunpack.c.h.b16 %v1232
    %v1379 = vunpack.c.l.b16 %v1233
    %v1380 = vunpack.c.l.b16 %v1234
    %v1381 = vunpack.c.h.b16 %v1234
    %v1382 = vunpack.c.l.b16 %v1235
    %v1383 = vunpack.c.l.b16 %v1236
    %v1384 = vunpack.c.h.b16 %v1236
    %v1385 = vunpack.c.l.b16 %v1237
    %v1386 = vpack.c.b16 %v1314, %v1311
    %v1387 = vpack.c.b16 %v1315, %v1312
    %v1388 = vpack.c.b16 %v1316, %v1313
    %v1389 = vpack.c.b16 %v1320, %v1317
    %v1390 = vpack.c.b16 %v1321, %v1318
    %v1391 = vpack.c.b16 %v1322, %v1319
    %v1392 = vpack.c.b16 %v1326, %v1323
    %v1393 = vpack.c.b16 %v1327, %v1324
    %v1394 = vpack.c.b16 %v1328, %v1325
    %v1395 = vpack.c.b16 %v1332, %v1329
    %v1396 = vpack.c.b16 %v1333, %v1330
    %v1397 = vpack.c.b16 %v1334, %v1331
    %v1398 = vpack.c.b16 %v1338, %v1335
    %v1399 = vpack.c.b16 %v1339, %v1336
    %v1400 = vpack.c.b16 %v1340, %v1337
    %v1401 = vpack.c.b16 %v1344, %v1341
    %v1402 = vpack.c.b16 %v1345, %v1342
    %v1403 = vpack.c.b16 %v1346, %v1343
    %v1404 = vpack.c.b16 %v1350, %v1347
    %v1405 = vpack.c.b16 %v1351, %v1348
    %v1406 = vpack.c.b16 %v1352, %v1349
    %v1407 = vpack.c.b16 %v1356, %v1353
    %v1408 = vpack.c.b16 %v1357, %v1354
    %v1409 = vpack.c.b16 %v1358, %v1355
    %v1410 = vpack.c.b16 %v1362, %v1359
    %v1411 = vpack.c.b16 %v1363, %v1360
    %v1412 = vpack.c.b16 %v1364, %v1361
    %v1413 = vpack.c.b16 %v1368, %v1365
    %v1414 = vpack.c.b16 %v1369, %v1366
    %v1415 = vpack.c.b16 %v1370, %v1367
    %v1416 = vpack.c.b16 %v1374, %v1371
    %v1417 = vpack.c.b16 %v1375, %v1372
    %v1418 = vpack.c.b16 %v1376, %v1373
    %v1419 = vpack.c.b16 %v1380, %v1377
    %v1420 = vpack.c.b16 %v1381, %v1378
    %v1421 = vpack.c.b16 %v1382, %v1379
    %v1422 = vpack.c.b16 %v1383, %v1383
    %v1423 = vpack.c.b16 %v1384, %v1384
    %v1424 = vpack.c.b16 %v1385, %v1385
    %vm1461 = vcmask 588800
    %v1463 = vsel %vm1461, %v1259, 0
    %v1466 = vsel %vm37, %v1422, 0
    %v1469 = vsel %vm37, %v1423, 0
    %v1472 = vsel %vm37, %v1424, 0
    %1474 = vmatprep.subr.bf16.mxu0 %v1387
    %1475 = vmatpush1.bf16.msra.mxu0 %v1386
    %1476 = vmatprep.subr.bf16.mxu0 %v1390
    %1477 = vmatpush1.bf16.msra.mxu0 %v1389
    %1478 = vmatprep.subr.bf16.mxu0 %v1393
    %1479 = vmatpush1.bf16.msra.mxu0 %v1392
    %1480 = vmatprep.subr.bf16.mxu0 %v1396
    %1481 = vmatpush1.bf16.msra.mxu0 %v1395
    %1482 = vmatprep.subr.bf16.mxu0 %v1399
    %1483 = vmatpush1.bf16.msra.mxu0 %v1398
    %1484 = vmatprep.subr.bf16.mxu0 %v1402
    %1485 = vmatpush1.bf16.msra.mxu0 %v1401
    %1486 = vmatprep.subr.bf16.mxu0 %v1405
    %1487 = vmatpush1.bf16.msra.mxu0 %v1404
    %1488 = vmatprep.subr.bf16.mxu0 %v1408
    %1489 = vmatpush1.bf16.msra.mxu0 %v1407
    %1490 = vmatprep.subr.bf16.mxu0 %v1411
    %1491 = vmatpush1.bf16.msra.mxu0 %v1410
    %1492 = vmatprep.subr.bf16.mxu0 %v1414
    %1493 = vmatpush1.bf16.msra.mxu0 %v1413
    %1494 = vmatprep.subr.bf16.mxu0 %v1417
    %1495 = vmatpush1.bf16.msra.mxu0 %v1416
    %1496 = vmatprep.subr.bf16.mxu0 %v1420
    %1497 = vmatpush1.bf16.msra.mxu0 %v1419
    %1498 = vmatprep.subr.bf16.mxu0 %v1469
    %1499 = vmatpush1.bf16.msra.mxu0 %v1466
    %1500 = vmatprep.subr.bf16.mxu0 0
    %1501 = vmatpush1.bf16.msra.mxu0 0
    %1502 = vmatprep.subr.bf16.mxu0 0
    %1503 = vmatpush1.bf16.msra.mxu0 0
    %1504 = vmatprep.subr.bf16.mxu0 0
    %1505 = vmatpush1.bf16.msra.mxu0 0
    %1506 = vmatprep.mubr.bf16.mxu0 %v1463
    %1507 = vmatmul.mubr.bf16.gmra.mrb[0].mxu0 %v1252
    %v1508 = vpop.f32.mrb[0].mxu0
    %v1509 = vadd.f32 0.0, %v1508
    %v1510 = vpop.f32.mrb[0].mxu0
    %v1511 = vadd.f32 0.0, %v1510
    %v1512 = vpop.f32.mrb[0].mxu0
    %v1513 = vpop.f32.mrb[0].mxu0
    %1514 = vdwg.mxu0
    %1515 = vmatprep.subr.bf16.mxu0 0
    %1516 = vmatpush1.bf16.msra.mxu0 %v1388
    %1517 = vmatprep.subr.bf16.mxu0 0
    %1518 = vmatpush1.bf16.msra.mxu0 %v1391
    %1519 = vmatprep.subr.bf16.mxu0 0
    %1520 = vmatpush1.bf16.msra.mxu0 %v1394
    %1521 = vmatprep.subr.bf16.mxu0 0
    %1522 = vmatpush1.bf16.msra.mxu0 %v1397
    %1523 = vmatprep.subr.bf16.mxu0 0
    %1524 = vmatpush1.bf16.msra.mxu0 %v1400
    %1525 = vmatprep.subr.bf16.mxu0 0
    %1526 = vmatpush1.bf16.msra.mxu0 %v1403
    %1527 = vmatprep.subr.bf16.mxu0 0
    %1528 = vmatpush1.bf16.msra.mxu0 %v1406
    %1529 = vmatprep.subr.bf16.mxu0 0
    %1530 = vmatpush1.bf16.msra.mxu0 %v1409
    %1531 = vmatprep.subr.bf16.mxu0 0
    %1532 = vmatpush1.bf16.msra.mxu0 %v1412
    %1533 = vmatprep.subr.bf16.mxu0 0
    %1534 = vmatpush1.bf16.msra.mxu0 %v1415
    %1535 = vmatprep.subr.bf16.mxu0 0
    %1536 = vmatpush1.bf16.msra.mxu0 %v1418
    %1537 = vmatprep.subr.bf16.mxu0 0
    %1538 = vmatpush1.bf16.msra.mxu0 %v1421
    %1539 = vmatprep.subr.bf16.mxu0 0
    %1540 = vmatpush1.bf16.msra.mxu0 %v1472
    %1541 = vmatprep.subr.bf16.mxu0 0
    %1542 = vmatpush1.bf16.msra.mxu0 0
    %1543 = vmatprep.subr.bf16.mxu0 0
    %1544 = vmatpush1.bf16.msra.mxu0 0
    %1545 = vmatprep.subr.bf16.mxu0 0
    %1546 = vmatpush1.bf16.msra.mxu0 0
    %1547 = vmatprep.mubr.bf16.mxu0 %v1463
    %1548 = vmatmul.mubr.bf16.gmra.mrb[0].mxu0 %v1252
    %v1549 = vpop.f32.mrb[0].mxu0
    %v1550 = vadd.f32 0.0, %v1549
    %v1551 = vpop.f32.mrb[0].mxu0
    %v1552 = vpop.f32.mrb[0].mxu0
    %v1553 = vpop.f32.mrb[0].mxu0
    %1554 = vdwg.mxu0
    %v1555 = vpack.c.b16 %v1240, %v1240
    %v1556 = vpack.c.b16 %v1241, %v1241
    %v1608 = vunpack.c.l.b16 %v1136
    %v1609 = vunpack.c.h.b16 %v1136
    %v1610 = vunpack.c.l.b16 %v1137
    %v1611 = vunpack.c.l.b16 %v1138
    %v1612 = vunpack.c.h.b16 %v1138
    %v1613 = vunpack.c.l.b16 %v1139
    %v1614 = vunpack.c.l.b16 %v1140
    %v1615 = vunpack.c.h.b16 %v1140
    %v1616 = vunpack.c.l.b16 %v1141
    %v1617 = vunpack.c.l.b16 %v1142
    %v1618 = vunpack.c.h.b16 %v1142
    %v1619 = vunpack.c.l.b16 %v1143
    %v1620 = vunpack.c.l.b16 %v1144
    %v1621 = vunpack.c.h.b16 %v1144
    %v1622 = vunpack.c.l.b16 %v1145
    %v1623 = vunpack.c.l.b16 %v1146
    %v1624 = vunpack.c.h.b16 %v1146
    %v1625 = vunpack.c.l.b16 %v1147
    %v1626 = vunpack.c.l.b16 %v1148
    %v1627 = vunpack.c.h.b16 %v1148
    %v1628 = vunpack.c.l.b16 %v1149
    %v1629 = vunpack.c.l.b16 %v1150
    %v1630 = vunpack.c.h.b16 %v1150
    %v1631 = vunpack.c.l.b16 %v1151
    %v1632 = vunpack.c.l.b16 %v1152
    %v1633 = vunpack.c.h.b16 %v1152
    %v1634 = vunpack.c.l.b16 %v1153
    %v1635 = vunpack.c.l.b16 %v1154
    %v1636 = vunpack.c.h.b16 %v1154
    %v1637 = vunpack.c.l.b16 %v1155
    %v1638 = vunpack.c.l.b16 %v1156
    %v1639 = vunpack.c.h.b16 %v1156
    %v1640 = vunpack.c.l.b16 %v1157
    %v1641 = vunpack.c.l.b16 %v1158
    %v1642 = vunpack.c.h.b16 %v1158
    %v1643 = vunpack.c.l.b16 %v1159
    %v1644 = vunpack.c.l.b16 %v1160
    %v1645 = vunpack.c.h.b16 %v1160
    %v1646 = vunpack.c.l.b16 %v1161
    %v1647 = vunpack.c.l.b16 %v1162
    %v1648 = vunpack.c.h.b16 %v1162
    %v1649 = vunpack.c.l.b16 %v1163
    %v1650 = vunpack.c.l.b16 %v1164
    %v1651 = vunpack.c.h.b16 %v1164
    %v1652 = vunpack.c.l.b16 %v1165
    %v1653 = vunpack.c.l.b16 %v1166
    %v1654 = vunpack.c.h.b16 %v1166
    %v1655 = vunpack.c.l.b16 %v1167
    %v1656 = vunpack.c.l.b16 %v1168
    %v1657 = vunpack.c.h.b16 %v1168
    %v1658 = vunpack.c.l.b16 %v1169
    %v1659 = vunpack.c.l.b16 %v1170
    %v1660 = vunpack.c.h.b16 %v1170
    %v1661 = vunpack.c.l.b16 %v1171
    %v1662 = vunpack.c.l.b16 %v1172
    %v1663 = vunpack.c.h.b16 %v1172
    %v1664 = vunpack.c.l.b16 %v1173
    %v1665 = vunpack.c.l.b16 %v1174
    %v1666 = vunpack.c.h.b16 %v1174
    %v1667 = vunpack.c.l.b16 %v1175
    %v1668 = vunpack.c.l.b16 %v1176
    %v1669 = vunpack.c.h.b16 %v1176
    %v1670 = vunpack.c.l.b16 %v1177
    %v1671 = vunpack.c.l.b16 %v1178
    %v1672 = vunpack.c.h.b16 %v1178
    %v1673 = vunpack.c.l.b16 %v1179
    %v1674 = vunpack.c.l.b16 %v1180
    %v1675 = vunpack.c.h.b16 %v1180
    %v1676 = vunpack.c.l.b16 %v1181
    %v1677 = vunpack.c.l.b16 %v1182
    %v1678 = vunpack.c.h.b16 %v1182
    %v1679 = vunpack.c.l.b16 %v1183
    %v1680 = vunpack.c.l.b16 %v1184
    %v1681 = vunpack.c.h.b16 %v1184
    %v1682 = vunpack.c.l.b16 %v1185
    %v1683 = vpack.c.b16 %v1611, %v1608
    %v1684 = vpack.c.b16 %v1612, %v1609
    %v1685 = vpack.c.b16 %v1613, %v1610
    %v1686 = vpack.c.b16 %v1617, %v1614
    %v1687 = vpack.c.b16 %v1618, %v1615
    %v1688 = vpack.c.b16 %v1619, %v1616
    %v1689 = vpack.c.b16 %v1623, %v1620
    %v1690 = vpack.c.b16 %v1624, %v1621
    %v1691 = vpack.c.b16 %v1625, %v1622
    %v1692 = vpack.c.b16 %v1629, %v1626
    %v1693 = vpack.c.b16 %v1630, %v1627
    %v1694 = vpack.c.b16 %v1631, %v1628
    %v1695 = vpack.c.b16 %v1635, %v1632
    %v1696 = vpack.c.b16 %v1636, %v1633
    %v1697 = vpack.c.b16 %v1637, %v1634
    %v1698 = vpack.c.b16 %v1641, %v1638
    %v1699 = vpack.c.b16 %v1642, %v1639
    %v1700 = vpack.c.b16 %v1643, %v1640
    %v1701 = vpack.c.b16 %v1647, %v1644
    %v1702 = vpack.c.b16 %v1648, %v1645
    %v1703 = vpack.c.b16 %v1649, %v1646
    %v1704 = vpack.c.b16 %v1653, %v1650
    %v1705 = vpack.c.b16 %v1654, %v1651
    %v1706 = vpack.c.b16 %v1655, %v1652
    %v1707 = vpack.c.b16 %v1659, %v1656
    %v1708 = vpack.c.b16 %v1660, %v1657
    %v1709 = vpack.c.b16 %v1661, %v1658
    %v1710 = vpack.c.b16 %v1665, %v1662
    %v1711 = vpack.c.b16 %v1666, %v1663
    %v1712 = vpack.c.b16 %v1667, %v1664
    %v1713 = vpack.c.b16 %v1671, %v1668
    %v1714 = vpack.c.b16 %v1672, %v1669
    %v1715 = vpack.c.b16 %v1673, %v1670
    %v1716 = vpack.c.b16 %v1677, %v1674
    %v1717 = vpack.c.b16 %v1678, %v1675
    %v1718 = vpack.c.b16 %v1679, %v1676
    %v1719 = vpack.c.b16 %v1680, %v1680
    %v1720 = vpack.c.b16 %v1681, %v1681
    %v1721 = vpack.c.b16 %v1682, %v1682
    %v1759 = vsel %vm1461, %v1556, 0
    %v1762 = vsel %vm37, %v1719, 0
    %v1765 = vsel %vm37, %v1720, 0
    %v1768 = vsel %vm37, %v1721, 0
    %1770 = vmatprep.subr.bf16.mxu0 %v1684
    %1771 = vmatpush1.bf16.msra.mxu0 %v1683
    %1772 = vmatprep.subr.bf16.mxu0 %v1687
    %1773 = vmatpush1.bf16.msra.mxu0 %v1686
    %1774 = vmatprep.subr.bf16.mxu0 %v1690
    %1775 = vmatpush1.bf16.msra.mxu0 %v1689
    %1776 = vmatprep.subr.bf16.mxu0 %v1693
    %1777 = vmatpush1.bf16.msra.mxu0 %v1692
    %1778 = vmatprep.subr.bf16.mxu0 %v1696
    %1779 = vmatpush1.bf16.msra.mxu0 %v1695
    %1780 = vmatprep.subr.bf16.mxu0 %v1699
    %1781 = vmatpush1.bf16.msra.mxu0 %v1698
    %1782 = vmatprep.subr.bf16.mxu0 %v1702
    %1783 = vmatpush1.bf16.msra.mxu0 %v1701
    %1784 = vmatprep.subr.bf16.mxu0 %v1705
    %1785 = vmatpush1.bf16.msra.mxu0 %v1704
    %1786 = vmatprep.subr.bf16.mxu0 %v1708
    %1787 = vmatpush1.bf16.msra.mxu0 %v1707
    %1788 = vmatprep.subr.bf16.mxu0 %v1711
    %1789 = vmatpush1.bf16.msra.mxu0 %v1710
    %1790 = vmatprep.subr.bf16.mxu0 %v1714
    %1791 = vmatpush1.bf16.msra.mxu0 %v1713
    %1792 = vmatprep.subr.bf16.mxu0 %v1717
    %1793 = vmatpush1.bf16.msra.mxu0 %v1716
    %1794 = vmatprep.subr.bf16.mxu0 %v1765
    %1795 = vmatpush1.bf16.msra.mxu0 %v1762
    %1796 = vmatprep.subr.bf16.mxu0 0
    %1797 = vmatpush1.bf16.msra.mxu0 0
    %1798 = vmatprep.subr.bf16.mxu0 0
    %1799 = vmatpush1.bf16.msra.mxu0 0
    %1800 = vmatprep.subr.bf16.mxu0 0
    %1801 = vmatpush1.bf16.msra.mxu0 0
    %1802 = vmatprep.mubr.bf16.mxu0 %v1759
    %1803 = vmatmul.mubr.bf16.gmra.mrb[0].mxu0 %v1555
    %v1804 = vpop.f32.mrb[0].mxu0
    %v1805 = vadd.f32 %v1509, %v1804
    %v1806 = vpop.f32.mrb[0].mxu0
    %v1807 = vadd.f32 %v1511, %v1806
    %v1808 = vpop.f32.mrb[0].mxu0
    %v1809 = vpop.f32.mrb[0].mxu0
    %1810 = vdwg.mxu0
    %1811 = vmatprep.subr.bf16.mxu0 0
    %1812 = vmatpush1.bf16.msra.mxu0 %v1685
    %1813 = vmatprep.subr.bf16.mxu0 0
    %1814 = vmatpush1.bf16.msra.mxu0 %v1688
    %1815 = vmatprep.subr.bf16.mxu0 0
    %1816 = vmatpush1.bf16.msra.mxu0 %v1691
    %1817 = vmatprep.subr.bf16.mxu0 0
    %1818 = vmatpush1.bf16.msra.mxu0 %v1694
    %1819 = vmatprep.subr.bf16.mxu0 0
    %1820 = vmatpush1.bf16.msra.mxu0 %v1697
    %1821 = vmatprep.subr.bf16.mxu0 0
    %1822 = vmatpush1.bf16.msra.mxu0 %v1700
    %1823 = vmatprep.subr.bf16.mxu0 0
    %1824 = vmatpush1.bf16.msra.mxu0 %v1703
    %1825 = vmatprep.subr.bf16.mxu0 0
    %1826 = vmatpush1.bf16.msra.mxu0 %v1706
    %1827 = vmatprep.subr.bf16.mxu0 0
    %1828 = vmatpush1.bf16.msra.mxu0 %v1709
    %1829 = vmatprep.subr.bf16.mxu0 0
    %1830 = vmatpush1.bf16.msra.mxu0 %v1712
    %1831 = vmatprep.subr.bf16.mxu0 0
    %1832 = vmatpush1.bf16.msra.mxu0 %v1715
    %1833 = vmatprep.subr.bf16.mxu0 0
    %1834 = vmatpush1.bf16.msra.mxu0 %v1718
    %1835 = vmatprep.subr.bf16.mxu0 0
    %1836 = vmatpush1.bf16.msra.mxu0 %v1768
    %1837 = vmatprep.subr.bf16.mxu0 0
    %1838 = vmatpush1.bf16.msra.mxu0 0
    %1839 = vmatprep.subr.bf16.mxu0 0
    %1840 = vmatpush1.bf16.msra.mxu0 0
    %1841 = vmatprep.subr.bf16.mxu0 0
    %1842 = vmatpush1.bf16.msra.mxu0 0
    %1843 = vmatprep.mubr.bf16.mxu0 %v1759
    %1844 = vmatmul.mubr.bf16.gmra.mrb[0].mxu0 %v1555
    %v1845 = vpop.f32.mrb[0].mxu0
    %v1846 = vadd.f32 %v1550, %v1845
    %v1847 = vpop.f32.mrb[0].mxu0
    %v1848 = vpop.f32.mrb[0].mxu0
    %v1849 = vpop.f32.mrb[0].mxu0
    %1850 = vdwg.mxu0
    %v1851 = vld [vmem:[#allocation2] sm:$0xee]
    %s1852 = scalar_lea.vmem %s3, 600
    %v1853 = vld [vmem:[%s1852] sm:$0xff]
    %v1854 = vld [vmem:[%s1852 + $0x8] sm:$0xf]
    %v1855 = vld [vmem:[%s1852 + $0xc] sm:$0xff]
    %v1856 = vld [vmem:[%s1852 + $0x14] sm:$0xf]
    %v1857 = vld [vmem:[%s1852 + $0x18] sm:$0xff]
    %v1858 = vld [vmem:[%s1852 + $0x20] sm:$0xf]
    %v1859 = vld [vmem:[%s1852 + $0x24] sm:$0xff]
    %v1860 = vld [vmem:[%s1852 + $0x2c] sm:$0xf]
    %v1861 = vld [vmem:[%s1852 + $0x30] sm:$0xff]
    %v1862 = vld [vmem:[%s1852 + $0x38] sm:$0xf]
    %v1863 = vld [vmem:[%s1852 + $0x3c] sm:$0xff]
    %v1864 = vld [vmem:[%s1852 + $0x44] sm:$0xf]
    %v1865 = vld [vmem:[%s1852 + $0x48] sm:$0xff]
    %v1866 = vld [vmem:[%s1852 + $0x50] sm:$0xf]
    %v1867 = vld [vmem:[%s1852 + $0x54] sm:$0xff]
    %v1868 = vld [vmem:[%s1852 + $0x5c] sm:$0xf]
    %v1869 = vld [vmem:[%s1852 + $0x60] sm:$0xff]
    %v1870 = vld [vmem:[%s1852 + $0x68] sm:$0xf]
    %v1871 = vld [vmem:[%s1852 + $0x6c] sm:$0xff]
    %v1872 = vld [vmem:[%s1852 + $0x74] sm:$0xf]
    %v1873 = vld [vmem:[%s1852 + $0x78] sm:$0xff]
    %v1874 = vld [vmem:[%s1852 + $0x80] sm:$0xf]
    %v1875 = vld [vmem:[%s1852 + $0x84] sm:$0xff]
    %v1876 = vld [vmem:[%s1852 + $0x8c] sm:$0xf]
    %v1877 = vld [vmem:[%s1852 + $0x90] sm:$0xff]
    %v1878 = vld [vmem:[%s1852 + $0x98] sm:$0xf]
    %v1879 = vld [vmem:[%s1852 + $0x9c] sm:$0xff]
    %v1880 = vld [vmem:[%s1852 + $0xa4] sm:$0xf]
    %v1881 = vld [vmem:[%s1852 + $0xa8] sm:$0xff]
    %v1882 = vld [vmem:[%s1852 + $0xb0] sm:$0xf]
    %v1883 = vld [vmem:[%s1852 + $0xb4] sm:$0xff]
    %v1884 = vld [vmem:[%s1852 + $0xbc] sm:$0xf]
    %v1885 = vld [vmem:[%s1852 + $0xc0] sm:$0xff]
    %v1886 = vld [vmem:[%s1852 + $0xc8] sm:$0xf]
    %v1887 = vld [vmem:[%s1852 + $0xcc] sm:$0xff]
    %v1888 = vld [vmem:[%s1852 + $0xd4] sm:$0xf]
    %v1889 = vld [vmem:[%s1852 + $0xd8] sm:$0xff]
    %v1890 = vld [vmem:[%s1852 + $0xe0] sm:$0xf]
    %v1891 = vld [vmem:[%s1852 + $0xe4] sm:$0xff]
    %v1892 = vld [vmem:[%s1852 + $0xec] sm:$0xf]
    %v1893 = vld [vmem:[%s1852 + $0xf0] sm:$0xff]
    %v1894 = vld [vmem:[%s1852 + $0xf8] sm:$0xf]
    %v1895 = vld [vmem:[%s1852 + $0xfc] sm:$0xff]
    %v1896 = vld [vmem:[%s1852 + $0x104] sm:$0xf]
    %v1897 = vld [vmem:[%s1852 + $0x108] sm:$0xff]
    %v1898 = vld [vmem:[%s1852 + $0x110] sm:$0xf]
    %v1899 = vld [vmem:[%s1852 + $0x114] sm:$0xff]
    %v1900 = vld [vmem:[%s1852 + $0x11c] sm:$0xf]
    %v1901 = vld [vmem:[%s1852 + $0x120] sm:$0xff]
    %v1902 = vld [vmem:[%s1852 + $0x128] sm:$0xf]
    %v1904 = vunpack.c.l.b16 %v1851
    %v1905 = vunpack.c.h.b16 %v1851
    %v1906 = vpack.c.b16 %v1242, %v1904
    %v1907 = vpack.c.b16 %v1243, %v1905
    %v1908 = vrot.slane %v1906, 1
    %v1909 = vrot.slane %v1907, 1
    %v1961 = vunpack.c.l.b16 %v1853
    %v1962 = vunpack.c.h.b16 %v1853
    %v1963 = vunpack.c.l.b16 %v1854
    %v1964 = vunpack.c.l.b16 %v1855
    %v1965 = vunpack.c.h.b16 %v1855
    %v1966 = vunpack.c.l.b16 %v1856
    %v1967 = vunpack.c.l.b16 %v1857
    %v1968 = vunpack.c.h.b16 %v1857
    %v1969 = vunpack.c.l.b16 %v1858
    %v1970 = vunpack.c.l.b16 %v1859
    %v1971 = vunpack.c.h.b16 %v1859
    %v1972 = vunpack.c.l.b16 %v1860
    %v1973 = vunpack.c.l.b16 %v1861
    %v1974 = vunpack.c.h.b16 %v1861
    %v1975 = vunpack.c.l.b16 %v1862
    %v1976 = vunpack.c.l.b16 %v1863
    %v1977 = vunpack.c.h.b16 %v1863
    %v1978 = vunpack.c.l.b16 %v1864
    %v1979 = vunpack.c.l.b16 %v1865
    %v1980 = vunpack.c.h.b16 %v1865
    %v1981 = vunpack.c.l.b16 %v1866
    %v1982 = vunpack.c.l.b16 %v1867
    %v1983 = vunpack.c.h.b16 %v1867
    %v1984 = vunpack.c.l.b16 %v1868
    %v1985 = vunpack.c.l.b16 %v1869
    %v1986 = vunpack.c.h.b16 %v1869
    %v1987 = vunpack.c.l.b16 %v1870
    %v1988 = vunpack.c.l.b16 %v1871
    %v1989 = vunpack.c.h.b16 %v1871
    %v1990 = vunpack.c.l.b16 %v1872
    %v1991 = vunpack.c.l.b16 %v1873
    %v1992 = vunpack.c.h.b16 %v1873
    %v1993 = vunpack.c.l.b16 %v1874
    %v1994 = vunpack.c.l.b16 %v1875
    %v1995 = vunpack.c.h.b16 %v1875
    %v1996 = vunpack.c.l.b16 %v1876
    %v1997 = vunpack.c.l.b16 %v1877
    %v1998 = vunpack.c.h.b16 %v1877
    %v1999 = vunpack.c.l.b16 %v1878
    %v2000 = vunpack.c.l.b16 %v1879
    %v2001 = vunpack.c.h.b16 %v1879
    %v2002 = vunpack.c.l.b16 %v1880
    %v2003 = vunpack.c.l.b16 %v1881
    %v2004 = vunpack.c.h.b16 %v1881
    %v2005 = vunpack.c.l.b16 %v1882
    %v2006 = vunpack.c.l.b16 %v1883
    %v2007 = vunpack.c.h.b16 %v1883
    %v2008 = vunpack.c.l.b16 %v1884
    %v2009 = vunpack.c.l.b16 %v1885
    %v2010 = vunpack.c.h.b16 %v1885
    %v2011 = vunpack.c.l.b16 %v1886
    %v2012 = vunpack.c.l.b16 %v1887
    %v2013 = vunpack.c.h.b16 %v1887
    %v2014 = vunpack.c.l.b16 %v1888
    %v2015 = vunpack.c.l.b16 %v1889
    %v2016 = vunpack.c.h.b16 %v1889
    %v2017 = vunpack.c.l.b16 %v1890
    %v2018 = vunpack.c.l.b16 %v1891
    %v2019 = vunpack.c.h.b16 %v1891
    %v2020 = vunpack.c.l.b16 %v1892
    %v2021 = vunpack.c.l.b16 %v1893
    %v2022 = vunpack.c.h.b16 %v1893
    %v2023 = vunpack.c.l.b16 %v1894
    %v2024 = vunpack.c.l.b16 %v1895
    %v2025 = vunpack.c.h.b16 %v1895
    %v2026 = vunpack.c.l.b16 %v1896
    %v2027 = vunpack.c.l.b16 %v1897
    %v2028 = vunpack.c.h.b16 %v1897
    %v2029 = vunpack.c.l.b16 %v1898
    %v2030 = vunpack.c.l.b16 %v1899
    %v2031 = vunpack.c.h.b16 %v1899
    %v2032 = vunpack.c.l.b16 %v1900
    %v2033 = vunpack.c.l.b16 %v1901
    %v2034 = vunpack.c.h.b16 %v1901
    %v2035 = vunpack.c.l.b16 %v1902
    %v2036 = vpack.c.b16 %v1964, %v1961
    %v2037 = vpack.c.b16 %v1965, %v1962
    %v2038 = vpack.c.b16 %v1966, %v1963
    %v2039 = vpack.c.b16 %v1970, %v1967
    %v2040 = vpack.c.b16 %v1971, %v1968
    %v2041 = vpack.c.b16 %v1972, %v1969
    %v2042 = vpack.c.b16 %v1976, %v1973
    %v2043 = vpack.c.b16 %v1977, %v1974
    %v2044 = vpack.c.b16 %v1978, %v1975
    %v2045 = vpack.c.b16 %v1982, %v1979
    %v2046 = vpack.c.b16 %v1983, %v1980
    %v2047 = vpack.c.b16 %v1984, %v1981
    %v2048 = vpack.c.b16 %v1988, %v1985
    %v2049 = vpack.c.b16 %v1989, %v1986
    %v2050 = vpack.c.b16 %v1990, %v1987
    %v2051 = vpack.c.b16 %v1994, %v1991
    %v2052 = vpack.c.b16 %v1995, %v1992
    %v2053 = vpack.c.b16 %v1996, %v1993
    %v2054 = vpack.c.b16 %v2000, %v1997
    %v2055 = vpack.c.b16 %v2001, %v1998
    %v2056 = vpack.c.b16 %v2002, %v1999
    %v2057 = vpack.c.b16 %v2006, %v2003
    %v2058 = vpack.c.b16 %v2007, %v2004
    %v2059 = vpack.c.b16 %v2008, %v2005
    %v2060 = vpack.c.b16 %v2012, %v2009
    %v2061 = vpack.c.b16 %v2013, %v2010
    %v2062 = vpack.c.b16 %v2014, %v2011
    %v2063 = vpack.c.b16 %v2018, %v2015
    %v2064 = vpack.c.b16 %v2019, %v2016
    %v2065 = vpack.c.b16 %v2020, %v2017
    %v2066 = vpack.c.b16 %v2024, %v2021
    %v2067 = vpack.c.b16 %v2025, %v2022
    %v2068 = vpack.c.b16 %v2026, %v2023
    %v2069 = vpack.c.b16 %v2030, %v2027
    %v2070 = vpack.c.b16 %v2031, %v2028
    %v2071 = vpack.c.b16 %v2032, %v2029
    %v2072 = vpack.c.b16 %v2033, %v2033
    %v2073 = vpack.c.b16 %v2034, %v2034
    %v2074 = vpack.c.b16 %v2035, %v2035
    %v2112 = vsel %vm1461, %v1909, 0
    %v2115 = vsel %vm37, %v2072, 0
    %v2118 = vsel %vm37, %v2073, 0
    %v2121 = vsel %vm37, %v2074, 0
    %2123 = vmatprep.subr.bf16.mxu0 %v2037
    %2124 = vmatpush1.bf16.msra.mxu0 %v2036
    %2125 = vmatprep.subr.bf16.mxu0 %v2040
    %2126 = vmatpush1.bf16.msra.mxu0 %v2039
    %2127 = vmatprep.subr.bf16.mxu0 %v2043
    %2128 = vmatpush1.bf16.msra.mxu0 %v2042
    %2129 = vmatprep.subr.bf16.mxu0 %v2046
    %2130 = vmatpush1.bf16.msra.mxu0 %v2045
    %2131 = vmatprep.subr.bf16.mxu0 %v2049
    %2132 = vmatpush1.bf16.msra.mxu0 %v2048
    %2133 = vmatprep.subr.bf16.mxu0 %v2052
    %2134 = vmatpush1.bf16.msra.mxu0 %v2051
    %2135 = vmatprep.subr.bf16.mxu0 %v2055
    %2136 = vmatpush1.bf16.msra.mxu0 %v2054
    %2137 = vmatprep.subr.bf16.mxu0 %v2058
    %2138 = vmatpush1.bf16.msra.mxu0 %v2057
    %2139 = vmatprep.subr.bf16.mxu0 %v2061
    %2140 = vmatpush1.bf16.msra.mxu0 %v2060
    %2141 = vmatprep.subr.bf16.mxu0 %v2064
    %2142 = vmatpush1.bf16.msra.mxu0 %v2063
    %2143 = vmatprep.subr.bf16.mxu0 %v2067
    %2144 = vmatpush1.bf16.msra.mxu0 %v2066
    %2145 = vmatprep.subr.bf16.mxu0 %v2070
    %2146 = vmatpush1.bf16.msra.mxu0 %v2069
    %2147 = vmatprep.subr.bf16.mxu0 %v2118
    %2148 = vmatpush1.bf16.msra.mxu0 %v2115
    %2149 = vmatprep.subr.bf16.mxu0 0
    %2150 = vmatpush1.bf16.msra.mxu0 0
    %2151 = vmatprep.subr.bf16.mxu0 0
    %2152 = vmatpush1.bf16.msra.mxu0 0
    %2153 = vmatprep.subr.bf16.mxu0 0
    %2154 = vmatpush1.bf16.msra.mxu0 0
    %2155 = vmatprep.mubr.bf16.mxu0 %v2112
    %2156 = vmatmul.mubr.bf16.gmra.mrb[0].mxu0 %v1908
    %v2157 = vpop.f32.mrb[0].mxu0
    %v2158 = vadd.f32 0.0, %v2157
    %v2159 = vpop.f32.mrb[0].mxu0
    %v2160 = vadd.f32 0.0, %v2159
    %v2161 = vpop.f32.mrb[0].mxu0
    %v2162 = vpop.f32.mrb[0].mxu0
    %2163 = vdwg.mxu0
    %2164 = vmatprep.subr.bf16.mxu0 0
    %2165 = vmatpush1.bf16.msra.mxu0 %v2038
    %2166 = vmatprep.subr.bf16.mxu0 0
    %2167 = vmatpush1.bf16.msra.mxu0 %v2041
    %2168 = vmatprep.subr.bf16.mxu0 0
    %2169 = vmatpush1.bf16.msra.mxu0 %v2044
    %2170 = vmatprep.subr.bf16.mxu0 0
    %2171 = vmatpush1.bf16.msra.mxu0 %v2047
    %2172 = vmatprep.subr.bf16.mxu0 0
    %2173 = vmatpush1.bf16.msra.mxu0 %v2050
    %2174 = vmatprep.subr.bf16.mxu0 0
    %2175 = vmatpush1.bf16.msra.mxu0 %v2053
    %2176 = vmatprep.subr.bf16.mxu0 0
    %2177 = vmatpush1.bf16.msra.mxu0 %v2056
    %2178 = vmatprep.subr.bf16.mxu0 0
    %2179 = vmatpush1.bf16.msra.mxu0 %v2059
    %2180 = vmatprep.subr.bf16.mxu0 0
    %2181 = vmatpush1.bf16.msra.mxu0 %v2062
    %2182 = vmatprep.subr.bf16.mxu0 0
    %2183 = vmatpush1.bf16.msra.mxu0 %v2065
    %2184 = vmatprep.subr.bf16.mxu0 0
    %2185 = vmatpush1.bf16.msra.mxu0 %v2068
    %2186 = vmatprep.subr.bf16.mxu0 0
    %2187 = vmatpush1.bf16.msra.mxu0 %v2071
    %2188 = vmatprep.subr.bf16.mxu0 0
    %2189 = vmatpush1.bf16.msra.mxu0 %v2121
    %2190 = vmatprep.subr.bf16.mxu0 0
    %2191 = vmatpush1.bf16.msra.mxu0 0
    %2192 = vmatprep.subr.bf16.mxu0 0
    %2193 = vmatpush1.bf16.msra.mxu0 0
    %2194 = vmatprep.subr.bf16.mxu0 0
    %2195 = vmatpush1.bf16.msra.mxu0 0
    %2196 = vmatprep.mubr.bf16.mxu0 %v2112
    %2197 = vmatmul.mubr.bf16.gmra.mrb[0].mxu0 %v1908
    %v2198 = vpop.f32.mrb[0].mxu0
    %v2199 = vadd.f32 0.0, %v2198
    %v2200 = vpop.f32.mrb[0].mxu0
    %v2201 = vpop.f32.mrb[0].mxu0
    %v2202 = vpop.f32.mrb[0].mxu0
    %2203 = vdwg.mxu0
    %v2204 = vadd.f32 %v1805, %v2158
    %v2205 = vadd.f32 %v1807, %v2160
    %v2206 = vadd.f32 %v1846, %v2199
    %v2207 = vld [vmem:[#allocation2 + $0x8] sm:$0x33]
    %s2208 = scalar_lea.vmem %s3, 900
    %v2209 = vld [vmem:[%s2208] sm:$0xff]
    %v2210 = vld [vmem:[%s2208 + $0x8] sm:$0xf]
    %v2211 = vld [vmem:[%s2208 + $0xc] sm:$0xff]
    %v2212 = vld [vmem:[%s2208 + $0x14] sm:$0xf]
    %v2213 = vld [vmem:[%s2208 + $0x18] sm:$0xff]
    %v2214 = vld [vmem:[%s2208 + $0x20] sm:$0xf]
    %v2215 = vld [vmem:[%s2208 + $0x24] sm:$0xff]
    %v2216 = vld [vmem:[%s2208 + $0x2c] sm:$0xf]
    %v2217 = vld [vmem:[%s2208 + $0x30] sm:$0xff]
    %v2218 = vld [vmem:[%s2208 + $0x38] sm:$0xf]
    %v2219 = vld [vmem:[%s2208 + $0x3c] sm:$0xff]
    %v2220 = vld [vmem:[%s2208 + $0x44] sm:$0xf]
    %v2221 = vld [vmem:[%s2208 + $0x48] sm:$0xff]
    %v2222 = vld [vmem:[%s2208 + $0x50] sm:$0xf]
    %v2223 = vld [vmem:[%s2208 + $0x54] sm:$0xff]
    %v2224 = vld [vmem:[%s2208 + $0x5c] sm:$0xf]
    %v2225 = vld [vmem:[%s2208 + $0x60] sm:$0xff]
    %v2226 = vld [vmem:[%s2208 + $0x68] sm:$0xf]
    %v2227 = vld [vmem:[%s2208 + $0x6c] sm:$0xff]
    %v2228 = vld [vmem:[%s2208 + $0x74] sm:$0xf]
    %v2229 = vld [vmem:[%s2208 + $0x78] sm:$0xff]
    %v2230 = vld [vmem:[%s2208 + $0x80] sm:$0xf]
    %v2231 = vld [vmem:[%s2208 + $0x84] sm:$0xff]
    %v2232 = vld [vmem:[%s2208 + $0x8c] sm:$0xf]
    %v2233 = vld [vmem:[%s2208 + $0x90] sm:$0xff]
    %v2234 = vld [vmem:[%s2208 + $0x98] sm:$0xf]
    %v2235 = vld [vmem:[%s2208 + $0x9c] sm:$0xff]
    %v2236 = vld [vmem:[%s2208 + $0xa4] sm:$0xf]
    %v2237 = vld [vmem:[%s2208 + $0xa8] sm:$0xff]
    %v2238 = vld [vmem:[%s2208 + $0xb0] sm:$0xf]
    %v2239 = vld [vmem:[%s2208 + $0xb4] sm:$0xff]
    %v2240 = vld [vmem:[%s2208 + $0xbc] sm:$0xf]
    %v2241 = vld [vmem:[%s2208 + $0xc0] sm:$0xff]
    %v2242 = vld [vmem:[%s2208 + $0xc8] sm:$0xf]
    %v2243 = vld [vmem:[%s2208 + $0xcc] sm:$0xff]
    %v2244 = vld [vmem:[%s2208 + $0xd4] sm:$0xf]
    %v2245 = vld [vmem:[%s2208 + $0xd8] sm:$0xff]
    %v2246 = vld [vmem:[%s2208 + $0xe0] sm:$0xf]
    %v2247 = vld [vmem:[%s2208 + $0xe4] sm:$0xff]
    %v2248 = vld [vmem:[%s2208 + $0xec] sm:$0xf]
    %v2249 = vld [vmem:[%s2208 + $0xf0] sm:$0xff]
    %v2250 = vld [vmem:[%s2208 + $0xf8] sm:$0xf]
    %v2251 = vld [vmem:[%s2208 + $0xfc] sm:$0xff]
    %v2252 = vld [vmem:[%s2208 + $0x104] sm:$0xf]
    %v2253 = vld [vmem:[%s2208 + $0x108] sm:$0xff]
    %v2254 = vld [vmem:[%s2208 + $0x110] sm:$0xf]
    %v2255 = vld [vmem:[%s2208 + $0x114] sm:$0xff]
    %v2256 = vld [vmem:[%s2208 + $0x11c] sm:$0xf]
    %v2257 = vld [vmem:[%s2208 + $0x120] sm:$0xff]
    %v2258 = vld [vmem:[%s2208 + $0x128] sm:$0xf]
    %v2260 = vunpack.c.l.b16 %v2207
    %v2261 = vunpack.c.h.b16 %v2207
    %v2262 = vpack.c.b16 %v2260, %v1904
    %v2263 = vpack.c.b16 %v2261, %v1905
    %v2265 = vshrl.u32 %v2262, 16
    %v2267 = vrot.slane %v2265, 1
    %v2268 = vshll.u32 %v2262, 16
    %v2270 = vrot.slane %v2268, 2
    %v2271 = vor.u32 %v2267, %v2270
    %v2273 = vshrl.u32 %v2263, 16
    %v2275 = vrot.slane %v2273, 1
    %v2276 = vshll.u32 %v2263, 16
    %v2278 = vrot.slane %v2276, 2
    %v2279 = vor.u32 %v2275, %v2278
    %v2331 = vunpack.c.l.b16 %v2209
    %v2332 = vunpack.c.h.b16 %v2209
    %v2333 = vunpack.c.l.b16 %v2210
    %v2334 = vunpack.c.l.b16 %v2211
    %v2335 = vunpack.c.h.b16 %v2211
    %v2336 = vunpack.c.l.b16 %v2212
    %v2337 = vunpack.c.l.b16 %v2213
    %v2338 = vunpack.c.h.b16 %v2213
    %v2339 = vunpack.c.l.b16 %v2214
    %v2340 = vunpack.c.l.b16 %v2215
    %v2341 = vunpack.c.h.b16 %v2215
    %v2342 = vunpack.c.l.b16 %v2216
    %v2343 = vunpack.c.l.b16 %v2217
    %v2344 = vunpack.c.h.b16 %v2217
    %v2345 = vunpack.c.l.b16 %v2218
    %v2346 = vunpack.c.l.b16 %v2219
    %v2347 = vunpack.c.h.b16 %v2219
    %v2348 = vunpack.c.l.b16 %v2220
    %v2349 = vunpack.c.l.b16 %v2221
    %v2350 = vunpack.c.h.b16 %v2221
    %v2351 = vunpack.c.l.b16 %v2222
    %v2352 = vunpack.c.l.b16 %v2223
    %v2353 = vunpack.c.h.b16 %v2223
    %v2354 = vunpack.c.l.b16 %v2224
    %v2355 = vunpack.c.l.b16 %v2225
    %v2356 = vunpack.c.h.b16 %v2225
    %v2357 = vunpack.c.l.b16 %v2226
    %v2358 = vunpack.c.l.b16 %v2227
    %v2359 = vunpack.c.h.b16 %v2227
    %v2360 = vunpack.c.l.b16 %v2228
    %v2361 = vunpack.c.l.b16 %v2229
    %v2362 = vunpack.c.h.b16 %v2229
    %v2363 = vunpack.c.l.b16 %v2230
    %v2364 = vunpack.c.l.b16 %v2231
    %v2365 = vunpack.c.h.b16 %v2231
    %v2366 = vunpack.c.l.b16 %v2232
    %v2367 = vunpack.c.l.b16 %v2233
    %v2368 = vunpack.c.h.b16 %v2233
    %v2369 = vunpack.c.l.b16 %v2234
    %v2370 = vunpack.c.l.b16 %v2235
    %v2371 = vunpack.c.h.b16 %v2235
    %v2372 = vunpack.c.l.b16 %v2236
    %v2373 = vunpack.c.l.b16 %v2237
    %v2374 = vunpack.c.h.b16 %v2237
    %v2375 = vunpack.c.l.b16 %v2238
    %v2376 = vunpack.c.l.b16 %v2239
    %v2377 = vunpack.c.h.b16 %v2239
    %v2378 = vunpack.c.l.b16 %v2240
    %v2379 = vunpack.c.l.b16 %v2241
    %v2380 = vunpack.c.h.b16 %v2241
    %v2381 = vunpack.c.l.b16 %v2242
    %v2382 = vunpack.c.l.b16 %v2243
    %v2383 = vunpack.c.h.b16 %v2243
    %v2384 = vunpack.c.l.b16 %v2244
    %v2385 = vunpack.c.l.b16 %v2245
    %v2386 = vunpack.c.h.b16 %v2245
    %v2387 = vunpack.c.l.b16 %v2246
    %v2388 = vunpack.c.l.b16 %v2247
    %v2389 = vunpack.c.h.b16 %v2247
    %v2390 = vunpack.c.l.b16 %v2248
    %v2391 = vunpack.c.l.b16 %v2249
    %v2392 = vunpack.c.h.b16 %v2249
    %v2393 = vunpack.c.l.b16 %v2250
    %v2394 = vunpack.c.l.b16 %v2251
    %v2395 = vunpack.c.h.b16 %v2251
    %v2396 = vunpack.c.l.b16 %v2252
    %v2397 = vunpack.c.l.b16 %v2253
    %v2398 = vunpack.c.h.b16 %v2253
    %v2399 = vunpack.c.l.b16 %v2254
    %v2400 = vunpack.c.l.b16 %v2255
    %v2401 = vunpack.c.h.b16 %v2255
    %v2402 = vunpack.c.l.b16 %v2256
    %v2403 = vunpack.c.l.b16 %v2257
    %v2404 = vunpack.c.h.b16 %v2257
    %v2405 = vunpack.c.l.b16 %v2258
    %v2406 = vpack.c.b16 %v2334, %v2331
    %v2407 = vpack.c.b16 %v2335, %v2332
    %v2408 = vpack.c.b16 %v2336, %v2333
    %v2409 = vpack.c.b16 %v2340, %v2337
    %v2410 = vpack.c.b16 %v2341, %v2338
    %v2411 = vpack.c.b16 %v2342, %v2339
    %v2412 = vpack.c.b16 %v2346, %v2343
    %v2413 = vpack.c.b16 %v2347, %v2344
    %v2414 = vpack.c.b16 %v2348, %v2345
    %v2415 = vpack.c.b16 %v2352, %v2349
    %v2416 = vpack.c.b16 %v2353, %v2350
    %v2417 = vpack.c.b16 %v2354, %v2351
    %v2418 = vpack.c.b16 %v2358, %v2355
    %v2419 = vpack.c.b16 %v2359, %v2356
    %v2420 = vpack.c.b16 %v2360, %v2357
    %v2421 = vpack.c.b16 %v2364, %v2361
    %v2422 = vpack.c.b16 %v2365, %v2362
    %v2423 = vpack.c.b16 %v2366, %v2363
    %v2424 = vpack.c.b16 %v2370, %v2367
    %v2425 = vpack.c.b16 %v2371, %v2368
    %v2426 = vpack.c.b16 %v2372, %v2369
    %v2427 = vpack.c.b16 %v2376, %v2373
    %v2428 = vpack.c.b16 %v2377, %v2374
    %v2429 = vpack.c.b16 %v2378, %v2375
    %v2430 = vpack.c.b16 %v2382, %v2379
    %v2431 = vpack.c.b16 %v2383, %v2380
    %v2432 = vpack.c.b16 %v2384, %v2381
    %v2433 = vpack.c.b16 %v2388, %v2385
    %v2434 = vpack.c.b16 %v2389, %v2386
    %v2435 = vpack.c.b16 %v2390, %v2387
    %v2436 = vpack.c.b16 %v2394, %v2391
    %v2437 = vpack.c.b16 %v2395, %v2392
    %v2438 = vpack.c.b16 %v2396, %v2393
    %v2439 = vpack.c.b16 %v2400, %v2397
    %v2440 = vpack.c.b16 %v2401, %v2398
    %v2441 = vpack.c.b16 %v2402, %v2399
    %v2442 = vpack.c.b16 %v2403, %v2403
    %v2443 = vpack.c.b16 %v2404, %v2404
    %v2444 = vpack.c.b16 %v2405, %v2405
    %v2482 = vsel %vm1461, %v2279, 0
    %v2485 = vsel %vm37, %v2442, 0
    %v2488 = vsel %vm37, %v2443, 0
    %v2491 = vsel %vm37, %v2444, 0
    %2493 = vmatprep.subr.bf16.mxu0 %v2407
    %2494 = vmatpush1.bf16.msra.mxu0 %v2406
    %2495 = vmatprep.subr.bf16.mxu0 %v2410
    %2496 = vmatpush1.bf16.msra.mxu0 %v2409
    %2497 = vmatprep.subr.bf16.mxu0 %v2413
    %2498 = vmatpush1.bf16.msra.mxu0 %v2412
    %2499 = vmatprep.subr.bf16.mxu0 %v2416
    %2500 = vmatpush1.bf16.msra.mxu0 %v2415
    %2501 = vmatprep.subr.bf16.mxu0 %v2419
    %2502 = vmatpush1.bf16.msra.mxu0 %v2418
    %2503 = vmatprep.subr.bf16.mxu0 %v2422
    %2504 = vmatpush1.bf16.msra.mxu0 %v2421
    %2505 = vmatprep.subr.bf16.mxu0 %v2425
    %2506 = vmatpush1.bf16.msra.mxu0 %v2424
    %2507 = vmatprep.subr.bf16.mxu0 %v2428
    %2508 = vmatpush1.bf16.msra.mxu0 %v2427
    %2509 = vmatprep.subr.bf16.mxu0 %v2431
    %2510 = vmatpush1.bf16.msra.mxu0 %v2430
    %2511 = vmatprep.subr.bf16.mxu0 %v2434
    %2512 = vmatpush1.bf16.msra.mxu0 %v2433
    %2513 = vmatprep.subr.bf16.mxu0 %v2437
    %2514 = vmatpush1.bf16.msra.mxu0 %v2436
    %2515 = vmatprep.subr.bf16.mxu0 %v2440
    %2516 = vmatpush1.bf16.msra.mxu0 %v2439
    %2517 = vmatprep.subr.bf16.mxu0 %v2488
    %2518 = vmatpush1.bf16.msra.mxu0 %v2485
    %2519 = vmatprep.subr.bf16.mxu0 0
    %2520 = vmatpush1.bf16.msra.mxu0 0
    %2521 = vmatprep.subr.bf16.mxu0 0
    %2522 = vmatpush1.bf16.msra.mxu0 0
    %2523 = vmatprep.subr.bf16.mxu0 0
    %2524 = vmatpush1.bf16.msra.mxu0 0
    %2525 = vmatprep.mubr.bf16.mxu0 %v2482
    %2526 = vmatmul.mubr.bf16.gmra.mrb[0].mxu0 %v2271
    %v2527 = vpop.f32.mrb[0].mxu0
    %v2528 = vadd.f32 0.0, %v2527
    %v2529 = vpop.f32.mrb[0].mxu0
    %v2530 = vadd.f32 0.0, %v2529
    %v2531 = vpop.f32.mrb[0].mxu0
    %v2532 = vpop.f32.mrb[0].mxu0
    %2533 = vdwg.mxu0
    %2534 = vmatprep.subr.bf16.mxu0 0
    %2535 = vmatpush1.bf16.msra.mxu0 %v2408
    %2536 = vmatprep.subr.bf16.mxu0 0
    %2537 = vmatpush1.bf16.msra.mxu0 %v2411
    %2538 = vmatprep.subr.bf16.mxu0 0
    %2539 = vmatpush1.bf16.msra.mxu0 %v2414
    %2540 = vmatprep.subr.bf16.mxu0 0
    %2541 = vmatpush1.bf16.msra.mxu0 %v2417
    %2542 = vmatprep.subr.bf16.mxu0 0
    %2543 = vmatpush1.bf16.msra.mxu0 %v2420
    %2544 = vmatprep.subr.bf16.mxu0 0
    %2545 = vmatpush1.bf16.msra.mxu0 %v2423
    %2546 = vmatprep.subr.bf16.mxu0 0
    %2547 = vmatpush1.bf16.msra.mxu0 %v2426
    %2548 = vmatprep.subr.bf16.mxu0 0
    %2549 = vmatpush1.bf16.msra.mxu0 %v2429
    %2550 = vmatprep.subr.bf16.mxu0 0
    %2551 = vmatpush1.bf16.msra.mxu0 %v2432
    %2552 = vmatprep.subr.bf16.mxu0 0
    %2553 = vmatpush1.bf16.msra.mxu0 %v2435
    %2554 = vmatprep.subr.bf16.mxu0 0
    %2555 = vmatpush1.bf16.msra.mxu0 %v2438
    %2556 = vmatprep.subr.bf16.mxu0 0
    %2557 = vmatpush1.bf16.msra.mxu0 %v2441
    %2558 = vmatprep.subr.bf16.mxu0 0
    %2559 = vmatpush1.bf16.msra.mxu0 %v2491
    %2560 = vmatprep.subr.bf16.mxu0 0
    %2561 = vmatpush1.bf16.msra.mxu0 0
    %2562 = vmatprep.subr.bf16.mxu0 0
    %2563 = vmatpush1.bf16.msra.mxu0 0
    %2564 = vmatprep.subr.bf16.mxu0 0
    %2565 = vmatpush1.bf16.msra.mxu0 0
    %2566 = vmatprep.mubr.bf16.mxu0 %v2482
    %2567 = vmatmul.mubr.bf16.gmra.mrb[0].mxu0 %v2271
    %v2568 = vpop.f32.mrb[0].mxu0
    %v2569 = vadd.f32 0.0, %v2568
    %v2570 = vpop.f32.mrb[0].mxu0
    %v2571 = vpop.f32.mrb[0].mxu0
    %v2572 = vpop.f32.mrb[0].mxu0
    %2573 = vdwg.mxu0
    %v2574 = vadd.f32 %v2204, %v2528
    %v2575 = vadd.f32 %v2205, %v2530
    %v2576 = vadd.f32 %v2206, %v2569
    %v2577 = vld [vmem:[#allocation2] sm:$0xcc]
    %s2578 = scalar_lea.vmem %s3, 1200
    %v2579 = vld [vmem:[%s2578] sm:$0xff]
    %v2580 = vld [vmem:[%s2578 + $0x8] sm:$0xf]
    %v2581 = vld [vmem:[%s2578 + $0xc] sm:$0xff]
    %v2582 = vld [vmem:[%s2578 + $0x14] sm:$0xf]
    %v2583 = vld [vmem:[%s2578 + $0x18] sm:$0xff]
    %v2584 = vld [vmem:[%s2578 + $0x20] sm:$0xf]
    %v2585 = vld [vmem:[%s2578 + $0x24] sm:$0xff]
    %v2586 = vld [vmem:[%s2578 + $0x2c] sm:$0xf]
    %v2587 = vld [vmem:[%s2578 + $0x30] sm:$0xff]
    %v2588 = vld [vmem:[%s2578 + $0x38] sm:$0xf]
    %v2589 = vld [vmem:[%s2578 + $0x3c] sm:$0xff]
    %v2590 = vld [vmem:[%s2578 + $0x44] sm:$0xf]
    %v2591 = vld [vmem:[%s2578 + $0x48] sm:$0xff]
    %v2592 = vld [vmem:[%s2578 + $0x50] sm:$0xf]
    %v2593 = vld [vmem:[%s2578 + $0x54] sm:$0xff]
    %v2594 = vld [vmem:[%s2578 + $0x5c] sm:$0xf]
    %v2595 = vld [vmem:[%s2578 + $0x60] sm:$0xff]
    %v2596 = vld [vmem:[%s2578 + $0x68] sm:$0xf]
    %v2597 = vld [vmem:[%s2578 + $0x6c] sm:$0xff]
    %v2598 = vld [vmem:[%s2578 + $0x74] sm:$0xf]
    %v2599 = vld [vmem:[%s2578 + $0x78] sm:$0xff]
    %v2600 = vld [vmem:[%s2578 + $0x80] sm:$0xf]
    %v2601 = vld [vmem:[%s2578 + $0x84] sm:$0xff]
    %v2602 = vld [vmem:[%s2578 + $0x8c] sm:$0xf]
    %v2603 = vld [vmem:[%s2578 + $0x90] sm:$0xff]
    %v2604 = vld [vmem:[%s2578 + $0x98] sm:$0xf]
    %v2605 = vld [vmem:[%s2578 + $0x9c] sm:$0xff]
    %v2606 = vld [vmem:[%s2578 + $0xa4] sm:$0xf]
    %v2607 = vld [vmem:[%s2578 + $0xa8] sm:$0xff]
    %v2608 = vld [vmem:[%s2578 + $0xb0] sm:$0xf]
    %v2609 = vld [vmem:[%s2578 + $0xb4] sm:$0xff]
    %v2610 = vld [vmem:[%s2578 + $0xbc] sm:$0xf]
    %v2611 = vld [vmem:[%s2578 + $0xc0] sm:$0xff]
    %v2612 = vld [vmem:[%s2578 + $0xc8] sm:$0xf]
    %v2613 = vld [vmem:[%s2578 + $0xcc] sm:$0xff]
    %v2614 = vld [vmem:[%s2578 + $0xd4] sm:$0xf]
    %v2615 = vld [vmem:[%s2578 + $0xd8] sm:$0xff]
    %v2616 = vld [vmem:[%s2578 + $0xe0] sm:$0xf]
    %v2617 = vld [vmem:[%s2578 + $0xe4] sm:$0xff]
    %v2618 = vld [vmem:[%s2578 + $0xec] sm:$0xf]
    %v2619 = vld [vmem:[%s2578 + $0xf0] sm:$0xff]
    %v2620 = vld [vmem:[%s2578 + $0xf8] sm:$0xf]
    %v2621 = vld [vmem:[%s2578 + $0xfc] sm:$0xff]
    %v2622 = vld [vmem:[%s2578 + $0x104] sm:$0xf]
    %v2623 = vld [vmem:[%s2578 + $0x108] sm:$0xff]
    %v2624 = vld [vmem:[%s2578 + $0x110] sm:$0xf]
    %v2625 = vld [vmem:[%s2578 + $0x114] sm:$0xff]
    %v2626 = vld [vmem:[%s2578 + $0x11c] sm:$0xf]
    %v2627 = vld [vmem:[%s2578 + $0x120] sm:$0xff]
    %v2628 = vld [vmem:[%s2578 + $0x128] sm:$0xf]
    %v2630 = vunpack.c.l.b16 %v2577
    %v2631 = vunpack.c.h.b16 %v2577
    %v2632 = vpack.c.b16 %v2260, %v2630
    %v2633 = vpack.c.b16 %v2261, %v2631
    %v2634 = vrot.slane %v2632, 2
    %v2635 = vrot.slane %v2633, 2
    %v2687 = vunpack.c.l.b16 %v2579
    %v2688 = vunpack.c.h.b16 %v2579
    %v2689 = vunpack.c.l.b16 %v2580
    %v2690 = vunpack.c.l.b16 %v2581
    %v2691 = vunpack.c.h.b16 %v2581
    %v2692 = vunpack.c.l.b16 %v2582
    %v2693 = vunpack.c.l.b16 %v2583
    %v2694 = vunpack.c.h.b16 %v2583
    %v2695 = vunpack.c.l.b16 %v2584
    %v2696 = vunpack.c.l.b16 %v2585
    %v2697 = vunpack.c.h.b16 %v2585
    %v2698 = vunpack.c.l.b16 %v2586
    %v2699 = vunpack.c.l.b16 %v2587
    %v2700 = vunpack.c.h.b16 %v2587
    %v2701 = vunpack.c.l.b16 %v2588
    %v2702 = vunpack.c.l.b16 %v2589
    %v2703 = vunpack.c.h.b16 %v2589
    %v2704 = vunpack.c.l.b16 %v2590
    %v2705 = vunpack.c.l.b16 %v2591
    %v2706 = vunpack.c.h.b16 %v2591
    %v2707 = vunpack.c.l.b16 %v2592
    %v2708 = vunpack.c.l.b16 %v2593
    %v2709 = vunpack.c.h.b16 %v2593
    %v2710 = vunpack.c.l.b16 %v2594
    %v2711 = vunpack.c.l.b16 %v2595
    %v2712 = vunpack.c.h.b16 %v2595
    %v2713 = vunpack.c.l.b16 %v2596
    %v2714 = vunpack.c.l.b16 %v2597
    %v2715 = vunpack.c.h.b16 %v2597
    %v2716 = vunpack.c.l.b16 %v2598
    %v2717 = vunpack.c.l.b16 %v2599
    %v2718 = vunpack.c.h.b16 %v2599
    %v2719 = vunpack.c.l.b16 %v2600
    %v2720 = vunpack.c.l.b16 %v2601
    %v2721 = vunpack.c.h.b16 %v2601
    %v2722 = vunpack.c.l.b16 %v2602
    %v2723 = vunpack.c.l.b16 %v2603
    %v2724 = vunpack.c.h.b16 %v2603
    %v2725 = vunpack.c.l.b16 %v2604
    %v2726 = vunpack.c.l.b16 %v2605
    %v2727 = vunpack.c.h.b16 %v2605
    %v2728 = vunpack.c.l.b16 %v2606
    %v2729 = vunpack.c.l.b16 %v2607
    %v2730 = vunpack.c.h.b16 %v2607
    %v2731 = vunpack.c.l.b16 %v2608
    %v2732 = vunpack.c.l.b16 %v2609
    %v2733 = vunpack.c.h.b16 %v2609
    %v2734 = vunpack.c.l.b16 %v2610
    %v2735 = vunpack.c.l.b16 %v2611
    %v2736 = vunpack.c.h.b16 %v2611
    %v2737 = vunpack.c.l.b16 %v2612
    %v2738 = vunpack.c.l.b16 %v2613
    %v2739 = vunpack.c.h.b16 %v2613
    %v2740 = vunpack.c.l.b16 %v2614
    %v2741 = vunpack.c.l.b16 %v2615
    %v2742 = vunpack.c.h.b16 %v2615
    %v2743 = vunpack.c.l.b16 %v2616
    %v2744 = vunpack.c.l.b16 %v2617
    %v2745 = vunpack.c.h.b16 %v2617
    %v2746 = vunpack.c.l.b16 %v2618
    %v2747 = vunpack.c.l.b16 %v2619
    %v2748 = vunpack.c.h.b16 %v2619
    %v2749 = vunpack.c.l.b16 %v2620
    %v2750 = vunpack.c.l.b16 %v2621
    %v2751 = vunpack.c.h.b16 %v2621
    %v2752 = vunpack.c.l.b16 %v2622
    %v2753 = vunpack.c.l.b16 %v2623
    %v2754 = vunpack.c.h.b16 %v2623
    %v2755 = vunpack.c.l.b16 %v2624
    %v2756 = vunpack.c.l.b16 %v2625
    %v2757 = vunpack.c.h.b16 %v2625
    %v2758 = vunpack.c.l.b16 %v2626
    %v2759 = vunpack.c.l.b16 %v2627
    %v2760 = vunpack.c.h.b16 %v2627
    %v2761 = vunpack.c.l.b16 %v2628
    %v2762 = vpack.c.b16 %v2690, %v2687
    %v2763 = vpack.c.b16 %v2691, %v2688
    %v2764 = vpack.c.b16 %v2692, %v2689
    %v2765 = vpack.c.b16 %v2696, %v2693
    %v2766 = vpack.c.b16 %v2697, %v2694
    %v2767 = vpack.c.b16 %v2698, %v2695
    %v2768 = vpack.c.b16 %v2702, %v2699
    %v2769 = vpack.c.b16 %v2703, %v2700
    %v2770 = vpack.c.b16 %v2704, %v2701
    %v2771 = vpack.c.b16 %v2708, %v2705
    %v2772 = vpack.c.b16 %v2709, %v2706
    %v2773 = vpack.c.b16 %v2710, %v2707
    %v2774 = vpack.c.b16 %v2714, %v2711
    %v2775 = vpack.c.b16 %v2715, %v2712
    %v2776 = vpack.c.b16 %v2716, %v2713
    %v2777 = vpack.c.b16 %v2720, %v2717
    %v2778 = vpack.c.b16 %v2721, %v2718
    %v2779 = vpack.c.b16 %v2722, %v2719
    %v2780 = vpack.c.b16 %v2726, %v2723
    %v2781 = vpack.c.b16 %v2727, %v2724
    %v2782 = vpack.c.b16 %v2728, %v2725
    %v2783 = vpack.c.b16 %v2732, %v2729
    %v2784 = vpack.c.b16 %v2733, %v2730
    %v2785 = vpack.c.b16 %v2734, %v2731
    %v2786 = vpack.c.b16 %v2738, %v2735
    %v2787 = vpack.c.b16 %v2739, %v2736
    %v2788 = vpack.c.b16 %v2740, %v2737
    %v2789 = vpack.c.b16 %v2744, %v2741
    %v2790 = vpack.c.b16 %v2745, %v2742
    %v2791 = vpack.c.b16 %v2746, %v2743
    %v2792 = vpack.c.b16 %v2750, %v2747
    %v2793 = vpack.c.b16 %v2751, %v2748
    %v2794 = vpack.c.b16 %v2752, %v2749
    %v2795 = vpack.c.b16 %v2756, %v2753
    %v2796 = vpack.c.b16 %v2757, %v2754
    %v2797 = vpack.c.b16 %v2758, %v2755
    %v2798 = vpack.c.b16 %v2759, %v2759
    %v2799 = vpack.c.b16 %v2760, %v2760
    %v2800 = vpack.c.b16 %v2761, %v2761
    %v2838 = vsel %vm1461, %v2635, 0
    %v2841 = vsel %vm37, %v2798, 0
    %v2844 = vsel %vm37, %v2799, 0
    %v2847 = vsel %vm37, %v2800, 0
    %2849 = vmatprep.subr.bf16.mxu0 %v2763
    %2850 = vmatpush1.bf16.msra.mxu0 %v2762
    %2851 = vmatprep.subr.bf16.mxu0 %v2766
    %2852 = vmatpush1.bf16.msra.mxu0 %v2765
    %2853 = vmatprep.subr.bf16.mxu0 %v2769
    %2854 = vmatpush1.bf16.msra.mxu0 %v2768
    %2855 = vmatprep.subr.bf16.mxu0 %v2772
    %2856 = vmatpush1.bf16.msra.mxu0 %v2771
    %2857 = vmatprep.subr.bf16.mxu0 %v2775
    %2858 = vmatpush1.bf16.msra.mxu0 %v2774
    %2859 = vmatprep.subr.bf16.mxu0 %v2778
    %2860 = vmatpush1.bf16.msra.mxu0 %v2777
    %2861 = vmatprep.subr.bf16.mxu0 %v2781
    %2862 = vmatpush1.bf16.msra.mxu0 %v2780
    %2863 = vmatprep.subr.bf16.mxu0 %v2784
    %2864 = vmatpush1.bf16.msra.mxu0 %v2783
    %2865 = vmatprep.subr.bf16.mxu0 %v2787
    %2866 = vmatpush1.bf16.msra.mxu0 %v2786
    %2867 = vmatprep.subr.bf16.mxu0 %v2790
    %2868 = vmatpush1.bf16.msra.mxu0 %v2789
    %2869 = vmatprep.subr.bf16.mxu0 %v2793
    %2870 = vmatpush1.bf16.msra.mxu0 %v2792
    %2871 = vmatprep.subr.bf16.mxu0 %v2796
    %2872 = vmatpush1.bf16.msra.mxu0 %v2795
    %2873 = vmatprep.subr.bf16.mxu0 %v2844
    %2874 = vmatpush1.bf16.msra.mxu0 %v2841
    %2875 = vmatprep.subr.bf16.mxu0 0
    %2876 = vmatpush1.bf16.msra.mxu0 0
    %2877 = vmatprep.subr.bf16.mxu0 0
    %2878 = vmatpush1.bf16.msra.mxu0 0
    %2879 = vmatprep.subr.bf16.mxu0 0
    %2880 = vmatpush1.bf16.msra.mxu0 0
    %2881 = vmatprep.mubr.bf16.mxu0 %v2838
    %2882 = vmatmul.mubr.bf16.gmra.mrb[0].mxu0 %v2634
    %v2883 = vpop.f32.mrb[0].mxu0
    %v2884 = vadd.f32 0.0, %v2883
    %v2885 = vpop.f32.mrb[0].mxu0
    %v2886 = vadd.f32 0.0, %v2885
    %v2887 = vpop.f32.mrb[0].mxu0
    %v2888 = vpop.f32.mrb[0].mxu0
    %2889 = vdwg.mxu0
    %2890 = vmatprep.subr.bf16.mxu0 0
    %2891 = vmatpush1.bf16.msra.mxu0 %v2764
    %2892 = vmatprep.subr.bf16.mxu0 0
    %2893 = vmatpush1.bf16.msra.mxu0 %v2767
    %2894 = vmatprep.subr.bf16.mxu0 0
    %2895 = vmatpush1.bf16.msra.mxu0 %v2770
    %2896 = vmatprep.subr.bf16.mxu0 0
    %2897 = vmatpush1.bf16.msra.mxu0 %v2773
    %2898 = vmatprep.subr.bf16.mxu0 0
    %2899 = vmatpush1.bf16.msra.mxu0 %v2776
    %2900 = vmatprep.subr.bf16.mxu0 0
    %2901 = vmatpush1.bf16.msra.mxu0 %v2779
    %2902 = vmatprep.subr.bf16.mxu0 0
    %2903 = vmatpush1.bf16.msra.mxu0 %v2782
    %2904 = vmatprep.subr.bf16.mxu0 0
    %2905 = vmatpush1.bf16.msra.mxu0 %v2785
    %2906 = vmatprep.subr.bf16.mxu0 0
    %2907 = vmatpush1.bf16.msra.mxu0 %v2788
    %2908 = vmatprep.subr.bf16.mxu0 0
    %2909 = vmatpush1.bf16.msra.mxu0 %v2791
    %2910 = vmatprep.subr.bf16.mxu0 0
    %2911 = vmatpush1.bf16.msra.mxu0 %v2794
    %2912 = vmatprep.subr.bf16.mxu0 0
    %2913 = vmatpush1.bf16.msra.mxu0 %v2797
    %2914 = vmatprep.subr.bf16.mxu0 0
    %2915 = vmatpush1.bf16.msra.mxu0 %v2847
    %2916 = vmatprep.subr.bf16.mxu0 0
    %2917 = vmatpush1.bf16.msra.mxu0 0
    %2918 = vmatprep.subr.bf16.mxu0 0
    %2919 = vmatpush1.bf16.msra.mxu0 0
    %2920 = vmatprep.subr.bf16.mxu0 0
    %2921 = vmatpush1.bf16.msra.mxu0 0
    %2922 = vmatprep.mubr.bf16.mxu0 %v2838
    %2923 = vmatmul.mubr.bf16.gmra.mrb[0].mxu0 %v2634
    %v2924 = vpop.f32.mrb[0].mxu0
    %v2925 = vadd.f32 0.0, %v2924
    %v2926 = vpop.f32.mrb[0].mxu0
    %v2927 = vpop.f32.mrb[0].mxu0
    %v2928 = vpop.f32.mrb[0].mxu0
    %2929 = vdwg.mxu0
    %v2930 = vadd.f32 %v2574, %v2884
    %v2931 = vadd.f32 %v2575, %v2886
    %v2932 = vadd.f32 %v2576, %v2925
    %v2933 = vld [vmem:[%s4] sm:$0x7]
    %v2935 = vlaneseq
    %v2936 = vshrl.u32 %v2935, 7
    %v2937 = vsub.s32 0, %v2936
    %v2938 = vrot.slane %v2933, %v2937
    %v2939 = vlaneseq
    %v2940 = vshrl.u32 %v2939, 7
    %v2941 = vsub.s32 1, %v2940
    %v2942 = vrot.slane %v2933, %v2941
    %v2943 = vlaneseq
    %v2944 = vshrl.u32 %v2943, 7
    %v2945 = vsub.s32 2, %v2944
    %v2946 = vrot.slane %v2933, %v2945
    %v2950 = vadd.f32 %v2930, %v2938
    %v2951 = vadd.f32 %v2931, %v2942
    %v2952 = vadd.f32 %v2932, %v2946
    %v2953 = vmax.f32 %v2950, 0.0
    %v2954 = vmax.f32 %v2951, 0.0
    %v2955 = vmax.f32 %v2952, 0.0
    %v2959 = vcombine.low %v2953, %v2954
    %v2960 = vcombine.high %v2953, %v2954
    %v2961 = vcombine.high %v2955, %v2955
    %v2965 = vcombine.high %v2959, %v2959
    %v2966 = vcombine.high %v2960, %v2960
    %v2969 = vsel %vm37, %v2959, -inf
    %v2970 = vrot.slane %v2969, 4
    %v2971 = vmax.f32 %v2969, %v2970
    %v2972 = vrot.slane %v2971, 2
    %v2973 = vmax.f32 %v2971, %v2972
    %v2974 = vrot.slane %v2973, 1
    %v2975 = vmax.f32 %v2973, %v2974
    %v2976 = vsel %vm37, %v2965, -inf
    %v2977 = vrot.slane %v2976, 4
    %v2978 = vmax.f32 %v2976, %v2977
    %v2979 = vrot.slane %v2978, 2
    %v2980 = vmax.f32 %v2978, %v2979
    %v2981 = vrot.slane %v2980, 1
    %v2982 = vmax.f32 %v2980, %v2981
    %vm2983 = vcmask 355328
    %v2984 = vsel %vm2983, %v2955, -inf
    %v2985 = vrot.slane %v2984, 4
    %v2986 = vmax.f32 %v2984, %v2985
    %v2987 = vrot.slane %v2986, 2
    %v2988 = vmax.f32 %v2986, %v2987
    %v2989 = vrot.slane %v2988, 1
    %v2990 = vmax.f32 %v2988, %v2989
    %v2991 = vsel %vm37, %v2960, -inf
    %v2992 = vrot.slane %v2991, 4
    %v2993 = vmax.f32 %v2991, %v2992
    %v2994 = vrot.slane %v2993, 2
    %v2995 = vmax.f32 %v2993, %v2994
    %v2996 = vrot.slane %v2995, 1
    %v2997 = vmax.f32 %v2995, %v2996
    %v2998 = vsel %vm37, %v2966, -inf
    %v2999 = vrot.slane %v2998, 4
    %v3000 = vmax.f32 %v2998, %v2999
    %v3001 = vrot.slane %v3000, 2
    %v3002 = vmax.f32 %v3000, %v3001
    %v3003 = vrot.slane %v3002, 1
    %v3004 = vmax.f32 %v3002, %v3003
    %v3005 = vsel %vm2983, %v2961, -inf
    %v3006 = vrot.slane %v3005, 4
    %v3007 = vmax.f32 %v3005, %v3006
    %v3008 = vrot.slane %v3007, 2
    %v3009 = vmax.f32 %v3007, %v3008
    %v3010 = vrot.slane %v3009, 1
    %v3011 = vmax.f32 %v3009, %v3010
    %v3012 = vpack.c.bf16 %v2975, %v2975
    %v3013 = vpack.c.bf16 %v2982, %v2982
    %v3014 = vpack.c.bf16 %v2990, %v2990
    %v3015 = vpack.c.bf16 %v2997, %v2997
    %v3016 = vpack.c.bf16 %v3004, %v3004
    %v3017 = vpack.c.bf16 %v3011, %v3011
    %v3018 = vld [vmem:[%s5] sm:$0xf]
    %v3019 = vld [vmem:[%s5 + $0x4] sm:$0xf]
    %v3020 = vld [vmem:[%s5 + $0x8] sm:$0xf]
    %v3021 = vld [vmem:[%s5 + $0xc] sm:$0xf]
    %v3022 = vld [vmem:[%s5 + $0x10] sm:$0xf]
    %v3023 = vld [vmem:[%s5 + $0x14] sm:$0xf]
    %v3024 = vld [vmem:[%s5 + $0x18] sm:$0xf]
    %v3025 = vld [vmem:[%s5 + $0x1c] sm:$0xf]
    %v3026 = vld [vmem:[%s5 + $0x20] sm:$0xf]
    %v3027 = vld [vmem:[%s5 + $0x24] sm:$0xf]
    %v3028 = vld [vmem:[%s5 + $0x28] sm:$0xf]
    %v3029 = vld [vmem:[%s5 + $0x2c] sm:$0xf]
    %v3030 = vld [vmem:[%s5 + $0x30] sm:$0xf]
    %v3031 = vld [vmem:[%s5 + $0x34] sm:$0xf]
    %v3032 = vld [vmem:[%s5 + $0x38] sm:$0xf]
    %v3033 = vld [vmem:[%s5 + $0x3c] sm:$0xf]
    %v3034 = vld [vmem:[%s5 + $0x40] sm:$0xf]
    %v3035 = vld [vmem:[%s5 + $0x44] sm:$0xf]
    %v3036 = vld [vmem:[%s5 + $0x48] sm:$0xf]
    %v3037 = vld [vmem:[%s5 + $0x4c] sm:$0xf]
    %v3038 = vld [vmem:[%s5 + $0x50] sm:$0xf]
    %v3039 = vld [vmem:[%s5 + $0x54] sm:$0xf]
    %v3040 = vld [vmem:[%s5 + $0x58] sm:$0xf]
    %v3041 = vld [vmem:[%s5 + $0x5c] sm:$0xf]
    %v3042 = vld [vmem:[%s5 + $0x60] sm:$0xf]
    %v3043 = vld [vmem:[%s5 + $0x64] sm:$0xf]
    %v3044 = vld [vmem:[%s5 + $0x68] sm:$0xf]
    %v3045 = vld [vmem:[%s5 + $0x6c] sm:$0xf]
    %v3046 = vld [vmem:[%s5 + $0x70] sm:$0xf]
    %v3047 = vld [vmem:[%s5 + $0x74] sm:$0xf]
    %v3048 = vld [vmem:[%s5 + $0x78] sm:$0xf]
    %v3049 = vld [vmem:[%s5 + $0x7c] sm:$0xf]
    %v3050 = vld [vmem:[%s5 + $0x80] sm:$0xf]
    %v3051 = vld [vmem:[%s5 + $0x84] sm:$0xf]
    %v3052 = vld [vmem:[%s5 + $0x88] sm:$0xf]
    %v3053 = vld [vmem:[%s5 + $0x8c] sm:$0xf]
    %v3054 = vld [vmem:[%s5 + $0x90] sm:$0xf]
    %v3055 = vld [vmem:[%s5 + $0x94] sm:$0x3]
    %v3056 = vld [vmem:[%s7] sm:$0x1]
    %v3058 = vlaneseq
    %v3059 = vshrl.u32 %v3058, 7
    %v3060 = vsub.s32 0, %v3059
    %v3061 = vrot.slane %v3056, %v3060
    %v3069 = vunpack.c.l.b16 %v3012
    %v3070 = vunpack.c.l.b16 %v3013
    %v3071 = vunpack.c.l.b16 %v3014
    %v3072 = vunpack.c.l.b16 %v3015
    %v3073 = vunpack.c.l.b16 %v3016
    %v3074 = vunpack.c.l.b16 %v3017
    %v3075 = vsel %vm1120, %v3072, %v3069
    %v3076 = vsel %vm1120, %v3073, %v3070
    %v3077 = vsel %vm1120, %v3074, %v3071
    %v3078 = vpack.c.b16 %v3075, %v3075
    %v3079 = vpack.c.b16 %v3076, %v3076
    %v3080 = vpack.c.b16 %v3077, %v3077
    %v3121 = vunpack.c.l.b16 %v3018
    %v3122 = vunpack.c.l.b16 %v3019
    %v3123 = vunpack.c.l.b16 %v3020
    %v3124 = vunpack.c.l.b16 %v3021
    %v3125 = vunpack.c.l.b16 %v3022
    %v3126 = vunpack.c.l.b16 %v3023
    %v3127 = vunpack.c.l.b16 %v3024
    %v3128 = vunpack.c.l.b16 %v3025
    %v3129 = vunpack.c.l.b16 %v3026
    %v3130 = vunpack.c.l.b16 %v3027
    %v3131 = vunpack.c.l.b16 %v3028
    %v3132 = vunpack.c.l.b16 %v3029
    %v3133 = vunpack.c.l.b16 %v3030
    %v3134 = vunpack.c.l.b16 %v3031
    %v3135 = vunpack.c.l.b16 %v3032
    %v3136 = vunpack.c.l.b16 %v3033
    %v3137 = vunpack.c.l.b16 %v3034
    %v3138 = vunpack.c.l.b16 %v3035
    %v3139 = vunpack.c.l.b16 %v3036
    %v3140 = vunpack.c.l.b16 %v3037
    %v3141 = vunpack.c.l.b16 %v3038
    %v3142 = vunpack.c.l.b16 %v3039
    %v3143 = vunpack.c.l.b16 %v3040
    %v3144 = vunpack.c.l.b16 %v3041
    %v3145 = vunpack.c.l.b16 %v3042
    %v3146 = vunpack.c.l.b16 %v3043
    %v3147 = vunpack.c.l.b16 %v3044
    %v3148 = vunpack.c.l.b16 %v3045
    %v3149 = vunpack.c.l.b16 %v3046
    %v3150 = vunpack.c.l.b16 %v3047
    %v3151 = vunpack.c.l.b16 %v3048
    %v3152 = vunpack.c.l.b16 %v3049
    %v3153 = vunpack.c.l.b16 %v3050
    %v3154 = vunpack.c.l.b16 %v3051
    %v3155 = vunpack.c.l.b16 %v3052
    %v3156 = vunpack.c.l.b16 %v3053
    %v3157 = vunpack.c.l.b16 %v3054
    %v3158 = vunpack.c.l.b16 %v3055
    %v3159 = vpack.c.b16 %v3122, %v3121
    %v3160 = vpack.c.b16 %v3124, %v3123
    %v3161 = vpack.c.b16 %v3126, %v3125
    %v3162 = vpack.c.b16 %v3128, %v3127
    %v3163 = vpack.c.b16 %v3130, %v3129
    %v3164 = vpack.c.b16 %v3132, %v3131
    %v3165 = vpack.c.b16 %v3134, %v3133
    %v3166 = vpack.c.b16 %v3136, %v3135
    %v3167 = vpack.c.b16 %v3138, %v3137
    %v3168 = vpack.c.b16 %v3140, %v3139
    %v3169 = vpack.c.b16 %v3142, %v3141
    %v3170 = vpack.c.b16 %v3144, %v3143
    %v3171 = vpack.c.b16 %v3146, %v3145
    %v3172 = vpack.c.b16 %v3148, %v3147
    %v3173 = vpack.c.b16 %v3150, %v3149
    %v3174 = vpack.c.b16 %v3152, %v3151
    %v3175 = vpack.c.b16 %v3154, %v3153
    %v3176 = vpack.c.b16 %v3156, %v3155
    %v3177 = vpack.c.b16 %v3158, %v3157
    %vm3196 = vcmask 359424
    %v3198 = vsel %vm3196, %v3080, 0
    %vm3200 = vcmask 1045504
    %v3202 = vsel %vm3200, %v3177, 0
    %3204 = vmatprep.subr.bf16.mxu0 0
    %3205 = vmatpush1.bf16.msra.mxu0 %v3159
    %3206 = vmatprep.subr.bf16.mxu0 0
    %3207 = vmatpush1.bf16.msra.mxu0 %v3160
    %3208 = vmatprep.subr.bf16.mxu0 0
    %3209 = vmatpush1.bf16.msra.mxu0 %v3161
    %3210 = vmatprep.subr.bf16.mxu0 0
    %3211 = vmatpush1.bf16.msra.mxu0 %v3162
    %3212 = vmatprep.subr.bf16.mxu0 0
    %3213 = vmatpush1.bf16.msra.mxu0 %v3163
    %3214 = vmatprep.subr.bf16.mxu0 0
    %3215 = vmatpush1.bf16.msra.mxu0 %v3164
    %3216 = vmatprep.subr.bf16.mxu0 0
    %3217 = vmatpush1.bf16.msra.mxu0 %v3165
    %3218 = vmatprep.subr.bf16.mxu0 0
    %3219 = vmatpush1.bf16.msra.mxu0 %v3166
    %3220 = vmatprep.subr.bf16.mxu0 0
    %3221 = vmatpush1.bf16.msra.mxu0 %v3167
    %3222 = vmatprep.subr.bf16.mxu0 0
    %3223 = vmatpush1.bf16.msra.mxu0 %v3168
    %3224 = vmatprep.subr.bf16.mxu0 0
    %3225 = vmatpush1.bf16.msra.mxu0 %v3169
    %3226 = vmatprep.subr.bf16.mxu0 0
    %3227 = vmatpush1.bf16.msra.mxu0 %v3170
    %3228 = vmatprep.subr.bf16.mxu0 0
    %3229 = vmatpush1.bf16.msra.mxu0 %v3171
    %3230 = vmatprep.subr.bf16.mxu0 0
    %3231 = vmatpush1.bf16.msra.mxu0 %v3172
    %3232 = vmatprep.subr.bf16.mxu0 0
    %3233 = vmatpush1.bf16.msra.mxu0 %v3173
    %3234 = vmatprep.subr.bf16.mxu0 0
    %3235 = vmatpush1.bf16.msra.mxu0 %v3174
    %3236 = vmatprep.mubr.bf16.mxu0 %v3079
    %3237 = vmatmul.mubr.bf16.gmra.mrb[0].mxu0 %v3078
    %v3238 = vpop.f32.mrb[0].mxu0
    %v3239 = vadd.f32 %v3061, %v3238
    %v3240 = vpop.f32.mrb[0].mxu0
    %v3241 = vpop.f32.mrb[0].mxu0
    %v3242 = vpop.f32.mrb[0].mxu0
    %3243 = vdwg.mxu0
    %3244 = vmatprep.subr.bf16.mxu0 0
    %3245 = vmatpush1.bf16.msra.mxu0 %v3175
    %3246 = vmatprep.subr.bf16.mxu0 0
    %3247 = vmatpush1.bf16.msra.mxu0 %v3176
    %3248 = vmatprep.subr.bf16.mxu0 0
    %3249 = vmatpush1.bf16.msra.mxu0 %v3202
    %3250 = vmatprep.subr.bf16.mxu0 0
    %3251 = vmatpush1.bf16.msra.mxu0 0
    %3252 = vmatprep.subr.bf16.mxu0 0
    %3253 = vmatpush1.bf16.msra.mxu0 0
    %3254 = vmatprep.subr.bf16.mxu0 0
    %3255 = vmatpush1.bf16.msra.mxu0 0
    %3256 = vmatprep.subr.bf16.mxu0 0
    %3257 = vmatpush1.bf16.msra.mxu0 0
    %3258 = vmatprep.subr.bf16.mxu0 0
    %3259 = vmatpush1.bf16.msra.mxu0 0
    %3260 = vmatprep.subr.bf16.mxu0 0
    %3261 = vmatpush1.bf16.msra.mxu0 0
    %3262 = vmatprep.subr.bf16.mxu0 0
    %3263 = vmatpush1.bf16.msra.mxu0 0
    %3264 = vmatprep.subr.bf16.mxu0 0
    %3265 = vmatpush1.bf16.msra.mxu0 0
    %3266 = vmatprep.subr.bf16.mxu0 0
    %3267 = vmatpush1.bf16.msra.mxu0 0
    %3268 = vmatprep.subr.bf16.mxu0 0
    %3269 = vmatpush1.bf16.msra.mxu0 0
    %3270 = vmatprep.subr.bf16.mxu0 0
    %3271 = vmatpush1.bf16.msra.mxu0 0
    %3272 = vmatprep.subr.bf16.mxu0 0
    %3273 = vmatpush1.bf16.msra.mxu0 0
    %3274 = vmatprep.subr.bf16.mxu0 0
    %3275 = vmatpush1.bf16.msra.mxu0 0
    %3276 = vmatprep.mubr.bf16.mxu0 0
    %3277 = vmatmul.mubr.bf16.gmra.mrb[0].mxu0 %v3198
    %v3278 = vpop.f32.mrb[0].mxu0
    %v3279 = vadd.f32 %v3239, %v3278
    %v3280 = vpop.f32.mrb[0].mxu0
    %v3281 = vpop.f32.mrb[0].mxu0
    %v3282 = vpop.f32.mrb[0].mxu0
    %3283 = vdwg.mxu0
    %s3284 = scalar_lea.vmem %s5, 152
    %v3285 = vld [vmem:[%s3284] sm:$0xf]
    %v3286 = vld [vmem:[%s3284 + $0x4] sm:$0xf]
    %v3287 = vld [vmem:[%s3284 + $0x8] sm:$0xf]
    %v3288 = vld [vmem:[%s3284 + $0xc] sm:$0xf]
    %v3289 = vld [vmem:[%s3284 + $0x10] sm:$0xf]
    %v3290 = vld [vmem:[%s3284 + $0x14] sm:$0xf]
    %v3291 = vld [vmem:[%s3284 + $0x18] sm:$0xf]
    %v3292 = vld [vmem:[%s3284 + $0x1c] sm:$0xf]
    %v3293 = vld [vmem:[%s3284 + $0x20] sm:$0xf]
    %v3294 = vld [vmem:[%s3284 + $0x24] sm:$0xf]
    %v3295 = vld [vmem:[%s3284 + $0x28] sm:$0xf]
    %v3296 = vld [vmem:[%s3284 + $0x2c] sm:$0xf]
    %v3297 = vld [vmem:[%s3284 + $0x30] sm:$0xf]
    %v3298 = vld [vmem:[%s3284 + $0x34] sm:$0xf]
    %v3299 = vld [vmem:[%s3284 + $0x38] sm:$0xf]
    %v3300 = vld [vmem:[%s3284 + $0x3c] sm:$0xf]
    %v3301 = vld [vmem:[%s3284 + $0x40] sm:$0xf]
    %v3302 = vld [vmem:[%s3284 + $0x44] sm:$0xf]
    %v3303 = vld [vmem:[%s3284 + $0x48] sm:$0xf]
    %v3304 = vld [vmem:[%s3284 + $0x4c] sm:$0xf]
    %v3305 = vld [vmem:[%s3284 + $0x50] sm:$0xf]
    %v3306 = vld [vmem:[%s3284 + $0x54] sm:$0xf]
    %v3307 = vld [vmem:[%s3284 + $0x58] sm:$0xf]
    %v3308 = vld [vmem:[%s3284 + $0x5c] sm:$0xf]
    %v3309 = vld [vmem:[%s3284 + $0x60] sm:$0xf]
    %v3310 = vld [vmem:[%s3284 + $0x64] sm:$0xf]
    %v3311 = vld [vmem:[%s3284 + $0x68] sm:$0xf]
    %v3312 = vld [vmem:[%s3284 + $0x6c] sm:$0xf]
    %v3313 = vld [vmem:[%s3284 + $0x70] sm:$0xf]
    %v3314 = vld [vmem:[%s3284 + $0x74] sm:$0xf]
    %v3315 = vld [vmem:[%s3284 + $0x78] sm:$0xf]
    %v3316 = vld [vmem:[%s3284 + $0x7c] sm:$0xf]
    %v3317 = vld [vmem:[%s3284 + $0x80] sm:$0xf]
    %v3318 = vld [vmem:[%s3284 + $0x84] sm:$0xf]
    %v3319 = vld [vmem:[%s3284 + $0x88] sm:$0xf]
    %v3320 = vld [vmem:[%s3284 + $0x8c] sm:$0xf]
    %v3321 = vld [vmem:[%s3284 + $0x90] sm:$0xf]
    %v3322 = vld [vmem:[%s3284 + $0x94] sm:$0x3]
    %s3323 = scalar_lea.vmem %s7, 1
    %v3324 = vld [vmem:[%s3323] sm:$0x1]
    %v3326 = vlaneseq
    %v3327 = vshrl.u32 %v3326, 7
    %v3328 = vsub.s32 0, %v3327
    %v3329 = vrot.slane %v3324, %v3328
    %v3369 = vunpack.c.l.b16 %v3285
    %v3370 = vunpack.c.l.b16 %v3286
    %v3371 = vunpack.c.l.b16 %v3287
    %v3372 = vunpack.c.l.b16 %v3288
    %v3373 = vunpack.c.l.b16 %v3289
    %v3374 = vunpack.c.l.b16 %v3290
    %v3375 = vunpack.c.l.b16 %v3291
    %v3376 = vunpack.c.l.b16 %v3292
    %v3377 = vunpack.c.l.b16 %v3293
    %v3378 = vunpack.c.l.b16 %v3294
    %v3379 = vunpack.c.l.b16 %v3295
    %v3380 = vunpack.c.l.b16 %v3296
    %v3381 = vunpack.c.l.b16 %v3297
    %v3382 = vunpack.c.l.b16 %v3298
    %v3383 = vunpack.c.l.b16 %v3299
    %v3384 = vunpack.c.l.b16 %v3300
    %v3385 = vunpack.c.l.b16 %v3301
    %v3386 = vunpack.c.l.b16 %v3302
    %v3387 = vunpack.c.l.b16 %v3303
    %v3388 = vunpack.c.l.b16 %v3304
    %v3389 = vunpack.c.l.b16 %v3305
    %v3390 = vunpack.c.l.b16 %v3306
    %v3391 = vunpack.c.l.b16 %v3307
    %v3392 = vunpack.c.l.b16 %v3308
    %v3393 = vunpack.c.l.b16 %v3309
    %v3394 = vunpack.c.l.b16 %v3310
    %v3395 = vunpack.c.l.b16 %v3311
    %v3396 = vunpack.c.l.b16 %v3312
    %v3397 = vunpack.c.l.b16 %v3313
    %v3398 = vunpack.c.l.b16 %v3314
    %v3399 = vunpack.c.l.b16 %v3315
    %v3400 = vunpack.c.l.b16 %v3316
    %v3401 = vunpack.c.l.b16 %v3317
    %v3402 = vunpack.c.l.b16 %v3318
    %v3403 = vunpack.c.l.b16 %v3319
    %v3404 = vunpack.c.l.b16 %v3320
    %v3405 = vunpack.c.l.b16 %v3321
    %v3406 = vunpack.c.l.b16 %v3322
    %v3407 = vpack.c.b16 %v3370, %v3369
    %v3408 = vpack.c.b16 %v3372, %v3371
    %v3409 = vpack.c.b16 %v3374, %v3373
    %v3410 = vpack.c.b16 %v3376, %v3375
    %v3411 = vpack.c.b16 %v3378, %v3377
    %v3412 = vpack.c.b16 %v3380, %v3379
    %v3413 = vpack.c.b16 %v3382, %v3381
    %v3414 = vpack.c.b16 %v3384, %v3383
    %v3415 = vpack.c.b16 %v3386, %v3385
    %v3416 = vpack.c.b16 %v3388, %v3387
    %v3417 = vpack.c.b16 %v3390, %v3389
    %v3418 = vpack.c.b16 %v3392, %v3391
    %v3419 = vpack.c.b16 %v3394, %v3393
    %v3420 = vpack.c.b16 %v3396, %v3395
    %v3421 = vpack.c.b16 %v3398, %v3397
    %v3422 = vpack.c.b16 %v3400, %v3399
    %v3423 = vpack.c.b16 %v3402, %v3401
    %v3424 = vpack.c.b16 %v3404, %v3403
    %v3425 = vpack.c.b16 %v3406, %v3405
    %v3445 = vsel %vm3200, %v3425, 0
    %3447 = vmatprep.subr.bf16.mxu0 0
    %3448 = vmatpush1.bf16.msra.mxu0 %v3407
    %3449 = vmatprep.subr.bf16.mxu0 0
    %3450 = vmatpush1.bf16.msra.mxu0 %v3408
    %3451 = vmatprep.subr.bf16.mxu0 0
    %3452 = vmatpush1.bf16.msra.mxu0 %v3409
    %3453 = vmatprep.subr.bf16.mxu0 0
    %3454 = vmatpush1.bf16.msra.mxu0 %v3410
    %3455 = vmatprep.subr.bf16.mxu0 0
    %3456 = vmatpush1.bf16.msra.mxu0 %v3411
    %3457 = vmatprep.subr.bf16.mxu0 0
    %3458 = vmatpush1.bf16.msra.mxu0 %v3412
    %3459 = vmatprep.subr.bf16.mxu0 0
    %3460 = vmatpush1.bf16.msra.mxu0 %v3413
    %3461 = vmatprep.subr.bf16.mxu0 0
    %3462 = vmatpush1.bf16.msra.mxu0 %v3414
    %3463 = vmatprep.subr.bf16.mxu0 0
    %3464 = vmatpush1.bf16.msra.mxu0 %v3415
    %3465 = vmatprep.subr.bf16.mxu0 0
    %3466 = vmatpush1.bf16.msra.mxu0 %v3416
    %3467 = vmatprep.subr.bf16.mxu0 0
    %3468 = vmatpush1.bf16.msra.mxu0 %v3417
    %3469 = vmatprep.subr.bf16.mxu0 0
    %3470 = vmatpush1.bf16.msra.mxu0 %v3418
    %3471 = vmatprep.subr.bf16.mxu0 0
    %3472 = vmatpush1.bf16.msra.mxu0 %v3419
    %3473 = vmatprep.subr.bf16.mxu0 0
    %3474 = vmatpush1.bf16.msra.mxu0 %v3420
    %3475 = vmatprep.subr.bf16.mxu0 0
    %3476 = vmatpush1.bf16.msra.mxu0 %v3421
    %3477 = vmatprep.subr.bf16.mxu0 0
    %3478 = vmatpush1.bf16.msra.mxu0 %v3422
    %3479 = vmatprep.mubr.bf16.mxu0 %v3079
    %3480 = vmatmul.mubr.bf16.gmra.mrb[0].mxu0 %v3078
    %v3481 = vpop.f32.mrb[0].mxu0
    %v3482 = vadd.f32 %v3329, %v3481
    %v3483 = vpop.f32.mrb[0].mxu0
    %v3484 = vpop.f32.mrb[0].mxu0
    %v3485 = vpop.f32.mrb[0].mxu0
    %3486 = vdwg.mxu0
    %3487 = vmatprep.subr.bf16.mxu0 0
    %3488 = vmatpush1.bf16.msra.mxu0 %v3423
    %3489 = vmatprep.subr.bf16.mxu0 0
    %3490 = vmatpush1.bf16.msra.mxu0 %v3424
    %3491 = vmatprep.subr.bf16.mxu0 0
    %3492 = vmatpush1.bf16.msra.mxu0 %v3445
    %3493 = vmatprep.subr.bf16.mxu0 0
    %3494 = vmatpush1.bf16.msra.mxu0 0
    %3495 = vmatprep.subr.bf16.mxu0 0
    %3496 = vmatpush1.bf16.msra.mxu0 0
    %3497 = vmatprep.subr.bf16.mxu0 0
    %3498 = vmatpush1.bf16.msra.mxu0 0
    %3499 = vmatprep.subr.bf16.mxu0 0
    %3500 = vmatpush1.bf16.msra.mxu0 0
    %3501 = vmatprep.subr.bf16.mxu0 0
    %3502 = vmatpush1.bf16.msra.mxu0 0
    %3503 = vmatprep.subr.bf16.mxu0 0
    %3504 = vmatpush1.bf16.msra.mxu0 0
    %3505 = vmatprep.subr.bf16.mxu0 0
    %3506 = vmatpush1.bf16.msra.mxu0 0
    %3507 = vmatprep.subr.bf16.mxu0 0
    %3508 = vmatpush1.bf16.msra.mxu0 0
    %3509 = vmatprep.subr.bf16.mxu0 0
    %3510 = vmatpush1.bf16.msra.mxu0 0
    %3511 = vmatprep.subr.bf16.mxu0 0
    %3512 = vmatpush1.bf16.msra.mxu0 0
    %3513 = vmatprep.subr.bf16.mxu0 0
    %3514 = vmatpush1.bf16.msra.mxu0 0
    %3515 = vmatprep.subr.bf16.mxu0 0
    %3516 = vmatpush1.bf16.msra.mxu0 0
    %3517 = vmatprep.subr.bf16.mxu0 0
    %3518 = vmatpush1.bf16.msra.mxu0 0
    %3519 = vmatprep.mubr.bf16.mxu0 0
    %3520 = vmatmul.mubr.bf16.gmra.mrb[0].mxu0 %v3198
    %v3521 = vpop.f32.mrb[0].mxu0
    %v3522 = vadd.f32 %v3482, %v3521
    %v3523 = vpop.f32.mrb[0].mxu0
    %v3524 = vpop.f32.mrb[0].mxu0
    %v3525 = vpop.f32.mrb[0].mxu0
    %3526 = vdwg.mxu0
    %s3527 = scalar_lea.vmem %s5, 304
    %v3528 = vld [vmem:[%s3527] sm:$0xf]
    %v3529 = vld [vmem:[%s3527 + $0x4] sm:$0xf]
    %v3530 = vld [vmem:[%s3527 + $0x8] sm:$0xf]
    %v3531 = vld [vmem:[%s3527 + $0xc] sm:$0xf]
    %v3532 = vld [vmem:[%s3527 + $0x10] sm:$0xf]
    %v3533 = vld [vmem:[%s3527 + $0x14] sm:$0xf]
    %v3534 = vld [vmem:[%s3527 + $0x18] sm:$0xf]
    %v3535 = vld [vmem:[%s3527 + $0x1c] sm:$0xf]
    %v3536 = vld [vmem:[%s3527 + $0x20] sm:$0xf]
    %v3537 = vld [vmem:[%s3527 + $0x24] sm:$0xf]
    %v3538 = vld [vmem:[%s3527 + $0x28] sm:$0xf]
    %v3539 = vld [vmem:[%s3527 + $0x2c] sm:$0xf]
    %v3540 = vld [vmem:[%s3527 + $0x30] sm:$0xf]
    %v3541 = vld [vmem:[%s3527 + $0x34] sm:$0xf]
    %v3542 = vld [vmem:[%s3527 + $0x38] sm:$0xf]
    %v3543 = vld [vmem:[%s3527 + $0x3c] sm:$0xf]
    %v3544 = vld [vmem:[%s3527 + $0x40] sm:$0xf]
    %v3545 = vld [vmem:[%s3527 + $0x44] sm:$0xf]
    %v3546 = vld [vmem:[%s3527 + $0x48] sm:$0xf]
    %v3547 = vld [vmem:[%s3527 + $0x4c] sm:$0xf]
    %v3548 = vld [vmem:[%s3527 + $0x50] sm:$0xf]
    %v3549 = vld [vmem:[%s3527 + $0x54] sm:$0xf]
    %v3550 = vld [vmem:[%s3527 + $0x58] sm:$0xf]
    %v3551 = vld [vmem:[%s3527 + $0x5c] sm:$0xf]
    %v3552 = vld [vmem:[%s3527 + $0x60] sm:$0xf]
    %v3553 = vld [vmem:[%s3527 + $0x64] sm:$0xf]
    %v3554 = vld [vmem:[%s3527 + $0x68] sm:$0xf]
    %v3555 = vld [vmem:[%s3527 + $0x6c] sm:$0xf]
    %v3556 = vld [vmem:[%s3527 + $0x70] sm:$0xf]
    %v3557 = vld [vmem:[%s3527 + $0x74] sm:$0xf]
    %v3558 = vld [vmem:[%s3527 + $0x78] sm:$0xf]
    %v3559 = vld [vmem:[%s3527 + $0x7c] sm:$0xf]
    %v3560 = vld [vmem:[%s3527 + $0x80] sm:$0xf]
    %v3561 = vld [vmem:[%s3527 + $0x84] sm:$0xf]
    %v3562 = vld [vmem:[%s3527 + $0x88] sm:$0xf]
    %v3563 = vld [vmem:[%s3527 + $0x8c] sm:$0xf]
    %v3564 = vld [vmem:[%s3527 + $0x90] sm:$0xf]
    %v3565 = vld [vmem:[%s3527 + $0x94] sm:$0x3]
    %s3566 = scalar_lea.vmem %s7, 2
    %v3567 = vld [vmem:[%s3566] sm:$0x1]
    %v3569 = vlaneseq
    %v3570 = vshrl.u32 %v3569, 7
    %v3571 = vsub.s32 0, %v3570
    %v3572 = vrot.slane %v3567, %v3571
    %v3612 = vunpack.c.l.b16 %v3528
    %v3613 = vunpack.c.l.b16 %v3529
    %v3614 = vunpack.c.l.b16 %v3530
    %v3615 = vunpack.c.l.b16 %v3531
    %v3616 = vunpack.c.l.b16 %v3532
    %v3617 = vunpack.c.l.b16 %v3533
    %v3618 = vunpack.c.l.b16 %v3534
    %v3619 = vunpack.c.l.b16 %v3535
    %v3620 = vunpack.c.l.b16 %v3536
    %v3621 = vunpack.c.l.b16 %v3537
    %v3622 = vunpack.c.l.b16 %v3538
    %v3623 = vunpack.c.l.b16 %v3539
    %v3624 = vunpack.c.l.b16 %v3540
    %v3625 = vunpack.c.l.b16 %v3541
    %v3626 = vunpack.c.l.b16 %v3542
    %v3627 = vunpack.c.l.b16 %v3543
    %v3628 = vunpack.c.l.b16 %v3544
    %v3629 = vunpack.c.l.b16 %v3545
    %v3630 = vunpack.c.l.b16 %v3546
    %v3631 = vunpack.c.l.b16 %v3547
    %v3632 = vunpack.c.l.b16 %v3548
    %v3633 = vunpack.c.l.b16 %v3549
    %v3634 = vunpack.c.l.b16 %v3550
    %v3635 = vunpack.c.l.b16 %v3551
    %v3636 = vunpack.c.l.b16 %v3552
    %v3637 = vunpack.c.l.b16 %v3553
    %v3638 = vunpack.c.l.b16 %v3554
    %v3639 = vunpack.c.l.b16 %v3555
    %v3640 = vunpack.c.l.b16 %v3556
    %v3641 = vunpack.c.l.b16 %v3557
    %v3642 = vunpack.c.l.b16 %v3558
    %v3643 = vunpack.c.l.b16 %v3559
    %v3644 = vunpack.c.l.b16 %v3560
    %v3645 = vunpack.c.l.b16 %v3561
    %v3646 = vunpack.c.l.b16 %v3562
    %v3647 = vunpack.c.l.b16 %v3563
    %v3648 = vunpack.c.l.b16 %v3564
    %v3649 = vunpack.c.l.b16 %v3565
    %v3650 = vpack.c.b16 %v3613, %v3612
    %v3651 = vpack.c.b16 %v3615, %v3614
    %v3652 = vpack.c.b16 %v3617, %v3616
    %v3653 = vpack.c.b16 %v3619, %v3618
    %v3654 = vpack.c.b16 %v3621, %v3620
    %v3655 = vpack.c.b16 %v3623, %v3622
    %v3656 = vpack.c.b16 %v3625, %v3624
    %v3657 = vpack.c.b16 %v3627, %v3626
    %v3658 = vpack.c.b16 %v3629, %v3628
    %v3659 = vpack.c.b16 %v3631, %v3630
    %v3660 = vpack.c.b16 %v3633, %v3632
    %v3661 = vpack.c.b16 %v3635, %v3634
    %v3662 = vpack.c.b16 %v3637, %v3636
    %v3663 = vpack.c.b16 %v3639, %v3638
    %v3664 = vpack.c.b16 %v3641, %v3640
    %v3665 = vpack.c.b16 %v3643, %v3642
    %v3666 = vpack.c.b16 %v3645, %v3644
    %v3667 = vpack.c.b16 %v3647, %v3646
    %v3668 = vpack.c.b16 %v3649, %v3648
    %v3688 = vsel %vm3200, %v3668, 0
    %3690 = vmatprep.subr.bf16.mxu0 0
    %3691 = vmatpush1.bf16.msra.mxu0 %v3650
    %3692 = vmatprep.subr.bf16.mxu0 0
    %3693 = vmatpush1.bf16.msra.mxu0 %v3651
    %3694 = vmatprep.subr.bf16.mxu0 0
    %3695 = vmatpush1.bf16.msra.mxu0 %v3652
    %3696 = vmatprep.subr.bf16.mxu0 0
    %3697 = vmatpush1.bf16.msra.mxu0 %v3653
    %3698 = vmatprep.subr.bf16.mxu0 0
    %3699 = vmatpush1.bf16.msra.mxu0 %v3654
    %3700 = vmatprep.subr.bf16.mxu0 0
    %3701 = vmatpush1.bf16.msra.mxu0 %v3655
    %3702 = vmatprep.subr.bf16.mxu0 0
    %3703 = vmatpush1.bf16.msra.mxu0 %v3656
    %3704 = vmatprep.subr.bf16.mxu0 0
    %3705 = vmatpush1.bf16.msra.mxu0 %v3657
    %3706 = vmatprep.subr.bf16.mxu0 0
    %3707 = vmatpush1.bf16.msra.mxu0 %v3658
    %3708 = vmatprep.subr.bf16.mxu0 0
    %3709 = vmatpush1.bf16.msra.mxu0 %v3659
    %3710 = vmatprep.subr.bf16.mxu0 0
    %3711 = vmatpush1.bf16.msra.mxu0 %v3660
    %3712 = vmatprep.subr.bf16.mxu0 0
    %3713 = vmatpush1.bf16.msra.mxu0 %v3661
    %3714 = vmatprep.subr.bf16.mxu0 0
    %3715 = vmatpush1.bf16.msra.mxu0 %v3662
    %3716 = vmatprep.subr.bf16.mxu0 0
    %3717 = vmatpush1.bf16.msra.mxu0 %v3663
    %3718 = vmatprep.subr.bf16.mxu0 0
    %3719 = vmatpush1.bf16.msra.mxu0 %v3664
    %3720 = vmatprep.subr.bf16.mxu0 0
    %3721 = vmatpush1.bf16.msra.mxu0 %v3665
    %3722 = vmatprep.mubr.bf16.mxu0 %v3079
    %3723 = vmatmul.mubr.bf16.gmra.mrb[0].mxu0 %v3078
    %v3724 = vpop.f32.mrb[0].mxu0
    %v3725 = vadd.f32 %v3572, %v3724
    %v3726 = vpop.f32.mrb[0].mxu0
    %v3727 = vpop.f32.mrb[0].mxu0
    %v3728 = vpop.f32.mrb[0].mxu0
    %3729 = vdwg.mxu0
    %3730 = vmatprep.subr.bf16.mxu0 0
    %3731 = vmatpush1.bf16.msra.mxu0 %v3666
    %3732 = vmatprep.subr.bf16.mxu0 0
    %3733 = vmatpush1.bf16.msra.mxu0 %v3667
    %3734 = vmatprep.subr.bf16.mxu0 0
    %3735 = vmatpush1.bf16.msra.mxu0 %v3688
    %3736 = vmatprep.subr.bf16.mxu0 0
    %3737 = vmatpush1.bf16.msra.mxu0 0
    %3738 = vmatprep.subr.bf16.mxu0 0
    %3739 = vmatpush1.bf16.msra.mxu0 0
    %3740 = vmatprep.subr.bf16.mxu0 0
    %3741 = vmatpush1.bf16.msra.mxu0 0
    %3742 = vmatprep.subr.bf16.mxu0 0
    %3743 = vmatpush1.bf16.msra.mxu0 0
    %3744 = vmatprep.subr.bf16.mxu0 0
    %3745 = vmatpush1.bf16.msra.mxu0 0
    %3746 = vmatprep.subr.bf16.mxu0 0
    %3747 = vmatpush1.bf16.msra.mxu0 0
    %3748 = vmatprep.subr.bf16.mxu0 0
    %3749 = vmatpush1.bf16.msra.mxu0 0
    %3750 = vmatprep.subr.bf16.mxu0 0
    %3751 = vmatpush1.bf16.msra.mxu0 0
    %3752 = vmatprep.subr.bf16.mxu0 0
    %3753 = vmatpush1.bf16.msra.mxu0 0
    %3754 = vmatprep.subr.bf16.mxu0 0
    %3755 = vmatpush1.bf16.msra.mxu0 0
    %3756 = vmatprep.subr.bf16.mxu0 0
    %3757 = vmatpush1.bf16.msra.mxu0 0
    %3758 = vmatprep.subr.bf16.mxu0 0
    %3759 = vmatpush1.bf16.msra.mxu0 0
    %3760 = vmatprep.subr.bf16.mxu0 0
    %3761 = vmatpush1.bf16.msra.mxu0 0
    %3762 = vmatprep.mubr.bf16.mxu0 0
    %3763 = vmatmul.mubr.bf16.gmra.mrb[0].mxu0 %v3198
    %v3764 = vpop.f32.mrb[0].mxu0
    %v3765 = vadd.f32 %v3725, %v3764
    %v3766 = vpop.f32.mrb[0].mxu0
    %v3767 = vpop.f32.mrb[0].mxu0
    %v3768 = vpop.f32.mrb[0].mxu0
    %3769 = vdwg.mxu0
    %s3770 = scalar_lea.vmem %s5, 456
    %v3771 = vld [vmem:[%s3770] sm:$0xf]
    %v3772 = vld [vmem:[%s3770 + $0x4] sm:$0xf]
    %v3773 = vld [vmem:[%s3770 + $0x8] sm:$0xf]
    %v3774 = vld [vmem:[%s3770 + $0xc] sm:$0xf]
    %v3775 = vld [vmem:[%s3770 + $0x10] sm:$0xf]
    %v3776 = vld [vmem:[%s3770 + $0x14] sm:$0xf]
    %v3777 = vld [vmem:[%s3770 + $0x18] sm:$0xf]
    %v3778 = vld [vmem:[%s3770 + $0x1c] sm:$0xf]
    %v3779 = vld [vmem:[%s3770 + $0x20] sm:$0xf]
    %v3780 = vld [vmem:[%s3770 + $0x24] sm:$0xf]
    %v3781 = vld [vmem:[%s3770 + $0x28] sm:$0xf]
    %v3782 = vld [vmem:[%s3770 + $0x2c] sm:$0xf]
    %v3783 = vld [vmem:[%s3770 + $0x30] sm:$0xf]
    %v3784 = vld [vmem:[%s3770 + $0x34] sm:$0xf]
    %v3785 = vld [vmem:[%s3770 + $0x38] sm:$0xf]
    %v3786 = vld [vmem:[%s3770 + $0x3c] sm:$0xf]
    %v3787 = vld [vmem:[%s3770 + $0x40] sm:$0xf]
    %v3788 = vld [vmem:[%s3770 + $0x44] sm:$0xf]
    %v3789 = vld [vmem:[%s3770 + $0x48] sm:$0xf]
    %v3790 = vld [vmem:[%s3770 + $0x4c] sm:$0xf]
    %v3791 = vld [vmem:[%s3770 + $0x50] sm:$0xf]
    %v3792 = vld [vmem:[%s3770 + $0x54] sm:$0xf]
    %v3793 = vld [vmem:[%s3770 + $0x58] sm:$0xf]
    %v3794 = vld [vmem:[%s3770 + $0x5c] sm:$0xf]
    %v3795 = vld [vmem:[%s3770 + $0x60] sm:$0xf]
    %v3796 = vld [vmem:[%s3770 + $0x64] sm:$0xf]
    %v3797 = vld [vmem:[%s3770 + $0x68] sm:$0xf]
    %v3798 = vld [vmem:[%s3770 + $0x6c] sm:$0xf]
    %v3799 = vld [vmem:[%s3770 + $0x70] sm:$0xf]
    %v3800 = vld [vmem:[%s3770 + $0x74] sm:$0xf]
    %v3801 = vld [vmem:[%s3770 + $0x78] sm:$0xf]
    %v3802 = vld [vmem:[%s3770 + $0x7c] sm:$0xf]
    %v3803 = vld [vmem:[%s3770 + $0x80] sm:$0xf]
    %v3804 = vld [vmem:[%s3770 + $0x84] sm:$0xf]
    %v3805 = vld [vmem:[%s3770 + $0x88] sm:$0xf]
    %v3806 = vld [vmem:[%s3770 + $0x8c] sm:$0xf]
    %v3807 = vld [vmem:[%s3770 + $0x90] sm:$0xf]
    %v3808 = vld [vmem:[%s3770 + $0x94] sm:$0x3]
    %s3809 = scalar_lea.vmem %s7, 3
    %v3810 = vld [vmem:[%s3809] sm:$0x1]
    %v3812 = vlaneseq
    %v3813 = vshrl.u32 %v3812, 7
    %v3814 = vsub.s32 0, %v3813
    %v3815 = vrot.slane %v3810, %v3814
    %v3855 = vunpack.c.l.b16 %v3771
    %v3856 = vunpack.c.l.b16 %v3772
    %v3857 = vunpack.c.l.b16 %v3773
    %v3858 = vunpack.c.l.b16 %v3774
    %v3859 = vunpack.c.l.b16 %v3775
    %v3860 = vunpack.c.l.b16 %v3776
    %v3861 = vunpack.c.l.b16 %v3777
    %v3862 = vunpack.c.l.b16 %v3778
    %v3863 = vunpack.c.l.b16 %v3779
    %v3864 = vunpack.c.l.b16 %v3780
    %v3865 = vunpack.c.l.b16 %v3781
    %v3866 = vunpack.c.l.b16 %v3782
    %v3867 = vunpack.c.l.b16 %v3783
    %v3868 = vunpack.c.l.b16 %v3784
    %v3869 = vunpack.c.l.b16 %v3785
    %v3870 = vunpack.c.l.b16 %v3786
    %v3871 = vunpack.c.l.b16 %v3787
    %v3872 = vunpack.c.l.b16 %v3788
    %v3873 = vunpack.c.l.b16 %v3789
    %v3874 = vunpack.c.l.b16 %v3790
    %v3875 = vunpack.c.l.b16 %v3791
    %v3876 = vunpack.c.l.b16 %v3792
    %v3877 = vunpack.c.l.b16 %v3793
    %v3878 = vunpack.c.l.b16 %v3794
    %v3879 = vunpack.c.l.b16 %v3795
    %v3880 = vunpack.c.l.b16 %v3796
    %v3881 = vunpack.c.l.b16 %v3797
    %v3882 = vunpack.c.l.b16 %v3798
    %v3883 = vunpack.c.l.b16 %v3799
    %v3884 = vunpack.c.l.b16 %v3800
    %v3885 = vunpack.c.l.b16 %v3801
    %v3886 = vunpack.c.l.b16 %v3802
    %v3887 = vunpack.c.l.b16 %v3803
    %v3888 = vunpack.c.l.b16 %v3804
    %v3889 = vunpack.c.l.b16 %v3805
    %v3890 = vunpack.c.l.b16 %v3806
    %v3891 = vunpack.c.l.b16 %v3807
    %v3892 = vunpack.c.l.b16 %v3808
    %v3893 = vpack.c.b16 %v3856, %v3855
    %v3894 = vpack.c.b16 %v3858, %v3857
    %v3895 = vpack.c.b16 %v3860, %v3859
    %v3896 = vpack.c.b16 %v3862, %v3861
    %v3897 = vpack.c.b16 %v3864, %v3863
    %v3898 = vpack.c.b16 %v3866, %v3865
    %v3899 = vpack.c.b16 %v3868, %v3867
    %v3900 = vpack.c.b16 %v3870, %v3869
    %v3901 = vpack.c.b16 %v3872, %v3871
    %v3902 = vpack.c.b16 %v3874, %v3873
    %v3903 = vpack.c.b16 %v3876, %v3875
    %v3904 = vpack.c.b16 %v3878, %v3877
    %v3905 = vpack.c.b16 %v3880, %v3879
    %v3906 = vpack.c.b16 %v3882, %v3881
    %v3907 = vpack.c.b16 %v3884, %v3883
    %v3908 = vpack.c.b16 %v3886, %v3885
    %v3909 = vpack.c.b16 %v3888, %v3887
    %v3910 = vpack.c.b16 %v3890, %v3889
    %v3911 = vpack.c.b16 %v3892, %v3891
    %v3931 = vsel %vm3200, %v3911, 0
    %3933 = vmatprep.subr.bf16.mxu0 0
    %3934 = vmatpush1.bf16.msra.mxu0 %v3893
    %3935 = vmatprep.subr.bf16.mxu0 0
    %3936 = vmatpush1.bf16.msra.mxu0 %v3894
    %3937 = vmatprep.subr.bf16.mxu0 0
    %3938 = vmatpush1.bf16.msra.mxu0 %v3895
    %3939 = vmatprep.subr.bf16.mxu0 0
    %3940 = vmatpush1.bf16.msra.mxu0 %v3896
    %3941 = vmatprep.subr.bf16.mxu0 0
    %3942 = vmatpush1.bf16.msra.mxu0 %v3897
    %3943 = vmatprep.subr.bf16.mxu0 0
    %3944 = vmatpush1.bf16.msra.mxu0 %v3898
    %3945 = vmatprep.subr.bf16.mxu0 0
    %3946 = vmatpush1.bf16.msra.mxu0 %v3899
    %3947 = vmatprep.subr.bf16.mxu0 0
    %3948 = vmatpush1.bf16.msra.mxu0 %v3900
    %3949 = vmatprep.subr.bf16.mxu0 0
    %3950 = vmatpush1.bf16.msra.mxu0 %v3901
    %3951 = vmatprep.subr.bf16.mxu0 0
    %3952 = vmatpush1.bf16.msra.mxu0 %v3902
    %3953 = vmatprep.subr.bf16.mxu0 0
    %3954 = vmatpush1.bf16.msra.mxu0 %v3903
    %3955 = vmatprep.subr.bf16.mxu0 0
    %3956 = vmatpush1.bf16.msra.mxu0 %v3904
    %3957 = vmatprep.subr.bf16.mxu0 0
    %3958 = vmatpush1.bf16.msra.mxu0 %v3905
    %3959 = vmatprep.subr.bf16.mxu0 0
    %3960 = vmatpush1.bf16.msra.mxu0 %v3906
    %3961 = vmatprep.subr.bf16.mxu0 0
    %3962 = vmatpush1.bf16.msra.mxu0 %v3907
    %3963 = vmatprep.subr.bf16.mxu0 0
    %3964 = vmatpush1.bf16.msra.mxu0 %v3908
    %3965 = vmatprep.mubr.bf16.mxu0 %v3079
    %3966 = vmatmul.mubr.bf16.gmra.mrb[0].mxu0 %v3078
    %v3967 = vpop.f32.mrb[0].mxu0
    %v3968 = vadd.f32 %v3815, %v3967
    %v3969 = vpop.f32.mrb[0].mxu0
    %v3970 = vpop.f32.mrb[0].mxu0
    %v3971 = vpop.f32.mrb[0].mxu0
    %3972 = vdwg.mxu0
    %3973 = vmatprep.subr.bf16.mxu0 0
    %3974 = vmatpush1.bf16.msra.mxu0 %v3909
    %3975 = vmatprep.subr.bf16.mxu0 0
    %3976 = vmatpush1.bf16.msra.mxu0 %v3910
    %3977 = vmatprep.subr.bf16.mxu0 0
    %3978 = vmatpush1.bf16.msra.mxu0 %v3931
    %3979 = vmatprep.subr.bf16.mxu0 0
    %3980 = vmatpush1.bf16.msra.mxu0 0
    %3981 = vmatprep.subr.bf16.mxu0 0
    %3982 = vmatpush1.bf16.msra.mxu0 0
    %3983 = vmatprep.subr.bf16.mxu0 0
    %3984 = vmatpush1.bf16.msra.mxu0 0
    %3985 = vmatprep.subr.bf16.mxu0 0
    %3986 = vmatpush1.bf16.msra.mxu0 0
    %3987 = vmatprep.subr.bf16.mxu0 0
    %3988 = vmatpush1.bf16.msra.mxu0 0
    %3989 = vmatprep.subr.bf16.mxu0 0
    %3990 = vmatpush1.bf16.msra.mxu0 0
    %3991 = vmatprep.subr.bf16.mxu0 0
    %3992 = vmatpush1.bf16.msra.mxu0 0
    %3993 = vmatprep.subr.bf16.mxu0 0
    %3994 = vmatpush1.bf16.msra.mxu0 0
    %3995 = vmatprep.subr.bf16.mxu0 0
    %3996 = vmatpush1.bf16.msra.mxu0 0
    %3997 = vmatprep.subr.bf16.mxu0 0
    %3998 = vmatpush1.bf16.msra.mxu0 0
    %3999 = vmatprep.subr.bf16.mxu0 0
    %4000 = vmatpush1.bf16.msra.mxu0 0
    %4001 = vmatprep.subr.bf16.mxu0 0
    %4002 = vmatpush1.bf16.msra.mxu0 0
    %4003 = vmatprep.subr.bf16.mxu0 0
    %4004 = vmatpush1.bf16.msra.mxu0 0
    %4005 = vmatprep.mubr.bf16.mxu0 0
    %4006 = vmatmul.mubr.bf16.gmra.mrb[0].mxu0 %v3198
    %v4007 = vpop.f32.mrb[0].mxu0
    %v4008 = vadd.f32 %v3968, %v4007
    %v4009 = vpop.f32.mrb[0].mxu0
    %v4010 = vpop.f32.mrb[0].mxu0
    %v4011 = vpop.f32.mrb[0].mxu0
    %4012 = vdwg.mxu0
    %v4013 = vld [vmem:[%s6] sm:$0xf]
    %v4014 = vld [vmem:[%s6 + $0x4] sm:$0xf]
    %v4015 = vld [vmem:[%s6 + $0x8] sm:$0xf]
    %v4016 = vld [vmem:[%s6 + $0xc] sm:$0xf]
    %v4017 = vld [vmem:[%s6 + $0x10] sm:$0xf]
    %v4018 = vld [vmem:[%s6 + $0x14] sm:$0xf]
    %v4019 = vld [vmem:[%s6 + $0x18] sm:$0x1]
    %v4027 = vunpack.c.l.b16 %v4013
    %v4028 = vunpack.c.l.b16 %v4014
    %v4029 = vunpack.c.l.b16 %v4015
    %v4030 = vunpack.c.l.b16 %v4016
    %v4031 = vunpack.c.l.b16 %v4017
    %v4032 = vunpack.c.l.b16 %v4018
    %v4033 = vunpack.c.l.b16 %v4019
    %v4034 = vpack.c.b16 %v4028, %v4027
    %v4035 = vpack.c.b16 %v4030, %v4029
    %v4036 = vpack.c.b16 %v4032, %v4031
    %v4037 = vpack.c.b16 %v4033, %v4033
    %vm4041 = vcmask 408576
    %v4043 = vsel %vm4041, 0, 0
    %v4046 = vsel %vm1131, %v4037, 0
    %4048 = vmatprep.subr.bf16.mxu0 0
    %4049 = vmatpush1.bf16.msra.mxu0 %v4034
    %4050 = vmatprep.subr.bf16.mxu0 0
    %4051 = vmatpush1.bf16.msra.mxu0 %v4035
    %4052 = vmatprep.subr.bf16.mxu0 0
    %4053 = vmatpush1.bf16.msra.mxu0 %v4036
    %4054 = vmatprep.subr.bf16.mxu0 0
    %4055 = vmatpush1.bf16.msra.mxu0 %v4046
    %4056 = vmatprep.subr.bf16.mxu0 0
    %4057 = vmatpush1.bf16.msra.mxu0 0
    %4058 = vmatprep.subr.bf16.mxu0 0
    %4059 = vmatpush1.bf16.msra.mxu0 0
    %4060 = vmatprep.subr.bf16.mxu0 0
    %4061 = vmatpush1.bf16.msra.mxu0 0
    %4062 = vmatprep.subr.bf16.mxu0 0
    %4063 = vmatpush1.bf16.msra.mxu0 0
    %4064 = vmatprep.subr.bf16.mxu0 0
    %4065 = vmatpush1.bf16.msra.mxu0 0
    %4066 = vmatprep.subr.bf16.mxu0 0
    %4067 = vmatpush1.bf16.msra.mxu0 0
    %4068 = vmatprep.subr.bf16.mxu0 0
    %4069 = vmatpush1.bf16.msra.mxu0 0
    %4070 = vmatprep.subr.bf16.mxu0 0
    %4071 = vmatpush1.bf16.msra.mxu0 0
    %4072 = vmatprep.subr.bf16.mxu0 0
    %4073 = vmatpush1.bf16.msra.mxu0 0
    %4074 = vmatprep.subr.bf16.mxu0 0
    %4075 = vmatpush1.bf16.msra.mxu0 0
    %4076 = vmatprep.subr.bf16.mxu0 0
    %4077 = vmatpush1.bf16.msra.mxu0 0
    %4078 = vmatprep.subr.bf16.mxu0 0
    %4079 = vmatpush1.bf16.msra.mxu0 0
    %4080 = vmatprep.mubr.bf16.mxu0 0
    %4081 = vmatmul.mubr.bf16.gmra.mrb[0].mxu0 %v4043
    %v4082 = vpop.f32.mrb[0].mxu0
    %v4083 = vadd.f32 0.0, %v4082
    %v4084 = vpop.f32.mrb[0].mxu0
    %v4085 = vpop.f32.mrb[0].mxu0
    %v4086 = vpop.f32.mrb[0].mxu0
    %4087 = vdwg.mxu0
    %s4088 = scalar_lea.vmem %s6, 28
    %v4089 = vld [vmem:[%s4088] sm:$0xf]
    %v4090 = vld [vmem:[%s4088 + $0x4] sm:$0xf]
    %v4091 = vld [vmem:[%s4088 + $0x8] sm:$0xf]
    %v4092 = vld [vmem:[%s4088 + $0xc] sm:$0xf]
    %v4093 = vld [vmem:[%s4088 + $0x10] sm:$0xf]
    %v4094 = vld [vmem:[%s4088 + $0x14] sm:$0xf]
    %v4095 = vld [vmem:[%s4088 + $0x18] sm:$0x1]
    %v4103 = vunpack.c.l.b16 %v4089
    %v4104 = vunpack.c.l.b16 %v4090
    %v4105 = vunpack.c.l.b16 %v4091
    %v4106 = vunpack.c.l.b16 %v4092
    %v4107 = vunpack.c.l.b16 %v4093
    %v4108 = vunpack.c.l.b16 %v4094
    %v4109 = vunpack.c.l.b16 %v4095
    %v4110 = vpack.c.b16 %v4104, %v4103
    %v4111 = vpack.c.b16 %v4106, %v4105
    %v4112 = vpack.c.b16 %v4108, %v4107
    %v4113 = vpack.c.b16 %v4109, %v4109
    %v4118 = vsel %vm1131, %v4113, 0
    %4120 = vmatprep.subr.bf16.mxu0 0
    %4121 = vmatpush1.bf16.msra.mxu0 %v4110
    %4122 = vmatprep.subr.bf16.mxu0 0
    %4123 = vmatpush1.bf16.msra.mxu0 %v4111
    %4124 = vmatprep.subr.bf16.mxu0 0
    %4125 = vmatpush1.bf16.msra.mxu0 %v4112
    %4126 = vmatprep.subr.bf16.mxu0 0
    %4127 = vmatpush1.bf16.msra.mxu0 %v4118
    %4128 = vmatprep.subr.bf16.mxu0 0
    %4129 = vmatpush1.bf16.msra.mxu0 0
    %4130 = vmatprep.subr.bf16.mxu0 0
    %4131 = vmatpush1.bf16.msra.mxu0 0
    %4132 = vmatprep.subr.bf16.mxu0 0
    %4133 = vmatpush1.bf16.msra.mxu0 0
    %4134 = vmatprep.subr.bf16.mxu0 0
    %4135 = vmatpush1.bf16.msra.mxu0 0
    %4136 = vmatprep.subr.bf16.mxu0 0
    %4137 = vmatpush1.bf16.msra.mxu0 0
    %4138 = vmatprep.subr.bf16.mxu0 0
    %4139 = vmatpush1.bf16.msra.mxu0 0
    %4140 = vmatprep.subr.bf16.mxu0 0
    %4141 = vmatpush1.bf16.msra.mxu0 0
    %4142 = vmatprep.subr.bf16.mxu0 0
    %4143 = vmatpush1.bf16.msra.mxu0 0
    %4144 = vmatprep.subr.bf16.mxu0 0
    %4145 = vmatpush1.bf16.msra.mxu0 0
    %4146 = vmatprep.subr.bf16.mxu0 0
    %4147 = vmatpush1.bf16.msra.mxu0 0
    %4148 = vmatprep.subr.bf16.mxu0 0
    %4149 = vmatpush1.bf16.msra.mxu0 0
    %4150 = vmatprep.subr.bf16.mxu0 0
    %4151 = vmatpush1.bf16.msra.mxu0 0
    %4152 = vmatprep.mubr.bf16.mxu0 0
    %4153 = vmatmul.mubr.bf16.gmra.mrb[0].mxu0 %v4043
    %v4154 = vpop.f32.mrb[0].mxu0
    %v4155 = vadd.f32 0.0, %v4154
    %v4156 = vpop.f32.mrb[0].mxu0
    %v4157 = vpop.f32.mrb[0].mxu0
    %v4158 = vpop.f32.mrb[0].mxu0
    %4159 = vdwg.mxu0
    %s4160 = scalar_lea.vmem %s6, 56
    %v4161 = vld [vmem:[%s4160] sm:$0xf]
    %v4162 = vld [vmem:[%s4160 + $0x4] sm:$0xf]
    %v4163 = vld [vmem:[%s4160 + $0x8] sm:$0xf]
    %v4164 = vld [vmem:[%s4160 + $0xc] sm:$0xf]
    %v4165 = vld [vmem:[%s4160 + $0x10] sm:$0xf]
    %v4166 = vld [vmem:[%s4160 + $0x14] sm:$0xf]
    %v4167 = vld [vmem:[%s4160 + $0x18] sm:$0x1]
    %v4175 = vunpack.c.l.b16 %v4161
    %v4176 = vunpack.c.l.b16 %v4162
    %v4177 = vunpack.c.l.b16 %v4163
    %v4178 = vunpack.c.l.b16 %v4164
    %v4179 = vunpack.c.l.b16 %v4165
    %v4180 = vunpack.c.l.b16 %v4166
    %v4181 = vunpack.c.l.b16 %v4167
    %v4182 = vpack.c.b16 %v4176, %v4175
    %v4183 = vpack.c.b16 %v4178, %v4177
    %v4184 = vpack.c.b16 %v4180, %v4179
    %v4185 = vpack.c.b16 %v4181, %v4181
    %v4190 = vsel %vm1131, %v4185, 0
    %4192 = vmatprep.subr.bf16.mxu0 0
    %4193 = vmatpush1.bf16.msra.mxu0 %v4182
    %4194 = vmatprep.subr.bf16.mxu0 0
    %4195 = vmatpush1.bf16.msra.mxu0 %v4183
    %4196 = vmatprep.subr.bf16.mxu0 0
    %4197 = vmatpush1.bf16.msra.mxu0 %v4184
    %4198 = vmatprep.subr.bf16.mxu0 0
    %4199 = vmatpush1.bf16.msra.mxu0 %v4190
    %4200 = vmatprep.subr.bf16.mxu0 0
    %4201 = vmatpush1.bf16.msra.mxu0 0
    %4202 = vmatprep.subr.bf16.mxu0 0
    %4203 = vmatpush1.bf16.msra.mxu0 0
    %4204 = vmatprep.subr.bf16.mxu0 0
    %4205 = vmatpush1.bf16.msra.mxu0 0
    %4206 = vmatprep.subr.bf16.mxu0 0
    %4207 = vmatpush1.bf16.msra.mxu0 0
    %4208 = vmatprep.subr.bf16.mxu0 0
    %4209 = vmatpush1.bf16.msra.mxu0 0
    %4210 = vmatprep.subr.bf16.mxu0 0
    %4211 = vmatpush1.bf16.msra.mxu0 0
    %4212 = vmatprep.subr.bf16.mxu0 0
    %4213 = vmatpush1.bf16.msra.mxu0 0
    %4214 = vmatprep.subr.bf16.mxu0 0
    %4215 = vmatpush1.bf16.msra.mxu0 0
    %4216 = vmatprep.subr.bf16.mxu0 0
    %4217 = vmatpush1.bf16.msra.mxu0 0
    %4218 = vmatprep.subr.bf16.mxu0 0
    %4219 = vmatpush1.bf16.msra.mxu0 0
    %4220 = vmatprep.subr.bf16.mxu0 0
    %4221 = vmatpush1.bf16.msra.mxu0 0
    %4222 = vmatprep.subr.bf16.mxu0 0
    %4223 = vmatpush1.bf16.msra.mxu0 0
    %4224 = vmatprep.mubr.bf16.mxu0 0
    %4225 = vmatmul.mubr.bf16.gmra.mrb[0].mxu0 %v4043
    %v4226 = vpop.f32.mrb[0].mxu0
    %v4227 = vadd.f32 0.0, %v4226
    %v4228 = vpop.f32.mrb[0].mxu0
    %v4229 = vpop.f32.mrb[0].mxu0
    %v4230 = vpop.f32.mrb[0].mxu0
    %4231 = vdwg.mxu0
    %s4232 = scalar_lea.vmem %s6, 84
    %v4233 = vld [vmem:[%s4232] sm:$0xf]
    %v4234 = vld [vmem:[%s4232 + $0x4] sm:$0xf]
    %v4235 = vld [vmem:[%s4232 + $0x8] sm:$0xf]
    %v4236 = vld [vmem:[%s4232 + $0xc] sm:$0xf]
    %v4237 = vld [vmem:[%s4232 + $0x10] sm:$0xf]
    %v4238 = vld [vmem:[%s4232 + $0x14] sm:$0xf]
    %v4239 = vld [vmem:[%s4232 + $0x18] sm:$0x1]
    %v4247 = vunpack.c.l.b16 %v4233
    %v4248 = vunpack.c.l.b16 %v4234
    %v4249 = vunpack.c.l.b16 %v4235
    %v4250 = vunpack.c.l.b16 %v4236
    %v4251 = vunpack.c.l.b16 %v4237
    %v4252 = vunpack.c.l.b16 %v4238
    %v4253 = vunpack.c.l.b16 %v4239
    %v4254 = vpack.c.b16 %v4248, %v4247
    %v4255 = vpack.c.b16 %v4250, %v4249
    %v4256 = vpack.c.b16 %v4252, %v4251
    %v4257 = vpack.c.b16 %v4253, %v4253
    %v4262 = vsel %vm1131, %v4257, 0
    %4264 = vmatprep.subr.bf16.mxu0 0
    %4265 = vmatpush1.bf16.msra.mxu0 %v4254
    %4266 = vmatprep.subr.bf16.mxu0 0
    %4267 = vmatpush1.bf16.msra.mxu0 %v4255
    %4268 = vmatprep.subr.bf16.mxu0 0
    %4269 = vmatpush1.bf16.msra.mxu0 %v4256
    %4270 = vmatprep.subr.bf16.mxu0 0
    %4271 = vmatpush1.bf16.msra.mxu0 %v4262
    %4272 = vmatprep.subr.bf16.mxu0 0
    %4273 = vmatpush1.bf16.msra.mxu0 0
    %4274 = vmatprep.subr.bf16.mxu0 0
    %4275 = vmatpush1.bf16.msra.mxu0 0
    %4276 = vmatprep.subr.bf16.mxu0 0
    %4277 = vmatpush1.bf16.msra.mxu0 0
    %4278 = vmatprep.subr.bf16.mxu0 0
    %4279 = vmatpush1.bf16.msra.mxu0 0
    %4280 = vmatprep.subr.bf16.mxu0 0
    %4281 = vmatpush1.bf16.msra.mxu0 0
    %4282 = vmatprep.subr.bf16.mxu0 0
    %4283 = vmatpush1.bf16.msra.mxu0 0
    %4284 = vmatprep.subr.bf16.mxu0 0
    %4285 = vmatpush1.bf16.msra.mxu0 0
    %4286 = vmatprep.subr.bf16.mxu0 0
    %4287 = vmatpush1.bf16.msra.mxu0 0
    %4288 = vmatprep.subr.bf16.mxu0 0
    %4289 = vmatpush1.bf16.msra.mxu0 0
    %4290 = vmatprep.subr.bf16.mxu0 0
    %4291 = vmatpush1.bf16.msra.mxu0 0
    %4292 = vmatprep.subr.bf16.mxu0 0
    %4293 = vmatpush1.bf16.msra.mxu0 0
    %4294 = vmatprep.subr.bf16.mxu0 0
    %4295 = vmatpush1.bf16.msra.mxu0 0
    %4296 = vmatprep.mubr.bf16.mxu0 0
    %4297 = vmatmul.mubr.bf16.gmra.mrb[0].mxu0 %v4043
    %v4298 = vpop.f32.mrb[0].mxu0
    %v4299 = vadd.f32 0.0, %v4298
    %v4300 = vpop.f32.mrb[0].mxu0
    %v4301 = vpop.f32.mrb[0].mxu0
    %v4302 = vpop.f32.mrb[0].mxu0
    %4303 = vdwg.mxu0
    %v4304 = vadd.f32 %v3279, %v4083
    %v4305 = vxor.u32 %v4304, 2147483648
    %v4306 = vmul.f32 %v4305, 1.442695
    %v4307 = vpow.pop %v4306
    %v4308 = vadd.f32 %v4307, 1.0
    %v4309 = vrcp.pop %v4308
    %v4310 = vmul.f32 1.0, %v4309
    %v4311 = vadd.f32 %v3522, %v4155
    %v4312 = vxor.u32 %v4311, 2147483648
    %v4313 = vmul.f32 %v4312, 1.442695
    %v4314 = vpow.pop %v4313
    %v4315 = vadd.f32 %v4314, 1.0
    %v4316 = vrcp.pop %v4315
    %v4317 = vmul.f32 1.0, %v4316
    %v4318 = vadd.f32 %v3765, %v4227
    %v4319 = vtanh.pop %v4318
    %v4320 = vadd.f32 %v4008, %v4299
    %v4321 = vxor.u32 %v4320, 2147483648
    %v4322 = vmul.f32 %v4321, 1.442695
    %v4323 = vpow.pop %v4322
    %v4324 = vadd.f32 %v4323, 1.0
    %v4325 = vrcp.pop %v4324
    %v4326 = vmul.f32 1.0, %v4325
    %v4327 = vmul.f32 %v4317, 0.0
    %v4328 = vmul.f32 %v4310, %v4319
    %v4329 = vadd.f32 %v4327, %v4328
    %v4330 = vtanh.pop %v4329
    %v4331 = vmul.f32 %v4326, %v4330
    %v4332 = vpack.c.bf16 %v4331, %v4331
    %v4334 = vsel %vm4041, %v4332, 0
    %4336 = vmatprep.subr.bf16.mxu0 0
    %4337 = vmatpush1.bf16.msra.mxu0 %v4034
    %4338 = vmatprep.subr.bf16.mxu0 0
    %4339 = vmatpush1.bf16.msra.mxu0 %v4035
    %4340 = vmatprep.subr.bf16.mxu0 0
    %4341 = vmatpush1.bf16.msra.mxu0 %v4036
    %4342 = vmatprep.subr.bf16.mxu0 0
    %4343 = vmatpush1.bf16.msra.mxu0 %v4046
    %4344 = vmatprep.subr.bf16.mxu0 0
    %4345 = vmatpush1.bf16.msra.mxu0 0
    %4346 = vmatprep.subr.bf16.mxu0 0
    %4347 = vmatpush1.bf16.msra.mxu0 0
    %4348 = vmatprep.subr.bf16.mxu0 0
    %4349 = vmatpush1.bf16.msra.mxu0 0
    %4350 = vmatprep.subr.bf16.mxu0 0
    %4351 = vmatpush1.bf16.msra.mxu0 0
    %4352 = vmatprep.subr.bf16.mxu0 0
    %4353 = vmatpush1.bf16.msra.mxu0 0
    %4354 = vmatprep.subr.bf16.mxu0 0
    %4355 = vmatpush1.bf16.msra.mxu0 0
    %4356 = vmatprep.subr.bf16.mxu0 0
    %4357 = vmatpush1.bf16.msra.mxu0 0
    %4358 = vmatprep.subr.bf16.mxu0 0
    %4359 = vmatpush1.bf16.msra.mxu0 0
    %4360 = vmatprep.subr.bf16.mxu0 0
    %4361 = vmatpush1.bf16.msra.mxu0 0
    %4362 = vmatprep.subr.bf16.mxu0 0
    %4363 = vmatpush1.bf16.msra.mxu0 0
    %4364 = vmatprep.subr.bf16.mxu0 0
    %4365 = vmatpush1.bf16.msra.mxu0 0
    %4366 = vmatprep.subr.bf16.mxu0 0
    %4367 = vmatpush1.bf16.msra.mxu0 0
    %4368 = vmatprep.mubr.bf16.mxu0 0
    %4369 = vmatmul.mubr.bf16.gmra.mrb[0].mxu0 %v4334
    %v4370 = vpop.f32.mrb[0].mxu0
    %v4371 = vadd.f32 0.0, %v4370
    %v4372 = vpop.f32.mrb[0].mxu0
    %v4373 = vpop.f32.mrb[0].mxu0
    %v4374 = vpop.f32.mrb[0].mxu0
    %4375 = vdwg.mxu0
    %4376 = vmatprep.subr.bf16.mxu0 0
    %4377 = vmatpush1.bf16.msra.mxu0 %v4110
    %4378 = vmatprep.subr.bf16.mxu0 0
    %4379 = vmatpush1.bf16.msra.mxu0 %v4111
    %4380 = vmatprep.subr.bf16.mxu0 0
    %4381 = vmatpush1.bf16.msra.mxu0 %v4112
    %4382 = vmatprep.subr.bf16.mxu0 0
    %4383 = vmatpush1.bf16.msra.mxu0 %v4118
    %4384 = vmatprep.subr.bf16.mxu0 0
    %4385 = vmatpush1.bf16.msra.mxu0 0
    %4386 = vmatprep.subr.bf16.mxu0 0
    %4387 = vmatpush1.bf16.msra.mxu0 0
    %4388 = vmatprep.subr.bf16.mxu0 0
    %4389 = vmatpush1.bf16.msra.mxu0 0
    %4390 = vmatprep.subr.bf16.mxu0 0
    %4391 = vmatpush1.bf16.msra.mxu0 0
    %4392 = vmatprep.subr.bf16.mxu0 0
    %4393 = vmatpush1.bf16.msra.mxu0 0
    %4394 = vmatprep.subr.bf16.mxu0 0
    %4395 = vmatpush1.bf16.msra.mxu0 0
    %4396 = vmatprep.subr.bf16.mxu0 0
    %4397 = vmatpush1.bf16.msra.mxu0 0
    %4398 = vmatprep.subr.bf16.mxu0 0
    %4399 = vmatpush1.bf16.msra.mxu0 0
    %4400 = vmatprep.subr.bf16.mxu0 0
    %4401 = vmatpush1.bf16.msra.mxu0 0
    %4402 = vmatprep.subr.bf16.mxu0 0
    %4403 = vmatpush1.bf16.msra.mxu0 0
    %4404 = vmatprep.subr.bf16.mxu0 0
    %4405 = vmatpush1.bf16.msra.mxu0 0
    %4406 = vmatprep.subr.bf16.mxu0 0
    %4407 = vmatpush1.bf16.msra.mxu0 0
    %4408 = vmatprep.mubr.bf16.mxu0 0
    %4409 = vmatmul.mubr.bf16.gmra.mrb[0].mxu0 %v4334
    %v4410 = vpop.f32.mrb[0].mxu0
    %v4411 = vadd.f32 0.0, %v4410
    %v4412 = vpop.f32.mrb[0].mxu0
    %v4413 = vpop.f32.mrb[0].mxu0
    %v4414 = vpop.f32.mrb[0].mxu0
    %4415 = vdwg.mxu0
    %4416 = vmatprep.subr.bf16.mxu0 0
    %4417 = vmatpush1.bf16.msra.mxu0 %v4182
    %4418 = vmatprep.subr.bf16.mxu0 0
    %4419 = vmatpush1.bf16.msra.mxu0 %v4183
    %4420 = vmatprep.subr.bf16.mxu0 0
    %4421 = vmatpush1.bf16.msra.mxu0 %v4184
    %4422 = vmatprep.subr.bf16.mxu0 0
    %4423 = vmatpush1.bf16.msra.mxu0 %v4190
    %4424 = vmatprep.subr.bf16.mxu0 0
    %4425 = vmatpush1.bf16.msra.mxu0 0
    %4426 = vmatprep.subr.bf16.mxu0 0
    %4427 = vmatpush1.bf16.msra.mxu0 0
    %4428 = vmatprep.subr.bf16.mxu0 0
    %4429 = vmatpush1.bf16.msra.mxu0 0
    %4430 = vmatprep.subr.bf16.mxu0 0
    %4431 = vmatpush1.bf16.msra.mxu0 0
    %4432 = vmatprep.subr.bf16.mxu0 0
    %4433 = vmatpush1.bf16.msra.mxu0 0
    %4434 = vmatprep.subr.bf16.mxu0 0
    %4435 = vmatpush1.bf16.msra.mxu0 0
    %4436 = vmatprep.subr.bf16.mxu0 0
    %4437 = vmatpush1.bf16.msra.mxu0 0
    %4438 = vmatprep.subr.bf16.mxu0 0
    %4439 = vmatpush1.bf16.msra.mxu0 0
    %4440 = vmatprep.subr.bf16.mxu0 0
    %4441 = vmatpush1.bf16.msra.mxu0 0
    %4442 = vmatprep.subr.bf16.mxu0 0
    %4443 = vmatpush1.bf16.msra.mxu0 0
    %4444 = vmatprep.subr.bf16.mxu0 0
    %4445 = vmatpush1.bf16.msra.mxu0 0
    %4446 = vmatprep.subr.bf16.mxu0 0
    %4447 = vmatpush1.bf16.msra.mxu0 0
    %4448 = vmatprep.mubr.bf16.mxu0 0
    %4449 = vmatmul.mubr.bf16.gmra.mrb[0].mxu0 %v4334
    %v4450 = vpop.f32.mrb[0].mxu0
    %v4451 = vadd.f32 0.0, %v4450
    %v4452 = vpop.f32.mrb[0].mxu0
    %v4453 = vpop.f32.mrb[0].mxu0
    %v4454 = vpop.f32.mrb[0].mxu0
    %4455 = vdwg.mxu0
    %4456 = vmatprep.subr.bf16.mxu0 0
    %4457 = vmatpush1.bf16.msra.mxu0 %v4254
    %4458 = vmatprep.subr.bf16.mxu0 0
    %4459 = vmatpush1.bf16.msra.mxu0 %v4255
    %4460 = vmatprep.subr.bf16.mxu0 0
    %4461 = vmatpush1.bf16.msra.mxu0 %v4256
    %4462 = vmatprep.subr.bf16.mxu0 0
    %4463 = vmatpush1.bf16.msra.mxu0 %v4262
    %4464 = vmatprep.subr.bf16.mxu0 0
    %4465 = vmatpush1.bf16.msra.mxu0 0
    %4466 = vmatprep.subr.bf16.mxu0 0
    %4467 = vmatpush1.bf16.msra.mxu0 0
    %4468 = vmatprep.subr.bf16.mxu0 0
    %4469 = vmatpush1.bf16.msra.mxu0 0
    %4470 = vmatprep.subr.bf16.mxu0 0
    %4471 = vmatpush1.bf16.msra.mxu0 0
    %4472 = vmatprep.subr.bf16.mxu0 0
    %4473 = vmatpush1.bf16.msra.mxu0 0
    %4474 = vmatprep.subr.bf16.mxu0 0
    %4475 = vmatpush1.bf16.msra.mxu0 0
    %4476 = vmatprep.subr.bf16.mxu0 0
    %4477 = vmatpush1.bf16.msra.mxu0 0
    %4478 = vmatprep.subr.bf16.mxu0 0
    %4479 = vmatpush1.bf16.msra.mxu0 0
    %4480 = vmatprep.subr.bf16.mxu0 0
    %4481 = vmatpush1.bf16.msra.mxu0 0
    %4482 = vmatprep.subr.bf16.mxu0 0
    %4483 = vmatpush1.bf16.msra.mxu0 0
    %4484 = vmatprep.subr.bf16.mxu0 0
    %4485 = vmatpush1.bf16.msra.mxu0 0
    %4486 = vmatprep.subr.bf16.mxu0 0
    %4487 = vmatpush1.bf16.msra.mxu0 0
    %4488 = vmatprep.mubr.bf16.mxu0 0
    %4489 = vmatmul.mubr.bf16.gmra.mrb[0].mxu0 %v4334
    %v4490 = vpop.f32.mrb[0].mxu0
    %v4491 = vadd.f32 0.0, %v4490
    %v4492 = vpop.f32.mrb[0].mxu0
    %v4493 = vpop.f32.mrb[0].mxu0
    %v4494 = vpop.f32.mrb[0].mxu0
    %4495 = vdwg.mxu0
    %v4497 = vrot.slane %v4371, 7
    %v4499 = vadd.f32 %v3279, %v4497
    %v4500 = vxor.u32 %v4499, 2147483648
    %v4501 = vmul.f32 %v4500, 1.442695
    %v4502 = vpow.pop %v4501
    %v4503 = vadd.f32 %v4502, 1.0
    %v4504 = vrcp.pop %v4503
    %v4505 = vmul.f32 1.0, %v4504
    %v4507 = vrot.slane %v4411, 7
    %v4509 = vadd.f32 %v3522, %v4507
    %v4510 = vxor.u32 %v4509, 2147483648
    %v4511 = vmul.f32 %v4510, 1.442695
    %v4512 = vpow.pop %v4511
    %v4513 = vadd.f32 %v4512, 1.0
    %v4514 = vrcp.pop %v4513
    %v4515 = vmul.f32 1.0, %v4514
    %v4517 = vrot.slane %v4451, 7
    %v4519 = vadd.f32 %v3765, %v4517
    %v4520 = vtanh.pop %v4519
    %v4522 = vrot.slane %v4491, 7
    %v4524 = vadd.f32 %v4008, %v4522
    %v4525 = vxor.u32 %v4524, 2147483648
    %v4526 = vmul.f32 %v4525, 1.442695
    %v4527 = vpow.pop %v4526
    %v4528 = vadd.f32 %v4527, 1.0
    %v4529 = vrcp.pop %v4528
    %v4530 = vmul.f32 1.0, %v4529
    %v4532 = vrot.slane %v4329, 7
    %v4534 = vmul.f32 %v4515, %v4532
    %v4535 = vmul.f32 %v4505, %v4520
    %v4536 = vadd.f32 %v4534, %v4535
    %v4537 = vtanh.pop %v4536
    %v4538 = vmul.f32 %v4530, %v4537
    %v4539 = vmax.f32 %v4538, 0.0
    %v4540 = vpack.c.bf16 %v4539, %v4539
    %v4541 = vld [vmem:[%s8] sm:$0xf]
    %v4542 = vld [vmem:[%s8 + $0x4] sm:$0xf]
    %v4543 = vld [vmem:[%s8 + $0x8] sm:$0xf]
    %v4544 = vld [vmem:[%s8 + $0xc] sm:$0xf]
    %v4545 = vld [vmem:[%s8 + $0x10] sm:$0xf]
    %v4546 = vld [vmem:[%s8 + $0x14] sm:$0xf]
    %v4547 = vld [vmem:[%s8 + $0x18] sm:$0x1]
    %v4548 = vld [vmem:[%s9] sm:$0x1]
    %v4550 = vshrl.u32 %v4540, 16
    %v4559 = vunpack.c.l.b16 %v4541
    %v4560 = vunpack.c.l.b16 %v4542
    %v4561 = vunpack.c.l.b16 %v4543
    %v4562 = vunpack.c.l.b16 %v4544
    %v4563 = vunpack.c.l.b16 %v4545
    %v4564 = vunpack.c.l.b16 %v4546
    %v4565 = vunpack.c.l.b16 %v4547
    %v4566 = vpack.c.b16 %v4560, %v4559
    %v4567 = vpack.c.b16 %v4562, %v4561
    %v4568 = vpack.c.b16 %v4564, %v4563
    %v4569 = vpack.c.b16 %v4565, %v4565
    %v4574 = vsel %vm4041, %v4550, 0
    %v4577 = vsel %vm1131, %v4569, 0
    %4579 = vmatprep.subr.bf16.mxu0 0
    %4580 = vmatpush1.bf16.msra.mxu0 %v4566
    %4581 = vmatprep.subr.bf16.mxu0 0
    %4582 = vmatpush1.bf16.msra.mxu0 %v4567
    %4583 = vmatprep.subr.bf16.mxu0 0
    %4584 = vmatpush1.bf16.msra.mxu0 %v4568
    %4585 = vmatprep.subr.bf16.mxu0 0
    %4586 = vmatpush1.bf16.msra.mxu0 %v4577
    %4587 = vmatprep.subr.bf16.mxu0 0
    %4588 = vmatpush1.bf16.msra.mxu0 0
    %4589 = vmatprep.subr.bf16.mxu0 0
    %4590 = vmatpush1.bf16.msra.mxu0 0
    %4591 = vmatprep.subr.bf16.mxu0 0
    %4592 = vmatpush1.bf16.msra.mxu0 0
    %4593 = vmatprep.subr.bf16.mxu0 0
    %4594 = vmatpush1.bf16.msra.mxu0 0
    %4595 = vmatprep.subr.bf16.mxu0 0
    %4596 = vmatpush1.bf16.msra.mxu0 0
    %4597 = vmatprep.subr.bf16.mxu0 0
    %4598 = vmatpush1.bf16.msra.mxu0 0
    %4599 = vmatprep.subr.bf16.mxu0 0
    %4600 = vmatpush1.bf16.msra.mxu0 0
    %4601 = vmatprep.subr.bf16.mxu0 0
    %4602 = vmatpush1.bf16.msra.mxu0 0
    %4603 = vmatprep.subr.bf16.mxu0 0
    %4604 = vmatpush1.bf16.msra.mxu0 0
    %4605 = vmatprep.subr.bf16.mxu0 0
    %4606 = vmatpush1.bf16.msra.mxu0 0
    %4607 = vmatprep.subr.bf16.mxu0 0
    %4608 = vmatpush1.bf16.msra.mxu0 0
    %4609 = vmatprep.subr.bf16.mxu0 0
    %4610 = vmatpush1.bf16.msra.mxu0 0
    %4611 = vmatprep.mubr.bf16.mxu0 0
    %4612 = vmatmul.mubr.bf16.gmra.mrb[0].mxu0 %v4574
    %v4613 = vpop.f32.mrb[0].mxu0
    %v4614 = vadd.f32 %v4548, %v4613
    %v4615 = vpop.f32.mrb[0].mxu0
    %v4616 = vpop.f32.mrb[0].mxu0
    %v4617 = vpop.f32.mrb[0].mxu0
    %4618 = vdwg.mxu0
    %s4619 = scalar_lea.vmem %s0, 20
    %v4620 = vld [vmem:[%s4619] sm:$0xf]
    %v4621 = vld [vmem:[%s4619 + $0x4] sm:$0xf]
    %v4622 = vld [vmem:[%s4619 + $0x8] sm:$0xf]
    %v4623 = vld [vmem:[%s4619 + $0xc] sm:$0xf]
    %v4624 = vld [vmem:[%s4619 + $0x10] sm:$0x3]
    %v4625 = vld [vmem:[%s1] sm:$0xff]
    %v4626 = vld [vmem:[%s1 + $0x8] sm:$0xff]
    %v4627 = vld [vmem:[%s1 + $0x10] sm:$0xff]
    %v4628 = vld [vmem:[%s1 + $0x18] sm:$0xff]
    %v4629 = vld [vmem:[%s1 + $0x20] sm:$0xff]
    %v4630 = vld [vmem:[%s1 + $0x28] sm:$0xff]
    %v4631 = vld [vmem:[%s1 + $0x30] sm:$0xff]
    %v4632 = vld [vmem:[%s1 + $0x38] sm:$0xff]
    %v4633 = vld [vmem:[%s1 + $0x40] sm:$0xff]
    %v4634 = vld [vmem:[%s1 + $0x48] sm:$0xff]
    %v4635 = vld [vmem:[%s1 + $0x50] sm:$0xff]
    %v4636 = vld [vmem:[%s1 + $0x58] sm:$0xff]
    %v4637 = vld [vmem:[%s1 + $0x60] sm:$0xff]
    %v4638 = vld [vmem:[%s63] sm:$0xff]
    %v4639 = vld [vmem:[%s63 + $0x8] sm:$0xff]
    %v4640 = vld [vmem:[%s63 + $0x10] sm:$0xff]
    %v4641 = vld [vmem:[%s63 + $0x18] sm:$0xff]
    %v4642 = vld [vmem:[%s63 + $0x20] sm:$0xff]
    %v4643 = vld [vmem:[%s63 + $0x28] sm:$0xff]
    %v4644 = vld [vmem:[%s63 + $0x30] sm:$0xff]
    %v4645 = vld [vmem:[%s63 + $0x38] sm:$0xff]
    %v4646 = vld [vmem:[%s63 + $0x40] sm:$0xff]
    %v4647 = vld [vmem:[%s63 + $0x48] sm:$0xff]
    %v4648 = vld [vmem:[%s63 + $0x50] sm:$0xff]
    %v4649 = vld [vmem:[%s63 + $0x58] sm:$0xff]
    %v4650 = vld [vmem:[%s63 + $0x60] sm:$0xff]
    %v4656 = vunpack.c.l.b16 %v4620
    %v4657 = vunpack.c.l.b16 %v4621
    %v4658 = vunpack.c.l.b16 %v4622
    %v4659 = vunpack.c.l.b16 %v4623
    %v4660 = vunpack.c.l.b16 %v4624
    %v4661 = vpack.c.b16 %v4657, %v4656
    %v4662 = vpack.c.b16 %v4659, %v4658
    %v4663 = vpack.c.b16 %v4660, %v4660
    %v4665 = vshrl.u32 %v4661, 16
    %v4667 = vshll.u32 %v4661, 16
    %v4669 = vrot.slane %v4667, 1
    %v4670 = vor.u32 %v4665, %v4669
    %v4672 = vshll.u32 %v4662, 16
    %v4674 = vrot.slane %v4672, 1
    %v4675 = vsel %vm90, %v4670, %v4674
    %v4676 = vshrl.u32 %v4662, 16
    %v4678 = vor.u32 %v4676, %v4674
    %v4680 = vshll.u32 %v4663, 16
    %v4682 = vrot.slane %v4680, 1
    %v4683 = vsel %vm90, %v4678, %v4682
    %v4697 = vunpack.c.l.b16 %v4638
    %v4698 = vunpack.c.h.b16 %v4638
    %v4699 = vunpack.c.l.b16 %v4639
    %v4700 = vunpack.c.h.b16 %v4639
    %v4701 = vunpack.c.l.b16 %v4640
    %v4702 = vunpack.c.h.b16 %v4640
    %v4703 = vunpack.c.l.b16 %v4641
    %v4704 = vunpack.c.h.b16 %v4641
    %v4705 = vunpack.c.l.b16 %v4642
    %v4706 = vunpack.c.h.b16 %v4642
    %v4707 = vunpack.c.l.b16 %v4643
    %v4708 = vunpack.c.h.b16 %v4643
    %v4709 = vunpack.c.l.b16 %v4644
    %v4710 = vunpack.c.h.b16 %v4644
    %v4711 = vunpack.c.l.b16 %v4645
    %v4712 = vunpack.c.h.b16 %v4645
    %v4713 = vunpack.c.l.b16 %v4646
    %v4714 = vunpack.c.h.b16 %v4646
    %v4715 = vunpack.c.l.b16 %v4647
    %v4716 = vunpack.c.h.b16 %v4647
    %v4717 = vunpack.c.l.b16 %v4648
    %v4718 = vunpack.c.h.b16 %v4648
    %v4719 = vunpack.c.l.b16 %v4649
    %v4720 = vunpack.c.h.b16 %v4649
    %v4721 = vunpack.c.l.b16 %v4650
    %v4722 = vunpack.c.h.b16 %v4650
    %v4723 = vpack.c.b16 %v4699, %v4697
    %v4724 = vpack.c.b16 %v4700, %v4698
    %v4725 = vpack.c.b16 %v4703, %v4701
    %v4726 = vpack.c.b16 %v4704, %v4702
    %v4727 = vpack.c.b16 %v4707, %v4705
    %v4728 = vpack.c.b16 %v4708, %v4706
    %v4729 = vpack.c.b16 %v4711, %v4709
    %v4730 = vpack.c.b16 %v4712, %v4710
    %v4731 = vpack.c.b16 %v4715, %v4713
    %v4732 = vpack.c.b16 %v4716, %v4714
    %v4733 = vpack.c.b16 %v4719, %v4717
    %v4734 = vpack.c.b16 %v4720, %v4718
    %v4735 = vpack.c.b16 %v4721, %v4721
    %v4736 = vpack.c.b16 %v4722, %v4722
    %v4750 = vsel %vm176, %v4675, 0
    %v4753 = vsel %vm176, %v4683, 0
    %v4756 = vsel %vm37, %v4735, 0
    %v4759 = vsel %vm37, %v4736, 0
    %4761 = vmatprep.subr.bf16.mxu0 %v4724
    %4762 = vmatpush1.bf16.msra.mxu0 %v4723
    %4763 = vmatprep.subr.bf16.mxu0 %v4726
    %4764 = vmatpush1.bf16.msra.mxu0 %v4725
    %4765 = vmatprep.subr.bf16.mxu0 %v4728
    %4766 = vmatpush1.bf16.msra.mxu0 %v4727
    %4767 = vmatprep.subr.bf16.mxu0 %v4730
    %4768 = vmatpush1.bf16.msra.mxu0 %v4729
    %4769 = vmatprep.subr.bf16.mxu0 %v4732
    %4770 = vmatpush1.bf16.msra.mxu0 %v4731
    %4771 = vmatprep.subr.bf16.mxu0 %v4734
    %4772 = vmatpush1.bf16.msra.mxu0 %v4733
    %4773 = vmatprep.subr.bf16.mxu0 %v4759
    %4774 = vmatpush1.bf16.msra.mxu0 %v4756
    %4775 = vmatprep.subr.bf16.mxu0 0
    %4776 = vmatpush1.bf16.msra.mxu0 0
    %4777 = vmatprep.subr.bf16.mxu0 0
    %4778 = vmatpush1.bf16.msra.mxu0 0
    %4779 = vmatprep.subr.bf16.mxu0 0
    %4780 = vmatpush1.bf16.msra.mxu0 0
    %4781 = vmatprep.subr.bf16.mxu0 0
    %4782 = vmatpush1.bf16.msra.mxu0 0
    %4783 = vmatprep.subr.bf16.mxu0 0
    %4784 = vmatpush1.bf16.msra.mxu0 0
    %4785 = vmatprep.subr.bf16.mxu0 0
    %4786 = vmatpush1.bf16.msra.mxu0 0
    %4787 = vmatprep.subr.bf16.mxu0 0
    %4788 = vmatpush1.bf16.msra.mxu0 0
    %4789 = vmatprep.subr.bf16.mxu0 0
    %4790 = vmatpush1.bf16.msra.mxu0 0
    %4791 = vmatprep.subr.bf16.mxu0 0
    %4792 = vmatpush1.bf16.msra.mxu0 0
    %4793 = vmatprep.mubr.bf16.mxu0 0
    %4794 = vmatmul.mubr.bf16.gmra.mrb[0].mxu0 %v4750
    %v4795 = vpop.f32.mrb[0].mxu0
    %v4796 = vadd.f32 0.0, %v4795
    %v4797 = vpop.f32.mrb[0].mxu0
    %v4798 = vadd.f32 0.0, %v4797
    %v4799 = vpop.f32.mrb[0].mxu0
    %v4800 = vadd.f32 0.0, %v4799
    %v4801 = vpop.f32.mrb[0].mxu0
    %v4802 = vadd.f32 0.0, %v4801
    %4803 = vmatprep.mubr.bf16.mxu0 0
    %4804 = vmatmul.mubr.bf16.gmra.mrb[0].mxu0 %v4753
    %v4805 = vpop.f32.mrb[0].mxu0
    %v4806 = vadd.f32 0.0, %v4805
    %v4807 = vpop.f32.mrb[0].mxu0
    %v4808 = vadd.f32 0.0, %v4807
    %v4809 = vpop.f32.mrb[0].mxu0
    %v4810 = vadd.f32 0.0, %v4809
    %v4811 = vpop.f32.mrb[0].mxu0
    %v4812 = vadd.f32 0.0, %v4811
    %4813 = vdwg.mxu0
    %v4827 = vunpack.c.l.b16 %v4625
    %v4828 = vunpack.c.h.b16 %v4625
    %v4829 = vunpack.c.l.b16 %v4626
    %v4830 = vunpack.c.h.b16 %v4626
    %v4831 = vunpack.c.l.b16 %v4627
    %v4832 = vunpack.c.h.b16 %v4627
    %v4833 = vunpack.c.l.b16 %v4628
    %v4834 = vunpack.c.h.b16 %v4628
    %v4835 = vunpack.c.l.b16 %v4629
    %v4836 = vunpack.c.h.b16 %v4629
    %v4837 = vunpack.c.l.b16 %v4630
    %v4838 = vunpack.c.h.b16 %v4630
    %v4839 = vunpack.c.l.b16 %v4631
    %v4840 = vunpack.c.h.b16 %v4631
    %v4841 = vunpack.c.l.b16 %v4632
    %v4842 = vunpack.c.h.b16 %v4632
    %v4843 = vunpack.c.l.b16 %v4633
    %v4844 = vunpack.c.h.b16 %v4633
    %v4845 = vunpack.c.l.b16 %v4634
    %v4846 = vunpack.c.h.b16 %v4634
    %v4847 = vunpack.c.l.b16 %v4635
    %v4848 = vunpack.c.h.b16 %v4635
    %v4849 = vunpack.c.l.b16 %v4636
    %v4850 = vunpack.c.h.b16 %v4636
    %v4851 = vunpack.c.l.b16 %v4637
    %v4852 = vunpack.c.h.b16 %v4637
    %v4853 = vpack.c.b16 %v4829, %v4827
    %v4854 = vpack.c.b16 %v4830, %v4828
    %v4855 = vpack.c.b16 %v4833, %v4831
    %v4856 = vpack.c.b16 %v4834, %v4832
    %v4857 = vpack.c.b16 %v4837, %v4835
    %v4858 = vpack.c.b16 %v4838, %v4836
    %v4859 = vpack.c.b16 %v4841, %v4839
    %v4860 = vpack.c.b16 %v4842, %v4840
    %v4861 = vpack.c.b16 %v4845, %v4843
    %v4862 = vpack.c.b16 %v4846, %v4844
    %v4863 = vpack.c.b16 %v4849, %v4847
    %v4864 = vpack.c.b16 %v4850, %v4848
    %v4865 = vpack.c.b16 %v4851, %v4851
    %v4866 = vpack.c.b16 %v4852, %v4852
    %v4879 = vsel %vm176, %v4661, 0
    %v4881 = vsel %vm176, %v4662, 0
    %v4884 = vsel %vm37, %v4865, 0
    %v4887 = vsel %vm37, %v4866, 0
    %4889 = vmatprep.subr.bf16.mxu0 %v4854
    %4890 = vmatpush1.bf16.msra.mxu0 %v4853
    %4891 = vmatprep.subr.bf16.mxu0 %v4856
    %4892 = vmatpush1.bf16.msra.mxu0 %v4855
    %4893 = vmatprep.subr.bf16.mxu0 %v4858
    %4894 = vmatpush1.bf16.msra.mxu0 %v4857
    %4895 = vmatprep.subr.bf16.mxu0 %v4860
    %4896 = vmatpush1.bf16.msra.mxu0 %v4859
    %4897 = vmatprep.subr.bf16.mxu0 %v4862
    %4898 = vmatpush1.bf16.msra.mxu0 %v4861
    %4899 = vmatprep.subr.bf16.mxu0 %v4864
    %4900 = vmatpush1.bf16.msra.mxu0 %v4863
    %4901 = vmatprep.subr.bf16.mxu0 %v4887
    %4902 = vmatpush1.bf16.msra.mxu0 %v4884
    %4903 = vmatprep.subr.bf16.mxu0 0
    %4904 = vmatpush1.bf16.msra.mxu0 0
    %4905 = vmatprep.subr.bf16.mxu0 0
    %4906 = vmatpush1.bf16.msra.mxu0 0
    %4907 = vmatprep.subr.bf16.mxu0 0
    %4908 = vmatpush1.bf16.msra.mxu0 0
    %4909 = vmatprep.subr.bf16.mxu0 0
    %4910 = vmatpush1.bf16.msra.mxu0 0
    %4911 = vmatprep.subr.bf16.mxu0 0
    %4912 = vmatpush1.bf16.msra.mxu0 0
    %4913 = vmatprep.subr.bf16.mxu0 0
    %4914 = vmatpush1.bf16.msra.mxu0 0
    %4915 = vmatprep.subr.bf16.mxu0 0
    %4916 = vmatpush1.bf16.msra.mxu0 0
    %4917 = vmatprep.subr.bf16.mxu0 0
    %4918 = vmatpush1.bf16.msra.mxu0 0
    %4919 = vmatprep.subr.bf16.mxu0 0
    %4920 = vmatpush1.bf16.msra.mxu0 0
    %4921 = vmatprep.mubr.bf16.mxu0 0
    %4922 = vmatmul.mubr.bf16.gmra.mrb[0].mxu0 %v4879
    %v4923 = vpop.f32.mrb[0].mxu0
    %v4924 = vadd.f32 %v4796, %v4923
    %v4925 = vpop.f32.mrb[0].mxu0
    %v4926 = vadd.f32 %v4798, %v4925
    %v4927 = vpop.f32.mrb[0].mxu0
    %v4928 = vadd.f32 %v4800, %v4927
    %v4929 = vpop.f32.mrb[0].mxu0
    %v4930 = vadd.f32 %v4802, %v4929
    %4931 = vmatprep.mubr.bf16.mxu0 0
    %4932 = vmatmul.mubr.bf16.gmra.mrb[0].mxu0 %v4881
    %v4933 = vpop.f32.mrb[0].mxu0
    %v4934 = vadd.f32 %v4806, %v4933
    %v4935 = vpop.f32.mrb[0].mxu0
    %v4936 = vadd.f32 %v4808, %v4935
    %v4937 = vpop.f32.mrb[0].mxu0
    %v4938 = vadd.f32 %v4810, %v4937
    %v4939 = vpop.f32.mrb[0].mxu0
    %v4940 = vadd.f32 %v4812, %v4939
    %4941 = vdwg.mxu0
    %v4942 = vld [vmem:[%s370] sm:$0xff]
    %v4943 = vld [vmem:[%s370 + $0x8] sm:$0xff]
    %v4944 = vld [vmem:[%s370 + $0x10] sm:$0xff]
    %v4945 = vld [vmem:[%s370 + $0x18] sm:$0xff]
    %v4946 = vld [vmem:[%s370 + $0x20] sm:$0xff]
    %v4947 = vld [vmem:[%s370 + $0x28] sm:$0xff]
    %v4948 = vld [vmem:[%s370 + $0x30] sm:$0xff]
    %v4949 = vld [vmem:[%s370 + $0x38] sm:$0xff]
    %v4950 = vld [vmem:[%s370 + $0x40] sm:$0xff]
    %v4951 = vld [vmem:[%s370 + $0x48] sm:$0xff]
    %v4952 = vld [vmem:[%s370 + $0x50] sm:$0xff]
    %v4953 = vld [vmem:[%s370 + $0x58] sm:$0xff]
    %v4954 = vld [vmem:[%s370 + $0x60] sm:$0xff]
    %v4955 = vrot.slane %v4661, 1
    %v4956 = vrot.slane %v4662, 1
    %v4957 = vsel %vm384, %v4955, %v4956
    %v4958 = vrot.slane %v4663, 1
    %v4959 = vsel %vm384, %v4956, %v4958
    %v4973 = vunpack.c.l.b16 %v4942
    %v4974 = vunpack.c.h.b16 %v4942
    %v4975 = vunpack.c.l.b16 %v4943
    %v4976 = vunpack.c.h.b16 %v4943
    %v4977 = vunpack.c.l.b16 %v4944
    %v4978 = vunpack.c.h.b16 %v4944
    %v4979 = vunpack.c.l.b16 %v4945
    %v4980 = vunpack.c.h.b16 %v4945
    %v4981 = vunpack.c.l.b16 %v4946
    %v4982 = vunpack.c.h.b16 %v4946
    %v4983 = vunpack.c.l.b16 %v4947
    %v4984 = vunpack.c.h.b16 %v4947
    %v4985 = vunpack.c.l.b16 %v4948
    %v4986 = vunpack.c.h.b16 %v4948
    %v4987 = vunpack.c.l.b16 %v4949
    %v4988 = vunpack.c.h.b16 %v4949
    %v4989 = vunpack.c.l.b16 %v4950
    %v4990 = vunpack.c.h.b16 %v4950
    %v4991 = vunpack.c.l.b16 %v4951
    %v4992 = vunpack.c.h.b16 %v4951
    %v4993 = vunpack.c.l.b16 %v4952
    %v4994 = vunpack.c.h.b16 %v4952
    %v4995 = vunpack.c.l.b16 %v4953
    %v4996 = vunpack.c.h.b16 %v4953
    %v4997 = vunpack.c.l.b16 %v4954
    %v4998 = vunpack.c.h.b16 %v4954
    %v4999 = vpack.c.b16 %v4975, %v4973
    %v5000 = vpack.c.b16 %v4976, %v4974
    %v5001 = vpack.c.b16 %v4979, %v4977
    %v5002 = vpack.c.b16 %v4980, %v4978
    %v5003 = vpack.c.b16 %v4983, %v4981
    %v5004 = vpack.c.b16 %v4984, %v4982
    %v5005 = vpack.c.b16 %v4987, %v4985
    %v5006 = vpack.c.b16 %v4988, %v4986
    %v5007 = vpack.c.b16 %v4991, %v4989
    %v5008 = vpack.c.b16 %v4992, %v4990
    %v5009 = vpack.c.b16 %v4995, %v4993
    %v5010 = vpack.c.b16 %v4996, %v4994
    %v5011 = vpack.c.b16 %v4997, %v4997
    %v5012 = vpack.c.b16 %v4998, %v4998
    %v5026 = vsel %vm176, %v4957, 0
    %v5029 = vsel %vm176, %v4959, 0
    %v5032 = vsel %vm37, %v5011, 0
    %v5035 = vsel %vm37, %v5012, 0
    %5037 = vmatprep.subr.bf16.mxu0 %v5000
    %5038 = vmatpush1.bf16.msra.mxu0 %v4999
    %5039 = vmatprep.subr.bf16.mxu0 %v5002
    %5040 = vmatpush1.bf16.msra.mxu0 %v5001
    %5041 = vmatprep.subr.bf16.mxu0 %v5004
    %5042 = vmatpush1.bf16.msra.mxu0 %v5003
    %5043 = vmatprep.subr.bf16.mxu0 %v5006
    %5044 = vmatpush1.bf16.msra.mxu0 %v5005
    %5045 = vmatprep.subr.bf16.mxu0 %v5008
    %5046 = vmatpush1.bf16.msra.mxu0 %v5007
    %5047 = vmatprep.subr.bf16.mxu0 %v5010
    %5048 = vmatpush1.bf16.msra.mxu0 %v5009
    %5049 = vmatprep.subr.bf16.mxu0 %v5035
    %5050 = vmatpush1.bf16.msra.mxu0 %v5032
    %5051 = vmatprep.subr.bf16.mxu0 0
    %5052 = vmatpush1.bf16.msra.mxu0 0
    %5053 = vmatprep.subr.bf16.mxu0 0
    %5054 = vmatpush1.bf16.msra.mxu0 0
    %5055 = vmatprep.subr.bf16.mxu0 0
    %5056 = vmatpush1.bf16.msra.mxu0 0
    %5057 = vmatprep.subr.bf16.mxu0 0
    %5058 = vmatpush1.bf16.msra.mxu0 0
    %5059 = vmatprep.subr.bf16.mxu0 0
    %5060 = vmatpush1.bf16.msra.mxu0 0
    %5061 = vmatprep.subr.bf16.mxu0 0
    %5062 = vmatpush1.bf16.msra.mxu0 0
    %5063 = vmatprep.subr.bf16.mxu0 0
    %5064 = vmatpush1.bf16.msra.mxu0 0
    %5065 = vmatprep.subr.bf16.mxu0 0
    %5066 = vmatpush1.bf16.msra.mxu0 0
    %5067 = vmatprep.subr.bf16.mxu0 0
    %5068 = vmatpush1.bf16.msra.mxu0 0
    %5069 = vmatprep.mubr.bf16.mxu0 0
    %5070 = vmatmul.mubr.bf16.gmra.mrb[0].mxu0 %v5026
    %v5071 = vpop.f32.mrb[0].mxu0
    %v5072 = vadd.f32 0.0, %v5071
    %v5073 = vpop.f32.mrb[0].mxu0
    %v5074 = vadd.f32 0.0, %v5073
    %v5075 = vpop.f32.mrb[0].mxu0
    %v5076 = vadd.f32 0.0, %v5075
    %v5077 = vpop.f32.mrb[0].mxu0
    %v5078 = vadd.f32 0.0, %v5077
    %5079 = vmatprep.mubr.bf16.mxu0 0
    %5080 = vmatmul.mubr.bf16.gmra.mrb[0].mxu0 %v5029
    %v5081 = vpop.f32.mrb[0].mxu0
    %v5082 = vadd.f32 0.0, %v5081
    %v5083 = vpop.f32.mrb[0].mxu0
    %v5084 = vadd.f32 0.0, %v5083
    %v5085 = vpop.f32.mrb[0].mxu0
    %v5086 = vadd.f32 0.0, %v5085
    %v5087 = vpop.f32.mrb[0].mxu0
    %v5088 = vadd.f32 0.0, %v5087
    %5089 = vdwg.mxu0
    %v5090 = vadd.f32 %v4924, %v5072
    %v5091 = vadd.f32 %v4926, %v5074
    %v5092 = vadd.f32 %v4928, %v5076
    %v5093 = vadd.f32 %v4930, %v5078
    %v5094 = vadd.f32 %v4934, %v5082
    %v5095 = vadd.f32 %v4936, %v5084
    %v5096 = vadd.f32 %v4938, %v5086
    %v5097 = vadd.f32 %v4940, %v5088
    %v5098 = vld [vmem:[%s528] sm:$0xff]
    %v5099 = vld [vmem:[%s528 + $0x8] sm:$0xff]
    %v5100 = vld [vmem:[%s528 + $0x10] sm:$0xff]
    %v5101 = vld [vmem:[%s528 + $0x18] sm:$0xff]
    %v5102 = vld [vmem:[%s528 + $0x20] sm:$0xff]
    %v5103 = vld [vmem:[%s528 + $0x28] sm:$0xff]
    %v5104 = vld [vmem:[%s528 + $0x30] sm:$0xff]
    %v5105 = vld [vmem:[%s528 + $0x38] sm:$0xff]
    %v5106 = vld [vmem:[%s528 + $0x40] sm:$0xff]
    %v5107 = vld [vmem:[%s528 + $0x48] sm:$0xff]
    %v5108 = vld [vmem:[%s528 + $0x50] sm:$0xff]
    %v5109 = vld [vmem:[%s528 + $0x58] sm:$0xff]
    %v5110 = vld [vmem:[%s528 + $0x60] sm:$0xff]
    %v5111 = vrot.slane %v4665, 1
    %v5112 = vrot.slane %v4667, 2
    %v5113 = vor.u32 %v5111, %v5112
    %v5114 = vrot.slane %v4676, 1
    %v5115 = vrot.slane %v4672, 2
    %v5116 = vor.u32 %v5114, %v5115
    %v5117 = vsel %vm542, %v5113, %v5116
    %v5118 = vshrl.u32 %v4663, 16
    %v5120 = vrot.slane %v5118, 1
    %v5121 = vrot.slane %v4680, 2
    %v5122 = vor.u32 %v5120, %v5121
    %v5123 = vsel %vm542, %v5116, %v5122
    %v5137 = vunpack.c.l.b16 %v5098
    %v5138 = vunpack.c.h.b16 %v5098
    %v5139 = vunpack.c.l.b16 %v5099
    %v5140 = vunpack.c.h.b16 %v5099
    %v5141 = vunpack.c.l.b16 %v5100
    %v5142 = vunpack.c.h.b16 %v5100
    %v5143 = vunpack.c.l.b16 %v5101
    %v5144 = vunpack.c.h.b16 %v5101
    %v5145 = vunpack.c.l.b16 %v5102
    %v5146 = vunpack.c.h.b16 %v5102
    %v5147 = vunpack.c.l.b16 %v5103
    %v5148 = vunpack.c.h.b16 %v5103
    %v5149 = vunpack.c.l.b16 %v5104
    %v5150 = vunpack.c.h.b16 %v5104
    %v5151 = vunpack.c.l.b16 %v5105
    %v5152 = vunpack.c.h.b16 %v5105
    %v5153 = vunpack.c.l.b16 %v5106
    %v5154 = vunpack.c.h.b16 %v5106
    %v5155 = vunpack.c.l.b16 %v5107
    %v5156 = vunpack.c.h.b16 %v5107
    %v5157 = vunpack.c.l.b16 %v5108
    %v5158 = vunpack.c.h.b16 %v5108
    %v5159 = vunpack.c.l.b16 %v5109
    %v5160 = vunpack.c.h.b16 %v5109
    %v5161 = vunpack.c.l.b16 %v5110
    %v5162 = vunpack.c.h.b16 %v5110
    %v5163 = vpack.c.b16 %v5139, %v5137
    %v5164 = vpack.c.b16 %v5140, %v5138
    %v5165 = vpack.c.b16 %v5143, %v5141
    %v5166 = vpack.c.b16 %v5144, %v5142
    %v5167 = vpack.c.b16 %v5147, %v5145
    %v5168 = vpack.c.b16 %v5148, %v5146
    %v5169 = vpack.c.b16 %v5151, %v5149
    %v5170 = vpack.c.b16 %v5152, %v5150
    %v5171 = vpack.c.b16 %v5155, %v5153
    %v5172 = vpack.c.b16 %v5156, %v5154
    %v5173 = vpack.c.b16 %v5159, %v5157
    %v5174 = vpack.c.b16 %v5160, %v5158
    %v5175 = vpack.c.b16 %v5161, %v5161
    %v5176 = vpack.c.b16 %v5162, %v5162
    %v5190 = vsel %vm176, %v5117, 0
    %v5193 = vsel %vm176, %v5123, 0
    %v5196 = vsel %vm37, %v5175, 0
    %v5199 = vsel %vm37, %v5176, 0
    %5201 = vmatprep.subr.bf16.mxu0 %v5164
    %5202 = vmatpush1.bf16.msra.mxu0 %v5163
    %5203 = vmatprep.subr.bf16.mxu0 %v5166
    %5204 = vmatpush1.bf16.msra.mxu0 %v5165
    %5205 = vmatprep.subr.bf16.mxu0 %v5168
    %5206 = vmatpush1.bf16.msra.mxu0 %v5167
    %5207 = vmatprep.subr.bf16.mxu0 %v5170
    %5208 = vmatpush1.bf16.msra.mxu0 %v5169
    %5209 = vmatprep.subr.bf16.mxu0 %v5172
    %5210 = vmatpush1.bf16.msra.mxu0 %v5171
    %5211 = vmatprep.subr.bf16.mxu0 %v5174
    %5212 = vmatpush1.bf16.msra.mxu0 %v5173
    %5213 = vmatprep.subr.bf16.mxu0 %v5199
    %5214 = vmatpush1.bf16.msra.mxu0 %v5196
    %5215 = vmatprep.subr.bf16.mxu0 0
    %5216 = vmatpush1.bf16.msra.mxu0 0
    %5217 = vmatprep.subr.bf16.mxu0 0
    %5218 = vmatpush1.bf16.msra.mxu0 0
    %5219 = vmatprep.subr.bf16.mxu0 0
    %5220 = vmatpush1.bf16.msra.mxu0 0
    %5221 = vmatprep.subr.bf16.mxu0 0
    %5222 = vmatpush1.bf16.msra.mxu0 0
    %5223 = vmatprep.subr.bf16.mxu0 0
    %5224 = vmatpush1.bf16.msra.mxu0 0
    %5225 = vmatprep.subr.bf16.mxu0 0
    %5226 = vmatpush1.bf16.msra.mxu0 0
    %5227 = vmatprep.subr.bf16.mxu0 0
    %5228 = vmatpush1.bf16.msra.mxu0 0
    %5229 = vmatprep.subr.bf16.mxu0 0
    %5230 = vmatpush1.bf16.msra.mxu0 0
    %5231 = vmatprep.subr.bf16.mxu0 0
    %5232 = vmatpush1.bf16.msra.mxu0 0
    %5233 = vmatprep.mubr.bf16.mxu0 0
    %5234 = vmatmul.mubr.bf16.gmra.mrb[0].mxu0 %v5190
    %v5235 = vpop.f32.mrb[0].mxu0
    %v5236 = vadd.f32 0.0, %v5235
    %v5237 = vpop.f32.mrb[0].mxu0
    %v5238 = vadd.f32 0.0, %v5237
    %v5239 = vpop.f32.mrb[0].mxu0
    %v5240 = vadd.f32 0.0, %v5239
    %v5241 = vpop.f32.mrb[0].mxu0
    %v5242 = vadd.f32 0.0, %v5241
    %5243 = vmatprep.mubr.bf16.mxu0 0
    %5244 = vmatmul.mubr.bf16.gmra.mrb[0].mxu0 %v5193
    %v5245 = vpop.f32.mrb[0].mxu0
    %v5246 = vadd.f32 0.0, %v5245
    %v5247 = vpop.f32.mrb[0].mxu0
    %v5248 = vadd.f32 0.0, %v5247
    %v5249 = vpop.f32.mrb[0].mxu0
    %v5250 = vadd.f32 0.0, %v5249
    %v5251 = vpop.f32.mrb[0].mxu0
    %v5252 = vadd.f32 0.0, %v5251
    %5253 = vdwg.mxu0
    %v5254 = vadd.f32 %v5090, %v5236
    %v5255 = vadd.f32 %v5091, %v5238
    %v5256 = vadd.f32 %v5092, %v5240
    %v5257 = vadd.f32 %v5093, %v5242
    %v5258 = vadd.f32 %v5094, %v5246
    %v5259 = vadd.f32 %v5095, %v5248
    %v5260 = vadd.f32 %v5096, %v5250
    %v5261 = vadd.f32 %v5097, %v5252
    %v5262 = vld [vmem:[%s694] sm:$0xff]
    %v5263 = vld [vmem:[%s694 + $0x8] sm:$0xff]
    %v5264 = vld [vmem:[%s694 + $0x10] sm:$0xff]
    %v5265 = vld [vmem:[%s694 + $0x18] sm:$0xff]
    %v5266 = vld [vmem:[%s694 + $0x20] sm:$0xff]
    %v5267 = vld [vmem:[%s694 + $0x28] sm:$0xff]
    %v5268 = vld [vmem:[%s694 + $0x30] sm:$0xff]
    %v5269 = vld [vmem:[%s694 + $0x38] sm:$0xff]
    %v5270 = vld [vmem:[%s694 + $0x40] sm:$0xff]
    %v5271 = vld [vmem:[%s694 + $0x48] sm:$0xff]
    %v5272 = vld [vmem:[%s694 + $0x50] sm:$0xff]
    %v5273 = vld [vmem:[%s694 + $0x58] sm:$0xff]
    %v5274 = vld [vmem:[%s694 + $0x60] sm:$0xff]
    %v5275 = vrot.slane %v4661, 2
    %v5276 = vrot.slane %v4662, 2
    %v5277 = vsel %vm708, %v5275, %v5276
    %v5278 = vrot.slane %v4663, 2
    %v5279 = vsel %vm708, %v5276, %v5278
    %v5293 = vunpack.c.l.b16 %v5262
    %v5294 = vunpack.c.h.b16 %v5262
    %v5295 = vunpack.c.l.b16 %v5263
    %v5296 = vunpack.c.h.b16 %v5263
    %v5297 = vunpack.c.l.b16 %v5264
    %v5298 = vunpack.c.h.b16 %v5264
    %v5299 = vunpack.c.l.b16 %v5265
    %v5300 = vunpack.c.h.b16 %v5265
    %v5301 = vunpack.c.l.b16 %v5266
    %v5302 = vunpack.c.h.b16 %v5266
    %v5303 = vunpack.c.l.b16 %v5267
    %v5304 = vunpack.c.h.b16 %v5267
    %v5305 = vunpack.c.l.b16 %v5268
    %v5306 = vunpack.c.h.b16 %v5268
    %v5307 = vunpack.c.l.b16 %v5269
    %v5308 = vunpack.c.h.b16 %v5269
    %v5309 = vunpack.c.l.b16 %v5270
    %v5310 = vunpack.c.h.b16 %v5270
    %v5311 = vunpack.c.l.b16 %v5271
    %v5312 = vunpack.c.h.b16 %v5271
    %v5313 = vunpack.c.l.b16 %v5272
    %v5314 = vunpack.c.h.b16 %v5272
    %v5315 = vunpack.c.l.b16 %v5273
    %v5316 = vunpack.c.h.b16 %v5273
    %v5317 = vunpack.c.l.b16 %v5274
    %v5318 = vunpack.c.h.b16 %v5274
    %v5319 = vpack.c.b16 %v5295, %v5293
    %v5320 = vpack.c.b16 %v5296, %v5294
    %v5321 = vpack.c.b16 %v5299, %v5297
    %v5322 = vpack.c.b16 %v5300, %v5298
    %v5323 = vpack.c.b16 %v5303, %v5301
    %v5324 = vpack.c.b16 %v5304, %v5302
    %v5325 = vpack.c.b16 %v5307, %v5305
    %v5326 = vpack.c.b16 %v5308, %v5306
    %v5327 = vpack.c.b16 %v5311, %v5309
    %v5328 = vpack.c.b16 %v5312, %v5310
    %v5329 = vpack.c.b16 %v5315, %v5313
    %v5330 = vpack.c.b16 %v5316, %v5314
    %v5331 = vpack.c.b16 %v5317, %v5317
    %v5332 = vpack.c.b16 %v5318, %v5318
    %v5346 = vsel %vm176, %v5277, 0
    %v5349 = vsel %vm176, %v5279, 0
    %v5352 = vsel %vm37, %v5331, 0
    %v5355 = vsel %vm37, %v5332, 0
    %5357 = vmatprep.subr.bf16.mxu0 %v5320
    %5358 = vmatpush1.bf16.msra.mxu0 %v5319
    %5359 = vmatprep.subr.bf16.mxu0 %v5322
    %5360 = vmatpush1.bf16.msra.mxu0 %v5321
    %5361 = vmatprep.subr.bf16.mxu0 %v5324
    %5362 = vmatpush1.bf16.msra.mxu0 %v5323
    %5363 = vmatprep.subr.bf16.mxu0 %v5326
    %5364 = vmatpush1.bf16.msra.mxu0 %v5325
    %5365 = vmatprep.subr.bf16.mxu0 %v5328
    %5366 = vmatpush1.bf16.msra.mxu0 %v5327
    %5367 = vmatprep.subr.bf16.mxu0 %v5330
    %5368 = vmatpush1.bf16.msra.mxu0 %v5329
    %5369 = vmatprep.subr.bf16.mxu0 %v5355
    %5370 = vmatpush1.bf16.msra.mxu0 %v5352
    %5371 = vmatprep.subr.bf16.mxu0 0
    %5372 = vmatpush1.bf16.msra.mxu0 0
    %5373 = vmatprep.subr.bf16.mxu0 0
    %5374 = vmatpush1.bf16.msra.mxu0 0
    %5375 = vmatprep.subr.bf16.mxu0 0
    %5376 = vmatpush1.bf16.msra.mxu0 0
    %5377 = vmatprep.subr.bf16.mxu0 0
    %5378 = vmatpush1.bf16.msra.mxu0 0
    %5379 = vmatprep.subr.bf16.mxu0 0
    %5380 = vmatpush1.bf16.msra.mxu0 0
    %5381 = vmatprep.subr.bf16.mxu0 0
    %5382 = vmatpush1.bf16.msra.mxu0 0
    %5383 = vmatprep.subr.bf16.mxu0 0
    %5384 = vmatpush1.bf16.msra.mxu0 0
    %5385 = vmatprep.subr.bf16.mxu0 0
    %5386 = vmatpush1.bf16.msra.mxu0 0
    %5387 = vmatprep.subr.bf16.mxu0 0
    %5388 = vmatpush1.bf16.msra.mxu0 0
    %5389 = vmatprep.mubr.bf16.mxu0 0
    %5390 = vmatmul.mubr.bf16.gmra.mrb[0].mxu0 %v5346
    %v5391 = vpop.f32.mrb[0].mxu0
    %v5392 = vadd.f32 0.0, %v5391
    %v5393 = vpop.f32.mrb[0].mxu0
    %v5394 = vadd.f32 0.0, %v5393
    %v5395 = vpop.f32.mrb[0].mxu0
    %v5396 = vadd.f32 0.0, %v5395
    %v5397 = vpop.f32.mrb[0].mxu0
    %v5398 = vadd.f32 0.0, %v5397
    %5399 = vmatprep.mubr.bf16.mxu0 0
    %5400 = vmatmul.mubr.bf16.gmra.mrb[0].mxu0 %v5349
    %v5401 = vpop.f32.mrb[0].mxu0
    %v5402 = vadd.f32 0.0, %v5401
    %v5403 = vpop.f32.mrb[0].mxu0
    %v5404 = vadd.f32 0.0, %v5403
    %v5405 = vpop.f32.mrb[0].mxu0
    %v5406 = vadd.f32 0.0, %v5405
    %v5407 = vpop.f32.mrb[0].mxu0
    %v5408 = vadd.f32 0.0, %v5407
    %5409 = vdwg.mxu0
    %v5410 = vadd.f32 %v5254, %v5392
    %v5411 = vadd.f32 %v5255, %v5394
    %v5412 = vadd.f32 %v5256, %v5396
    %v5413 = vadd.f32 %v5257, %v5398
    %v5414 = vadd.f32 %v5258, %v5402
    %v5415 = vadd.f32 %v5259, %v5404
    %v5416 = vadd.f32 %v5260, %v5406
    %v5417 = vadd.f32 %v5261, %v5408
    %v5418 = vld [vmem:[%s2] sm:$0x3]
    %v5420 = vlaneseq
    %v5421 = vshrl.u32 %v5420, 7
    %v5422 = vsub.s32 0, %v5421
    %v5423 = vrot.slane %v5418, %v5422
    %v5424 = vlaneseq
    %v5425 = vshrl.u32 %v5424, 7
    %v5426 = vsub.s32 1, %v5425
    %v5427 = vrot.slane %v5418, %v5426
    %v5430 = vadd.f32 %v5410, %v5423
    %v5431 = vadd.f32 %v5411, %v5427
    %v5432 = vadd.f32 %v5412, %v5423
    %v5433 = vadd.f32 %v5413, %v5427
    %v5434 = vadd.f32 %v5414, %v5423
    %v5435 = vadd.f32 %v5415, %v5427
    %v5436 = vadd.f32 %v5416, %v5423
    %v5437 = vadd.f32 %v5417, %v5427
    %v5438 = vmax.f32 %v5430, 0.0
    %v5439 = vmax.f32 %v5431, 0.0
    %v5440 = vmax.f32 %v5432, 0.0
    %v5441 = vmax.f32 %v5433, 0.0
    %v5442 = vmax.f32 %v5434, 0.0
    %v5443 = vmax.f32 %v5435, 0.0
    %v5444 = vmax.f32 %v5436, 0.0
    %v5445 = vmax.f32 %v5437, 0.0
    %v5454 = vcombine.low %v5438, %v5439
    %v5455 = vcombine.high %v5438, %v5439
    %v5456 = vcombine.low %v5440, %v5441
    %v5457 = vcombine.high %v5440, %v5441
    %v5458 = vcombine.low %v5442, %v5443
    %v5459 = vcombine.high %v5442, %v5443
    %v5460 = vcombine.low %v5444, %v5445
    %v5461 = vcombine.high %v5444, %v5445
    %v5470 = vcombine.high %v5454, %v5454
    %v5471 = vcombine.high %v5455, %v5455
    %v5472 = vcombine.high %v5456, %v5456
    %v5473 = vcombine.high %v5457, %v5457
    %v5474 = vcombine.high %v5458, %v5458
    %v5475 = vcombine.high %v5459, %v5459
    %v5476 = vcombine.high %v5460, %v5460
    %v5477 = vcombine.high %v5461, %v5461
    %v5486 = vsel %vm37, %v5454, -inf
    %v5487 = vrot.slane %v5486, 4
    %v5488 = vmax.f32 %v5486, %v5487
    %v5489 = vrot.slane %v5488, 2
    %v5490 = vmax.f32 %v5488, %v5489
    %v5491 = vrot.slane %v5490, 1
    %v5492 = vmax.f32 %v5490, %v5491
    %v5493 = vsel %vm927, %v5470, -inf
    %v5494 = vrot.slane %v5493, 4
    %v5495 = vmax.f32 %v5493, %v5494
    %v5496 = vrot.slane %v5495, 2
    %v5497 = vmax.f32 %v5495, %v5496
    %v5498 = vrot.slane %v5497, 1
    %v5499 = vmax.f32 %v5497, %v5498
    %v5500 = vsel %vm37, %v5455, -inf
    %v5501 = vrot.slane %v5500, 4
    %v5502 = vmax.f32 %v5500, %v5501
    %v5503 = vrot.slane %v5502, 2
    %v5504 = vmax.f32 %v5502, %v5503
    %v5505 = vrot.slane %v5504, 1
    %v5506 = vmax.f32 %v5504, %v5505
    %v5507 = vsel %vm927, %v5471, -inf
    %v5508 = vrot.slane %v5507, 4
    %v5509 = vmax.f32 %v5507, %v5508
    %v5510 = vrot.slane %v5509, 2
    %v5511 = vmax.f32 %v5509, %v5510
    %v5512 = vrot.slane %v5511, 1
    %v5513 = vmax.f32 %v5511, %v5512
    %v5514 = vsel %vm37, %v5456, -inf
    %v5515 = vrot.slane %v5514, 4
    %v5516 = vmax.f32 %v5514, %v5515
    %v5517 = vrot.slane %v5516, 2
    %v5518 = vmax.f32 %v5516, %v5517
    %v5519 = vrot.slane %v5518, 1
    %v5520 = vmax.f32 %v5518, %v5519
    %v5521 = vsel %vm927, %v5472, -inf
    %v5522 = vrot.slane %v5521, 4
    %v5523 = vmax.f32 %v5521, %v5522
    %v5524 = vrot.slane %v5523, 2
    %v5525 = vmax.f32 %v5523, %v5524
    %v5526 = vrot.slane %v5525, 1
    %v5527 = vmax.f32 %v5525, %v5526
    %v5528 = vsel %vm37, %v5457, -inf
    %v5529 = vrot.slane %v5528, 4
    %v5530 = vmax.f32 %v5528, %v5529
    %v5531 = vrot.slane %v5530, 2
    %v5532 = vmax.f32 %v5530, %v5531
    %v5533 = vrot.slane %v5532, 1
    %v5534 = vmax.f32 %v5532, %v5533
    %v5535 = vsel %vm927, %v5473, -inf
    %v5536 = vrot.slane %v5535, 4
    %v5537 = vmax.f32 %v5535, %v5536
    %v5538 = vrot.slane %v5537, 2
    %v5539 = vmax.f32 %v5537, %v5538
    %v5540 = vrot.slane %v5539, 1
    %v5541 = vmax.f32 %v5539, %v5540
    %v5542 = vsel %vm37, %v5458, -inf
    %v5543 = vrot.slane %v5542, 4
    %v5544 = vmax.f32 %v5542, %v5543
    %v5545 = vrot.slane %v5544, 2
    %v5546 = vmax.f32 %v5544, %v5545
    %v5547 = vrot.slane %v5546, 1
    %v5548 = vmax.f32 %v5546, %v5547
    %v5549 = vsel %vm927, %v5474, -inf
    %v5550 = vrot.slane %v5549, 4
    %v5551 = vmax.f32 %v5549, %v5550
    %v5552 = vrot.slane %v5551, 2
    %v5553 = vmax.f32 %v5551, %v5552
    %v5554 = vrot.slane %v5553, 1
    %v5555 = vmax.f32 %v5553, %v5554
    %v5556 = vsel %vm37, %v5459, -inf
    %v5557 = vrot.slane %v5556, 4
    %v5558 = vmax.f32 %v5556, %v5557
    %v5559 = vrot.slane %v5558, 2
    %v5560 = vmax.f32 %v5558, %v5559
    %v5561 = vrot.slane %v5560, 1
    %v5562 = vmax.f32 %v5560, %v5561
    %v5563 = vsel %vm927, %v5475, -inf
    %v5564 = vrot.slane %v5563, 4
    %v5565 = vmax.f32 %v5563, %v5564
    %v5566 = vrot.slane %v5565, 2
    %v5567 = vmax.f32 %v5565, %v5566
    %v5568 = vrot.slane %v5567, 1
    %v5569 = vmax.f32 %v5567, %v5568
    %v5570 = vsel %vm37, %v5460, -inf
    %v5571 = vrot.slane %v5570, 4
    %v5572 = vmax.f32 %v5570, %v5571
    %v5573 = vrot.slane %v5572, 2
    %v5574 = vmax.f32 %v5572, %v5573
    %v5575 = vrot.slane %v5574, 1
    %v5576 = vmax.f32 %v5574, %v5575
    %v5577 = vsel %vm927, %v5476, -inf
    %v5578 = vrot.slane %v5577, 4
    %v5579 = vmax.f32 %v5577, %v5578
    %v5580 = vrot.slane %v5579, 2
    %v5581 = vmax.f32 %v5579, %v5580
    %v5582 = vrot.slane %v5581, 1
    %v5583 = vmax.f32 %v5581, %v5582
    %v5584 = vsel %vm37, %v5461, -inf
    %v5585 = vrot.slane %v5584, 4
    %v5586 = vmax.f32 %v5584, %v5585
    %v5587 = vrot.slane %v5586, 2
    %v5588 = vmax.f32 %v5586, %v5587
    %v5589 = vrot.slane %v5588, 1
    %v5590 = vmax.f32 %v5588, %v5589
    %v5591 = vsel %vm927, %v5477, -inf
    %v5592 = vrot.slane %v5591, 4
    %v5593 = vmax.f32 %v5591, %v5592
    %v5594 = vrot.slane %v5593, 2
    %v5595 = vmax.f32 %v5593, %v5594
    %v5596 = vrot.slane %v5595, 1
    %v5597 = vmax.f32 %v5595, %v5596
    %v5598 = vpack.c.bf16 %v5492, %v5492
    %v5599 = vpack.c.bf16 %v5499, %v5499
    %v5600 = vpack.c.bf16 %v5506, %v5506
    %v5601 = vpack.c.bf16 %v5513, %v5513
    %v5602 = vpack.c.bf16 %v5520, %v5520
    %v5603 = vpack.c.bf16 %v5527, %v5527
    %v5604 = vpack.c.bf16 %v5534, %v5534
    %v5605 = vpack.c.bf16 %v5541, %v5541
    %v5606 = vpack.c.bf16 %v5548, %v5548
    %v5607 = vpack.c.bf16 %v5555, %v5555
    %v5608 = vpack.c.bf16 %v5562, %v5562
    %v5609 = vpack.c.bf16 %v5569, %v5569
    %v5610 = vpack.c.bf16 %v5576, %v5576
    %v5611 = vpack.c.bf16 %v5583, %v5583
    %v5612 = vpack.c.bf16 %v5590, %v5590
    %v5613 = vpack.c.bf16 %v5597, %v5597
    %v5630 = vunpack.c.l.b16 %v5598
    %v5631 = vunpack.c.l.b16 %v5599
    %v5632 = vunpack.c.l.b16 %v5600
    %v5633 = vunpack.c.l.b16 %v5601
    %v5634 = vunpack.c.l.b16 %v5602
    %v5635 = vunpack.c.l.b16 %v5603
    %v5636 = vunpack.c.l.b16 %v5604
    %v5637 = vunpack.c.l.b16 %v5605
    %v5638 = vunpack.c.l.b16 %v5606
    %v5639 = vunpack.c.l.b16 %v5607
    %v5640 = vunpack.c.l.b16 %v5608
    %v5641 = vunpack.c.l.b16 %v5609
    %v5642 = vunpack.c.l.b16 %v5610
    %v5643 = vunpack.c.l.b16 %v5611
    %v5644 = vunpack.c.l.b16 %v5612
    %v5645 = vunpack.c.l.b16 %v5613
    %v5646 = vpack.c.b16 %v5631, %v5630
    %v5647 = vpack.c.b16 %v5633, %v5632
    %v5648 = vpack.c.b16 %v5635, %v5634
    %v5649 = vpack.c.b16 %v5637, %v5636
    %v5650 = vpack.c.b16 %v5639, %v5638
    %v5651 = vpack.c.b16 %v5641, %v5640
    %v5652 = vpack.c.b16 %v5643, %v5642
    %v5653 = vpack.c.b16 %v5645, %v5644
    %v5654 = vunpack.c.l.b16 %v5646
    %v5655 = vunpack.c.h.b16 %v5646
    %v5656 = vunpack.c.l.b16 %v5647
    %v5657 = vunpack.c.h.b16 %v5647
    %v5658 = vunpack.c.l.b16 %v5648
    %v5659 = vunpack.c.h.b16 %v5648
    %v5660 = vunpack.c.l.b16 %v5649
    %v5661 = vunpack.c.h.b16 %v5649
    %v5662 = vunpack.c.l.b16 %v5650
    %v5663 = vunpack.c.h.b16 %v5650
    %v5664 = vunpack.c.l.b16 %v5651
    %v5665 = vunpack.c.h.b16 %v5651
    %v5666 = vunpack.c.l.b16 %v5652
    %v5667 = vunpack.c.h.b16 %v5652
    %v5668 = vunpack.c.l.b16 %v5653
    %v5669 = vunpack.c.h.b16 %v5653
    %v5670 = vsel %vm1105, %v5656, %v5654
    %v5671 = vsel %vm1107, %v5658, %v5670
    %v5672 = vsel %vm1109, %v5660, %v5671
    %v5673 = vsel %vm1111, %v5662, %v5672
    %v5674 = vsel %vm1113, %v5664, %v5673
    %v5675 = vsel %vm1105, %v5657, %v5655
    %v5676 = vsel %vm1107, %v5659, %v5675
    %v5677 = vsel %vm1109, %v5661, %v5676
    %v5678 = vsel %vm1111, %v5663, %v5677
    %v5679 = vsel %vm1113, %v5665, %v5678
    %v5680 = vsel %vm1120, %v5668, %v5666
    %v5681 = vsel %vm1120, %v5669, %v5667
    %v5682 = vpack.c.b16 %v5679, %v5674
    %v5683 = vpack.c.b16 %v5681, %v5680
    %5686 = vst.msk [vmem:[#allocation2] sm:$0xee] %vm1129, %v5682
    %5687 = vst.msk [vmem:[#allocation2 + $0x8] sm:$0x11] %vm1133, %v5683
    %v5688 = vld [vmem:[#allocation2] sm:$0xff]
    %v5689 = vld [vmem:[%s3] sm:$0xff]
    %v5690 = vld [vmem:[%s3 + $0x8] sm:$0xf]
    %v5691 = vld [vmem:[%s3 + $0xc] sm:$0xff]
    %v5692 = vld [vmem:[%s3 + $0x14] sm:$0xf]
    %v5693 = vld [vmem:[%s3 + $0x18] sm:$0xff]
    %v5694 = vld [vmem:[%s3 + $0x20] sm:$0xf]
    %v5695 = vld [vmem:[%s3 + $0x24] sm:$0xff]
    %v5696 = vld [vmem:[%s3 + $0x2c] sm:$0xf]
    %v5697 = vld [vmem:[%s3 + $0x30] sm:$0xff]
    %v5698 = vld [vmem:[%s3 + $0x38] sm:$0xf]
    %v5699 = vld [vmem:[%s3 + $0x3c] sm:$0xff]
    %v5700 = vld [vmem:[%s3 + $0x44] sm:$0xf]
    %v5701 = vld [vmem:[%s3 + $0x48] sm:$0xff]
    %v5702 = vld [vmem:[%s3 + $0x50] sm:$0xf]
    %v5703 = vld [vmem:[%s3 + $0x54] sm:$0xff]
    %v5704 = vld [vmem:[%s3 + $0x5c] sm:$0xf]
    %v5705 = vld [vmem:[%s3 + $0x60] sm:$0xff]
    %v5706 = vld [vmem:[%s3 + $0x68] sm:$0xf]
    %v5707 = vld [vmem:[%s3 + $0x6c] sm:$0xff]
    %v5708 = vld [vmem:[%s3 + $0x74] sm:$0xf]
    %v5709 = vld [vmem:[%s3 + $0x78] sm:$0xff]
    %v5710 = vld [vmem:[%s3 + $0x80] sm:$0xf]
    %v5711 = vld [vmem:[%s3 + $0x84] sm:$0xff]
    %v5712 = vld [vmem:[%s3 + $0x8c] sm:$0xf]
    %v5713 = vld [vmem:[%s3 + $0x90] sm:$0xff]
    %v5714 = vld [vmem:[%s3 + $0x98] sm:$0xf]
    %v5715 = vld [vmem:[%s3 + $0x9c] sm:$0xff]
    %v5716 = vld [vmem:[%s3 + $0xa4] sm:$0xf]
    %v5717 = vld [vmem:[%s3 + $0xa8] sm:$0xff]
    %v5718 = vld [vmem:[%s3 + $0xb0] sm:$0xf]
    %v5719 = vld [vmem:[%s3 + $0xb4] sm:$0xff]
    %v5720 = vld [vmem:[%s3 + $0xbc] sm:$0xf]
    %v5721 = vld [vmem:[%s3 + $0xc0] sm:$0xff]
    %v5722 = vld [vmem:[%s3 + $0xc8] sm:$0xf]
    %v5723 = vld [vmem:[%s3 + $0xcc] sm:$0xff]
    %v5724 = vld [vmem:[%s3 + $0xd4] sm:$0xf]
    %v5725 = vld [vmem:[%s3 + $0xd8] sm:$0xff]
    %v5726 = vld [vmem:[%s3 + $0xe0] sm:$0xf]
    %v5727 = vld [vmem:[%s3 + $0xe4] sm:$0xff]
    %v5728 = vld [vmem:[%s3 + $0xec] sm:$0xf]
    %v5729 = vld [vmem:[%s3 + $0xf0] sm:$0xff]
    %v5730 = vld [vmem:[%s3 + $0xf8] sm:$0xf]
    %v5731 = vld [vmem:[%s3 + $0xfc] sm:$0xff]
    %v5732 = vld [vmem:[%s3 + $0x104] sm:$0xf]
    %v5733 = vld [vmem:[%s3 + $0x108] sm:$0xff]
    %v5734 = vld [vmem:[%s3 + $0x110] sm:$0xf]
    %v5735 = vld [vmem:[%s3 + $0x114] sm:$0xff]
    %v5736 = vld [vmem:[%s3 + $0x11c] sm:$0xf]
    %v5737 = vld [vmem:[%s3 + $0x120] sm:$0xff]
    %v5738 = vld [vmem:[%s3 + $0x128] sm:$0xf]
    %v5739 = vld [vmem:[#allocation2 + $0x8] sm:$0x11]
    %v5740 = vld [vmem:[%s1187] sm:$0xff]
    %v5741 = vld [vmem:[%s1187 + $0x8] sm:$0xf]
    %v5742 = vld [vmem:[%s1187 + $0xc] sm:$0xff]
    %v5743 = vld [vmem:[%s1187 + $0x14] sm:$0xf]
    %v5744 = vld [vmem:[%s1187 + $0x18] sm:$0xff]
    %v5745 = vld [vmem:[%s1187 + $0x20] sm:$0xf]
    %v5746 = vld [vmem:[%s1187 + $0x24] sm:$0xff]
    %v5747 = vld [vmem:[%s1187 + $0x2c] sm:$0xf]
    %v5748 = vld [vmem:[%s1187 + $0x30] sm:$0xff]
    %v5749 = vld [vmem:[%s1187 + $0x38] sm:$0xf]
    %v5750 = vld [vmem:[%s1187 + $0x3c] sm:$0xff]
    %v5751 = vld [vmem:[%s1187 + $0x44] sm:$0xf]
    %v5752 = vld [vmem:[%s1187 + $0x48] sm:$0xff]
    %v5753 = vld [vmem:[%s1187 + $0x50] sm:$0xf]
    %v5754 = vld [vmem:[%s1187 + $0x54] sm:$0xff]
    %v5755 = vld [vmem:[%s1187 + $0x5c] sm:$0xf]
    %v5756 = vld [vmem:[%s1187 + $0x60] sm:$0xff]
    %v5757 = vld [vmem:[%s1187 + $0x68] sm:$0xf]
    %v5758 = vld [vmem:[%s1187 + $0x6c] sm:$0xff]
    %v5759 = vld [vmem:[%s1187 + $0x74] sm:$0xf]
    %v5760 = vld [vmem:[%s1187 + $0x78] sm:$0xff]
    %v5761 = vld [vmem:[%s1187 + $0x80] sm:$0xf]
    %v5762 = vld [vmem:[%s1187 + $0x84] sm:$0xff]
    %v5763 = vld [vmem:[%s1187 + $0x8c] sm:$0xf]
    %v5764 = vld [vmem:[%s1187 + $0x90] sm:$0xff]
    %v5765 = vld [vmem:[%s1187 + $0x98] sm:$0xf]
    %v5766 = vld [vmem:[%s1187 + $0x9c] sm:$0xff]
    %v5767 = vld [vmem:[%s1187 + $0xa4] sm:$0xf]
    %v5768 = vld [vmem:[%s1187 + $0xa8] sm:$0xff]
    %v5769 = vld [vmem:[%s1187 + $0xb0] sm:$0xf]
    %v5770 = vld [vmem:[%s1187 + $0xb4] sm:$0xff]
    %v5771 = vld [vmem:[%s1187 + $0xbc] sm:$0xf]
    %v5772 = vld [vmem:[%s1187 + $0xc0] sm:$0xff]
    %v5773 = vld [vmem:[%s1187 + $0xc8] sm:$0xf]
    %v5774 = vld [vmem:[%s1187 + $0xcc] sm:$0xff]
    %v5775 = vld [vmem:[%s1187 + $0xd4] sm:$0xf]
    %v5776 = vld [vmem:[%s1187 + $0xd8] sm:$0xff]
    %v5777 = vld [vmem:[%s1187 + $0xe0] sm:$0xf]
    %v5778 = vld [vmem:[%s1187 + $0xe4] sm:$0xff]
    %v5779 = vld [vmem:[%s1187 + $0xec] sm:$0xf]
    %v5780 = vld [vmem:[%s1187 + $0xf0] sm:$0xff]
    %v5781 = vld [vmem:[%s1187 + $0xf8] sm:$0xf]
    %v5782 = vld [vmem:[%s1187 + $0xfc] sm:$0xff]
    %v5783 = vld [vmem:[%s1187 + $0x104] sm:$0xf]
    %v5784 = vld [vmem:[%s1187 + $0x108] sm:$0xff]
    %v5785 = vld [vmem:[%s1187 + $0x110] sm:$0xf]
    %v5786 = vld [vmem:[%s1187 + $0x114] sm:$0xff]
    %v5787 = vld [vmem:[%s1187 + $0x11c] sm:$0xf]
    %v5788 = vld [vmem:[%s1187 + $0x120] sm:$0xff]
    %v5789 = vld [vmem:[%s1187 + $0x128] sm:$0xf]
    %v5792 = vunpack.c.l.b16 %v5688
    %v5793 = vunpack.c.h.b16 %v5688
    %v5794 = vunpack.c.l.b16 %v5739
    %v5795 = vunpack.c.h.b16 %v5739
    %v5796 = vpack.c.b16 %v5794, %v5792
    %v5797 = vpack.c.b16 %v5795, %v5793
    %v5799 = vshrl.u32 %v5796, 16
    %v5801 = vshll.u32 %v5796, 16
    %v5803 = vrot.slane %v5801, 1
    %v5804 = vor.u32 %v5799, %v5803
    %v5806 = vshrl.u32 %v5797, 16
    %v5808 = vshll.u32 %v5797, 16
    %v5810 = vrot.slane %v5808, 1
    %v5811 = vor.u32 %v5806, %v5810
    %v5863 = vunpack.c.l.b16 %v5740
    %v5864 = vunpack.c.h.b16 %v5740
    %v5865 = vunpack.c.l.b16 %v5741
    %v5866 = vunpack.c.l.b16 %v5742
    %v5867 = vunpack.c.h.b16 %v5742
    %v5868 = vunpack.c.l.b16 %v5743
    %v5869 = vunpack.c.l.b16 %v5744
    %v5870 = vunpack.c.h.b16 %v5744
    %v5871 = vunpack.c.l.b16 %v5745
    %v5872 = vunpack.c.l.b16 %v5746
    %v5873 = vunpack.c.h.b16 %v5746
    %v5874 = vunpack.c.l.b16 %v5747
    %v5875 = vunpack.c.l.b16 %v5748
    %v5876 = vunpack.c.h.b16 %v5748
    %v5877 = vunpack.c.l.b16 %v5749
    %v5878 = vunpack.c.l.b16 %v5750
    %v5879 = vunpack.c.h.b16 %v5750
    %v5880 = vunpack.c.l.b16 %v5751
    %v5881 = vunpack.c.l.b16 %v5752
    %v5882 = vunpack.c.h.b16 %v5752
    %v5883 = vunpack.c.l.b16 %v5753
    %v5884 = vunpack.c.l.b16 %v5754
    %v5885 = vunpack.c.h.b16 %v5754
    %v5886 = vunpack.c.l.b16 %v5755
    %v5887 = vunpack.c.l.b16 %v5756
    %v5888 = vunpack.c.h.b16 %v5756
    %v5889 = vunpack.c.l.b16 %v5757
    %v5890 = vunpack.c.l.b16 %v5758
    %v5891 = vunpack.c.h.b16 %v5758
    %v5892 = vunpack.c.l.b16 %v5759
    %v5893 = vunpack.c.l.b16 %v5760
    %v5894 = vunpack.c.h.b16 %v5760
    %v5895 = vunpack.c.l.b16 %v5761
    %v5896 = vunpack.c.l.b16 %v5762
    %v5897 = vunpack.c.h.b16 %v5762
    %v5898 = vunpack.c.l.b16 %v5763
    %v5899 = vunpack.c.l.b16 %v5764
    %v5900 = vunpack.c.h.b16 %v5764
    %v5901 = vunpack.c.l.b16 %v5765
    %v5902 = vunpack.c.l.b16 %v5766
    %v5903 = vunpack.c.h.b16 %v5766
    %v5904 = vunpack.c.l.b16 %v5767
    %v5905 = vunpack.c.l.b16 %v5768
    %v5906 = vunpack.c.h.b16 %v5768
    %v5907 = vunpack.c.l.b16 %v5769
    %v5908 = vunpack.c.l.b16 %v5770
    %v5909 = vunpack.c.h.b16 %v5770
    %v5910 = vunpack.c.l.b16 %v5771
    %v5911 = vunpack.c.l.b16 %v5772
    %v5912 = vunpack.c.h.b16 %v5772
    %v5913 = vunpack.c.l.b16 %v5773
    %v5914 = vunpack.c.l.b16 %v5774
    %v5915 = vunpack.c.h.b16 %v5774
    %v5916 = vunpack.c.l.b16 %v5775
    %v5917 = vunpack.c.l.b16 %v5776
    %v5918 = vunpack.c.h.b16 %v5776
    %v5919 = vunpack.c.l.b16 %v5777
    %v5920 = vunpack.c.l.b16 %v5778
    %v5921 = vunpack.c.h.b16 %v5778
    %v5922 = vunpack.c.l.b16 %v5779
    %v5923 = vunpack.c.l.b16 %v5780
    %v5924 = vunpack.c.h.b16 %v5780
    %v5925 = vunpack.c.l.b16 %v5781
    %v5926 = vunpack.c.l.b16 %v5782
    %v5927 = vunpack.c.h.b16 %v5782
    %v5928 = vunpack.c.l.b16 %v5783
    %v5929 = vunpack.c.l.b16 %v5784
    %v5930 = vunpack.c.h.b16 %v5784
    %v5931 = vunpack.c.l.b16 %v5785
    %v5932 = vunpack.c.l.b16 %v5786
    %v5933 = vunpack.c.h.b16 %v5786
    %v5934 = vunpack.c.l.b16 %v5787
    %v5935 = vunpack.c.l.b16 %v5788
    %v5936 = vunpack.c.h.b16 %v5788
    %v5937 = vunpack.c.l.b16 %v5789
    %v5938 = vpack.c.b16 %v5866, %v5863
    %v5939 = vpack.c.b16 %v5867, %v5864
    %v5940 = vpack.c.b16 %v5868, %v5865
    %v5941 = vpack.c.b16 %v5872, %v5869
    %v5942 = vpack.c.b16 %v5873, %v5870
    %v5943 = vpack.c.b16 %v5874, %v5871
    %v5944 = vpack.c.b16 %v5878, %v5875
    %v5945 = vpack.c.b16 %v5879, %v5876
    %v5946 = vpack.c.b16 %v5880, %v5877
    %v5947 = vpack.c.b16 %v5884, %v5881
    %v5948 = vpack.c.b16 %v5885, %v5882
    %v5949 = vpack.c.b16 %v5886, %v5883
    %v5950 = vpack.c.b16 %v5890, %v5887
    %v5951 = vpack.c.b16 %v5891, %v5888
    %v5952 = vpack.c.b16 %v5892, %v5889
    %v5953 = vpack.c.b16 %v5896, %v5893
    %v5954 = vpack.c.b16 %v5897, %v5894
    %v5955 = vpack.c.b16 %v5898, %v5895
    %v5956 = vpack.c.b16 %v5902, %v5899
    %v5957 = vpack.c.b16 %v5903, %v5900
    %v5958 = vpack.c.b16 %v5904, %v5901
    %v5959 = vpack.c.b16 %v5908, %v5905
    %v5960 = vpack.c.b16 %v5909, %v5906
    %v5961 = vpack.c.b16 %v5910, %v5907
    %v5962 = vpack.c.b16 %v5914, %v5911
    %v5963 = vpack.c.b16 %v5915, %v5912
    %v5964 = vpack.c.b16 %v5916, %v5913
    %v5965 = vpack.c.b16 %v5920, %v5917
    %v5966 = vpack.c.b16 %v5921, %v5918
    %v5967 = vpack.c.b16 %v5922, %v5919
    %v5968 = vpack.c.b16 %v5926, %v5923
    %v5969 = vpack.c.b16 %v5927, %v5924
    %v5970 = vpack.c.b16 %v5928, %v5925
    %v5971 = vpack.c.b16 %v5932, %v5929
    %v5972 = vpack.c.b16 %v5933, %v5930
    %v5973 = vpack.c.b16 %v5934, %v5931
    %v5974 = vpack.c.b16 %v5935, %v5935
    %v5975 = vpack.c.b16 %v5936, %v5936
    %v5976 = vpack.c.b16 %v5937, %v5937
    %v6014 = vsel %vm1461, %v5811, 0
    %v6017 = vsel %vm37, %v5974, 0
    %v6020 = vsel %vm37, %v5975, 0
    %v6023 = vsel %vm37, %v5976, 0
    %6025 = vmatprep.subr.bf16.mxu0 %v5939
    %6026 = vmatpush1.bf16.msra.mxu0 %v5938
    %6027 = vmatprep.subr.bf16.mxu0 %v5942
    %6028 = vmatpush1.bf16.msra.mxu0 %v5941
    %6029 = vmatprep.subr.bf16.mxu0 %v5945
    %6030 = vmatpush1.bf16.msra.mxu0 %v5944
    %6031 = vmatprep.subr.bf16.mxu0 %v5948
    %6032 = vmatpush1.bf16.msra.mxu0 %v5947
    %6033 = vmatprep.subr.bf16.mxu0 %v5951
    %6034 = vmatpush1.bf16.msra.mxu0 %v5950
    %6035 = vmatprep.subr.bf16.mxu0 %v5954
    %6036 = vmatpush1.bf16.msra.mxu0 %v5953
    %6037 = vmatprep.subr.bf16.mxu0 %v5957
    %6038 = vmatpush1.bf16.msra.mxu0 %v5956
    %6039 = vmatprep.subr.bf16.mxu0 %v5960
    %6040 = vmatpush1.bf16.msra.mxu0 %v5959
    %6041 = vmatprep.subr.bf16.mxu0 %v5963
    %6042 = vmatpush1.bf16.msra.mxu0 %v5962
    %6043 = vmatprep.subr.bf16.mxu0 %v5966
    %6044 = vmatpush1.bf16.msra.mxu0 %v5965
    %6045 = vmatprep.subr.bf16.mxu0 %v5969
    %6046 = vmatpush1.bf16.msra.mxu0 %v5968
    %6047 = vmatprep.subr.bf16.mxu0 %v5972
    %6048 = vmatpush1.bf16.msra.mxu0 %v5971
    %6049 = vmatprep.subr.bf16.mxu0 %v6020
    %6050 = vmatpush1.bf16.msra.mxu0 %v6017
    %6051 = vmatprep.subr.bf16.mxu0 0
    %6052 = vmatpush1.bf16.msra.mxu0 0
    %6053 = vmatprep.subr.bf16.mxu0 0
    %6054 = vmatpush1.bf16.msra.mxu0 0
    %6055 = vmatprep.subr.bf16.mxu0 0
    %6056 = vmatpush1.bf16.msra.mxu0 0
    %6057 = vmatprep.mubr.bf16.mxu0 %v6014
    %6058 = vmatmul.mubr.bf16.gmra.mrb[0].mxu0 %v5804
    %v6059 = vpop.f32.mrb[0].mxu0
    %v6060 = vadd.f32 0.0, %v6059
    %v6061 = vpop.f32.mrb[0].mxu0
    %v6062 = vadd.f32 0.0, %v6061
    %v6063 = vpop.f32.mrb[0].mxu0
    %v6064 = vpop.f32.mrb[0].mxu0
    %6065 = vdwg.mxu0
    %6066 = vmatprep.subr.bf16.mxu0 0
    %6067 = vmatpush1.bf16.msra.mxu0 %v5940
    %6068 = vmatprep.subr.bf16.mxu0 0
    %6069 = vmatpush1.bf16.msra.mxu0 %v5943
    %6070 = vmatprep.subr.bf16.mxu0 0
    %6071 = vmatpush1.bf16.msra.mxu0 %v5946
    %6072 = vmatprep.subr.bf16.mxu0 0
    %6073 = vmatpush1.bf16.msra.mxu0 %v5949
    %6074 = vmatprep.subr.bf16.mxu0 0
    %6075 = vmatpush1.bf16.msra.mxu0 %v5952
    %6076 = vmatprep.subr.bf16.mxu0 0
    %6077 = vmatpush1.bf16.msra.mxu0 %v5955
    %6078 = vmatprep.subr.bf16.mxu0 0
    %6079 = vmatpush1.bf16.msra.mxu0 %v5958
    %6080 = vmatprep.subr.bf16.mxu0 0
    %6081 = vmatpush1.bf16.msra.mxu0 %v5961
    %6082 = vmatprep.subr.bf16.mxu0 0
    %6083 = vmatpush1.bf16.msra.mxu0 %v5964
    %6084 = vmatprep.subr.bf16.mxu0 0
    %6085 = vmatpush1.bf16.msra.mxu0 %v5967
    %6086 = vmatprep.subr.bf16.mxu0 0
    %6087 = vmatpush1.bf16.msra.mxu0 %v5970
    %6088 = vmatprep.subr.bf16.mxu0 0
    %6089 = vmatpush1.bf16.msra.mxu0 %v5973
    %6090 = vmatprep.subr.bf16.mxu0 0
    %6091 = vmatpush1.bf16.msra.mxu0 %v6023
    %6092 = vmatprep.subr.bf16.mxu0 0
    %6093 = vmatpush1.bf16.msra.mxu0 0
    %6094 = vmatprep.subr.bf16.mxu0 0
    %6095 = vmatpush1.bf16.msra.mxu0 0
    %6096 = vmatprep.subr.bf16.mxu0 0
    %6097 = vmatpush1.bf16.msra.mxu0 0
    %6098 = vmatprep.mubr.bf16.mxu0 %v6014
    %6099 = vmatmul.mubr.bf16.gmra.mrb[0].mxu0 %v5804
    %v6100 = vpop.f32.mrb[0].mxu0
    %v6101 = vadd.f32 0.0, %v6100
    %v6102 = vpop.f32.mrb[0].mxu0
    %v6103 = vpop.f32.mrb[0].mxu0
    %v6104 = vpop.f32.mrb[0].mxu0
    %6105 = vdwg.mxu0
    %v6106 = vpack.c.b16 %v5792, %v5792
    %v6107 = vpack.c.b16 %v5793, %v5793
    %v6159 = vunpack.c.l.b16 %v5689
    %v6160 = vunpack.c.h.b16 %v5689
    %v6161 = vunpack.c.l.b16 %v5690
    %v6162 = vunpack.c.l.b16 %v5691
    %v6163 = vunpack.c.h.b16 %v5691
    %v6164 = vunpack.c.l.b16 %v5692
    %v6165 = vunpack.c.l.b16 %v5693
    %v6166 = vunpack.c.h.b16 %v5693
    %v6167 = vunpack.c.l.b16 %v5694
    %v6168 = vunpack.c.l.b16 %v5695
    %v6169 = vunpack.c.h.b16 %v5695
    %v6170 = vunpack.c.l.b16 %v5696
    %v6171 = vunpack.c.l.b16 %v5697
    %v6172 = vunpack.c.h.b16 %v5697
    %v6173 = vunpack.c.l.b16 %v5698
    %v6174 = vunpack.c.l.b16 %v5699
    %v6175 = vunpack.c.h.b16 %v5699
    %v6176 = vunpack.c.l.b16 %v5700
    %v6177 = vunpack.c.l.b16 %v5701
    %v6178 = vunpack.c.h.b16 %v5701
    %v6179 = vunpack.c.l.b16 %v5702
    %v6180 = vunpack.c.l.b16 %v5703
    %v6181 = vunpack.c.h.b16 %v5703
    %v6182 = vunpack.c.l.b16 %v5704
    %v6183 = vunpack.c.l.b16 %v5705
    %v6184 = vunpack.c.h.b16 %v5705
    %v6185 = vunpack.c.l.b16 %v5706
    %v6186 = vunpack.c.l.b16 %v5707
    %v6187 = vunpack.c.h.b16 %v5707
    %v6188 = vunpack.c.l.b16 %v5708
    %v6189 = vunpack.c.l.b16 %v5709
    %v6190 = vunpack.c.h.b16 %v5709
    %v6191 = vunpack.c.l.b16 %v5710
    %v6192 = vunpack.c.l.b16 %v5711
    %v6193 = vunpack.c.h.b16 %v5711
    %v6194 = vunpack.c.l.b16 %v5712
    %v6195 = vunpack.c.l.b16 %v5713
    %v6196 = vunpack.c.h.b16 %v5713
    %v6197 = vunpack.c.l.b16 %v5714
    %v6198 = vunpack.c.l.b16 %v5715
    %v6199 = vunpack.c.h.b16 %v5715
    %v6200 = vunpack.c.l.b16 %v5716
    %v6201 = vunpack.c.l.b16 %v5717
    %v6202 = vunpack.c.h.b16 %v5717
    %v6203 = vunpack.c.l.b16 %v5718
    %v6204 = vunpack.c.l.b16 %v5719
    %v6205 = vunpack.c.h.b16 %v5719
    %v6206 = vunpack.c.l.b16 %v5720
    %v6207 = vunpack.c.l.b16 %v5721
    %v6208 = vunpack.c.h.b16 %v5721
    %v6209 = vunpack.c.l.b16 %v5722
    %v6210 = vunpack.c.l.b16 %v5723
    %v6211 = vunpack.c.h.b16 %v5723
    %v6212 = vunpack.c.l.b16 %v5724
    %v6213 = vunpack.c.l.b16 %v5725
    %v6214 = vunpack.c.h.b16 %v5725
    %v6215 = vunpack.c.l.b16 %v5726
    %v6216 = vunpack.c.l.b16 %v5727
    %v6217 = vunpack.c.h.b16 %v5727
    %v6218 = vunpack.c.l.b16 %v5728
    %v6219 = vunpack.c.l.b16 %v5729
    %v6220 = vunpack.c.h.b16 %v5729
    %v6221 = vunpack.c.l.b16 %v5730
    %v6222 = vunpack.c.l.b16 %v5731
    %v6223 = vunpack.c.h.b16 %v5731
    %v6224 = vunpack.c.l.b16 %v5732
    %v6225 = vunpack.c.l.b16 %v5733
    %v6226 = vunpack.c.h.b16 %v5733
    %v6227 = vunpack.c.l.b16 %v5734
    %v6228 = vunpack.c.l.b16 %v5735
    %v6229 = vunpack.c.h.b16 %v5735
    %v6230 = vunpack.c.l.b16 %v5736
    %v6231 = vunpack.c.l.b16 %v5737
    %v6232 = vunpack.c.h.b16 %v5737
    %v6233 = vunpack.c.l.b16 %v5738
    %v6234 = vpack.c.b16 %v6162, %v6159
    %v6235 = vpack.c.b16 %v6163, %v6160
    %v6236 = vpack.c.b16 %v6164, %v6161
    %v6237 = vpack.c.b16 %v6168, %v6165
    %v6238 = vpack.c.b16 %v6169, %v6166
    %v6239 = vpack.c.b16 %v6170, %v6167
    %v6240 = vpack.c.b16 %v6174, %v6171
    %v6241 = vpack.c.b16 %v6175, %v6172
    %v6242 = vpack.c.b16 %v6176, %v6173
    %v6243 = vpack.c.b16 %v6180, %v6177
    %v6244 = vpack.c.b16 %v6181, %v6178
    %v6245 = vpack.c.b16 %v6182, %v6179
    %v6246 = vpack.c.b16 %v6186, %v6183
    %v6247 = vpack.c.b16 %v6187, %v6184
    %v6248 = vpack.c.b16 %v6188, %v6185
    %v6249 = vpack.c.b16 %v6192, %v6189
    %v6250 = vpack.c.b16 %v6193, %v6190
    %v6251 = vpack.c.b16 %v6194, %v6191
    %v6252 = vpack.c.b16 %v6198, %v6195
    %v6253 = vpack.c.b16 %v6199, %v6196
    %v6254 = vpack.c.b16 %v6200, %v6197
    %v6255 = vpack.c.b16 %v6204, %v6201
    %v6256 = vpack.c.b16 %v6205, %v6202
    %v6257 = vpack.c.b16 %v6206, %v6203
    %v6258 = vpack.c.b16 %v6210, %v6207
    %v6259 = vpack.c.b16 %v6211, %v6208
    %v6260 = vpack.c.b16 %v6212, %v6209
    %v6261 = vpack.c.b16 %v6216, %v6213
    %v6262 = vpack.c.b16 %v6217, %v6214
    %v6263 = vpack.c.b16 %v6218, %v6215
    %v6264 = vpack.c.b16 %v6222, %v6219
    %v6265 = vpack.c.b16 %v6223, %v6220
    %v6266 = vpack.c.b16 %v6224, %v6221
    %v6267 = vpack.c.b16 %v6228, %v6225
    %v6268 = vpack.c.b16 %v6229, %v6226
    %v6269 = vpack.c.b16 %v6230, %v6227
    %v6270 = vpack.c.b16 %v6231, %v6231
    %v6271 = vpack.c.b16 %v6232, %v6232
    %v6272 = vpack.c.b16 %v6233, %v6233
    %v6310 = vsel %vm1461, %v6107, 0
    %v6313 = vsel %vm37, %v6270, 0
    %v6316 = vsel %vm37, %v6271, 0
    %v6319 = vsel %vm37, %v6272, 0
    %6321 = vmatprep.subr.bf16.mxu0 %v6235
    %6322 = vmatpush1.bf16.msra.mxu0 %v6234
    %6323 = vmatprep.subr.bf16.mxu0 %v6238
    %6324 = vmatpush1.bf16.msra.mxu0 %v6237
    %6325 = vmatprep.subr.bf16.mxu0 %v6241
    %6326 = vmatpush1.bf16.msra.mxu0 %v6240
    %6327 = vmatprep.subr.bf16.mxu0 %v6244
    %6328 = vmatpush1.bf16.msra.mxu0 %v6243
    %6329 = vmatprep.subr.bf16.mxu0 %v6247
    %6330 = vmatpush1.bf16.msra.mxu0 %v6246
    %6331 = vmatprep.subr.bf16.mxu0 %v6250
    %6332 = vmatpush1.bf16.msra.mxu0 %v6249
    %6333 = vmatprep.subr.bf16.mxu0 %v6253
    %6334 = vmatpush1.bf16.msra.mxu0 %v6252
    %6335 = vmatprep.subr.bf16.mxu0 %v6256
    %6336 = vmatpush1.bf16.msra.mxu0 %v6255
    %6337 = vmatprep.subr.bf16.mxu0 %v6259
    %6338 = vmatpush1.bf16.msra.mxu0 %v6258
    %6339 = vmatprep.subr.bf16.mxu0 %v6262
    %6340 = vmatpush1.bf16.msra.mxu0 %v6261
    %6341 = vmatprep.subr.bf16.mxu0 %v6265
    %6342 = vmatpush1.bf16.msra.mxu0 %v6264
    %6343 = vmatprep.subr.bf16.mxu0 %v6268
    %6344 = vmatpush1.bf16.msra.mxu0 %v6267
    %6345 = vmatprep.subr.bf16.mxu0 %v6316
    %6346 = vmatpush1.bf16.msra.mxu0 %v6313
    %6347 = vmatprep.subr.bf16.mxu0 0
    %6348 = vmatpush1.bf16.msra.mxu0 0
    %6349 = vmatprep.subr.bf16.mxu0 0
    %6350 = vmatpush1.bf16.msra.mxu0 0
    %6351 = vmatprep.subr.bf16.mxu0 0
    %6352 = vmatpush1.bf16.msra.mxu0 0
    %6353 = vmatprep.mubr.bf16.mxu0 %v6310
    %6354 = vmatmul.mubr.bf16.gmra.mrb[0].mxu0 %v6106
    %v6355 = vpop.f32.mrb[0].mxu0
    %v6356 = vadd.f32 %v6060, %v6355
    %v6357 = vpop.f32.mrb[0].mxu0
    %v6358 = vadd.f32 %v6062, %v6357
    %v6359 = vpop.f32.mrb[0].mxu0
    %v6360 = vpop.f32.mrb[0].mxu0
    %6361 = vdwg.mxu0
    %6362 = vmatprep.subr.bf16.mxu0 0
    %6363 = vmatpush1.bf16.msra.mxu0 %v6236
    %6364 = vmatprep.subr.bf16.mxu0 0
    %6365 = vmatpush1.bf16.msra.mxu0 %v6239
    %6366 = vmatprep.subr.bf16.mxu0 0
    %6367 = vmatpush1.bf16.msra.mxu0 %v6242
    %6368 = vmatprep.subr.bf16.mxu0 0
    %6369 = vmatpush1.bf16.msra.mxu0 %v6245
    %6370 = vmatprep.subr.bf16.mxu0 0
    %6371 = vmatpush1.bf16.msra.mxu0 %v6248
    %6372 = vmatprep.subr.bf16.mxu0 0
    %6373 = vmatpush1.bf16.msra.mxu0 %v6251
    %6374 = vmatprep.subr.bf16.mxu0 0
    %6375 = vmatpush1.bf16.msra.mxu0 %v6254
    %6376 = vmatprep.subr.bf16.mxu0 0
    %6377 = vmatpush1.bf16.msra.mxu0 %v6257
    %6378 = vmatprep.subr.bf16.mxu0 0
    %6379 = vmatpush1.bf16.msra.mxu0 %v6260
    %6380 = vmatprep.subr.bf16.mxu0 0
    %6381 = vmatpush1.bf16.msra.mxu0 %v6263
    %6382 = vmatprep.subr.bf16.mxu0 0
    %6383 = vmatpush1.bf16.msra.mxu0 %v6266
    %6384 = vmatprep.subr.bf16.mxu0 0
    %6385 = vmatpush1.bf16.msra.mxu0 %v6269
    %6386 = vmatprep.subr.bf16.mxu0 0
    %6387 = vmatpush1.bf16.msra.mxu0 %v6319
    %6388 = vmatprep.subr.bf16.mxu0 0
    %6389 = vmatpush1.bf16.msra.mxu0 0
    %6390 = vmatprep.subr.bf16.mxu0 0
    %6391 = vmatpush1.bf16.msra.mxu0 0
    %6392 = vmatprep.subr.bf16.mxu0 0
    %6393 = vmatpush1.bf16.msra.mxu0 0
    %6394 = vmatprep.mubr.bf16.mxu0 %v6310
    %6395 = vmatmul.mubr.bf16.gmra.mrb[0].mxu0 %v6106
    %v6396 = vpop.f32.mrb[0].mxu0
    %v6397 = vadd.f32 %v6101, %v6396
    %v6398 = vpop.f32.mrb[0].mxu0
    %v6399 = vpop.f32.mrb[0].mxu0
    %v6400 = vpop.f32.mrb[0].mxu0
    %6401 = vdwg.mxu0
    %v6402 = vld [vmem:[#allocation2] sm:$0xee]
    %v6403 = vld [vmem:[%s1852] sm:$0xff]
    %v6404 = vld [vmem:[%s1852 + $0x8] sm:$0xf]
    %v6405 = vld [vmem:[%s1852 + $0xc] sm:$0xff]
    %v6406 = vld [vmem:[%s1852 + $0x14] sm:$0xf]
    %v6407 = vld [vmem:[%s1852 + $0x18] sm:$0xff]
    %v6408 = vld [vmem:[%s1852 + $0x20] sm:$0xf]
    %v6409 = vld [vmem:[%s1852 + $0x24] sm:$0xff]
    %v6410 = vld [vmem:[%s1852 + $0x2c] sm:$0xf]
    %v6411 = vld [vmem:[%s1852 + $0x30] sm:$0xff]
    %v6412 = vld [vmem:[%s1852 + $0x38] sm:$0xf]
    %v6413 = vld [vmem:[%s1852 + $0x3c] sm:$0xff]
    %v6414 = vld [vmem:[%s1852 + $0x44] sm:$0xf]
    %v6415 = vld [vmem:[%s1852 + $0x48] sm:$0xff]
    %v6416 = vld [vmem:[%s1852 + $0x50] sm:$0xf]
    %v6417 = vld [vmem:[%s1852 + $0x54] sm:$0xff]
    %v6418 = vld [vmem:[%s1852 + $0x5c] sm:$0xf]
    %v6419 = vld [vmem:[%s1852 + $0x60] sm:$0xff]
    %v6420 = vld [vmem:[%s1852 + $0x68] sm:$0xf]
    %v6421 = vld [vmem:[%s1852 + $0x6c] sm:$0xff]
    %v6422 = vld [vmem:[%s1852 + $0x74] sm:$0xf]
    %v6423 = vld [vmem:[%s1852 + $0x78] sm:$0xff]
    %v6424 = vld [vmem:[%s1852 + $0x80] sm:$0xf]
    %v6425 = vld [vmem:[%s1852 + $0x84] sm:$0xff]
    %v6426 = vld [vmem:[%s1852 + $0x8c] sm:$0xf]
    %v6427 = vld [vmem:[%s1852 + $0x90] sm:$0xff]
    %v6428 = vld [vmem:[%s1852 + $0x98] sm:$0xf]
    %v6429 = vld [vmem:[%s1852 + $0x9c] sm:$0xff]
    %v6430 = vld [vmem:[%s1852 + $0xa4] sm:$0xf]
    %v6431 = vld [vmem:[%s1852 + $0xa8] sm:$0xff]
    %v6432 = vld [vmem:[%s1852 + $0xb0] sm:$0xf]
    %v6433 = vld [vmem:[%s1852 + $0xb4] sm:$0xff]
    %v6434 = vld [vmem:[%s1852 + $0xbc] sm:$0xf]
    %v6435 = vld [vmem:[%s1852 + $0xc0] sm:$0xff]
    %v6436 = vld [vmem:[%s1852 + $0xc8] sm:$0xf]
    %v6437 = vld [vmem:[%s1852 + $0xcc] sm:$0xff]
    %v6438 = vld [vmem:[%s1852 + $0xd4] sm:$0xf]
    %v6439 = vld [vmem:[%s1852 + $0xd8] sm:$0xff]
    %v6440 = vld [vmem:[%s1852 + $0xe0] sm:$0xf]
    %v6441 = vld [vmem:[%s1852 + $0xe4] sm:$0xff]
    %v6442 = vld [vmem:[%s1852 + $0xec] sm:$0xf]
    %v6443 = vld [vmem:[%s1852 + $0xf0] sm:$0xff]
    %v6444 = vld [vmem:[%s1852 + $0xf8] sm:$0xf]
    %v6445 = vld [vmem:[%s1852 + $0xfc] sm:$0xff]
    %v6446 = vld [vmem:[%s1852 + $0x104] sm:$0xf]
    %v6447 = vld [vmem:[%s1852 + $0x108] sm:$0xff]
    %v6448 = vld [vmem:[%s1852 + $0x110] sm:$0xf]
    %v6449 = vld [vmem:[%s1852 + $0x114] sm:$0xff]
    %v6450 = vld [vmem:[%s1852 + $0x11c] sm:$0xf]
    %v6451 = vld [vmem:[%s1852 + $0x120] sm:$0xff]
    %v6452 = vld [vmem:[%s1852 + $0x128] sm:$0xf]
    %v6454 = vunpack.c.l.b16 %v6402
    %v6455 = vunpack.c.h.b16 %v6402
    %v6456 = vpack.c.b16 %v5794, %v6454
    %v6457 = vpack.c.b16 %v5795, %v6455
    %v6458 = vrot.slane %v6456, 1
    %v6459 = vrot.slane %v6457, 1
    %v6511 = vunpack.c.l.b16 %v6403
    %v6512 = vunpack.c.h.b16 %v6403
    %v6513 = vunpack.c.l.b16 %v6404
    %v6514 = vunpack.c.l.b16 %v6405
    %v6515 = vunpack.c.h.b16 %v6405
    %v6516 = vunpack.c.l.b16 %v6406
    %v6517 = vunpack.c.l.b16 %v6407
    %v6518 = vunpack.c.h.b16 %v6407
    %v6519 = vunpack.c.l.b16 %v6408
    %v6520 = vunpack.c.l.b16 %v6409
    %v6521 = vunpack.c.h.b16 %v6409
    %v6522 = vunpack.c.l.b16 %v6410
    %v6523 = vunpack.c.l.b16 %v6411
    %v6524 = vunpack.c.h.b16 %v6411
    %v6525 = vunpack.c.l.b16 %v6412
    %v6526 = vunpack.c.l.b16 %v6413
    %v6527 = vunpack.c.h.b16 %v6413
    %v6528 = vunpack.c.l.b16 %v6414
    %v6529 = vunpack.c.l.b16 %v6415
    %v6530 = vunpack.c.h.b16 %v6415
    %v6531 = vunpack.c.l.b16 %v6416
    %v6532 = vunpack.c.l.b16 %v6417
    %v6533 = vunpack.c.h.b16 %v6417
    %v6534 = vunpack.c.l.b16 %v6418
    %v6535 = vunpack.c.l.b16 %v6419
    %v6536 = vunpack.c.h.b16 %v6419
    %v6537 = vunpack.c.l.b16 %v6420
    %v6538 = vunpack.c.l.b16 %v6421
    %v6539 = vunpack.c.h.b16 %v6421
    %v6540 = vunpack.c.l.b16 %v6422
    %v6541 = vunpack.c.l.b16 %v6423
    %v6542 = vunpack.c.h.b16 %v6423
    %v6543 = vunpack.c.l.b16 %v6424
    %v6544 = vunpack.c.l.b16 %v6425
    %v6545 = vunpack.c.h.b16 %v6425
    %v6546 = vunpack.c.l.b16 %v6426
    %v6547 = vunpack.c.l.b16 %v6427
    %v6548 = vunpack.c.h.b16 %v6427
    %v6549 = vunpack.c.l.b16 %v6428
    %v6550 = vunpack.c.l.b16 %v6429
    %v6551 = vunpack.c.h.b16 %v6429
    %v6552 = vunpack.c.l.b16 %v6430
    %v6553 = vunpack.c.l.b16 %v6431
    %v6554 = vunpack.c.h.b16 %v6431
    %v6555 = vunpack.c.l.b16 %v6432
    %v6556 = vunpack.c.l.b16 %v6433
    %v6557 = vunpack.c.h.b16 %v6433
    %v6558 = vunpack.c.l.b16 %v6434
    %v6559 = vunpack.c.l.b16 %v6435
    %v6560 = vunpack.c.h.b16 %v6435
    %v6561 = vunpack.c.l.b16 %v6436
    %v6562 = vunpack.c.l.b16 %v6437
    %v6563 = vunpack.c.h.b16 %v6437
    %v6564 = vunpack.c.l.b16 %v6438
    %v6565 = vunpack.c.l.b16 %v6439
    %v6566 = vunpack.c.h.b16 %v6439
    %v6567 = vunpack.c.l.b16 %v6440
    %v6568 = vunpack.c.l.b16 %v6441
    %v6569 = vunpack.c.h.b16 %v6441
    %v6570 = vunpack.c.l.b16 %v6442
    %v6571 = vunpack.c.l.b16 %v6443
    %v6572 = vunpack.c.h.b16 %v6443
    %v6573 = vunpack.c.l.b16 %v6444
    %v6574 = vunpack.c.l.b16 %v6445
    %v6575 = vunpack.c.h.b16 %v6445
    %v6576 = vunpack.c.l.b16 %v6446
    %v6577 = vunpack.c.l.b16 %v6447
    %v6578 = vunpack.c.h.b16 %v6447
    %v6579 = vunpack.c.l.b16 %v6448
    %v6580 = vunpack.c.l.b16 %v6449
    %v6581 = vunpack.c.h.b16 %v6449
    %v6582 = vunpack.c.l.b16 %v6450
    %v6583 = vunpack.c.l.b16 %v6451
    %v6584 = vunpack.c.h.b16 %v6451
    %v6585 = vunpack.c.l.b16 %v6452
    %v6586 = vpack.c.b16 %v6514, %v6511
    %v6587 = vpack.c.b16 %v6515, %v6512
    %v6588 = vpack.c.b16 %v6516, %v6513
    %v6589 = vpack.c.b16 %v6520, %v6517
    %v6590 = vpack.c.b16 %v6521, %v6518
    %v6591 = vpack.c.b16 %v6522, %v6519
    %v6592 = vpack.c.b16 %v6526, %v6523
    %v6593 = vpack.c.b16 %v6527, %v6524
    %v6594 = vpack.c.b16 %v6528, %v6525
    %v6595 = vpack.c.b16 %v6532, %v6529
    %v6596 = vpack.c.b16 %v6533, %v6530
    %v6597 = vpack.c.b16 %v6534, %v6531
    %v6598 = vpack.c.b16 %v6538, %v6535
    %v6599 = vpack.c.b16 %v6539, %v6536
    %v6600 = vpack.c.b16 %v6540, %v6537
    %v6601 = vpack.c.b16 %v6544, %v6541
    %v6602 = vpack.c.b16 %v6545, %v6542
    %v6603 = vpack.c.b16 %v6546, %v6543
    %v6604 = vpack.c.b16 %v6550, %v6547
    %v6605 = vpack.c.b16 %v6551, %v6548
    %v6606 = vpack.c.b16 %v6552, %v6549
    %v6607 = vpack.c.b16 %v6556, %v6553
    %v6608 = vpack.c.b16 %v6557, %v6554
    %v6609 = vpack.c.b16 %v6558, %v6555
    %v6610 = vpack.c.b16 %v6562, %v6559
    %v6611 = vpack.c.b16 %v6563, %v6560
    %v6612 = vpack.c.b16 %v6564, %v6561
    %v6613 = vpack.c.b16 %v6568, %v6565
    %v6614 = vpack.c.b16 %v6569, %v6566
    %v6615 = vpack.c.b16 %v6570, %v6567
    %v6616 = vpack.c.b16 %v6574, %v6571
    %v6617 = vpack.c.b16 %v6575, %v6572
    %v6618 = vpack.c.b16 %v6576, %v6573
    %v6619 = vpack.c.b16 %v6580, %v6577
    %v6620 = vpack.c.b16 %v6581, %v6578
    %v6621 = vpack.c.b16 %v6582, %v6579
    %v6622 = vpack.c.b16 %v6583, %v6583
    %v6623 = vpack.c.b16 %v6584, %v6584
    %v6624 = vpack.c.b16 %v6585, %v6585
    %v6662 = vsel %vm1461, %v6459, 0
    %v6665 = vsel %vm37, %v6622, 0
    %v6668 = vsel %vm37, %v6623, 0
    %v6671 = vsel %vm37, %v6624, 0
    %6673 = vmatprep.subr.bf16.mxu0 %v6587
    %6674 = vmatpush1.bf16.msra.mxu0 %v6586
    %6675 = vmatprep.subr.bf16.mxu0 %v6590
    %6676 = vmatpush1.bf16.msra.mxu0 %v6589
    %6677 = vmatprep.subr.bf16.mxu0 %v6593
    %6678 = vmatpush1.bf16.msra.mxu0 %v6592
    %6679 = vmatprep.subr.bf16.mxu0 %v6596
    %6680 = vmatpush1.bf16.msra.mxu0 %v6595
    %6681 = vmatprep.subr.bf16.mxu0 %v6599
    %6682 = vmatpush1.bf16.msra.mxu0 %v6598
    %6683 = vmatprep.subr.bf16.mxu0 %v6602
    %6684 = vmatpush1.bf16.msra.mxu0 %v6601
    %6685 = vmatprep.subr.bf16.mxu0 %v6605
    %6686 = vmatpush1.bf16.msra.mxu0 %v6604
    %6687 = vmatprep.subr.bf16.mxu0 %v6608
    %6688 = vmatpush1.bf16.msra.mxu0 %v6607
    %6689 = vmatprep.subr.bf16.mxu0 %v6611
    %6690 = vmatpush1.bf16.msra.mxu0 %v6610
    %6691 = vmatprep.subr.bf16.mxu0 %v6614
    %6692 = vmatpush1.bf16.msra.mxu0 %v6613
    %6693 = vmatprep.subr.bf16.mxu0 %v6617
    %6694 = vmatpush1.bf16.msra.mxu0 %v6616
    %6695 = vmatprep.subr.bf16.mxu0 %v6620
    %6696 = vmatpush1.bf16.msra.mxu0 %v6619
    %6697 = vmatprep.subr.bf16.mxu0 %v6668
    %6698 = vmatpush1.bf16.msra.mxu0 %v6665
    %6699 = vmatprep.subr.bf16.mxu0 0
    %6700 = vmatpush1.bf16.msra.mxu0 0
    %6701 = vmatprep.subr.bf16.mxu0 0
    %6702 = vmatpush1.bf16.msra.mxu0 0
    %6703 = vmatprep.subr.bf16.mxu0 0
    %6704 = vmatpush1.bf16.msra.mxu0 0
    %6705 = vmatprep.mubr.bf16.mxu0 %v6662
    %6706 = vmatmul.mubr.bf16.gmra.mrb[0].mxu0 %v6458
    %v6707 = vpop.f32.mrb[0].mxu0
    %v6708 = vadd.f32 0.0, %v6707
    %v6709 = vpop.f32.mrb[0].mxu0
    %v6710 = vadd.f32 0.0, %v6709
    %v6711 = vpop.f32.mrb[0].mxu0
    %v6712 = vpop.f32.mrb[0].mxu0
    %6713 = vdwg.mxu0
    %6714 = vmatprep.subr.bf16.mxu0 0
    %6715 = vmatpush1.bf16.msra.mxu0 %v6588
    %6716 = vmatprep.subr.bf16.mxu0 0
    %6717 = vmatpush1.bf16.msra.mxu0 %v6591
    %6718 = vmatprep.subr.bf16.mxu0 0
    %6719 = vmatpush1.bf16.msra.mxu0 %v6594
    %6720 = vmatprep.subr.bf16.mxu0 0
    %6721 = vmatpush1.bf16.msra.mxu0 %v6597
    %6722 = vmatprep.subr.bf16.mxu0 0
    %6723 = vmatpush1.bf16.msra.mxu0 %v6600
    %6724 = vmatprep.subr.bf16.mxu0 0
    %6725 = vmatpush1.bf16.msra.mxu0 %v6603
    %6726 = vmatprep.subr.bf16.mxu0 0
    %6727 = vmatpush1.bf16.msra.mxu0 %v6606
    %6728 = vmatprep.subr.bf16.mxu0 0
    %6729 = vmatpush1.bf16.msra.mxu0 %v6609
    %6730 = vmatprep.subr.bf16.mxu0 0
    %6731 = vmatpush1.bf16.msra.mxu0 %v6612
    %6732 = vmatprep.subr.bf16.mxu0 0
    %6733 = vmatpush1.bf16.msra.mxu0 %v6615
    %6734 = vmatprep.subr.bf16.mxu0 0
    %6735 = vmatpush1.bf16.msra.mxu0 %v6618
    %6736 = vmatprep.subr.bf16.mxu0 0
    %6737 = vmatpush1.bf16.msra.mxu0 %v6621
    %6738 = vmatprep.subr.bf16.mxu0 0
    %6739 = vmatpush1.bf16.msra.mxu0 %v6671
    %6740 = vmatprep.subr.bf16.mxu0 0
    %6741 = vmatpush1.bf16.msra.mxu0 0
    %6742 = vmatprep.subr.bf16.mxu0 0
    %6743 = vmatpush1.bf16.msra.mxu0 0
    %6744 = vmatprep.subr.bf16.mxu0 0
    %6745 = vmatpush1.bf16.msra.mxu0 0
    %6746 = vmatprep.mubr.bf16.mxu0 %v6662
    %6747 = vmatmul.mubr.bf16.gmra.mrb[0].mxu0 %v6458
    %v6748 = vpop.f32.mrb[0].mxu0
    %v6749 = vadd.f32 0.0, %v6748
    %v6750 = vpop.f32.mrb[0].mxu0
    %v6751 = vpop.f32.mrb[0].mxu0
    %v6752 = vpop.f32.mrb[0].mxu0
    %6753 = vdwg.mxu0
    %v6754 = vadd.f32 %v6356, %v6708
    %v6755 = vadd.f32 %v6358, %v6710
    %v6756 = vadd.f32 %v6397, %v6749
    %v6757 = vld [vmem:[#allocation2 + $0x8] sm:$0x33]
    %v6758 = vld [vmem:[%s2208] sm:$0xff]
    %v6759 = vld [vmem:[%s2208 + $0x8] sm:$0xf]
    %v6760 = vld [vmem:[%s2208 + $0xc] sm:$0xff]
    %v6761 = vld [vmem:[%s2208 + $0x14] sm:$0xf]
    %v6762 = vld [vmem:[%s2208 + $0x18] sm:$0xff]
    %v6763 = vld [vmem:[%s2208 + $0x20] sm:$0xf]
    %v6764 = vld [vmem:[%s2208 + $0x24] sm:$0xff]
    %v6765 = vld [vmem:[%s2208 + $0x2c] sm:$0xf]
    %v6766 = vld [vmem:[%s2208 + $0x30] sm:$0xff]
    %v6767 = vld [vmem:[%s2208 + $0x38] sm:$0xf]
    %v6768 = vld [vmem:[%s2208 + $0x3c] sm:$0xff]
    %v6769 = vld [vmem:[%s2208 + $0x44] sm:$0xf]
    %v6770 = vld [vmem:[%s2208 + $0x48] sm:$0xff]
    %v6771 = vld [vmem:[%s2208 + $0x50] sm:$0xf]
    %v6772 = vld [vmem:[%s2208 + $0x54] sm:$0xff]
    %v6773 = vld [vmem:[%s2208 + $0x5c] sm:$0xf]
    %v6774 = vld [vmem:[%s2208 + $0x60] sm:$0xff]
    %v6775 = vld [vmem:[%s2208 + $0x68] sm:$0xf]
    %v6776 = vld [vmem:[%s2208 + $0x6c] sm:$0xff]
    %v6777 = vld [vmem:[%s2208 + $0x74] sm:$0xf]
    %v6778 = vld [vmem:[%s2208 + $0x78] sm:$0xff]
    %v6779 = vld [vmem:[%s2208 + $0x80] sm:$0xf]
    %v6780 = vld [vmem:[%s2208 + $0x84] sm:$0xff]
    %v6781 = vld [vmem:[%s2208 + $0x8c] sm:$0xf]
    %v6782 = vld [vmem:[%s2208 + $0x90] sm:$0xff]
    %v6783 = vld [vmem:[%s2208 + $0x98] sm:$0xf]
    %v6784 = vld [vmem:[%s2208 + $0x9c] sm:$0xff]
    %v6785 = vld [vmem:[%s2208 + $0xa4] sm:$0xf]
    %v6786 = vld [vmem:[%s2208 + $0xa8] sm:$0xff]
    %v6787 = vld [vmem:[%s2208 + $0xb0] sm:$0xf]
    %v6788 = vld [vmem:[%s2208 + $0xb4] sm:$0xff]
    %v6789 = vld [vmem:[%s2208 + $0xbc] sm:$0xf]
    %v6790 = vld [vmem:[%s2208 + $0xc0] sm:$0xff]
    %v6791 = vld [vmem:[%s2208 + $0xc8] sm:$0xf]
    %v6792 = vld [vmem:[%s2208 + $0xcc] sm:$0xff]
    %v6793 = vld [vmem:[%s2208 + $0xd4] sm:$0xf]
    %v6794 = vld [vmem:[%s2208 + $0xd8] sm:$0xff]
    %v6795 = vld [vmem:[%s2208 + $0xe0] sm:$0xf]
    %v6796 = vld [vmem:[%s2208 + $0xe4] sm:$0xff]
    %v6797 = vld [vmem:[%s2208 + $0xec] sm:$0xf]
    %v6798 = vld [vmem:[%s2208 + $0xf0] sm:$0xff]
    %v6799 = vld [vmem:[%s2208 + $0xf8] sm:$0xf]
    %v6800 = vld [vmem:[%s2208 + $0xfc] sm:$0xff]
    %v6801 = vld [vmem:[%s2208 + $0x104] sm:$0xf]
    %v6802 = vld [vmem:[%s2208 + $0x108] sm:$0xff]
    %v6803 = vld [vmem:[%s2208 + $0x110] sm:$0xf]
    %v6804 = vld [vmem:[%s2208 + $0x114] sm:$0xff]
    %v6805 = vld [vmem:[%s2208 + $0x11c] sm:$0xf]
    %v6806 = vld [vmem:[%s2208 + $0x120] sm:$0xff]
    %v6807 = vld [vmem:[%s2208 + $0x128] sm:$0xf]
    %v6809 = vunpack.c.l.b16 %v6757
    %v6810 = vunpack.c.h.b16 %v6757
    %v6811 = vpack.c.b16 %v6809, %v6454
    %v6812 = vpack.c.b16 %v6810, %v6455
    %v6814 = vshrl.u32 %v6811, 16
    %v6816 = vrot.slane %v6814, 1
    %v6817 = vshll.u32 %v6811, 16
    %v6819 = vrot.slane %v6817, 2
    %v6820 = vor.u32 %v6816, %v6819
    %v6822 = vshrl.u32 %v6812, 16
    %v6824 = vrot.slane %v6822, 1
    %v6825 = vshll.u32 %v6812, 16
    %v6827 = vrot.slane %v6825, 2
    %v6828 = vor.u32 %v6824, %v6827
    %v6880 = vunpack.c.l.b16 %v6758
    %v6881 = vunpack.c.h.b16 %v6758
    %v6882 = vunpack.c.l.b16 %v6759
    %v6883 = vunpack.c.l.b16 %v6760
    %v6884 = vunpack.c.h.b16 %v6760
    %v6885 = vunpack.c.l.b16 %v6761
    %v6886 = vunpack.c.l.b16 %v6762
    %v6887 = vunpack.c.h.b16 %v6762
    %v6888 = vunpack.c.l.b16 %v6763
    %v6889 = vunpack.c.l.b16 %v6764
    %v6890 = vunpack.c.h.b16 %v6764
    %v6891 = vunpack.c.l.b16 %v6765
    %v6892 = vunpack.c.l.b16 %v6766
    %v6893 = vunpack.c.h.b16 %v6766
    %v6894 = vunpack.c.l.b16 %v6767
    %v6895 = vunpack.c.l.b16 %v6768
    %v6896 = vunpack.c.h.b16 %v6768
    %v6897 = vunpack.c.l.b16 %v6769
    %v6898 = vunpack.c.l.b16 %v6770
    %v6899 = vunpack.c.h.b16 %v6770
    %v6900 = vunpack.c.l.b16 %v6771
    %v6901 = vunpack.c.l.b16 %v6772
    %v6902 = vunpack.c.h.b16 %v6772
    %v6903 = vunpack.c.l.b16 %v6773
    %v6904 = vunpack.c.l.b16 %v6774
    %v6905 = vunpack.c.h.b16 %v6774
    %v6906 = vunpack.c.l.b16 %v6775
    %v6907 = vunpack.c.l.b16 %v6776
    %v6908 = vunpack.c.h.b16 %v6776
    %v6909 = vunpack.c.l.b16 %v6777
    %v6910 = vunpack.c.l.b16 %v6778
    %v6911 = vunpack.c.h.b16 %v6778
    %v6912 = vunpack.c.l.b16 %v6779
    %v6913 = vunpack.c.l.b16 %v6780
    %v6914 = vunpack.c.h.b16 %v6780
    %v6915 = vunpack.c.l.b16 %v6781
    %v6916 = vunpack.c.l.b16 %v6782
    %v6917 = vunpack.c.h.b16 %v6782
    %v6918 = vunpack.c.l.b16 %v6783
    %v6919 = vunpack.c.l.b16 %v6784
    %v6920 = vunpack.c.h.b16 %v6784
    %v6921 = vunpack.c.l.b16 %v6785
    %v6922 = vunpack.c.l.b16 %v6786
    %v6923 = vunpack.c.h.b16 %v6786
    %v6924 = vunpack.c.l.b16 %v6787
    %v6925 = vunpack.c.l.b16 %v6788
    %v6926 = vunpack.c.h.b16 %v6788
    %v6927 = vunpack.c.l.b16 %v6789
    %v6928 = vunpack.c.l.b16 %v6790
    %v6929 = vunpack.c.h.b16 %v6790
    %v6930 = vunpack.c.l.b16 %v6791
    %v6931 = vunpack.c.l.b16 %v6792
    %v6932 = vunpack.c.h.b16 %v6792
    %v6933 = vunpack.c.l.b16 %v6793
    %v6934 = vunpack.c.l.b16 %v6794
    %v6935 = vunpack.c.h.b16 %v6794
    %v6936 = vunpack.c.l.b16 %v6795
    %v6937 = vunpack.c.l.b16 %v6796
    %v6938 = vunpack.c.h.b16 %v6796
    %v6939 = vunpack.c.l.b16 %v6797
    %v6940 = vunpack.c.l.b16 %v6798
    %v6941 = vunpack.c.h.b16 %v6798
    %v6942 = vunpack.c.l.b16 %v6799
    %v6943 = vunpack.c.l.b16 %v6800
    %v6944 = vunpack.c.h.b16 %v6800
    %v6945 = vunpack.c.l.b16 %v6801
    %v6946 = vunpack.c.l.b16 %v6802
    %v6947 = vunpack.c.h.b16 %v6802
    %v6948 = vunpack.c.l.b16 %v6803
    %v6949 = vunpack.c.l.b16 %v6804
    %v6950 = vunpack.c.h.b16 %v6804
    %v6951 = vunpack.c.l.b16 %v6805
    %v6952 = vunpack.c.l.b16 %v6806
    %v6953 = vunpack.c.h.b16 %v6806
    %v6954 = vunpack.c.l.b16 %v6807
    %v6955 = vpack.c.b16 %v6883, %v6880
    %v6956 = vpack.c.b16 %v6884, %v6881
    %v6957 = vpack.c.b16 %v6885, %v6882
    %v6958 = vpack.c.b16 %v6889, %v6886
    %v6959 = vpack.c.b16 %v6890, %v6887
    %v6960 = vpack.c.b16 %v6891, %v6888
    %v6961 = vpack.c.b16 %v6895, %v6892
    %v6962 = vpack.c.b16 %v6896, %v6893
    %v6963 = vpack.c.b16 %v6897, %v6894
    %v6964 = vpack.c.b16 %v6901, %v6898
    %v6965 = vpack.c.b16 %v6902, %v6899
    %v6966 = vpack.c.b16 %v6903, %v6900
    %v6967 = vpack.c.b16 %v6907, %v6904
    %v6968 = vpack.c.b16 %v6908, %v6905
    %v6969 = vpack.c.b16 %v6909, %v6906
    %v6970 = vpack.c.b16 %v6913, %v6910
    %v6971 = vpack.c.b16 %v6914, %v6911
    %v6972 = vpack.c.b16 %v6915, %v6912
    %v6973 = vpack.c.b16 %v6919, %v6916
    %v6974 = vpack.c.b16 %v6920, %v6917
    %v6975 = vpack.c.b16 %v6921, %v6918
    %v6976 = vpack.c.b16 %v6925, %v6922
    %v6977 = vpack.c.b16 %v6926, %v6923
    %v6978 = vpack.c.b16 %v6927, %v6924
    %v6979 = vpack.c.b16 %v6931, %v6928
    %v6980 = vpack.c.b16 %v6932, %v6929
    %v6981 = vpack.c.b16 %v6933, %v6930
    %v6982 = vpack.c.b16 %v6937, %v6934
    %v6983 = vpack.c.b16 %v6938, %v6935
    %v6984 = vpack.c.b16 %v6939, %v6936
    %v6985 = vpack.c.b16 %v6943, %v6940
    %v6986 = vpack.c.b16 %v6944, %v6941
    %v6987 = vpack.c.b16 %v6945, %v6942
    %v6988 = vpack.c.b16 %v6949, %v6946
    %v6989 = vpack.c.b16 %v6950, %v6947
    %v6990 = vpack.c.b16 %v6951, %v6948
    %v6991 = vpack.c.b16 %v6952, %v6952
    %v6992 = vpack.c.b16 %v6953, %v6953
    %v6993 = vpack.c.b16 %v6954, %v6954
    %v7031 = vsel %vm1461, %v6828, 0
    %v7034 = vsel %vm37, %v6991, 0
    %v7037 = vsel %vm37, %v6992, 0
    %v7040 = vsel %vm37, %v6993, 0
    %7042 = vmatprep.subr.bf16.mxu0 %v6956
    %7043 = vmatpush1.bf16.msra.mxu0 %v6955
    %7044 = vmatprep.subr.bf16.mxu0 %v6959
    %7045 = vmatpush1.bf16.msra.mxu0 %v6958
    %7046 = vmatprep.subr.bf16.mxu0 %v6962
    %7047 = vmatpush1.bf16.msra.mxu0 %v6961
    %7048 = vmatprep.subr.bf16.mxu0 %v6965
    %7049 = vmatpush1.bf16.msra.mxu0 %v6964
    %7050 = vmatprep.subr.bf16.mxu0 %v6968
    %7051 = vmatpush1.bf16.msra.mxu0 %v6967
    %7052 = vmatprep.subr.bf16.mxu0 %v6971
    %7053 = vmatpush1.bf16.msra.mxu0 %v6970
    %7054 = vmatprep.subr.bf16.mxu0 %v6974
    %7055 = vmatpush1.bf16.msra.mxu0 %v6973
    %7056 = vmatprep.subr.bf16.mxu0 %v6977
    %7057 = vmatpush1.bf16.msra.mxu0 %v6976
    %7058 = vmatprep.subr.bf16.mxu0 %v6980
    %7059 = vmatpush1.bf16.msra.mxu0 %v6979
    %7060 = vmatprep.subr.bf16.mxu0 %v6983
    %7061 = vmatpush1.bf16.msra.mxu0 %v6982
    %7062 = vmatprep.subr.bf16.mxu0 %v6986
    %7063 = vmatpush1.bf16.msra.mxu0 %v6985
    %7064 = vmatprep.subr.bf16.mxu0 %v6989
    %7065 = vmatpush1.bf16.msra.mxu0 %v6988
    %7066 = vmatprep.subr.bf16.mxu0 %v7037
    %7067 = vmatpush1.bf16.msra.mxu0 %v7034
    %7068 = vmatprep.subr.bf16.mxu0 0
    %7069 = vmatpush1.bf16.msra.mxu0 0
    %7070 = vmatprep.subr.bf16.mxu0 0
    %7071 = vmatpush1.bf16.msra.mxu0 0
    %7072 = vmatprep.subr.bf16.mxu0 0
    %7073 = vmatpush1.bf16.msra.mxu0 0
    %7074 = vmatprep.mubr.bf16.mxu0 %v7031
    %7075 = vmatmul.mubr.bf16.gmra.mrb[0].mxu0 %v6820
    %v7076 = vpop.f32.mrb[0].mxu0
    %v7077 = vadd.f32 0.0, %v7076
    %v7078 = vpop.f32.mrb[0].mxu0
    %v7079 = vadd.f32 0.0, %v7078
    %v7080 = vpop.f32.mrb[0].mxu0
    %v7081 = vpop.f32.mrb[0].mxu0
    %7082 = vdwg.mxu0
    %7083 = vmatprep.subr.bf16.mxu0 0
    %7084 = vmatpush1.bf16.msra.mxu0 %v6957
    %7085 = vmatprep.subr.bf16.mxu0 0
    %7086 = vmatpush1.bf16.msra.mxu0 %v6960
    %7087 = vmatprep.subr.bf16.mxu0 0
    %7088 = vmatpush1.bf16.msra.mxu0 %v6963
    %7089 = vmatprep.subr.bf16.mxu0 0
    %7090 = vmatpush1.bf16.msra.mxu0 %v6966
    %7091 = vmatprep.subr.bf16.mxu0 0
    %7092 = vmatpush1.bf16.msra.mxu0 %v6969
    %7093 = vmatprep.subr.bf16.mxu0 0
    %7094 = vmatpush1.bf16.msra.mxu0 %v6972
    %7095 = vmatprep.subr.bf16.mxu0 0
    %7096 = vmatpush1.bf16.msra.mxu0 %v6975
    %7097 = vmatprep.subr.bf16.mxu0 0
    %7098 = vmatpush1.bf16.msra.mxu0 %v6978
    %7099 = vmatprep.subr.bf16.mxu0 0
    %7100 = vmatpush1.bf16.msra.mxu0 %v6981
    %7101 = vmatprep.subr.bf16.mxu0 0
    %7102 = vmatpush1.bf16.msra.mxu0 %v6984
    %7103 = vmatprep.subr.bf16.mxu0 0
    %7104 = vmatpush1.bf16.msra.mxu0 %v6987
    %7105 = vmatprep.subr.bf16.mxu0 0
    %7106 = vmatpush1.bf16.msra.mxu0 %v6990
    %7107 = vmatprep.subr.bf16.mxu0 0
    %7108 = vmatpush1.bf16.msra.mxu0 %v7040
    %7109 = vmatprep.subr.bf16.mxu0 0
    %7110 = vmatpush1.bf16.msra.mxu0 0
    %7111 = vmatprep.subr.bf16.mxu0 0
    %7112 = vmatpush1.bf16.msra.mxu0 0
    %7113 = vmatprep.subr.bf16.mxu0 0
    %7114 = vmatpush1.bf16.msra.mxu0 0
    %7115 = vmatprep.mubr.bf16.mxu0 %v7031
    %7116 = vmatmul.mubr.bf16.gmra.mrb[0].mxu0 %v6820
    %v7117 = vpop.f32.mrb[0].mxu0
    %v7118 = vadd.f32 0.0, %v7117
    %v7119 = vpop.f32.mrb[0].mxu0
    %v7120 = vpop.f32.mrb[0].mxu0
    %v7121 = vpop.f32.mrb[0].mxu0
    %7122 = vdwg.mxu0
    %v7123 = vadd.f32 %v6754, %v7077
    %v7124 = vadd.f32 %v6755, %v7079
    %v7125 = vadd.f32 %v6756, %v7118
    %v7126 = vld [vmem:[#allocation2] sm:$0xcc]
    %v7127 = vld [vmem:[%s2578] sm:$0xff]
    %v7128 = vld [vmem:[%s2578 + $0x8] sm:$0xf]
    %v7129 = vld [vmem:[%s2578 + $0xc] sm:$0xff]
    %v7130 = vld [vmem:[%s2578 + $0x14] sm:$0xf]
    %v7131 = vld [vmem:[%s2578 + $0x18] sm:$0xff]
    %v7132 = vld [vmem:[%s2578 + $0x20] sm:$0xf]
    %v7133 = vld [vmem:[%s2578 + $0x24] sm:$0xff]
    %v7134 = vld [vmem:[%s2578 + $0x2c] sm:$0xf]
    %v7135 = vld [vmem:[%s2578 + $0x30] sm:$0xff]
    %v7136 = vld [vmem:[%s2578 + $0x38] sm:$0xf]
    %v7137 = vld [vmem:[%s2578 + $0x3c] sm:$0xff]
    %v7138 = vld [vmem:[%s2578 + $0x44] sm:$0xf]
    %v7139 = vld [vmem:[%s2578 + $0x48] sm:$0xff]
    %v7140 = vld [vmem:[%s2578 + $0x50] sm:$0xf]
    %v7141 = vld [vmem:[%s2578 + $0x54] sm:$0xff]
    %v7142 = vld [vmem:[%s2578 + $0x5c] sm:$0xf]
    %v7143 = vld [vmem:[%s2578 + $0x60] sm:$0xff]
    %v7144 = vld [vmem:[%s2578 + $0x68] sm:$0xf]
    %v7145 = vld [vmem:[%s2578 + $0x6c] sm:$0xff]
    %v7146 = vld [vmem:[%s2578 + $0x74] sm:$0xf]
    %v7147 = vld [vmem:[%s2578 + $0x78] sm:$0xff]
    %v7148 = vld [vmem:[%s2578 + $0x80] sm:$0xf]
    %v7149 = vld [vmem:[%s2578 + $0x84] sm:$0xff]
    %v7150 = vld [vmem:[%s2578 + $0x8c] sm:$0xf]
    %v7151 = vld [vmem:[%s2578 + $0x90] sm:$0xff]
    %v7152 = vld [vmem:[%s2578 + $0x98] sm:$0xf]
    %v7153 = vld [vmem:[%s2578 + $0x9c] sm:$0xff]
    %v7154 = vld [vmem:[%s2578 + $0xa4] sm:$0xf]
    %v7155 = vld [vmem:[%s2578 + $0xa8] sm:$0xff]
    %v7156 = vld [vmem:[%s2578 + $0xb0] sm:$0xf]
    %v7157 = vld [vmem:[%s2578 + $0xb4] sm:$0xff]
    %v7158 = vld [vmem:[%s2578 + $0xbc] sm:$0xf]
    %v7159 = vld [vmem:[%s2578 + $0xc0] sm:$0xff]
    %v7160 = vld [vmem:[%s2578 + $0xc8] sm:$0xf]
    %v7161 = vld [vmem:[%s2578 + $0xcc] sm:$0xff]
    %v7162 = vld [vmem:[%s2578 + $0xd4] sm:$0xf]
    %v7163 = vld [vmem:[%s2578 + $0xd8] sm:$0xff]
    %v7164 = vld [vmem:[%s2578 + $0xe0] sm:$0xf]
    %v7165 = vld [vmem:[%s2578 + $0xe4] sm:$0xff]
    %v7166 = vld [vmem:[%s2578 + $0xec] sm:$0xf]
    %v7167 = vld [vmem:[%s2578 + $0xf0] sm:$0xff]
    %v7168 = vld [vmem:[%s2578 + $0xf8] sm:$0xf]
    %v7169 = vld [vmem:[%s2578 + $0xfc] sm:$0xff]
    %v7170 = vld [vmem:[%s2578 + $0x104] sm:$0xf]
    %v7171 = vld [vmem:[%s2578 + $0x108] sm:$0xff]
    %v7172 = vld [vmem:[%s2578 + $0x110] sm:$0xf]
    %v7173 = vld [vmem:[%s2578 + $0x114] sm:$0xff]
    %v7174 = vld [vmem:[%s2578 + $0x11c] sm:$0xf]
    %v7175 = vld [vmem:[%s2578 + $0x120] sm:$0xff]
    %v7176 = vld [vmem:[%s2578 + $0x128] sm:$0xf]
    %v7178 = vunpack.c.l.b16 %v7126
    %v7179 = vunpack.c.h.b16 %v7126
    %v7180 = vpack.c.b16 %v6809, %v7178
    %v7181 = vpack.c.b16 %v6810, %v7179
    %v7182 = vrot.slane %v7180, 2
    %v7183 = vrot.slane %v7181, 2
    %v7235 = vunpack.c.l.b16 %v7127
    %v7236 = vunpack.c.h.b16 %v7127
    %v7237 = vunpack.c.l.b16 %v7128
    %v7238 = vunpack.c.l.b16 %v7129
    %v7239 = vunpack.c.h.b16 %v7129
    %v7240 = vunpack.c.l.b16 %v7130
    %v7241 = vunpack.c.l.b16 %v7131
    %v7242 = vunpack.c.h.b16 %v7131
    %v7243 = vunpack.c.l.b16 %v7132
    %v7244 = vunpack.c.l.b16 %v7133
    %v7245 = vunpack.c.h.b16 %v7133
    %v7246 = vunpack.c.l.b16 %v7134
    %v7247 = vunpack.c.l.b16 %v7135
    %v7248 = vunpack.c.h.b16 %v7135
    %v7249 = vunpack.c.l.b16 %v7136
    %v7250 = vunpack.c.l.b16 %v7137
    %v7251 = vunpack.c.h.b16 %v7137
    %v7252 = vunpack.c.l.b16 %v7138
    %v7253 = vunpack.c.l.b16 %v7139
    %v7254 = vunpack.c.h.b16 %v7139
    %v7255 = vunpack.c.l.b16 %v7140
    %v7256 = vunpack.c.l.b16 %v7141
    %v7257 = vunpack.c.h.b16 %v7141
    %v7258 = vunpack.c.l.b16 %v7142
    %v7259 = vunpack.c.l.b16 %v7143
    %v7260 = vunpack.c.h.b16 %v7143
    %v7261 = vunpack.c.l.b16 %v7144
    %v7262 = vunpack.c.l.b16 %v7145
    %v7263 = vunpack.c.h.b16 %v7145
    %v7264 = vunpack.c.l.b16 %v7146
    %v7265 = vunpack.c.l.b16 %v7147
    %v7266 = vunpack.c.h.b16 %v7147
    %v7267 = vunpack.c.l.b16 %v7148
    %v7268 = vunpack.c.l.b16 %v7149
    %v7269 = vunpack.c.h.b16 %v7149
    %v7270 = vunpack.c.l.b16 %v7150
    %v7271 = vunpack.c.l.b16 %v7151
    %v7272 = vunpack.c.h.b16 %v7151
    %v7273 = vunpack.c.l.b16 %v7152
    %v7274 = vunpack.c.l.b16 %v7153
    %v7275 = vunpack.c.h.b16 %v7153
    %v7276 = vunpack.c.l.b16 %v7154
    %v7277 = vunpack.c.l.b16 %v7155
    %v7278 = vunpack.c.h.b16 %v7155
    %v7279 = vunpack.c.l.b16 %v7156
    %v7280 = vunpack.c.l.b16 %v7157
    %v7281 = vunpack.c.h.b16 %v7157
    %v7282 = vunpack.c.l.b16 %v7158
    %v7283 = vunpack.c.l.b16 %v7159
    %v7284 = vunpack.c.h.b16 %v7159
    %v7285 = vunpack.c.l.b16 %v7160
    %v7286 = vunpack.c.l.b16 %v7161
    %v7287 = vunpack.c.h.b16 %v7161
    %v7288 = vunpack.c.l.b16 %v7162
    %v7289 = vunpack.c.l.b16 %v7163
    %v7290 = vunpack.c.h.b16 %v7163
    %v7291 = vunpack.c.l.b16 %v7164
    %v7292 = vunpack.c.l.b16 %v7165
    %v7293 = vunpack.c.h.b16 %v7165
    %v7294 = vunpack.c.l.b16 %v7166
    %v7295 = vunpack.c.l.b16 %v7167
    %v7296 = vunpack.c.h.b16 %v7167
    %v7297 = vunpack.c.l.b16 %v7168
    %v7298 = vunpack.c.l.b16 %v7169
    %v7299 = vunpack.c.h.b16 %v7169
    %v7300 = vunpack.c.l.b16 %v7170
    %v7301 = vunpack.c.l.b16 %v7171
    %v7302 = vunpack.c.h.b16 %v7171
    %v7303 = vunpack.c.l.b16 %v7172
    %v7304 = vunpack.c.l.b16 %v7173
    %v7305 = vunpack.c.h.b16 %v7173
    %v7306 = vunpack.c.l.b16 %v7174
    %v7307 = vunpack.c.l.b16 %v7175
    %v7308 = vunpack.c.h.b16 %v7175
    %v7309 = vunpack.c.l.b16 %v7176
    %v7310 = vpack.c.b16 %v7238, %v7235
    %v7311 = vpack.c.b16 %v7239, %v7236
    %v7312 = vpack.c.b16 %v7240, %v7237
    %v7313 = vpack.c.b16 %v7244, %v7241
    %v7314 = vpack.c.b16 %v7245, %v7242
    %v7315 = vpack.c.b16 %v7246, %v7243
    %v7316 = vpack.c.b16 %v7250, %v7247
    %v7317 = vpack.c.b16 %v7251, %v7248
    %v7318 = vpack.c.b16 %v7252, %v7249
    %v7319 = vpack.c.b16 %v7256, %v7253
    %v7320 = vpack.c.b16 %v7257, %v7254
    %v7321 = vpack.c.b16 %v7258, %v7255
    %v7322 = vpack.c.b16 %v7262, %v7259
    %v7323 = vpack.c.b16 %v7263, %v7260
    %v7324 = vpack.c.b16 %v7264, %v7261
    %v7325 = vpack.c.b16 %v7268, %v7265
    %v7326 = vpack.c.b16 %v7269, %v7266
    %v7327 = vpack.c.b16 %v7270, %v7267
    %v7328 = vpack.c.b16 %v7274, %v7271
    %v7329 = vpack.c.b16 %v7275, %v7272
    %v7330 = vpack.c.b16 %v7276, %v7273
    %v7331 = vpack.c.b16 %v7280, %v7277
    %v7332 = vpack.c.b16 %v7281, %v7278
    %v7333 = vpack.c.b16 %v7282, %v7279
    %v7334 = vpack.c.b16 %v7286, %v7283
    %v7335 = vpack.c.b16 %v7287, %v7284
    %v7336 = vpack.c.b16 %v7288, %v7285
    %v7337 = vpack.c.b16 %v7292, %v7289
    %v7338 = vpack.c.b16 %v7293, %v7290
    %v7339 = vpack.c.b16 %v7294, %v7291
    %v7340 = vpack.c.b16 %v7298, %v7295
    %v7341 = vpack.c.b16 %v7299, %v7296
    %v7342 = vpack.c.b16 %v7300, %v7297
    %v7343 = vpack.c.b16 %v7304, %v7301
    %v7344 = vpack.c.b16 %v7305, %v7302
    %v7345 = vpack.c.b16 %v7306, %v7303
    %v7346 = vpack.c.b16 %v7307, %v7307
    %v7347 = vpack.c.b16 %v7308, %v7308
    %v7348 = vpack.c.b16 %v7309, %v7309
    %v7386 = vsel %vm1461, %v7183, 0
    %v7389 = vsel %vm37, %v7346, 0
    %v7392 = vsel %vm37, %v7347, 0
    %v7395 = vsel %vm37, %v7348, 0
    %7397 = vmatprep.subr.bf16.mxu0 %v7311
    %7398 = vmatpush1.bf16.msra.mxu0 %v7310
    %7399 = vmatprep.subr.bf16.mxu0 %v7314
    %7400 = vmatpush1.bf16.msra.mxu0 %v7313
    %7401 = vmatprep.subr.bf16.mxu0 %v7317
    %7402 = vmatpush1.bf16.msra.mxu0 %v7316
    %7403 = vmatprep.subr.bf16.mxu0 %v7320
    %7404 = vmatpush1.bf16.msra.mxu0 %v7319
    %7405 = vmatprep.subr.bf16.mxu0 %v7323
    %7406 = vmatpush1.bf16.msra.mxu0 %v7322
    %7407 = vmatprep.subr.bf16.mxu0 %v7326
    %7408 = vmatpush1.bf16.msra.mxu0 %v7325
    %7409 = vmatprep.subr.bf16.mxu0 %v7329
    %7410 = vmatpush1.bf16.msra.mxu0 %v7328
    %7411 = vmatprep.subr.bf16.mxu0 %v7332
    %7412 = vmatpush1.bf16.msra.mxu0 %v7331
    %7413 = vmatprep.subr.bf16.mxu0 %v7335
    %7414 = vmatpush1.bf16.msra.mxu0 %v7334
    %7415 = vmatprep.subr.bf16.mxu0 %v7338
    %7416 = vmatpush1.bf16.msra.mxu0 %v7337
    %7417 = vmatprep.subr.bf16.mxu0 %v7341
    %7418 = vmatpush1.bf16.msra.mxu0 %v7340
    %7419 = vmatprep.subr.bf16.mxu0 %v7344
    %7420 = vmatpush1.bf16.msra.mxu0 %v7343
    %7421 = vmatprep.subr.bf16.mxu0 %v7392
    %7422 = vmatpush1.bf16.msra.mxu0 %v7389
    %7423 = vmatprep.subr.bf16.mxu0 0
    %7424 = vmatpush1.bf16.msra.mxu0 0
    %7425 = vmatprep.subr.bf16.mxu0 0
    %7426 = vmatpush1.bf16.msra.mxu0 0
    %7427 = vmatprep.subr.bf16.mxu0 0
    %7428 = vmatpush1.bf16.msra.mxu0 0
    %7429 = vmatprep.mubr.bf16.mxu0 %v7386
    %7430 = vmatmul.mubr.bf16.gmra.mrb[0].mxu0 %v7182
    %v7431 = vpop.f32.mrb[0].mxu0
    %v7432 = vadd.f32 0.0, %v7431
    %v7433 = vpop.f32.mrb[0].mxu0
    %v7434 = vadd.f32 0.0, %v7433
    %v7435 = vpop.f32.mrb[0].mxu0
    %v7436 = vpop.f32.mrb[0].mxu0
    %7437 = vdwg.mxu0
    %7438 = vmatprep.subr.bf16.mxu0 0
    %7439 = vmatpush1.bf16.msra.mxu0 %v7312
    %7440 = vmatprep.subr.bf16.mxu0 0
    %7441 = vmatpush1.bf16.msra.mxu0 %v7315
    %7442 = vmatprep.subr.bf16.mxu0 0
    %7443 = vmatpush1.bf16.msra.mxu0 %v7318
    %7444 = vmatprep.subr.bf16.mxu0 0
    %7445 = vmatpush1.bf16.msra.mxu0 %v7321
    %7446 = vmatprep.subr.bf16.mxu0 0
    %7447 = vmatpush1.bf16.msra.mxu0 %v7324
    %7448 = vmatprep.subr.bf16.mxu0 0
    %7449 = vmatpush1.bf16.msra.mxu0 %v7327
    %7450 = vmatprep.subr.bf16.mxu0 0
    %7451 = vmatpush1.bf16.msra.mxu0 %v7330
    %7452 = vmatprep.subr.bf16.mxu0 0
    %7453 = vmatpush1.bf16.msra.mxu0 %v7333
    %7454 = vmatprep.subr.bf16.mxu0 0
    %7455 = vmatpush1.bf16.msra.mxu0 %v7336
    %7456 = vmatprep.subr.bf16.mxu0 0
    %7457 = vmatpush1.bf16.msra.mxu0 %v7339
    %7458 = vmatprep.subr.bf16.mxu0 0
    %7459 = vmatpush1.bf16.msra.mxu0 %v7342
    %7460 = vmatprep.subr.bf16.mxu0 0
    %7461 = vmatpush1.bf16.msra.mxu0 %v7345
    %7462 = vmatprep.subr.bf16.mxu0 0
    %7463 = vmatpush1.bf16.msra.mxu0 %v7395
    %7464 = vmatprep.subr.bf16.mxu0 0
    %7465 = vmatpush1.bf16.msra.mxu0 0
    %7466 = vmatprep.subr.bf16.mxu0 0
    %7467 = vmatpush1.bf16.msra.mxu0 0
    %7468 = vmatprep.subr.bf16.mxu0 0
    %7469 = vmatpush1.bf16.msra.mxu0 0
    %7470 = vmatprep.mubr.bf16.mxu0 %v7386
    %7471 = vmatmul.mubr.bf16.gmra.mrb[0].mxu0 %v7182
    %v7472 = vpop.f32.mrb[0].mxu0
    %v7473 = vadd.f32 0.0, %v7472
    %v7474 = vpop.f32.mrb[0].mxu0
    %v7475 = vpop.f32.mrb[0].mxu0
    %v7476 = vpop.f32.mrb[0].mxu0
    %7477 = vdwg.mxu0
    %v7478 = vadd.f32 %v7123, %v7432
    %v7479 = vadd.f32 %v7124, %v7434
    %v7480 = vadd.f32 %v7125, %v7473
    %v7481 = vld [vmem:[%s4] sm:$0x7]
    %v7483 = vlaneseq
    %v7484 = vshrl.u32 %v7483, 7
    %v7485 = vsub.s32 0, %v7484
    %v7486 = vrot.slane %v7481, %v7485
    %v7487 = vlaneseq
    %v7488 = vshrl.u32 %v7487, 7
    %v7489 = vsub.s32 1, %v7488
    %v7490 = vrot.slane %v7481, %v7489
    %v7491 = vlaneseq
    %v7492 = vshrl.u32 %v7491, 7
    %v7493 = vsub.s32 2, %v7492
    %v7494 = vrot.slane %v7481, %v7493
    %v7498 = vadd.f32 %v7478, %v7486
    %v7499 = vadd.f32 %v7479, %v7490
    %v7500 = vadd.f32 %v7480, %v7494
    %v7501 = vmax.f32 %v7498, 0.0
    %v7502 = vmax.f32 %v7499, 0.0
    %v7503 = vmax.f32 %v7500, 0.0
    %v7507 = vcombine.low %v7501, %v7502
    %v7508 = vcombine.high %v7501, %v7502
    %v7509 = vcombine.high %v7503, %v7503
    %v7513 = vcombine.high %v7507, %v7507
    %v7514 = vcombine.high %v7508, %v7508
    %v7517 = vsel %vm37, %v7507, -inf
    %v7518 = vrot.slane %v7517, 4
    %v7519 = vmax.f32 %v7517, %v7518
    %v7520 = vrot.slane %v7519, 2
    %v7521 = vmax.f32 %v7519, %v7520
    %v7522 = vrot.slane %v7521, 1
    %v7523 = vmax.f32 %v7521, %v7522
    %v7524 = vsel %vm37, %v7513, -inf
    %v7525 = vrot.slane %v7524, 4
    %v7526 = vmax.f32 %v7524, %v7525
    %v7527 = vrot.slane %v7526, 2
    %v7528 = vmax.f32 %v7526, %v7527
    %v7529 = vrot.slane %v7528, 1
    %v7530 = vmax.f32 %v7528, %v7529
    %v7531 = vsel %vm2983, %v7503, -inf
    %v7532 = vrot.slane %v7531, 4
    %v7533 = vmax.f32 %v7531, %v7532
    %v7534 = vrot.slane %v7533, 2
    %v7535 = vmax.f32 %v7533, %v7534
    %v7536 = vrot.slane %v7535, 1
    %v7537 = vmax.f32 %v7535, %v7536
    %v7538 = vsel %vm37, %v7508, -inf
    %v7539 = vrot.slane %v7538, 4
    %v7540 = vmax.f32 %v7538, %v7539
    %v7541 = vrot.slane %v7540, 2
    %v7542 = vmax.f32 %v7540, %v7541
    %v7543 = vrot.slane %v7542, 1
    %v7544 = vmax.f32 %v7542, %v7543
    %v7545 = vsel %vm37, %v7514, -inf
    %v7546 = vrot.slane %v7545, 4
    %v7547 = vmax.f32 %v7545, %v7546
    %v7548 = vrot.slane %v7547, 2
    %v7549 = vmax.f32 %v7547, %v7548
    %v7550 = vrot.slane %v7549, 1
    %v7551 = vmax.f32 %v7549, %v7550
    %v7552 = vsel %vm2983, %v7509, -inf
    %v7553 = vrot.slane %v7552, 4
    %v7554 = vmax.f32 %v7552, %v7553
    %v7555 = vrot.slane %v7554, 2
    %v7556 = vmax.f32 %v7554, %v7555
    %v7557 = vrot.slane %v7556, 1
    %v7558 = vmax.f32 %v7556, %v7557
    %v7559 = vpack.c.bf16 %v7523, %v7523
    %v7560 = vpack.c.bf16 %v7530, %v7530
    %v7561 = vpack.c.bf16 %v7537, %v7537
    %v7562 = vpack.c.bf16 %v7544, %v7544
    %v7563 = vpack.c.bf16 %v7551, %v7551
    %v7564 = vpack.c.bf16 %v7558, %v7558
    %v7565 = vld [vmem:[%s5] sm:$0xf]
    %v7566 = vld [vmem:[%s5 + $0x4] sm:$0xf]
    %v7567 = vld [vmem:[%s5 + $0x8] sm:$0xf]
    %v7568 = vld [vmem:[%s5 + $0xc] sm:$0xf]
    %v7569 = vld [vmem:[%s5 + $0x10] sm:$0xf]
    %v7570 = vld [vmem:[%s5 + $0x14] sm:$0xf]
    %v7571 = vld [vmem:[%s5 + $0x18] sm:$0xf]
    %v7572 = vld [vmem:[%s5 + $0x1c] sm:$0xf]
    %v7573 = vld [vmem:[%s5 + $0x20] sm:$0xf]
    %v7574 = vld [vmem:[%s5 + $0x24] sm:$0xf]
    %v7575 = vld [vmem:[%s5 + $0x28] sm:$0xf]
    %v7576 = vld [vmem:[%s5 + $0x2c] sm:$0xf]
    %v7577 = vld [vmem:[%s5 + $0x30] sm:$0xf]
    %v7578 = vld [vmem:[%s5 + $0x34] sm:$0xf]
    %v7579 = vld [vmem:[%s5 + $0x38] sm:$0xf]
    %v7580 = vld [vmem:[%s5 + $0x3c] sm:$0xf]
    %v7581 = vld [vmem:[%s5 + $0x40] sm:$0xf]
    %v7582 = vld [vmem:[%s5 + $0x44] sm:$0xf]
    %v7583 = vld [vmem:[%s5 + $0x48] sm:$0xf]
    %v7584 = vld [vmem:[%s5 + $0x4c] sm:$0xf]
    %v7585 = vld [vmem:[%s5 + $0x50] sm:$0xf]
    %v7586 = vld [vmem:[%s5 + $0x54] sm:$0xf]
    %v7587 = vld [vmem:[%s5 + $0x58] sm:$0xf]
    %v7588 = vld [vmem:[%s5 + $0x5c] sm:$0xf]
    %v7589 = vld [vmem:[%s5 + $0x60] sm:$0xf]
    %v7590 = vld [vmem:[%s5 + $0x64] sm:$0xf]
    %v7591 = vld [vmem:[%s5 + $0x68] sm:$0xf]
    %v7592 = vld [vmem:[%s5 + $0x6c] sm:$0xf]
    %v7593 = vld [vmem:[%s5 + $0x70] sm:$0xf]
    %v7594 = vld [vmem:[%s5 + $0x74] sm:$0xf]
    %v7595 = vld [vmem:[%s5 + $0x78] sm:$0xf]
    %v7596 = vld [vmem:[%s5 + $0x7c] sm:$0xf]
    %v7597 = vld [vmem:[%s5 + $0x80] sm:$0xf]
    %v7598 = vld [vmem:[%s5 + $0x84] sm:$0xf]
    %v7599 = vld [vmem:[%s5 + $0x88] sm:$0xf]
    %v7600 = vld [vmem:[%s5 + $0x8c] sm:$0xf]
    %v7601 = vld [vmem:[%s5 + $0x90] sm:$0xf]
    %v7602 = vld [vmem:[%s5 + $0x94] sm:$0x3]
    %v7603 = vld [vmem:[%s7] sm:$0x1]
    %v7605 = vlaneseq
    %v7606 = vshrl.u32 %v7605, 7
    %v7607 = vsub.s32 0, %v7606
    %v7608 = vrot.slane %v7603, %v7607
    %v7616 = vunpack.c.l.b16 %v7559
    %v7617 = vunpack.c.l.b16 %v7560
    %v7618 = vunpack.c.l.b16 %v7561
    %v7619 = vunpack.c.l.b16 %v7562
    %v7620 = vunpack.c.l.b16 %v7563
    %v7621 = vunpack.c.l.b16 %v7564
    %v7622 = vsel %vm1120, %v7619, %v7616
    %v7623 = vsel %vm1120, %v7620, %v7617
    %v7624 = vsel %vm1120, %v7621, %v7618
    %v7625 = vpack.c.b16 %v7622, %v7622
    %v7626 = vpack.c.b16 %v7623, %v7623
    %v7627 = vpack.c.b16 %v7624, %v7624
    %v7668 = vunpack.c.l.b16 %v7565
    %v7669 = vunpack.c.l.b16 %v7566
    %v7670 = vunpack.c.l.b16 %v7567
    %v7671 = vunpack.c.l.b16 %v7568
    %v7672 = vunpack.c.l.b16 %v7569
    %v7673 = vunpack.c.l.b16 %v7570
    %v7674 = vunpack.c.l.b16 %v7571
    %v7675 = vunpack.c.l.b16 %v7572
    %v7676 = vunpack.c.l.b16 %v7573
    %v7677 = vunpack.c.l.b16 %v7574
    %v7678 = vunpack.c.l.b16 %v7575
    %v7679 = vunpack.c.l.b16 %v7576
    %v7680 = vunpack.c.l.b16 %v7577
    %v7681 = vunpack.c.l.b16 %v7578
    %v7682 = vunpack.c.l.b16 %v7579
    %v7683 = vunpack.c.l.b16 %v7580
    %v7684 = vunpack.c.l.b16 %v7581
    %v7685 = vunpack.c.l.b16 %v7582
    %v7686 = vunpack.c.l.b16 %v7583
    %v7687 = vunpack.c.l.b16 %v7584
    %v7688 = vunpack.c.l.b16 %v7585
    %v7689 = vunpack.c.l.b16 %v7586
    %v7690 = vunpack.c.l.b16 %v7587
    %v7691 = vunpack.c.l.b16 %v7588
    %v7692 = vunpack.c.l.b16 %v7589
    %v7693 = vunpack.c.l.b16 %v7590
    %v7694 = vunpack.c.l.b16 %v7591
    %v7695 = vunpack.c.l.b16 %v7592
    %v7696 = vunpack.c.l.b16 %v7593
    %v7697 = vunpack.c.l.b16 %v7594
    %v7698 = vunpack.c.l.b16 %v7595
    %v7699 = vunpack.c.l.b16 %v7596
    %v7700 = vunpack.c.l.b16 %v7597
    %v7701 = vunpack.c.l.b16 %v7598
    %v7702 = vunpack.c.l.b16 %v7599
    %v7703 = vunpack.c.l.b16 %v7600
    %v7704 = vunpack.c.l.b16 %v7601
    %v7705 = vunpack.c.l.b16 %v7602
    %v7706 = vpack.c.b16 %v7669, %v7668
    %v7707 = vpack.c.b16 %v7671, %v7670
    %v7708 = vpack.c.b16 %v7673, %v7672
    %v7709 = vpack.c.b16 %v7675, %v7674
    %v7710 = vpack.c.b16 %v7677, %v7676
    %v7711 = vpack.c.b16 %v7679, %v7678
    %v7712 = vpack.c.b16 %v7681, %v7680
    %v7713 = vpack.c.b16 %v7683, %v7682
    %v7714 = vpack.c.b16 %v7685, %v7684
    %v7715 = vpack.c.b16 %v7687, %v7686
    %v7716 = vpack.c.b16 %v7689, %v7688
    %v7717 = vpack.c.b16 %v7691, %v7690
    %v7718 = vpack.c.b16 %v7693, %v7692
    %v7719 = vpack.c.b16 %v7695, %v7694
    %v7720 = vpack.c.b16 %v7697, %v7696
    %v7721 = vpack.c.b16 %v7699, %v7698
    %v7722 = vpack.c.b16 %v7701, %v7700
    %v7723 = vpack.c.b16 %v7703, %v7702
    %v7724 = vpack.c.b16 %v7705, %v7704
    %v7744 = vsel %vm3196, %v7627, 0
    %v7747 = vsel %vm3200, %v7724, 0
    %7749 = vmatprep.subr.bf16.mxu0 0
    %7750 = vmatpush1.bf16.msra.mxu0 %v7706
    %7751 = vmatprep.subr.bf16.mxu0 0
    %7752 = vmatpush1.bf16.msra.mxu0 %v7707
    %7753 = vmatprep.subr.bf16.mxu0 0
    %7754 = vmatpush1.bf16.msra.mxu0 %v7708
    %7755 = vmatprep.subr.bf16.mxu0 0
    %7756 = vmatpush1.bf16.msra.mxu0 %v7709
    %7757 = vmatprep.subr.bf16.mxu0 0
    %7758 = vmatpush1.bf16.msra.mxu0 %v7710
    %7759 = vmatprep.subr.bf16.mxu0 0
    %7760 = vmatpush1.bf16.msra.mxu0 %v7711
    %7761 = vmatprep.subr.bf16.mxu0 0
    %7762 = vmatpush1.bf16.msra.mxu0 %v7712
    %7763 = vmatprep.subr.bf16.mxu0 0
    %7764 = vmatpush1.bf16.msra.mxu0 %v7713
    %7765 = vmatprep.subr.bf16.mxu0 0
    %7766 = vmatpush1.bf16.msra.mxu0 %v7714
    %7767 = vmatprep.subr.bf16.mxu0 0
    %7768 = vmatpush1.bf16.msra.mxu0 %v7715
    %7769 = vmatprep.subr.bf16.mxu0 0
    %7770 = vmatpush1.bf16.msra.mxu0 %v7716
    %7771 = vmatprep.subr.bf16.mxu0 0
    %7772 = vmatpush1.bf16.msra.mxu0 %v7717
    %7773 = vmatprep.subr.bf16.mxu0 0
    %7774 = vmatpush1.bf16.msra.mxu0 %v7718
    %7775 = vmatprep.subr.bf16.mxu0 0
    %7776 = vmatpush1.bf16.msra.mxu0 %v7719
    %7777 = vmatprep.subr.bf16.mxu0 0
    %7778 = vmatpush1.bf16.msra.mxu0 %v7720
    %7779 = vmatprep.subr.bf16.mxu0 0
    %7780 = vmatpush1.bf16.msra.mxu0 %v7721
    %7781 = vmatprep.mubr.bf16.mxu0 %v7626
    %7782 = vmatmul.mubr.bf16.gmra.mrb[0].mxu0 %v7625
    %v7783 = vpop.f32.mrb[0].mxu0
    %v7784 = vadd.f32 %v7608, %v7783
    %v7785 = vpop.f32.mrb[0].mxu0
    %v7786 = vpop.f32.mrb[0].mxu0
    %v7787 = vpop.f32.mrb[0].mxu0
    %7788 = vdwg.mxu0
    %7789 = vmatprep.subr.bf16.mxu0 0
    %7790 = vmatpush1.bf16.msra.mxu0 %v7722
    %7791 = vmatprep.subr.bf16.mxu0 0
    %7792 = vmatpush1.bf16.msra.mxu0 %v7723
    %7793 = vmatprep.subr.bf16.mxu0 0
    %7794 = vmatpush1.bf16.msra.mxu0 %v7747
    %7795 = vmatprep.subr.bf16.mxu0 0
    %7796 = vmatpush1.bf16.msra.mxu0 0
    %7797 = vmatprep.subr.bf16.mxu0 0
    %7798 = vmatpush1.bf16.msra.mxu0 0
    %7799 = vmatprep.subr.bf16.mxu0 0
    %7800 = vmatpush1.bf16.msra.mxu0 0
    %7801 = vmatprep.subr.bf16.mxu0 0
    %7802 = vmatpush1.bf16.msra.mxu0 0
    %7803 = vmatprep.subr.bf16.mxu0 0
    %7804 = vmatpush1.bf16.msra.mxu0 0
    %7805 = vmatprep.subr.bf16.mxu0 0
    %7806 = vmatpush1.bf16.msra.mxu0 0
    %7807 = vmatprep.subr.bf16.mxu0 0
    %7808 = vmatpush1.bf16.msra.mxu0 0
    %7809 = vmatprep.subr.bf16.mxu0 0
    %7810 = vmatpush1.bf16.msra.mxu0 0
    %7811 = vmatprep.subr.bf16.mxu0 0
    %7812 = vmatpush1.bf16.msra.mxu0 0
    %7813 = vmatprep.subr.bf16.mxu0 0
    %7814 = vmatpush1.bf16.msra.mxu0 0
    %7815 = vmatprep.subr.bf16.mxu0 0
    %7816 = vmatpush1.bf16.msra.mxu0 0
    %7817 = vmatprep.subr.bf16.mxu0 0
    %7818 = vmatpush1.bf16.msra.mxu0 0
    %7819 = vmatprep.subr.bf16.mxu0 0
    %7820 = vmatpush1.bf16.msra.mxu0 0
    %7821 = vmatprep.mubr.bf16.mxu0 0
    %7822 = vmatmul.mubr.bf16.gmra.mrb[0].mxu0 %v7744
    %v7823 = vpop.f32.mrb[0].mxu0
    %v7824 = vadd.f32 %v7784, %v7823
    %v7825 = vpop.f32.mrb[0].mxu0
    %v7826 = vpop.f32.mrb[0].mxu0
    %v7827 = vpop.f32.mrb[0].mxu0
    %7828 = vdwg.mxu0
    %v7829 = vld [vmem:[%s3284] sm:$0xf]
    %v7830 = vld [vmem:[%s3284 + $0x4] sm:$0xf]
    %v7831 = vld [vmem:[%s3284 + $0x8] sm:$0xf]
    %v7832 = vld [vmem:[%s3284 + $0xc] sm:$0xf]
    %v7833 = vld [vmem:[%s3284 + $0x10] sm:$0xf]
    %v7834 = vld [vmem:[%s3284 + $0x14] sm:$0xf]
    %v7835 = vld [vmem:[%s3284 + $0x18] sm:$0xf]
    %v7836 = vld [vmem:[%s3284 + $0x1c] sm:$0xf]
    %v7837 = vld [vmem:[%s3284 + $0x20] sm:$0xf]
    %v7838 = vld [vmem:[%s3284 + $0x24] sm:$0xf]
    %v7839 = vld [vmem:[%s3284 + $0x28] sm:$0xf]
    %v7840 = vld [vmem:[%s3284 + $0x2c] sm:$0xf]
    %v7841 = vld [vmem:[%s3284 + $0x30] sm:$0xf]
    %v7842 = vld [vmem:[%s3284 + $0x34] sm:$0xf]
    %v7843 = vld [vmem:[%s3284 + $0x38] sm:$0xf]
    %v7844 = vld [vmem:[%s3284 + $0x3c] sm:$0xf]
    %v7845 = vld [vmem:[%s3284 + $0x40] sm:$0xf]
    %v7846 = vld [vmem:[%s3284 + $0x44] sm:$0xf]
    %v7847 = vld [vmem:[%s3284 + $0x48] sm:$0xf]
    %v7848 = vld [vmem:[%s3284 + $0x4c] sm:$0xf]
    %v7849 = vld [vmem:[%s3284 + $0x50] sm:$0xf]
    %v7850 = vld [vmem:[%s3284 + $0x54] sm:$0xf]
    %v7851 = vld [vmem:[%s3284 + $0x58] sm:$0xf]
    %v7852 = vld [vmem:[%s3284 + $0x5c] sm:$0xf]
    %v7853 = vld [vmem:[%s3284 + $0x60] sm:$0xf]
    %v7854 = vld [vmem:[%s3284 + $0x64] sm:$0xf]
    %v7855 = vld [vmem:[%s3284 + $0x68] sm:$0xf]
    %v7856 = vld [vmem:[%s3284 + $0x6c] sm:$0xf]
    %v7857 = vld [vmem:[%s3284 + $0x70] sm:$0xf]
    %v7858 = vld [vmem:[%s3284 + $0x74] sm:$0xf]
    %v7859 = vld [vmem:[%s3284 + $0x78] sm:$0xf]
    %v7860 = vld [vmem:[%s3284 + $0x7c] sm:$0xf]
    %v7861 = vld [vmem:[%s3284 + $0x80] sm:$0xf]
    %v7862 = vld [vmem:[%s3284 + $0x84] sm:$0xf]
    %v7863 = vld [vmem:[%s3284 + $0x88] sm:$0xf]
    %v7864 = vld [vmem:[%s3284 + $0x8c] sm:$0xf]
    %v7865 = vld [vmem:[%s3284 + $0x90] sm:$0xf]
    %v7866 = vld [vmem:[%s3284 + $0x94] sm:$0x3]
    %v7867 = vld [vmem:[%s3323] sm:$0x1]
    %v7869 = vlaneseq
    %v7870 = vshrl.u32 %v7869, 7
    %v7871 = vsub.s32 0, %v7870
    %v7872 = vrot.slane %v7867, %v7871
    %v7912 = vunpack.c.l.b16 %v7829
    %v7913 = vunpack.c.l.b16 %v7830
    %v7914 = vunpack.c.l.b16 %v7831
    %v7915 = vunpack.c.l.b16 %v7832
    %v7916 = vunpack.c.l.b16 %v7833
    %v7917 = vunpack.c.l.b16 %v7834
    %v7918 = vunpack.c.l.b16 %v7835
    %v7919 = vunpack.c.l.b16 %v7836
    %v7920 = vunpack.c.l.b16 %v7837
    %v7921 = vunpack.c.l.b16 %v7838
    %v7922 = vunpack.c.l.b16 %v7839
    %v7923 = vunpack.c.l.b16 %v7840
    %v7924 = vunpack.c.l.b16 %v7841
    %v7925 = vunpack.c.l.b16 %v7842
    %v7926 = vunpack.c.l.b16 %v7843
    %v7927 = vunpack.c.l.b16 %v7844
    %v7928 = vunpack.c.l.b16 %v7845
    %v7929 = vunpack.c.l.b16 %v7846
    %v7930 = vunpack.c.l.b16 %v7847
    %v7931 = vunpack.c.l.b16 %v7848
    %v7932 = vunpack.c.l.b16 %v7849
    %v7933 = vunpack.c.l.b16 %v7850
    %v7934 = vunpack.c.l.b16 %v7851
    %v7935 = vunpack.c.l.b16 %v7852
    %v7936 = vunpack.c.l.b16 %v7853
    %v7937 = vunpack.c.l.b16 %v7854
    %v7938 = vunpack.c.l.b16 %v7855
    %v7939 = vunpack.c.l.b16 %v7856
    %v7940 = vunpack.c.l.b16 %v7857
    %v7941 = vunpack.c.l.b16 %v7858
    %v7942 = vunpack.c.l.b16 %v7859
    %v7943 = vunpack.c.l.b16 %v7860
    %v7944 = vunpack.c.l.b16 %v7861
    %v7945 = vunpack.c.l.b16 %v7862
    %v7946 = vunpack.c.l.b16 %v7863
    %v7947 = vunpack.c.l.b16 %v7864
    %v7948 = vunpack.c.l.b16 %v7865
    %v7949 = vunpack.c.l.b16 %v7866
    %v7950 = vpack.c.b16 %v7913, %v7912
    %v7951 = vpack.c.b16 %v7915, %v7914
    %v7952 = vpack.c.b16 %v7917, %v7916
    %v7953 = vpack.c.b16 %v7919, %v7918
    %v7954 = vpack.c.b16 %v7921, %v7920
    %v7955 = vpack.c.b16 %v7923, %v7922
    %v7956 = vpack.c.b16 %v7925, %v7924
    %v7957 = vpack.c.b16 %v7927, %v7926
    %v7958 = vpack.c.b16 %v7929, %v7928
    %v7959 = vpack.c.b16 %v7931, %v7930
    %v7960 = vpack.c.b16 %v7933, %v7932
    %v7961 = vpack.c.b16 %v7935, %v7934
    %v7962 = vpack.c.b16 %v7937, %v7936
    %v7963 = vpack.c.b16 %v7939, %v7938
    %v7964 = vpack.c.b16 %v7941, %v7940
    %v7965 = vpack.c.b16 %v7943, %v7942
    %v7966 = vpack.c.b16 %v7945, %v7944
    %v7967 = vpack.c.b16 %v7947, %v7946
    %v7968 = vpack.c.b16 %v7949, %v7948
    %v7988 = vsel %vm3200, %v7968, 0
    %7990 = vmatprep.subr.bf16.mxu0 0
    %7991 = vmatpush1.bf16.msra.mxu0 %v7950
    %7992 = vmatprep.subr.bf16.mxu0 0
    %7993 = vmatpush1.bf16.msra.mxu0 %v7951
    %7994 = vmatprep.subr.bf16.mxu0 0
    %7995 = vmatpush1.bf16.msra.mxu0 %v7952
    %7996 = vmatprep.subr.bf16.mxu0 0
    %7997 = vmatpush1.bf16.msra.mxu0 %v7953
    %7998 = vmatprep.subr.bf16.mxu0 0
    %7999 = vmatpush1.bf16.msra.mxu0 %v7954
    %8000 = vmatprep.subr.bf16.mxu0 0
    %8001 = vmatpush1.bf16.msra.mxu0 %v7955
    %8002 = vmatprep.subr.bf16.mxu0 0
    %8003 = vmatpush1.bf16.msra.mxu0 %v7956
    %8004 = vmatprep.subr.bf16.mxu0 0
    %8005 = vmatpush1.bf16.msra.mxu0 %v7957
    %8006 = vmatprep.subr.bf16.mxu0 0
    %8007 = vmatpush1.bf16.msra.mxu0 %v7958
    %8008 = vmatprep.subr.bf16.mxu0 0
    %8009 = vmatpush1.bf16.msra.mxu0 %v7959
    %8010 = vmatprep.subr.bf16.mxu0 0
    %8011 = vmatpush1.bf16.msra.mxu0 %v7960
    %8012 = vmatprep.subr.bf16.mxu0 0
    %8013 = vmatpush1.bf16.msra.mxu0 %v7961
    %8014 = vmatprep.subr.bf16.mxu0 0
    %8015 = vmatpush1.bf16.msra.mxu0 %v7962
    %8016 = vmatprep.subr.bf16.mxu0 0
    %8017 = vmatpush1.bf16.msra.mxu0 %v7963
    %8018 = vmatprep.subr.bf16.mxu0 0
    %8019 = vmatpush1.bf16.msra.mxu0 %v7964
    %8020 = vmatprep.subr.bf16.mxu0 0
    %8021 = vmatpush1.bf16.msra.mxu0 %v7965
    %8022 = vmatprep.mubr.bf16.mxu0 %v7626
    %8023 = vmatmul.mubr.bf16.gmra.mrb[0].mxu0 %v7625
    %v8024 = vpop.f32.mrb[0].mxu0
    %v8025 = vadd.f32 %v7872, %v8024
    %v8026 = vpop.f32.mrb[0].mxu0
    %v8027 = vpop.f32.mrb[0].mxu0
    %v8028 = vpop.f32.mrb[0].mxu0
    %8029 = vdwg.mxu0
    %8030 = vmatprep.subr.bf16.mxu0 0
    %8031 = vmatpush1.bf16.msra.mxu0 %v7966
    %8032 = vmatprep.subr.bf16.mxu0 0
    %8033 = vmatpush1.bf16.msra.mxu0 %v7967
    %8034 = vmatprep.subr.bf16.mxu0 0
    %8035 = vmatpush1.bf16.msra.mxu0 %v7988
    %8036 = vmatprep.subr.bf16.mxu0 0
    %8037 = vmatpush1.bf16.msra.mxu0 0
    %8038 = vmatprep.subr.bf16.mxu0 0
    %8039 = vmatpush1.bf16.msra.mxu0 0
    %8040 = vmatprep.subr.bf16.mxu0 0
    %8041 = vmatpush1.bf16.msra.mxu0 0
    %8042 = vmatprep.subr.bf16.mxu0 0
    %8043 = vmatpush1.bf16.msra.mxu0 0
    %8044 = vmatprep.subr.bf16.mxu0 0
    %8045 = vmatpush1.bf16.msra.mxu0 0
    %8046 = vmatprep.subr.bf16.mxu0 0
    %8047 = vmatpush1.bf16.msra.mxu0 0
    %8048 = vmatprep.subr.bf16.mxu0 0
    %8049 = vmatpush1.bf16.msra.mxu0 0
    %8050 = vmatprep.subr.bf16.mxu0 0
    %8051 = vmatpush1.bf16.msra.mxu0 0
    %8052 = vmatprep.subr.bf16.mxu0 0
    %8053 = vmatpush1.bf16.msra.mxu0 0
    %8054 = vmatprep.subr.bf16.mxu0 0
    %8055 = vmatpush1.bf16.msra.mxu0 0
    %8056 = vmatprep.subr.bf16.mxu0 0
    %8057 = vmatpush1.bf16.msra.mxu0 0
    %8058 = vmatprep.subr.bf16.mxu0 0
    %8059 = vmatpush1.bf16.msra.mxu0 0
    %8060 = vmatprep.subr.bf16.mxu0 0
    %8061 = vmatpush1.bf16.msra.mxu0 0
    %8062 = vmatprep.mubr.bf16.mxu0 0
    %8063 = vmatmul.mubr.bf16.gmra.mrb[0].mxu0 %v7744
    %v8064 = vpop.f32.mrb[0].mxu0
    %v8065 = vadd.f32 %v8025, %v8064
    %v8066 = vpop.f32.mrb[0].mxu0
    %v8067 = vpop.f32.mrb[0].mxu0
    %v8068 = vpop.f32.mrb[0].mxu0
    %8069 = vdwg.mxu0
    %v8070 = vld [vmem:[%s3527] sm:$0xf]
    %v8071 = vld [vmem:[%s3527 + $0x4] sm:$0xf]
    %v8072 = vld [vmem:[%s3527 + $0x8] sm:$0xf]
    %v8073 = vld [vmem:[%s3527 + $0xc] sm:$0xf]
    %v8074 = vld [vmem:[%s3527 + $0x10] sm:$0xf]
    %v8075 = vld [vmem:[%s3527 + $0x14] sm:$0xf]
    %v8076 = vld [vmem:[%s3527 + $0x18] sm:$0xf]
    %v8077 = vld [vmem:[%s3527 + $0x1c] sm:$0xf]
    %v8078 = vld [vmem:[%s3527 + $0x20] sm:$0xf]
    %v8079 = vld [vmem:[%s3527 + $0x24] sm:$0xf]
    %v8080 = vld [vmem:[%s3527 + $0x28] sm:$0xf]
    %v8081 = vld [vmem:[%s3527 + $0x2c] sm:$0xf]
    %v8082 = vld [vmem:[%s3527 + $0x30] sm:$0xf]
    %v8083 = vld [vmem:[%s3527 + $0x34] sm:$0xf]
    %v8084 = vld [vmem:[%s3527 + $0x38] sm:$0xf]
    %v8085 = vld [vmem:[%s3527 + $0x3c] sm:$0xf]
    %v8086 = vld [vmem:[%s3527 + $0x40] sm:$0xf]
    %v8087 = vld [vmem:[%s3527 + $0x44] sm:$0xf]
    %v8088 = vld [vmem:[%s3527 + $0x48] sm:$0xf]
    %v8089 = vld [vmem:[%s3527 + $0x4c] sm:$0xf]
    %v8090 = vld [vmem:[%s3527 + $0x50] sm:$0xf]
    %v8091 = vld [vmem:[%s3527 + $0x54] sm:$0xf]
    %v8092 = vld [vmem:[%s3527 + $0x58] sm:$0xf]
    %v8093 = vld [vmem:[%s3527 + $0x5c] sm:$0xf]
    %v8094 = vld [vmem:[%s3527 + $0x60] sm:$0xf]
    %v8095 = vld [vmem:[%s3527 + $0x64] sm:$0xf]
    %v8096 = vld [vmem:[%s3527 + $0x68] sm:$0xf]
    %v8097 = vld [vmem:[%s3527 + $0x6c] sm:$0xf]
    %v8098 = vld [vmem:[%s3527 + $0x70] sm:$0xf]
    %v8099 = vld [vmem:[%s3527 + $0x74] sm:$0xf]
    %v8100 = vld [vmem:[%s3527 + $0x78] sm:$0xf]
    %v8101 = vld [vmem:[%s3527 + $0x7c] sm:$0xf]
    %v8102 = vld [vmem:[%s3527 + $0x80] sm:$0xf]
    %v8103 = vld [vmem:[%s3527 + $0x84] sm:$0xf]
    %v8104 = vld [vmem:[%s3527 + $0x88] sm:$0xf]
    %v8105 = vld [vmem:[%s3527 + $0x8c] sm:$0xf]
    %v8106 = vld [vmem:[%s3527 + $0x90] sm:$0xf]
    %v8107 = vld [vmem:[%s3527 + $0x94] sm:$0x3]
    %v8108 = vld [vmem:[%s3566] sm:$0x1]
    %v8110 = vlaneseq
    %v8111 = vshrl.u32 %v8110, 7
    %v8112 = vsub.s32 0, %v8111
    %v8113 = vrot.slane %v8108, %v8112
    %v8153 = vunpack.c.l.b16 %v8070
    %v8154 = vunpack.c.l.b16 %v8071
    %v8155 = vunpack.c.l.b16 %v8072
    %v8156 = vunpack.c.l.b16 %v8073
    %v8157 = vunpack.c.l.b16 %v8074
    %v8158 = vunpack.c.l.b16 %v8075
    %v8159 = vunpack.c.l.b16 %v8076
    %v8160 = vunpack.c.l.b16 %v8077
    %v8161 = vunpack.c.l.b16 %v8078
    %v8162 = vunpack.c.l.b16 %v8079
    %v8163 = vunpack.c.l.b16 %v8080
    %v8164 = vunpack.c.l.b16 %v8081
    %v8165 = vunpack.c.l.b16 %v8082
    %v8166 = vunpack.c.l.b16 %v8083
    %v8167 = vunpack.c.l.b16 %v8084
    %v8168 = vunpack.c.l.b16 %v8085
    %v8169 = vunpack.c.l.b16 %v8086
    %v8170 = vunpack.c.l.b16 %v8087
    %v8171 = vunpack.c.l.b16 %v8088
    %v8172 = vunpack.c.l.b16 %v8089
    %v8173 = vunpack.c.l.b16 %v8090
    %v8174 = vunpack.c.l.b16 %v8091
    %v8175 = vunpack.c.l.b16 %v8092
    %v8176 = vunpack.c.l.b16 %v8093
    %v8177 = vunpack.c.l.b16 %v8094
    %v8178 = vunpack.c.l.b16 %v8095
    %v8179 = vunpack.c.l.b16 %v8096
    %v8180 = vunpack.c.l.b16 %v8097
    %v8181 = vunpack.c.l.b16 %v8098
    %v8182 = vunpack.c.l.b16 %v8099
    %v8183 = vunpack.c.l.b16 %v8100
    %v8184 = vunpack.c.l.b16 %v8101
    %v8185 = vunpack.c.l.b16 %v8102
    %v8186 = vunpack.c.l.b16 %v8103
    %v8187 = vunpack.c.l.b16 %v8104
    %v8188 = vunpack.c.l.b16 %v8105
    %v8189 = vunpack.c.l.b16 %v8106
    %v8190 = vunpack.c.l.b16 %v8107
    %v8191 = vpack.c.b16 %v8154, %v8153
    %v8192 = vpack.c.b16 %v8156, %v8155
    %v8193 = vpack.c.b16 %v8158, %v8157
    %v8194 = vpack.c.b16 %v8160, %v8159
    %v8195 = vpack.c.b16 %v8162, %v8161
    %v8196 = vpack.c.b16 %v8164, %v8163
    %v8197 = vpack.c.b16 %v8166, %v8165
    %v8198 = vpack.c.b16 %v8168, %v8167
    %v8199 = vpack.c.b16 %v8170, %v8169
    %v8200 = vpack.c.b16 %v8172, %v8171
    %v8201 = vpack.c.b16 %v8174, %v8173
    %v8202 = vpack.c.b16 %v8176, %v8175
    %v8203 = vpack.c.b16 %v8178, %v8177
    %v8204 = vpack.c.b16 %v8180, %v8179
    %v8205 = vpack.c.b16 %v8182, %v8181
    %v8206 = vpack.c.b16 %v8184, %v8183
    %v8207 = vpack.c.b16 %v8186, %v8185
    %v8208 = vpack.c.b16 %v8188, %v8187
    %v8209 = vpack.c.b16 %v8190, %v8189
    %v8229 = vsel %vm3200, %v8209, 0
    %8231 = vmatprep.subr.bf16.mxu0 0
    %8232 = vmatpush1.bf16.msra.mxu0 %v8191
    %8233 = vmatprep.subr.bf16.mxu0 0
    %8234 = vmatpush1.bf16.msra.mxu0 %v8192
    %8235 = vmatprep.subr.bf16.mxu0 0
    %8236 = vmatpush1.bf16.msra.mxu0 %v8193
    %8237 = vmatprep.subr.bf16.mxu0 0
    %8238 = vmatpush1.bf16.msra.mxu0 %v8194
    %8239 = vmatprep.subr.bf16.mxu0 0
    %8240 = vmatpush1.bf16.msra.mxu0 %v8195
    %8241 = vmatprep.subr.bf16.mxu0 0
    %8242 = vmatpush1.bf16.msra.mxu0 %v8196
    %8243 = vmatprep.subr.bf16.mxu0 0
    %8244 = vmatpush1.bf16.msra.mxu0 %v8197
    %8245 = vmatprep.subr.bf16.mxu0 0
    %8246 = vmatpush1.bf16.msra.mxu0 %v8198
    %8247 = vmatprep.subr.bf16.mxu0 0
    %8248 = vmatpush1.bf16.msra.mxu0 %v8199
    %8249 = vmatprep.subr.bf16.mxu0 0
    %8250 = vmatpush1.bf16.msra.mxu0 %v8200
    %8251 = vmatprep.subr.bf16.mxu0 0
    %8252 = vmatpush1.bf16.msra.mxu0 %v8201
    %8253 = vmatprep.subr.bf16.mxu0 0
    %8254 = vmatpush1.bf16.msra.mxu0 %v8202
    %8255 = vmatprep.subr.bf16.mxu0 0
    %8256 = vmatpush1.bf16.msra.mxu0 %v8203
    %8257 = vmatprep.subr.bf16.mxu0 0
    %8258 = vmatpush1.bf16.msra.mxu0 %v8204
    %8259 = vmatprep.subr.bf16.mxu0 0
    %8260 = vmatpush1.bf16.msra.mxu0 %v8205
    %8261 = vmatprep.subr.bf16.mxu0 0
    %8262 = vmatpush1.bf16.msra.mxu0 %v8206
    %8263 = vmatprep.mubr.bf16.mxu0 %v7626
    %8264 = vmatmul.mubr.bf16.gmra.mrb[0].mxu0 %v7625
    %v8265 = vpop.f32.mrb[0].mxu0
    %v8266 = vadd.f32 %v8113, %v8265
    %v8267 = vpop.f32.mrb[0].mxu0
    %v8268 = vpop.f32.mrb[0].mxu0
    %v8269 = vpop.f32.mrb[0].mxu0
    %8270 = vdwg.mxu0
    %8271 = vmatprep.subr.bf16.mxu0 0
    %8272 = vmatpush1.bf16.msra.mxu0 %v8207
    %8273 = vmatprep.subr.bf16.mxu0 0
    %8274 = vmatpush1.bf16.msra.mxu0 %v8208
    %8275 = vmatprep.subr.bf16.mxu0 0
    %8276 = vmatpush1.bf16.msra.mxu0 %v8229
    %8277 = vmatprep.subr.bf16.mxu0 0
    %8278 = vmatpush1.bf16.msra.mxu0 0
    %8279 = vmatprep.subr.bf16.mxu0 0
    %8280 = vmatpush1.bf16.msra.mxu0 0
    %8281 = vmatprep.subr.bf16.mxu0 0
    %8282 = vmatpush1.bf16.msra.mxu0 0
    %8283 = vmatprep.subr.bf16.mxu0 0
    %8284 = vmatpush1.bf16.msra.mxu0 0
    %8285 = vmatprep.subr.bf16.mxu0 0
    %8286 = vmatpush1.bf16.msra.mxu0 0
    %8287 = vmatprep.subr.bf16.mxu0 0
    %8288 = vmatpush1.bf16.msra.mxu0 0
    %8289 = vmatprep.subr.bf16.mxu0 0
    %8290 = vmatpush1.bf16.msra.mxu0 0
    %8291 = vmatprep.subr.bf16.mxu0 0
    %8292 = vmatpush1.bf16.msra.mxu0 0
    %8293 = vmatprep.subr.bf16.mxu0 0
    %8294 = vmatpush1.bf16.msra.mxu0 0
    %8295 = vmatprep.subr.bf16.mxu0 0
    %8296 = vmatpush1.bf16.msra.mxu0 0
    %8297 = vmatprep.subr.bf16.mxu0 0
    %8298 = vmatpush1.bf16.msra.mxu0 0
    %8299 = vmatprep.subr.bf16.mxu0 0
    %8300 = vmatpush1.bf16.msra.mxu0 0
    %8301 = vmatprep.subr.bf16.mxu0 0
    %8302 = vmatpush1.bf16.msra.mxu0 0
    %8303 = vmatprep.mubr.bf16.mxu0 0
    %8304 = vmatmul.mubr.bf16.gmra.mrb[0].mxu0 %v7744
    %v8305 = vpop.f32.mrb[0].mxu0
    %v8306 = vadd.f32 %v8266, %v8305
    %v8307 = vpop.f32.mrb[0].mxu0
    %v8308 = vpop.f32.mrb[0].mxu0
    %v8309 = vpop.f32.mrb[0].mxu0
    %8310 = vdwg.mxu0
    %v8311 = vld [vmem:[%s3770] sm:$0xf]
    %v8312 = vld [vmem:[%s3770 + $0x4] sm:$0xf]
    %v8313 = vld [vmem:[%s3770 + $0x8] sm:$0xf]
    %v8314 = vld [vmem:[%s3770 + $0xc] sm:$0xf]
    %v8315 = vld [vmem:[%s3770 + $0x10] sm:$0xf]
    %v8316 = vld [vmem:[%s3770 + $0x14] sm:$0xf]
    %v8317 = vld [vmem:[%s3770 + $0x18] sm:$0xf]
    %v8318 = vld [vmem:[%s3770 + $0x1c] sm:$0xf]
    %v8319 = vld [vmem:[%s3770 + $0x20] sm:$0xf]
    %v8320 = vld [vmem:[%s3770 + $0x24] sm:$0xf]
    %v8321 = vld [vmem:[%s3770 + $0x28] sm:$0xf]
    %v8322 = vld [vmem:[%s3770 + $0x2c] sm:$0xf]
    %v8323 = vld [vmem:[%s3770 + $0x30] sm:$0xf]
    %v8324 = vld [vmem:[%s3770 + $0x34] sm:$0xf]
    %v8325 = vld [vmem:[%s3770 + $0x38] sm:$0xf]
    %v8326 = vld [vmem:[%s3770 + $0x3c] sm:$0xf]
    %v8327 = vld [vmem:[%s3770 + $0x40] sm:$0xf]
    %v8328 = vld [vmem:[%s3770 + $0x44] sm:$0xf]
    %v8329 = vld [vmem:[%s3770 + $0x48] sm:$0xf]
    %v8330 = vld [vmem:[%s3770 + $0x4c] sm:$0xf]
    %v8331 = vld [vmem:[%s3770 + $0x50] sm:$0xf]
    %v8332 = vld [vmem:[%s3770 + $0x54] sm:$0xf]
    %v8333 = vld [vmem:[%s3770 + $0x58] sm:$0xf]
    %v8334 = vld [vmem:[%s3770 + $0x5c] sm:$0xf]
    %v8335 = vld [vmem:[%s3770 + $0x60] sm:$0xf]
    %v8336 = vld [vmem:[%s3770 + $0x64] sm:$0xf]
    %v8337 = vld [vmem:[%s3770 + $0x68] sm:$0xf]
    %v8338 = vld [vmem:[%s3770 + $0x6c] sm:$0xf]
    %v8339 = vld [vmem:[%s3770 + $0x70] sm:$0xf]
    %v8340 = vld [vmem:[%s3770 + $0x74] sm:$0xf]
    %v8341 = vld [vmem:[%s3770 + $0x78] sm:$0xf]
    %v8342 = vld [vmem:[%s3770 + $0x7c] sm:$0xf]
    %v8343 = vld [vmem:[%s3770 + $0x80] sm:$0xf]
    %v8344 = vld [vmem:[%s3770 + $0x84] sm:$0xf]
    %v8345 = vld [vmem:[%s3770 + $0x88] sm:$0xf]
    %v8346 = vld [vmem:[%s3770 + $0x8c] sm:$0xf]
    %v8347 = vld [vmem:[%s3770 + $0x90] sm:$0xf]
    %v8348 = vld [vmem:[%s3770 + $0x94] sm:$0x3]
    %v8349 = vld [vmem:[%s3809] sm:$0x1]
    %v8351 = vlaneseq
    %v8352 = vshrl.u32 %v8351, 7
    %v8353 = vsub.s32 0, %v8352
    %v8354 = vrot.slane %v8349, %v8353
    %v8394 = vunpack.c.l.b16 %v8311
    %v8395 = vunpack.c.l.b16 %v8312
    %v8396 = vunpack.c.l.b16 %v8313
    %v8397 = vunpack.c.l.b16 %v8314
    %v8398 = vunpack.c.l.b16 %v8315
    %v8399 = vunpack.c.l.b16 %v8316
    %v8400 = vunpack.c.l.b16 %v8317
    %v8401 = vunpack.c.l.b16 %v8318
    %v8402 = vunpack.c.l.b16 %v8319
    %v8403 = vunpack.c.l.b16 %v8320
    %v8404 = vunpack.c.l.b16 %v8321
    %v8405 = vunpack.c.l.b16 %v8322
    %v8406 = vunpack.c.l.b16 %v8323
    %v8407 = vunpack.c.l.b16 %v8324
    %v8408 = vunpack.c.l.b16 %v8325
    %v8409 = vunpack.c.l.b16 %v8326
    %v8410 = vunpack.c.l.b16 %v8327
    %v8411 = vunpack.c.l.b16 %v8328
    %v8412 = vunpack.c.l.b16 %v8329
    %v8413 = vunpack.c.l.b16 %v8330
    %v8414 = vunpack.c.l.b16 %v8331
    %v8415 = vunpack.c.l.b16 %v8332
    %v8416 = vunpack.c.l.b16 %v8333
    %v8417 = vunpack.c.l.b16 %v8334
    %v8418 = vunpack.c.l.b16 %v8335
    %v8419 = vunpack.c.l.b16 %v8336
    %v8420 = vunpack.c.l.b16 %v8337
    %v8421 = vunpack.c.l.b16 %v8338
    %v8422 = vunpack.c.l.b16 %v8339
    %v8423 = vunpack.c.l.b16 %v8340
    %v8424 = vunpack.c.l.b16 %v8341
    %v8425 = vunpack.c.l.b16 %v8342
    %v8426 = vunpack.c.l.b16 %v8343
    %v8427 = vunpack.c.l.b16 %v8344
    %v8428 = vunpack.c.l.b16 %v8345
    %v8429 = vunpack.c.l.b16 %v8346
    %v8430 = vunpack.c.l.b16 %v8347
    %v8431 = vunpack.c.l.b16 %v8348
    %v8432 = vpack.c.b16 %v8395, %v8394
    %v8433 = vpack.c.b16 %v8397, %v8396
    %v8434 = vpack.c.b16 %v8399, %v8398
    %v8435 = vpack.c.b16 %v8401, %v8400
    %v8436 = vpack.c.b16 %v8403, %v8402
    %v8437 = vpack.c.b16 %v8405, %v8404
    %v8438 = vpack.c.b16 %v8407, %v8406
    %v8439 = vpack.c.b16 %v8409, %v8408
    %v8440 = vpack.c.b16 %v8411, %v8410
    %v8441 = vpack.c.b16 %v8413, %v8412
    %v8442 = vpack.c.b16 %v8415, %v8414
    %v8443 = vpack.c.b16 %v8417, %v8416
    %v8444 = vpack.c.b16 %v8419, %v8418
    %v8445 = vpack.c.b16 %v8421, %v8420
    %v8446 = vpack.c.b16 %v8423, %v8422
    %v8447 = vpack.c.b16 %v8425, %v8424
    %v8448 = vpack.c.b16 %v8427, %v8426
    %v8449 = vpack.c.b16 %v8429, %v8428
    %v8450 = vpack.c.b16 %v8431, %v8430
    %v8470 = vsel %vm3200, %v8450, 0
    %8472 = vmatprep.subr.bf16.mxu0 0
    %8473 = vmatpush1.bf16.msra.mxu0 %v8432
    %8474 = vmatprep.subr.bf16.mxu0 0
    %8475 = vmatpush1.bf16.msra.mxu0 %v8433
    %8476 = vmatprep.subr.bf16.mxu0 0
    %8477 = vmatpush1.bf16.msra.mxu0 %v8434
    %8478 = vmatprep.subr.bf16.mxu0 0
    %8479 = vmatpush1.bf16.msra.mxu0 %v8435
    %8480 = vmatprep.subr.bf16.mxu0 0
    %8481 = vmatpush1.bf16.msra.mxu0 %v8436
    %8482 = vmatprep.subr.bf16.mxu0 0
    %8483 = vmatpush1.bf16.msra.mxu0 %v8437
    %8484 = vmatprep.subr.bf16.mxu0 0
    %8485 = vmatpush1.bf16.msra.mxu0 %v8438
    %8486 = vmatprep.subr.bf16.mxu0 0
    %8487 = vmatpush1.bf16.msra.mxu0 %v8439
    %8488 = vmatprep.subr.bf16.mxu0 0
    %8489 = vmatpush1.bf16.msra.mxu0 %v8440
    %8490 = vmatprep.subr.bf16.mxu0 0
    %8491 = vmatpush1.bf16.msra.mxu0 %v8441
    %8492 = vmatprep.subr.bf16.mxu0 0
    %8493 = vmatpush1.bf16.msra.mxu0 %v8442
    %8494 = vmatprep.subr.bf16.mxu0 0
    %8495 = vmatpush1.bf16.msra.mxu0 %v8443
    %8496 = vmatprep.subr.bf16.mxu0 0
    %8497 = vmatpush1.bf16.msra.mxu0 %v8444
    %8498 = vmatprep.subr.bf16.mxu0 0
    %8499 = vmatpush1.bf16.msra.mxu0 %v8445
    %8500 = vmatprep.subr.bf16.mxu0 0
    %8501 = vmatpush1.bf16.msra.mxu0 %v8446
    %8502 = vmatprep.subr.bf16.mxu0 0
    %8503 = vmatpush1.bf16.msra.mxu0 %v8447
    %8504 = vmatprep.mubr.bf16.mxu0 %v7626
    %8505 = vmatmul.mubr.bf16.gmra.mrb[0].mxu0 %v7625
    %v8506 = vpop.f32.mrb[0].mxu0
    %v8507 = vadd.f32 %v8354, %v8506
    %v8508 = vpop.f32.mrb[0].mxu0
    %v8509 = vpop.f32.mrb[0].mxu0
    %v8510 = vpop.f32.mrb[0].mxu0
    %8511 = vdwg.mxu0
    %8512 = vmatprep.subr.bf16.mxu0 0
    %8513 = vmatpush1.bf16.msra.mxu0 %v8448
    %8514 = vmatprep.subr.bf16.mxu0 0
    %8515 = vmatpush1.bf16.msra.mxu0 %v8449
    %8516 = vmatprep.subr.bf16.mxu0 0
    %8517 = vmatpush1.bf16.msra.mxu0 %v8470
    %8518 = vmatprep.subr.bf16.mxu0 0
    %8519 = vmatpush1.bf16.msra.mxu0 0
    %8520 = vmatprep.subr.bf16.mxu0 0
    %8521 = vmatpush1.bf16.msra.mxu0 0
    %8522 = vmatprep.subr.bf16.mxu0 0
    %8523 = vmatpush1.bf16.msra.mxu0 0
    %8524 = vmatprep.subr.bf16.mxu0 0
    %8525 = vmatpush1.bf16.msra.mxu0 0
    %8526 = vmatprep.subr.bf16.mxu0 0
    %8527 = vmatpush1.bf16.msra.mxu0 0
    %8528 = vmatprep.subr.bf16.mxu0 0
    %8529 = vmatpush1.bf16.msra.mxu0 0
    %8530 = vmatprep.subr.bf16.mxu0 0
    %8531 = vmatpush1.bf16.msra.mxu0 0
    %8532 = vmatprep.subr.bf16.mxu0 0
    %8533 = vmatpush1.bf16.msra.mxu0 0
    %8534 = vmatprep.subr.bf16.mxu0 0
    %8535 = vmatpush1.bf16.msra.mxu0 0
    %8536 = vmatprep.subr.bf16.mxu0 0
    %8537 = vmatpush1.bf16.msra.mxu0 0
    %8538 = vmatprep.subr.bf16.mxu0 0
    %8539 = vmatpush1.bf16.msra.mxu0 0
    %8540 = vmatprep.subr.bf16.mxu0 0
    %8541 = vmatpush1.bf16.msra.mxu0 0
    %8542 = vmatprep.subr.bf16.mxu0 0
    %8543 = vmatpush1.bf16.msra.mxu0 0
    %8544 = vmatprep.mubr.bf16.mxu0 0
    %8545 = vmatmul.mubr.bf16.gmra.mrb[0].mxu0 %v7744
    %v8546 = vpop.f32.mrb[0].mxu0
    %v8547 = vadd.f32 %v8507, %v8546
    %v8548 = vpop.f32.mrb[0].mxu0
    %v8549 = vpop.f32.mrb[0].mxu0
    %v8550 = vpop.f32.mrb[0].mxu0
    %8551 = vdwg.mxu0
    %v8552 = vld [vmem:[%s6] sm:$0xf]
    %v8553 = vld [vmem:[%s6 + $0x4] sm:$0xf]
    %v8554 = vld [vmem:[%s6 + $0x8] sm:$0xf]
    %v8555 = vld [vmem:[%s6 + $0xc] sm:$0xf]
    %v8556 = vld [vmem:[%s6 + $0x10] sm:$0xf]
    %v8557 = vld [vmem:[%s6 + $0x14] sm:$0xf]
    %v8558 = vld [vmem:[%s6 + $0x18] sm:$0x1]
    %v8566 = vunpack.c.l.b16 %v8552
    %v8567 = vunpack.c.l.b16 %v8553
    %v8568 = vunpack.c.l.b16 %v8554
    %v8569 = vunpack.c.l.b16 %v8555
    %v8570 = vunpack.c.l.b16 %v8556
    %v8571 = vunpack.c.l.b16 %v8557
    %v8572 = vunpack.c.l.b16 %v8558
    %v8573 = vpack.c.b16 %v8567, %v8566
    %v8574 = vpack.c.b16 %v8569, %v8568
    %v8575 = vpack.c.b16 %v8571, %v8570
    %v8576 = vpack.c.b16 %v8572, %v8572
    %v8581 = vsel %vm1131, %v8576, 0
    %8583 = vmatprep.subr.bf16.mxu0 0
    %8584 = vmatpush1.bf16.msra.mxu0 %v8573
    %8585 = vmatprep.subr.bf16.mxu0 0
    %8586 = vmatpush1.bf16.msra.mxu0 %v8574
    %8587 = vmatprep.subr.bf16.mxu0 0
    %8588 = vmatpush1.bf16.msra.mxu0 %v8575
    %8589 = vmatprep.subr.bf16.mxu0 0
    %8590 = vmatpush1.bf16.msra.mxu0 %v8581
    %8591 = vmatprep.subr.bf16.mxu0 0
    %8592 = vmatpush1.bf16.msra.mxu0 0
    %8593 = vmatprep.subr.bf16.mxu0 0
    %8594 = vmatpush1.bf16.msra.mxu0 0
    %8595 = vmatprep.subr.bf16.mxu0 0
    %8596 = vmatpush1.bf16.msra.mxu0 0
    %8597 = vmatprep.subr.bf16.mxu0 0
    %8598 = vmatpush1.bf16.msra.mxu0 0
    %8599 = vmatprep.subr.bf16.mxu0 0
    %8600 = vmatpush1.bf16.msra.mxu0 0
    %8601 = vmatprep.subr.bf16.mxu0 0
    %8602 = vmatpush1.bf16.msra.mxu0 0
    %8603 = vmatprep.subr.bf16.mxu0 0
    %8604 = vmatpush1.bf16.msra.mxu0 0
    %8605 = vmatprep.subr.bf16.mxu0 0
    %8606 = vmatpush1.bf16.msra.mxu0 0
    %8607 = vmatprep.subr.bf16.mxu0 0
    %8608 = vmatpush1.bf16.msra.mxu0 0
    %8609 = vmatprep.subr.bf16.mxu0 0
    %8610 = vmatpush1.bf16.msra.mxu0 0
    %8611 = vmatprep.subr.bf16.mxu0 0
    %8612 = vmatpush1.bf16.msra.mxu0 0
    %8613 = vmatprep.subr.bf16.mxu0 0
    %8614 = vmatpush1.bf16.msra.mxu0 0
    %8615 = vmatprep.mubr.bf16.mxu0 0
    %8616 = vmatmul.mubr.bf16.gmra.mrb[0].mxu0 %v4043
    %v8617 = vpop.f32.mrb[0].mxu0
    %v8618 = vadd.f32 0.0, %v8617
    %v8619 = vpop.f32.mrb[0].mxu0
    %v8620 = vpop.f32.mrb[0].mxu0
    %v8621 = vpop.f32.mrb[0].mxu0
    %8622 = vdwg.mxu0
    %v8623 = vld [vmem:[%s4088] sm:$0xf]
    %v8624 = vld [vmem:[%s4088 + $0x4] sm:$0xf]
    %v8625 = vld [vmem:[%s4088 + $0x8] sm:$0xf]
    %v8626 = vld [vmem:[%s4088 + $0xc] sm:$0xf]
    %v8627 = vld [vmem:[%s4088 + $0x10] sm:$0xf]
    %v8628 = vld [vmem:[%s4088 + $0x14] sm:$0xf]
    %v8629 = vld [vmem:[%s4088 + $0x18] sm:$0x1]
    %v8637 = vunpack.c.l.b16 %v8623
    %v8638 = vunpack.c.l.b16 %v8624
    %v8639 = vunpack.c.l.b16 %v8625
    %v8640 = vunpack.c.l.b16 %v8626
    %v8641 = vunpack.c.l.b16 %v8627
    %v8642 = vunpack.c.l.b16 %v8628
    %v8643 = vunpack.c.l.b16 %v8629
    %v8644 = vpack.c.b16 %v8638, %v8637
    %v8645 = vpack.c.b16 %v8640, %v8639
    %v8646 = vpack.c.b16 %v8642, %v8641
    %v8647 = vpack.c.b16 %v8643, %v8643
    %v8652 = vsel %vm1131, %v8647, 0
    %8654 = vmatprep.subr.bf16.mxu0 0
    %8655 = vmatpush1.bf16.msra.mxu0 %v8644
    %8656 = vmatprep.subr.bf16.mxu0 0
    %8657 = vmatpush1.bf16.msra.mxu0 %v8645
    %8658 = vmatprep.subr.bf16.mxu0 0
    %8659 = vmatpush1.bf16.msra.mxu0 %v8646
    %8660 = vmatprep.subr.bf16.mxu0 0
    %8661 = vmatpush1.bf16.msra.mxu0 %v8652
    %8662 = vmatprep.subr.bf16.mxu0 0
    %8663 = vmatpush1.bf16.msra.mxu0 0
    %8664 = vmatprep.subr.bf16.mxu0 0
    %8665 = vmatpush1.bf16.msra.mxu0 0
    %8666 = vmatprep.subr.bf16.mxu0 0
    %8667 = vmatpush1.bf16.msra.mxu0 0
    %8668 = vmatprep.subr.bf16.mxu0 0
    %8669 = vmatpush1.bf16.msra.mxu0 0
    %8670 = vmatprep.subr.bf16.mxu0 0
    %8671 = vmatpush1.bf16.msra.mxu0 0
    %8672 = vmatprep.subr.bf16.mxu0 0
    %8673 = vmatpush1.bf16.msra.mxu0 0
    %8674 = vmatprep.subr.bf16.mxu0 0
    %8675 = vmatpush1.bf16.msra.mxu0 0
    %8676 = vmatprep.subr.bf16.mxu0 0
    %8677 = vmatpush1.bf16.msra.mxu0 0
    %8678 = vmatprep.subr.bf16.mxu0 0
    %8679 = vmatpush1.bf16.msra.mxu0 0
    %8680 = vmatprep.subr.bf16.mxu0 0
    %8681 = vmatpush1.bf16.msra.mxu0 0
    %8682 = vmatprep.subr.bf16.mxu0 0
    %8683 = vmatpush1.bf16.msra.mxu0 0
    %8684 = vmatprep.subr.bf16.mxu0 0
    %8685 = vmatpush1.bf16.msra.mxu0 0
    %8686 = vmatprep.mubr.bf16.mxu0 0
    %8687 = vmatmul.mubr.bf16.gmra.mrb[0].mxu0 %v4043
    %v8688 = vpop.f32.mrb[0].mxu0
    %v8689 = vadd.f32 0.0, %v8688
    %v8690 = vpop.f32.mrb[0].mxu0
    %v8691 = vpop.f32.mrb[0].mxu0
    %v8692 = vpop.f32.mrb[0].mxu0
    %8693 = vdwg.mxu0
    %v8694 = vld [vmem:[%s4160] sm:$0xf]
    %v8695 = vld [vmem:[%s4160 + $0x4] sm:$0xf]
    %v8696 = vld [vmem:[%s4160 + $0x8] sm:$0xf]
    %v8697 = vld [vmem:[%s4160 + $0xc] sm:$0xf]
    %v8698 = vld [vmem:[%s4160 + $0x10] sm:$0xf]
    %v8699 = vld [vmem:[%s4160 + $0x14] sm:$0xf]
    %v8700 = vld [vmem:[%s4160 + $0x18] sm:$0x1]
    %v8708 = vunpack.c.l.b16 %v8694
    %v8709 = vunpack.c.l.b16 %v8695
    %v8710 = vunpack.c.l.b16 %v8696
    %v8711 = vunpack.c.l.b16 %v8697
    %v8712 = vunpack.c.l.b16 %v8698
    %v8713 = vunpack.c.l.b16 %v8699
    %v8714 = vunpack.c.l.b16 %v8700
    %v8715 = vpack.c.b16 %v8709, %v8708
    %v8716 = vpack.c.b16 %v8711, %v8710
    %v8717 = vpack.c.b16 %v8713, %v8712
    %v8718 = vpack.c.b16 %v8714, %v8714
    %v8723 = vsel %vm1131, %v8718, 0
    %8725 = vmatprep.subr.bf16.mxu0 0
    %8726 = vmatpush1.bf16.msra.mxu0 %v8715
    %8727 = vmatprep.subr.bf16.mxu0 0
    %8728 = vmatpush1.bf16.msra.mxu0 %v8716
    %8729 = vmatprep.subr.bf16.mxu0 0
    %8730 = vmatpush1.bf16.msra.mxu0 %v8717
    %8731 = vmatprep.subr.bf16.mxu0 0
    %8732 = vmatpush1.bf16.msra.mxu0 %v8723
    %8733 = vmatprep.subr.bf16.mxu0 0
    %8734 = vmatpush1.bf16.msra.mxu0 0
    %8735 = vmatprep.subr.bf16.mxu0 0
    %8736 = vmatpush1.bf16.msra.mxu0 0
    %8737 = vmatprep.subr.bf16.mxu0 0
    %8738 = vmatpush1.bf16.msra.mxu0 0
    %8739 = vmatprep.subr.bf16.mxu0 0
    %8740 = vmatpush1.bf16.msra.mxu0 0
    %8741 = vmatprep.subr.bf16.mxu0 0
    %8742 = vmatpush1.bf16.msra.mxu0 0
    %8743 = vmatprep.subr.bf16.mxu0 0
    %8744 = vmatpush1.bf16.msra.mxu0 0
    %8745 = vmatprep.subr.bf16.mxu0 0
    %8746 = vmatpush1.bf16.msra.mxu0 0
    %8747 = vmatprep.subr.bf16.mxu0 0
    %8748 = vmatpush1.bf16.msra.mxu0 0
    %8749 = vmatprep.subr.bf16.mxu0 0
    %8750 = vmatpush1.bf16.msra.mxu0 0
    %8751 = vmatprep.subr.bf16.mxu0 0
    %8752 = vmatpush1.bf16.msra.mxu0 0
    %8753 = vmatprep.subr.bf16.mxu0 0
    %8754 = vmatpush1.bf16.msra.mxu0 0
    %8755 = vmatprep.subr.bf16.mxu0 0
    %8756 = vmatpush1.bf16.msra.mxu0 0
    %8757 = vmatprep.mubr.bf16.mxu0 0
    %8758 = vmatmul.mubr.bf16.gmra.mrb[0].mxu0 %v4043
    %v8759 = vpop.f32.mrb[0].mxu0
    %v8760 = vadd.f32 0.0, %v8759
    %v8761 = vpop.f32.mrb[0].mxu0
    %v8762 = vpop.f32.mrb[0].mxu0
    %v8763 = vpop.f32.mrb[0].mxu0
    %8764 = vdwg.mxu0
    %v8765 = vld [vmem:[%s4232] sm:$0xf]
    %v8766 = vld [vmem:[%s4232 + $0x4] sm:$0xf]
    %v8767 = vld [vmem:[%s4232 + $0x8] sm:$0xf]
    %v8768 = vld [vmem:[%s4232 + $0xc] sm:$0xf]
    %v8769 = vld [vmem:[%s4232 + $0x10] sm:$0xf]
    %v8770 = vld [vmem:[%s4232 + $0x14] sm:$0xf]
    %v8771 = vld [vmem:[%s4232 + $0x18] sm:$0x1]
    %v8779 = vunpack.c.l.b16 %v8765
    %v8780 = vunpack.c.l.b16 %v8766
    %v8781 = vunpack.c.l.b16 %v8767
    %v8782 = vunpack.c.l.b16 %v8768
    %v8783 = vunpack.c.l.b16 %v8769
    %v8784 = vunpack.c.l.b16 %v8770
    %v8785 = vunpack.c.l.b16 %v8771
    %v8786 = vpack.c.b16 %v8780, %v8779
    %v8787 = vpack.c.b16 %v8782, %v8781
    %v8788 = vpack.c.b16 %v8784, %v8783
    %v8789 = vpack.c.b16 %v8785, %v8785
    %v8794 = vsel %vm1131, %v8789, 0
    %8796 = vmatprep.subr.bf16.mxu0 0
    %8797 = vmatpush1.bf16.msra.mxu0 %v8786
    %8798 = vmatprep.subr.bf16.mxu0 0
    %8799 = vmatpush1.bf16.msra.mxu0 %v8787
    %8800 = vmatprep.subr.bf16.mxu0 0
    %8801 = vmatpush1.bf16.msra.mxu0 %v8788
    %8802 = vmatprep.subr.bf16.mxu0 0
    %8803 = vmatpush1.bf16.msra.mxu0 %v8794
    %8804 = vmatprep.subr.bf16.mxu0 0
    %8805 = vmatpush1.bf16.msra.mxu0 0
    %8806 = vmatprep.subr.bf16.mxu0 0
    %8807 = vmatpush1.bf16.msra.mxu0 0
    %8808 = vmatprep.subr.bf16.mxu0 0
    %8809 = vmatpush1.bf16.msra.mxu0 0
    %8810 = vmatprep.subr.bf16.mxu0 0
    %8811 = vmatpush1.bf16.msra.mxu0 0
    %8812 = vmatprep.subr.bf16.mxu0 0
    %8813 = vmatpush1.bf16.msra.mxu0 0
    %8814 = vmatprep.subr.bf16.mxu0 0
    %8815 = vmatpush1.bf16.msra.mxu0 0
    %8816 = vmatprep.subr.bf16.mxu0 0
    %8817 = vmatpush1.bf16.msra.mxu0 0
    %8818 = vmatprep.subr.bf16.mxu0 0
    %8819 = vmatpush1.bf16.msra.mxu0 0
    %8820 = vmatprep.subr.bf16.mxu0 0
    %8821 = vmatpush1.bf16.msra.mxu0 0
    %8822 = vmatprep.subr.bf16.mxu0 0
    %8823 = vmatpush1.bf16.msra.mxu0 0
    %8824 = vmatprep.subr.bf16.mxu0 0
    %8825 = vmatpush1.bf16.msra.mxu0 0
    %8826 = vmatprep.subr.bf16.mxu0 0
    %8827 = vmatpush1.bf16.msra.mxu0 0
    %8828 = vmatprep.mubr.bf16.mxu0 0
    %8829 = vmatmul.mubr.bf16.gmra.mrb[0].mxu0 %v4043
    %v8830 = vpop.f32.mrb[0].mxu0
    %v8831 = vadd.f32 0.0, %v8830
    %v8832 = vpop.f32.mrb[0].mxu0
    %v8833 = vpop.f32.mrb[0].mxu0
    %v8834 = vpop.f32.mrb[0].mxu0
    %8835 = vdwg.mxu0
    %v8836 = vadd.f32 %v7824, %v8618
    %v8837 = vxor.u32 %v8836, 2147483648
    %v8838 = vmul.f32 %v8837, 1.442695
    %v8839 = vpow.pop %v8838
    %v8840 = vadd.f32 %v8839, 1.0
    %v8841 = vrcp.pop %v8840
    %v8842 = vmul.f32 1.0, %v8841
    %v8843 = vadd.f32 %v8065, %v8689
    %v8844 = vxor.u32 %v8843, 2147483648
    %v8845 = vmul.f32 %v8844, 1.442695
    %v8846 = vpow.pop %v8845
    %v8847 = vadd.f32 %v8846, 1.0
    %v8848 = vrcp.pop %v8847
    %v8849 = vmul.f32 1.0, %v8848
    %v8850 = vadd.f32 %v8306, %v8760
    %v8851 = vtanh.pop %v8850
    %v8852 = vadd.f32 %v8547, %v8831
    %v8853 = vxor.u32 %v8852, 2147483648
    %v8854 = vmul.f32 %v8853, 1.442695
    %v8855 = vpow.pop %v8854
    %v8856 = vadd.f32 %v8855, 1.0
    %v8857 = vrcp.pop %v8856
    %v8858 = vmul.f32 1.0, %v8857
    %v8859 = vmul.f32 %v8849, 0.0
    %v8860 = vmul.f32 %v8842, %v8851
    %v8861 = vadd.f32 %v8859, %v8860
    %v8862 = vtanh.pop %v8861
    %v8863 = vmul.f32 %v8858, %v8862
    %v8864 = vpack.c.bf16 %v8863, %v8863
    %v8866 = vsel %vm4041, %v8864, 0
    %8868 = vmatprep.subr.bf16.mxu0 0
    %8869 = vmatpush1.bf16.msra.mxu0 %v8573
    %8870 = vmatprep.subr.bf16.mxu0 0
    %8871 = vmatpush1.bf16.msra.mxu0 %v8574
    %8872 = vmatprep.subr.bf16.mxu0 0
    %8873 = vmatpush1.bf16.msra.mxu0 %v8575
    %8874 = vmatprep.subr.bf16.mxu0 0
    %8875 = vmatpush1.bf16.msra.mxu0 %v8581
    %8876 = vmatprep.subr.bf16.mxu0 0
    %8877 = vmatpush1.bf16.msra.mxu0 0
    %8878 = vmatprep.subr.bf16.mxu0 0
    %8879 = vmatpush1.bf16.msra.mxu0 0
    %8880 = vmatprep.subr.bf16.mxu0 0
    %8881 = vmatpush1.bf16.msra.mxu0 0
    %8882 = vmatprep.subr.bf16.mxu0 0
    %8883 = vmatpush1.bf16.msra.mxu0 0
    %8884 = vmatprep.subr.bf16.mxu0 0
    %8885 = vmatpush1.bf16.msra.mxu0 0
    %8886 = vmatprep.subr.bf16.mxu0 0
    %8887 = vmatpush1.bf16.msra.mxu0 0
    %8888 = vmatprep.subr.bf16.mxu0 0
    %8889 = vmatpush1.bf16.msra.mxu0 0
    %8890 = vmatprep.subr.bf16.mxu0 0
    %8891 = vmatpush1.bf16.msra.mxu0 0
    %8892 = vmatprep.subr.bf16.mxu0 0
    %8893 = vmatpush1.bf16.msra.mxu0 0
    %8894 = vmatprep.subr.bf16.mxu0 0
    %8895 = vmatpush1.bf16.msra.mxu0 0
    %8896 = vmatprep.subr.bf16.mxu0 0
    %8897 = vmatpush1.bf16.msra.mxu0 0
    %8898 = vmatprep.subr.bf16.mxu0 0
    %8899 = vmatpush1.bf16.msra.mxu0 0
    %8900 = vmatprep.mubr.bf16.mxu0 0
    %8901 = vmatmul.mubr.bf16.gmra.mrb[0].mxu0 %v8866
    %v8902 = vpop.f32.mrb[0].mxu0
    %v8903 = vadd.f32 0.0, %v8902
    %v8904 = vpop.f32.mrb[0].mxu0
    %v8905 = vpop.f32.mrb[0].mxu0
    %v8906 = vpop.f32.mrb[0].mxu0
    %8907 = vdwg.mxu0
    %8908 = vmatprep.subr.bf16.mxu0 0
    %8909 = vmatpush1.bf16.msra.mxu0 %v8644
    %8910 = vmatprep.subr.bf16.mxu0 0
    %8911 = vmatpush1.bf16.msra.mxu0 %v8645
    %8912 = vmatprep.subr.bf16.mxu0 0
    %8913 = vmatpush1.bf16.msra.mxu0 %v8646
    %8914 = vmatprep.subr.bf16.mxu0 0
    %8915 = vmatpush1.bf16.msra.mxu0 %v8652
    %8916 = vmatprep.subr.bf16.mxu0 0
    %8917 = vmatpush1.bf16.msra.mxu0 0
    %8918 = vmatprep.subr.bf16.mxu0 0
    %8919 = vmatpush1.bf16.msra.mxu0 0
    %8920 = vmatprep.subr.bf16.mxu0 0
    %8921 = vmatpush1.bf16.msra.mxu0 0
    %8922 = vmatprep.subr.bf16.mxu0 0
    %8923 = vmatpush1.bf16.msra.mxu0 0
    %8924 = vmatprep.subr.bf16.mxu0 0
    %8925 = vmatpush1.bf16.msra.mxu0 0
    %8926 = vmatprep.subr.bf16.mxu0 0
    %8927 = vmatpush1.bf16.msra.mxu0 0
    %8928 = vmatprep.subr.bf16.mxu0 0
    %8929 = vmatpush1.bf16.msra.mxu0 0
    %8930 = vmatprep.subr.bf16.mxu0 0
    %8931 = vmatpush1.bf16.msra.mxu0 0
    %8932 = vmatprep.subr.bf16.mxu0 0
    %8933 = vmatpush1.bf16.msra.mxu0 0
    %8934 = vmatprep.subr.bf16.mxu0 0
    %8935 = vmatpush1.bf16.msra.mxu0 0
    %8936 = vmatprep.subr.bf16.mxu0 0
    %8937 = vmatpush1.bf16.msra.mxu0 0
    %8938 = vmatprep.subr.bf16.mxu0 0
    %8939 = vmatpush1.bf16.msra.mxu0 0
    %8940 = vmatprep.mubr.bf16.mxu0 0
    %8941 = vmatmul.mubr.bf16.gmra.mrb[0].mxu0 %v8866
    %v8942 = vpop.f32.mrb[0].mxu0
    %v8943 = vadd.f32 0.0, %v8942
    %v8944 = vpop.f32.mrb[0].mxu0
    %v8945 = vpop.f32.mrb[0].mxu0
    %v8946 = vpop.f32.mrb[0].mxu0
    %8947 = vdwg.mxu0
    %8948 = vmatprep.subr.bf16.mxu0 0
    %8949 = vmatpush1.bf16.msra.mxu0 %v8715
    %8950 = vmatprep.subr.bf16.mxu0 0
    %8951 = vmatpush1.bf16.msra.mxu0 %v8716
    %8952 = vmatprep.subr.bf16.mxu0 0
    %8953 = vmatpush1.bf16.msra.mxu0 %v8717
    %8954 = vmatprep.subr.bf16.mxu0 0
    %8955 = vmatpush1.bf16.msra.mxu0 %v8723
    %8956 = vmatprep.subr.bf16.mxu0 0
    %8957 = vmatpush1.bf16.msra.mxu0 0
    %8958 = vmatprep.subr.bf16.mxu0 0
    %8959 = vmatpush1.bf16.msra.mxu0 0
    %8960 = vmatprep.subr.bf16.mxu0 0
    %8961 = vmatpush1.bf16.msra.mxu0 0
    %8962 = vmatprep.subr.bf16.mxu0 0
    %8963 = vmatpush1.bf16.msra.mxu0 0
    %8964 = vmatprep.subr.bf16.mxu0 0
    %8965 = vmatpush1.bf16.msra.mxu0 0
    %8966 = vmatprep.subr.bf16.mxu0 0
    %8967 = vmatpush1.bf16.msra.mxu0 0
    %8968 = vmatprep.subr.bf16.mxu0 0
    %8969 = vmatpush1.bf16.msra.mxu0 0
    %8970 = vmatprep.subr.bf16.mxu0 0
    %8971 = vmatpush1.bf16.msra.mxu0 0
    %8972 = vmatprep.subr.bf16.mxu0 0
    %8973 = vmatpush1.bf16.msra.mxu0 0
    %8974 = vmatprep.subr.bf16.mxu0 0
    %8975 = vmatpush1.bf16.msra.mxu0 0
    %8976 = vmatprep.subr.bf16.mxu0 0
    %8977 = vmatpush1.bf16.msra.mxu0 0
    %8978 = vmatprep.subr.bf16.mxu0 0
    %8979 = vmatpush1.bf16.msra.mxu0 0
    %8980 = vmatprep.mubr.bf16.mxu0 0
    %8981 = vmatmul.mubr.bf16.gmra.mrb[0].mxu0 %v8866
    %v8982 = vpop.f32.mrb[0].mxu0
    %v8983 = vadd.f32 0.0, %v8982
    %v8984 = vpop.f32.mrb[0].mxu0
    %v8985 = vpop.f32.mrb[0].mxu0
    %v8986 = vpop.f32.mrb[0].mxu0
    %8987 = vdwg.mxu0
    %8988 = vmatprep.subr.bf16.mxu0 0
    %8989 = vmatpush1.bf16.msra.mxu0 %v8786
    %8990 = vmatprep.subr.bf16.mxu0 0
    %8991 = vmatpush1.bf16.msra.mxu0 %v8787
    %8992 = vmatprep.subr.bf16.mxu0 0
    %8993 = vmatpush1.bf16.msra.mxu0 %v8788
    %8994 = vmatprep.subr.bf16.mxu0 0
    %8995 = vmatpush1.bf16.msra.mxu0 %v8794
    %8996 = vmatprep.subr.bf16.mxu0 0
    %8997 = vmatpush1.bf16.msra.mxu0 0
    %8998 = vmatprep.subr.bf16.mxu0 0
    %8999 = vmatpush1.bf16.msra.mxu0 0
    %9000 = vmatprep.subr.bf16.mxu0 0
    %9001 = vmatpush1.bf16.msra.mxu0 0
    %9002 = vmatprep.subr.bf16.mxu0 0
    %9003 = vmatpush1.bf16.msra.mxu0 0
    %9004 = vmatprep.subr.bf16.mxu0 0
    %9005 = vmatpush1.bf16.msra.mxu0 0
    %9006 = vmatprep.subr.bf16.mxu0 0
    %9007 = vmatpush1.bf16.msra.mxu0 0
    %9008 = vmatprep.subr.bf16.mxu0 0
    %9009 = vmatpush1.bf16.msra.mxu0 0
    %9010 = vmatprep.subr.bf16.mxu0 0
    %9011 = vmatpush1.bf16.msra.mxu0 0
    %9012 = vmatprep.subr.bf16.mxu0 0
    %9013 = vmatpush1.bf16.msra.mxu0 0
    %9014 = vmatprep.subr.bf16.mxu0 0
    %9015 = vmatpush1.bf16.msra.mxu0 0
    %9016 = vmatprep.subr.bf16.mxu0 0
    %9017 = vmatpush1.bf16.msra.mxu0 0
    %9018 = vmatprep.subr.bf16.mxu0 0
    %9019 = vmatpush1.bf16.msra.mxu0 0
    %9020 = vmatprep.mubr.bf16.mxu0 0
    %9021 = vmatmul.mubr.bf16.gmra.mrb[0].mxu0 %v8866
    %v9022 = vpop.f32.mrb[0].mxu0
    %v9023 = vadd.f32 0.0, %v9022
    %v9024 = vpop.f32.mrb[0].mxu0
    %v9025 = vpop.f32.mrb[0].mxu0
    %v9026 = vpop.f32.mrb[0].mxu0
    %9027 = vdwg.mxu0
    %v9029 = vrot.slane %v8903, 7
    %v9031 = vadd.f32 %v7824, %v9029
    %v9032 = vxor.u32 %v9031, 2147483648
    %v9033 = vmul.f32 %v9032, 1.442695
    %v9034 = vpow.pop %v9033
    %v9035 = vadd.f32 %v9034, 1.0
    %v9036 = vrcp.pop %v9035
    %v9037 = vmul.f32 1.0, %v9036
    %v9039 = vrot.slane %v8943, 7
    %v9041 = vadd.f32 %v8065, %v9039
    %v9042 = vxor.u32 %v9041, 2147483648
    %v9043 = vmul.f32 %v9042, 1.442695
    %v9044 = vpow.pop %v9043
    %v9045 = vadd.f32 %v9044, 1.0
    %v9046 = vrcp.pop %v9045
    %v9047 = vmul.f32 1.0, %v9046
    %v9049 = vrot.slane %v8983, 7
    %v9051 = vadd.f32 %v8306, %v9049
    %v9052 = vtanh.pop %v9051
    %v9054 = vrot.slane %v9023, 7
    %v9056 = vadd.f32 %v8547, %v9054
    %v9057 = vxor.u32 %v9056, 2147483648
    %v9058 = vmul.f32 %v9057, 1.442695
    %v9059 = vpow.pop %v9058
    %v9060 = vadd.f32 %v9059, 1.0
    %v9061 = vrcp.pop %v9060
    %v9062 = vmul.f32 1.0, %v9061
    %v9064 = vrot.slane %v8861, 7
    %v9066 = vmul.f32 %v9047, %v9064
    %v9067 = vmul.f32 %v9037, %v9052
    %v9068 = vadd.f32 %v9066, %v9067
    %v9069 = vtanh.pop %v9068
    %v9070 = vmul.f32 %v9062, %v9069
    %v9071 = vmax.f32 %v9070, 0.0
    %v9072 = vpack.c.bf16 %v9071, %v9071
    %v9073 = vld [vmem:[%s8] sm:$0xf]
    %v9074 = vld [vmem:[%s8 + $0x4] sm:$0xf]
    %v9075 = vld [vmem:[%s8 + $0x8] sm:$0xf]
    %v9076 = vld [vmem:[%s8 + $0xc] sm:$0xf]
    %v9077 = vld [vmem:[%s8 + $0x10] sm:$0xf]
    %v9078 = vld [vmem:[%s8 + $0x14] sm:$0xf]
    %v9079 = vld [vmem:[%s8 + $0x18] sm:$0x1]
    %v9080 = vld [vmem:[%s9] sm:$0x1]
    %v9082 = vshrl.u32 %v9072, 16
    %v9091 = vunpack.c.l.b16 %v9073
    %v9092 = vunpack.c.l.b16 %v9074
    %v9093 = vunpack.c.l.b16 %v9075
    %v9094 = vunpack.c.l.b16 %v9076
    %v9095 = vunpack.c.l.b16 %v9077
    %v9096 = vunpack.c.l.b16 %v9078
    %v9097 = vunpack.c.l.b16 %v9079
    %v9098 = vpack.c.b16 %v9092, %v9091
    %v9099 = vpack.c.b16 %v9094, %v9093
    %v9100 = vpack.c.b16 %v9096, %v9095
    %v9101 = vpack.c.b16 %v9097, %v9097
    %v9106 = vsel %vm4041, %v9082, 0
    %v9109 = vsel %vm1131, %v9101, 0
    %9111 = vmatprep.subr.bf16.mxu0 0
    %9112 = vmatpush1.bf16.msra.mxu0 %v9098
    %9113 = vmatprep.subr.bf16.mxu0 0
    %9114 = vmatpush1.bf16.msra.mxu0 %v9099
    %9115 = vmatprep.subr.bf16.mxu0 0
    %9116 = vmatpush1.bf16.msra.mxu0 %v9100
    %9117 = vmatprep.subr.bf16.mxu0 0
    %9118 = vmatpush1.bf16.msra.mxu0 %v9109
    %9119 = vmatprep.subr.bf16.mxu0 0
    %9120 = vmatpush1.bf16.msra.mxu0 0
    %9121 = vmatprep.subr.bf16.mxu0 0
    %9122 = vmatpush1.bf16.msra.mxu0 0
    %9123 = vmatprep.subr.bf16.mxu0 0
    %9124 = vmatpush1.bf16.msra.mxu0 0
    %9125 = vmatprep.subr.bf16.mxu0 0
    %9126 = vmatpush1.bf16.msra.mxu0 0
    %9127 = vmatprep.subr.bf16.mxu0 0
    %9128 = vmatpush1.bf16.msra.mxu0 0
    %9129 = vmatprep.subr.bf16.mxu0 0
    %9130 = vmatpush1.bf16.msra.mxu0 0
    %9131 = vmatprep.subr.bf16.mxu0 0
    %9132 = vmatpush1.bf16.msra.mxu0 0
    %9133 = vmatprep.subr.bf16.mxu0 0
    %9134 = vmatpush1.bf16.msra.mxu0 0
    %9135 = vmatprep.subr.bf16.mxu0 0
    %9136 = vmatpush1.bf16.msra.mxu0 0
    %9137 = vmatprep.subr.bf16.mxu0 0
    %9138 = vmatpush1.bf16.msra.mxu0 0
    %9139 = vmatprep.subr.bf16.mxu0 0
    %9140 = vmatpush1.bf16.msra.mxu0 0
    %9141 = vmatprep.subr.bf16.mxu0 0
    %9142 = vmatpush1.bf16.msra.mxu0 0
    %9143 = vmatprep.mubr.bf16.mxu0 0
    %9144 = vmatmul.mubr.bf16.gmra.mrb[0].mxu0 %v9106
    %v9145 = vpop.f32.mrb[0].mxu0
    %v9146 = vadd.f32 %v9080, %v9145
    %v9147 = vpop.f32.mrb[0].mxu0
    %v9148 = vpop.f32.mrb[0].mxu0
    %v9149 = vpop.f32.mrb[0].mxu0
    %9150 = vdwg.mxu0
    %v9152 = vrot.slane %v9146, 7
    %v9154 = vsel %vm1131, %v4614, %v9152
    %vm9155 = vcmask 82944
    %9156 = vst.msk [vmem:[#allocation3] sm:$0x3] %vm9155, %v9154
    // Predicated region
    $region42: #{tpu_custom_call.1} parent=1 // pred_check
      _
    $region43: #{tpu_custom_call.1} parent=1 // pred_check_branch
      %9158 = sbr.rel (0) target = $region45
    $region44: #{tpu_custom_call.1} parent=1 // pred_region
      %s9160 = ssub.s32 32, 32
      %9161 = vsyncadd [#allocation4], %s9160
      %s9163 = sshll.u32 [#allocation3], 4
      %s9164 = int_to_ptr.vmem [resolvable:$true] %s9163
      %9166 = dma.vmem_to_hbm [thread:$0]  %s9164, 32, %s10, [#allocation4]
    $region45: #{tpu_custom_call.1} parent=1 // pred_fallthru
      _
    // Predicated region
    $region46: #{tpu_custom_call.1} parent=1 // pred_check
      _
    $region47: #{tpu_custom_call.1} parent=1 // pred_check_branch
      %9168 = sbr.rel (0) target = $region49
    $region48: #{tpu_custom_call.1} parent=1 // pred_region
      %9169 = dma.done [#allocation4], 32
    $region49: #{tpu_custom_call.1} parent=1 // pred_fallthru
      _
    %9170 = vsyncpa [#allocation4], 1

</llo_original>
